<compile_context>
chip_gen: v5e
topology: v5e:2x2
jax: 0.10.0
libtpu: 0.0.40
codegen_flags: <defaults>
</compile_context>

<pallas_src>
import math
from functools import partial

import jax
import jax.numpy as jnp
from jax.experimental import pallas as pl
from jax.experimental.pallas import tpu as pltpu


# ----------------------------------------------------------------------------
# Fused kernel: all encoder layers for one batch element (grid = (B, L)).
# ----------------------------------------------------------------------------
def fused_encoder_kernel(
    x_ref,        # (1, S, D)   input activations (read at layer 0 only)
    wqkv_ref,     # (Lb, D, 3D) bf16, columns [Q | K | V] head-major, Q pre-scaled
    bqkv_ref,     # (Lb, 1, 3D) f32
    wo_ref,       # (Lb, D, D)  bf16
    bo_ref,       # (Lb, 1, D)  f32
    g1_ref,       # (Lb, 1, D)  LayerNorm1 gamma
    be1_ref,      # (Lb, 1, D)  LayerNorm1 beta
    w1_ref,       # (Lb, D, F)  bf16
    b1_ref,       # (Lb, 1, F)  f32
    w2_ref,       # (Lb, F, D)  bf16
    b2_ref,       # (Lb, 1, D)  f32
    g2_ref,       # (Lb, 1, D)  LayerNorm2 gamma
    be2_ref,      # (Lb, 1, D)  LayerNorm2 beta
    o_ref,        # (1, S, D)   residual stream / output (resident across L)
    *,
    num_heads: int,
    head_dim: int,
    weights_resident: bool,
    exp_in_bf16: bool,
):
    layer = pl.program_id(1)

    # Seed the residual stream at the first layer; for later layers o_ref
    # still holds the previous layer's output (same block index along the
    # "arbitrary" layer axis -> stays resident in VMEM).
    @pl.when(layer == 0)
    def _():
        o_ref[...] = x_ref[...]

    # Resident path: weight refs hold the whole layer stack (Lb == L) ->
    # dynamic first-axis index by `layer`.  Streaming path: Lb == 1 -> index 0.
    li = layer if weights_resident else 0

    S, D = o_ref.shape[1], o_ref.shape[2]
    H, hd = num_heads, head_dim

    x = o_ref[0].astype(jnp.float32)               # (S, D) residual, f32
    xb = x.astype(jnp.bfloat16)

    # ---- fused QKV projection (1/sqrt(hd) already folded into Q columns) ----
    qkv = jnp.dot(xb, wqkv_ref[li], preferred_element_type=jnp.float32)
    qkv = qkv + bqkv_ref[li]                        # (S, 3D), layout [Q | K | V]

    q = qkv[:, :D].astype(jnp.bfloat16)
    k = qkv[:, D:2 * D].astype(jnp.bfloat16)
    v = qkv[:, 2 * D:].astype(jnp.bfloat16)

    # head-batched layout (H, S, hd); last (lane) dim preserved
    qh = pltpu.einshape("shd->hsd", q.reshape(S, H, hd))
    kh = pltpu.einshape("shd->hsd", k.reshape(S, H, hd))
    vh = pltpu.einshape("shd->hsd", v.reshape(S, H, hd))

    # ---- scaled dot-product attention, batched over heads -------------------
    logits = jnp.einsum("hqd,hkd->hqk", qh, kh,
                        preferred_element_type=jnp.float32)     # (H, S, S) f32
    m = jnp.max(logits, axis=-1, keepdims=True)
    z = logits - m
    if exp_in_bf16:
        # bf16 EUP path (v6e / v7x); row-sum stays f32.
        p = jnp.exp(z.astype(jnp.bfloat16))                     # (H, S, S) bf16
        denom = jnp.sum(p.astype(jnp.float32), axis=-1, keepdims=True)
    else:
        pf = jnp.exp(z)                                         # f32 (v5e-safe)
        denom = jnp.sum(pf, axis=-1, keepdims=True)
        p = pf.astype(jnp.bfloat16)

    # unnormalized PV matmul, normalize the (H, S, hd) result afterwards
    vals = jnp.einsum("hqk,hkd->hqd", p, vh,
                      preferred_element_type=jnp.float32)       # (H, S, hd) f32
    vals = vals * pl.reciprocal(denom, approx=True)
    vals = pltpu.einshape("hsd->shd", vals).reshape(S, D)       # (S, D) head-major

    attn_out = jnp.dot(vals.astype(jnp.bfloat16), wo_ref[li],
                       preferred_element_type=jnp.float32) + bo_ref[li]

    # ---- residual + LayerNorm 1 (f32 statistics) -----------------------------
    x1 = x + attn_out
    mu1 = jnp.mean(x1, axis=-1, keepdims=True)
    var1 = jnp.mean(jnp.square(x1 - mu1), axis=-1, keepdims=True)
    x1n = (x1 - mu1) * jax.lax.rsqrt(var1 + 1e-5)
    x1n = x1n * g1_ref[li] + be1_ref[li]

    # ---- feed-forward: Linear -> ReLU -> Linear ------------------------------
    h1 = jnp.dot(x1n.astype(jnp.bfloat16), w1_ref[li],
                 preferred_element_type=jnp.float32) + b1_ref[li]
    h1 = jnp.maximum(h1, 0.0)
    ff = jnp.dot(h1.astype(jnp.bfloat16), w2_ref[li],
                 preferred_element_type=jnp.float32) + b2_ref[li]

    # ---- residual + LayerNorm 2 ----------------------------------------------
    x2 = x1n + ff
    mu2 = jnp.mean(x2, axis=-1, keepdims=True)
    var2 = jnp.mean(jnp.square(x2 - mu2), axis=-1, keepdims=True)
    x2n = (x2 - mu2) * jax.lax.rsqrt(var2 + 1e-5)
    out = x2n * g2_ref[li] + be2_ref[li]

    o_ref[0] = out.astype(o_ref.dtype)


# ----------------------------------------------------------------------------
# Chip-aware helpers.
# ----------------------------------------------------------------------------
def _use_bf16_exp():
    """bf16 EUP exists on v6e / v7x only; keep f32 exp elsewhere."""
    try:
        kind = jax.devices()[0].device_kind.lower()
    except Exception:
        return False
    return ("v6" in kind) or ("v7" in kind)


def _vmem_capacity_bytes():
    try:
        info = pltpu.get_tpu_info()
        return int(getattr(info, "vmem_capacity_bytes", 64 << 20))
    except Exception:   # interpret mode / non-TPU backend
        return 64 << 20


# ----------------------------------------------------------------------------
# Wrapper: fuse the whole layer stack into one pallas_call.
# ----------------------------------------------------------------------------
def transformer_encoder(x, layer_params, *, num_heads):
    B, S, D = x.shape
    L = len(layer_params)
    F = layer_params[0]["w1"].shape[1]
    head_dim = D // num_heads
    scale = 1.0 / math.sqrt(head_dim)

    # Module layout of wqkv columns is per-head interleaved [q_h|k_h|v_h];
    # permute to [Q_allheads | K_allheads | V_allheads] (lane-aligned D-wide
    # blocks) and fold 1/sqrt(head_dim) into the Q block (weights and bias).
    def permute_qkv_w(w):                       # (D, 3D) -> (D, 3D)
        w4 = (w.reshape(D, num_heads, 3, head_dim)
                .transpose(0, 2, 1, 3))          # (D, 3, H, hd)
        w4 = w4.at[:, 0].multiply(scale)
        return w4.reshape(D, 3 * D)

    def permute_qkv_b(b):                       # (1, 3D) -> (1, 3D)
        b4 = (b.reshape(1, num_heads, 3, head_dim)
                .transpose(0, 2, 1, 3))
        b4 = b4.at[:, 0].multiply(scale)
        return b4.reshape(1, 3 * D)

    def stack(key, fn=None, dtype=None):
        arrs = [p[key] if fn is None else fn(p[key]) for p in layer_params]
        out = jnp.stack(arrs, axis=0)
        return out.astype(dtype) if dtype is not None else out

    wqkv = stack("wqkv", permute_qkv_w, jnp.bfloat16)   # (L, D, 3D)
    bqkv = stack("bqkv", permute_qkv_b)                 # (L, 1, 3D) f32
    wo   = stack("wo", None, jnp.bfloat16)              # (L, D, D)
    bo   = stack("bo")                                  # (L, 1, D)
    g1   = stack("g1")
    be1  = stack("be1")
    w1   = stack("w1", None, jnp.bfloat16)              # (L, D, F)
    b1   = stack("b1")                                  # (L, 1, F)
    w2   = stack("w2", None, jnp.bfloat16)              # (L, F, D)
    b2   = stack("b2")
    g2   = stack("g2")
    be2  = stack("be2")

    weight_args = (wqkv, bqkv, wo, bo, g1, be1, w1, b1, w2, b2, g2, be2)

    # ---- VMEM budget & weight-residency decision -----------------------------
    def _nbytes(a):
        return a.size * a.dtype.itemsize

    total_w = sum(_nbytes(w) for w in weight_args)
    per_layer_w = total_w // L
    act_block = S * D * max(x.dtype.itemsize, 4)
    intermediates = 4 * (3 * S * D + 2 * num_heads * S * S + 2 * S * F
                         + 10 * S * D)
    margin = 4 << 20

    vmem_cap = _vmem_capacity_bytes()           # 128 MiB v5e/v6e, 64 MiB v7x
    headroom = 8 << 20                          # compiler scratch / relayouts

    resident_need = 2 * total_w + 4 * act_block + intermediates + margin
    stream_need = 4 * per_layer_w + 4 * act_block + intermediates + margin
    weights_resident = resident_need <= (vmem_cap - headroom)
    needed = resident_need if weights_resident else stream_need
    vmem_limit = int(max(16 << 20, min(needed, vmem_cap - headroom)))

    x_spec = pl.BlockSpec((1, S, D), lambda b, l: (b, 0, 0))
    out_spec = pl.BlockSpec((1, S, D), lambda b, l: (b, 0, 0))

    if weights_resident:
        # Whole layer stack fetched once, stays resident for the full grid.
        def wspec(arr):
            return pl.BlockSpec(arr.shape, lambda b, l: (0, 0, 0))
    else:
        # Per-layer streaming (re-fetched per batch element) fallback.
        def wspec(arr):
            return pl.BlockSpec((1,) + arr.shape[1:], lambda b, l: (l, 0, 0))

    kernel = partial(fused_encoder_kernel, num_heads=num_heads,
                     head_dim=head_dim, weights_resident=weights_resident,
                     exp_in_bf16=_use_bf16_exp())

    return pl.pallas_call(
        kernel,
        out_shape=jax.ShapeDtypeStruct((B, S, D), x.dtype),
        grid_spec=pl.GridSpec(
            grid=(B, L),
            in_specs=[x_spec] + [wspec(w) for w in weight_args],
            out_specs=out_spec,
        ),
        compiler_params=pltpu.CompilerParams(
            dimension_semantics=("parallel", "arbitrary"),
            vmem_limit_bytes=vmem_limit,
        ),
    )(x, *weight_args)


# ----------------------------------------------------------------------------
# Deterministic parameter init (xavier_uniform weights, zero biases, LayerNorm
# gamma=1 / beta=0) — mirrors MultiheadAttention._reset_parameters + defaults.
# Parameters are stored in the module's natural layout (qkv per-head
# interleaved); the wrapper permutes/scales/casts/stacks them for the kernel.
# ----------------------------------------------------------------------------
def xavier_uniform(key, fan_in, fan_out, dtype=jnp.float32):
    limit = math.sqrt(6.0 / (fan_in + fan_out))
    return jax.random.uniform(key, (fan_in, fan_out), dtype,
                              minval=-limit, maxval=limit)


def init_layer_params(key, input_dim, dim_feedforward):
    D, F = input_dim, dim_feedforward
    k = jax.random.split(key, 4)
    return {
        "wqkv": xavier_uniform(k[0], D, 3 * D),
        "bqkv": jnp.zeros((1, 3 * D), jnp.float32),
        "wo":   xavier_uniform(k[1], D, D),
        "bo":   jnp.zeros((1, D), jnp.float32),
        "g1":   jnp.ones((1, D), jnp.float32),
        "be1":  jnp.zeros((1, D), jnp.float32),
        "w1":   xavier_uniform(k[2], D, F),
        "b1":   jnp.zeros((1, F), jnp.float32),
        "w2":   xavier_uniform(k[3], F, D),
        "b2":   jnp.zeros((1, D), jnp.float32),
        "g2":   jnp.ones((1, D), jnp.float32),
        "be2":  jnp.zeros((1, D), jnp.float32),
    }


if __name__ == "__main__":
    # Small but lane-aligned shapes (D multiple of 128 -> unmasked stores),
    # batch=2 so the parallel batch axis splits across v7x's 2 TensorCores.
    batch, seq_len, input_dim = 2, 128, 128
    num_heads, dim_feedforward, num_layers = 4, 256, 2

    root = jax.random.PRNGKey(0)
    x_key, *layer_keys = jax.random.split(root, num_layers + 1)

    x = jax.random.normal(x_key, (batch, seq_len, input_dim), jnp.float32)
    layer_params = [init_layer_params(k, input_dim, dim_feedforward)
                    for k in layer_keys]

    out = transformer_encoder(x, layer_params, num_heads=num_heads)
    out = jax.block_until_ready(out)

    assert out.shape == (batch, seq_len, input_dim)
    assert bool(jnp.all(jnp.isfinite(out)))
    print("KERNEL_OK")
</pallas_src>

<mosaic_0001>
module attributes {stable_mosaic.version = 11 : i64} {
  func.func @fused_encoder_kernel(%arg0: i32, %arg1: i32, %arg2: memref<1x128x128xf32, #tpu.memory_space<vmem>>, %arg3: memref<2x128x384xbf16, #tpu.memory_space<vmem>>, %arg4: memref<2x1x384xf32, #tpu.memory_space<vmem>>, %arg5: memref<2x128x128xbf16, #tpu.memory_space<vmem>>, %arg6: memref<2x1x128xf32, #tpu.memory_space<vmem>>, %arg7: memref<2x1x128xf32, #tpu.memory_space<vmem>>, %arg8: memref<2x1x128xf32, #tpu.memory_space<vmem>>, %arg9: memref<2x128x256xbf16, #tpu.memory_space<vmem>>, %arg10: memref<2x1x256xf32, #tpu.memory_space<vmem>>, %arg11: memref<2x256x128xbf16, #tpu.memory_space<vmem>>, %arg12: memref<2x1x128xf32, #tpu.memory_space<vmem>>, %arg13: memref<2x1x128xf32, #tpu.memory_space<vmem>>, %arg14: memref<2x1x128xf32, #tpu.memory_space<vmem>>, %arg15: memref<1x128x128xf32, #tpu.memory_space<vmem>>) attributes {dimension_semantics = [#tpu.dimension_semantics<parallel>, #tpu.dimension_semantics<arbitrary>], iteration_bounds = array<i64: 2, 2>, scalar_prefetch = 0 : i64, scratch_operands = 0 : i64, tpu.core_type = #tpu.core_type<tc>, window_params = [{transform_indices = @transform_0, window_bounds = array<i64: 1, 128, 128>}, {pipeline_mode = #tpu.pipeline_mode<synchronous>, transform_indices = @transform_1, window_bounds = array<i64: 2, 128, 384>}, {pipeline_mode = #tpu.pipeline_mode<synchronous>, transform_indices = @transform_2, window_bounds = array<i64: 2, 1, 384>}, {pipeline_mode = #tpu.pipeline_mode<synchronous>, transform_indices = @transform_3, window_bounds = array<i64: 2, 128, 128>}, {pipeline_mode = #tpu.pipeline_mode<synchronous>, transform_indices = @transform_4, window_bounds = array<i64: 2, 1, 128>}, {pipeline_mode = #tpu.pipeline_mode<synchronous>, transform_indices = @transform_5, window_bounds = array<i64: 2, 1, 128>}, {pipeline_mode = #tpu.pipeline_mode<synchronous>, transform_indices = @transform_6, window_bounds = array<i64: 2, 1, 128>}, {pipeline_mode = #tpu.pipeline_mode<synchronous>, transform_indices = @transform_7, window_bounds = array<i64: 2, 128, 256>}, {pipeline_mode = #tpu.pipeline_mode<synchronous>, transform_indices = @transform_8, window_bounds = array<i64: 2, 1, 256>}, {pipeline_mode = #tpu.pipeline_mode<synchronous>, transform_indices = @transform_9, window_bounds = array<i64: 2, 256, 128>}, {pipeline_mode = #tpu.pipeline_mode<synchronous>, transform_indices = @transform_10, window_bounds = array<i64: 2, 1, 128>}, {pipeline_mode = #tpu.pipeline_mode<synchronous>, transform_indices = @transform_11, window_bounds = array<i64: 2, 1, 128>}, {pipeline_mode = #tpu.pipeline_mode<synchronous>, transform_indices = @transform_12, window_bounds = array<i64: 2, 1, 128>}, {transform_indices = @transform_13, window_bounds = array<i64: 1, 128, 128>}]} {
    %c0_i32 = arith.constant 0 : i32
    %0 = arith.cmpi eq, %arg1, %c0_i32 : i32
    %1 = arith.extui %0 : i1 to i32
    %c0_i32_0 = arith.constant 0 : i32
    %2 = arith.cmpi ne, %1, %c0_i32_0 : i32
    scf.if %2 {
      %c0_48 = arith.constant 0 : index
      %c0_49 = arith.constant 0 : index
      %c0_50 = arith.constant 0 : index
      %135 = vector.load %arg2[%c0_48, %c0_49, %c0_50] : memref<1x128x128xf32, #tpu.memory_space<vmem>>, vector<1x128x128xf32>
      %c0_51 = arith.constant 0 : index
      %c0_52 = arith.constant 0 : index
      %c0_53 = arith.constant 0 : index
      %136 = vector.load %arg15[%c0_51, %c0_52, %c0_53] : memref<1x128x128xf32, #tpu.memory_space<vmem>>, vector<1x128x128xf32>
      tpu.vector_store %arg15[%c0_51, %c0_52, %c0_53], %135 {strides = array<i32>} : memref<1x128x128xf32, #tpu.memory_space<vmem>>, vector<1x128x128xf32>,
    } else {
    }
    %c0 = arith.constant 0 : index
    %c0_1 = arith.constant 0 : index
    %c0_2 = arith.constant 0 : index
    %3 = vector.load %arg15[%c0, %c0_1, %c0_2] : memref<1x128x128xf32, #tpu.memory_space<vmem>>, vector<1x128x128xf32>
    %4 = vector.shape_cast %3 : vector<1x128x128xf32> to vector<128x128xf32>
    %5 = arith.truncf %4 : vector<128x128xf32> to vector<128x128xbf16>
    %6 = arith.index_cast %arg1 : i32 to index
    %c0_3 = arith.constant 0 : index
    %c0_4 = arith.constant 0 : index
    %7 = vector.load %arg3[%6, %c0_3, %c0_4] : memref<2x128x384xbf16, #tpu.memory_space<vmem>>, vector<1x128x384xbf16>
    %8 = vector.shape_cast %7 : vector<1x128x384xbf16> to vector<128x384xbf16>
    %cst = arith.constant dense<0.000000e+00> : vector<128x384xf32>
    %9 = tpu.matmul %5, %8, %cst {dimension_numbers = #tpu.dot_dimension_numbers<[1], [0], [0], [1], [0, 0, 1, 1], [], []>} : vector<128x128xbf16>, vector<128x384xbf16>, vector<128x384xf32> -> vector<128x384xf32>
    %10 = arith.index_cast %arg1 : i32 to index
    %c0_5 = arith.constant 0 : index
    %c0_6 = arith.constant 0 : index
    %11 = vector.load %arg4[%10, %c0_5, %c0_6] : memref<2x1x384xf32, #tpu.memory_space<vmem>>, vector<1x1x384xf32>
    %12 = vector.shape_cast %11 : vector<1x1x384xf32> to vector<1x384xf32>
    %13 = vector.broadcast %12 : vector<1x384xf32> to vector<128x384xf32>
    %14 = arith.addf %9, %13 : vector<128x384xf32>
    %15 = vector.extract_strided_slice %14 {offsets = [0, 0], sizes = [128, 128], strides = [1, 1]} : vector<128x384xf32> to vector<128x128xf32>
    %16 = arith.truncf %15 : vector<128x128xf32> to vector<128x128xbf16>
    %17 = vector.extract_strided_slice %14 {offsets = [0, 128], sizes = [128, 128], strides = [1, 1]} : vector<128x384xf32> to vector<128x128xf32>
    %18 = arith.truncf %17 : vector<128x128xf32> to vector<128x128xbf16>
    %19 = vector.extract_strided_slice %14 {offsets = [0, 256], sizes = [128, 128], strides = [1, 1]} : vector<128x384xf32> to vector<128x128xf32>
    %20 = arith.truncf %19 : vector<128x128xf32> to vector<128x128xbf16>
    %21 = vector.shape_cast %16 : vector<128x128xbf16> to vector<128x4x32xbf16>
    %22 = tpu.transpose %21, [1, 0, 2] : vector<128x4x32xbf16> -> vector<4x128x32xbf16>
    %23 = vector.shape_cast %18 : vector<128x128xbf16> to vector<128x4x32xbf16>
    %24 = tpu.transpose %23, [1, 0, 2] : vector<128x4x32xbf16> -> vector<4x128x32xbf16>
    %25 = vector.shape_cast %20 : vector<128x128xbf16> to vector<128x4x32xbf16>
    %26 = tpu.transpose %25, [1, 0, 2] : vector<128x4x32xbf16> -> vector<4x128x32xbf16>
    "tpu.trace_start"() <{level = 10 : i32, message = "hqd,hkd->hqk"}> : () -> ()
    %cst_7 = arith.constant dense<0.000000e+00> : vector<4x128x128xf32>
    %27 = tpu.matmul %22, %24, %cst_7 {dimension_numbers = #tpu.dot_dimension_numbers<[2], [2], [1], [1], [0, 0, 0, 1, 1, 1], [0], [0]>} : vector<4x128x32xbf16>, vector<4x128x32xbf16>, vector<4x128x128xf32> -> vector<4x128x128xf32>
    "tpu.trace_stop"() : () -> ()
    %cst_8 = arith.constant dense<0xFF800000> : vector<4x128xf32>
    %28 = vector.multi_reduction <maximumf>, %27, %cst_8 [2] : vector<4x128x128xf32> to vector<4x128xf32>
    %29 = vector.shape_cast %28 : vector<4x128xf32> to vector<4x128x1xf32>
    %30 = vector.broadcast %29 : vector<4x128x1xf32> to vector<4x128x128xf32>
    %31 = arith.subf %27, %30 : vector<4x128x128xf32>
    %32 = math.exp %31 : vector<4x128x128xf32>
    %cst_9 = arith.constant dense<0.000000e+00> : vector<4x128xf32>
    %33 = vector.multi_reduction <add>, %32, %cst_9 [2] : vector<4x128x128xf32> to vector<4x128xf32>
    %34 = vector.shape_cast %33 : vector<4x128xf32> to vector<4x128x1xf32>
    %35 = arith.truncf %32 : vector<4x128x128xf32> to vector<4x128x128xbf16>
    "tpu.trace_start"() <{level = 10 : i32, message = "hqk,hkd->hqd"}> : () -> ()
    %cst_10 = arith.constant dense<0.000000e+00> : vector<4x128x32xf32>
    %36 = tpu.matmul %35, %26, %cst_10 {dimension_numbers = #tpu.dot_dimension_numbers<[2], [1], [1], [2], [0, 0, 0, 1, 1, 2], [0], [0]>} : vector<4x128x128xbf16>, vector<4x128x32xbf16>, vector<4x128x32xf32> -> vector<4x128x32xf32>
    "tpu.trace_stop"() : () -> ()
    %37 = tpu.reciprocal %34 {approx = true} : vector<4x128x1xf32> -> vector<4x128x1xf32>
    %38 = vector.broadcast %37 : vector<4x128x1xf32> to vector<4x128x32xf32>
    %39 = arith.mulf %36, %38 : vector<4x128x32xf32>
    %40 = tpu.transpose %39, [1, 0, 2] : vector<4x128x32xf32> -> vector<128x4x32xf32>
    %41 = vector.shape_cast %40 : vector<128x4x32xf32> to vector<128x128xf32>
    %42 = arith.truncf %41 : vector<128x128xf32> to vector<128x128xbf16>
    %43 = arith.index_cast %arg1 : i32 to index
    %c0_11 = arith.constant 0 : index
    %c0_12 = arith.constant 0 : index
    %44 = vector.load %arg5[%43, %c0_11, %c0_12] : memref<2x128x128xbf16, #tpu.memory_space<vmem>>, vector<1x128x128xbf16>
    %45 = vector.shape_cast %44 : vector<1x128x128xbf16> to vector<128x128xbf16>
    %cst_13 = arith.constant dense<0.000000e+00> : vector<128x128xf32>
    %46 = tpu.matmul %42, %45, %cst_13 {dimension_numbers = #tpu.dot_dimension_numbers<[1], [0], [0], [1], [0, 0, 1, 1], [], []>} : vector<128x128xbf16>, vector<128x128xbf16>, vector<128x128xf32> -> vector<128x128xf32>
    %47 = arith.index_cast %arg1 : i32 to index
    %c0_14 = arith.constant 0 : index
    %c0_15 = arith.constant 0 : index
    %48 = vector.load %arg6[%47, %c0_14, %c0_15] : memref<2x1x128xf32, #tpu.memory_space<vmem>>, vector<1x1x128xf32>
    %49 = vector.shape_cast %48 : vector<1x1x128xf32> to vector<1x128xf32>
    %50 = vector.broadcast %49 : vector<1x128xf32> to vector<128x128xf32>
    %51 = arith.addf %46, %50 : vector<128x128xf32>
    %52 = arith.addf %4, %51 : vector<128x128xf32>
    %cst_16 = arith.constant dense<0.000000e+00> : vector<128xf32>
    %53 = vector.multi_reduction <add>, %52, %cst_16 [1] : vector<128x128xf32> to vector<128xf32>
    %54 = vector.shape_cast %53 : vector<128xf32> to vector<128x1xf32>
    %cst_17 = arith.constant 1.280000e+02 : f32
    %55 = vector.broadcast %cst_17 : f32 to vector<128x1xf32>
    %56 = arith.divf %54, %55 : vector<128x1xf32>
    %57 = vector.broadcast %56 : vector<128x1xf32> to vector<128x128xf32>
    %58 = arith.subf %52, %57 : vector<128x128xf32>
    %59 = arith.mulf %58, %58 : vector<128x128xf32>
    %cst_18 = arith.constant dense<0.000000e+00> : vector<128xf32>
    %60 = vector.multi_reduction <add>, %59, %cst_18 [1] : vector<128x128xf32> to vector<128xf32>
    %61 = vector.shape_cast %60 : vector<128xf32> to vector<128x1xf32>
    %cst_19 = arith.constant 1.280000e+02 : f32
    %62 = vector.broadcast %cst_19 : f32 to vector<128x1xf32>
    %63 = arith.divf %61, %62 : vector<128x1xf32>
    %64 = vector.broadcast %56 : vector<128x1xf32> to vector<128x128xf32>
    %65 = arith.subf %52, %64 : vector<128x128xf32>
    %cst_20 = arith.constant 9.99999974E-6 : f32
    %66 = vector.broadcast %cst_20 : f32 to vector<128x1xf32>
    %67 = arith.addf %63, %66 : vector<128x1xf32>
    %68 = math.rsqrt %67 : vector<128x1xf32>
    %69 = vector.broadcast %68 : vector<128x1xf32> to vector<128x128xf32>
    %70 = arith.mulf %65, %69 : vector<128x128xf32>
    %71 = arith.index_cast %arg1 : i32 to index
    %c0_21 = arith.constant 0 : index
    %c0_22 = arith.constant 0 : index
    %72 = vector.load %arg7[%71, %c0_21, %c0_22] : memref<2x1x128xf32, #tpu.memory_space<vmem>>, vector<1x1x128xf32>
    %73 = vector.shape_cast %72 : vector<1x1x128xf32> to vector<1x128xf32>
    %74 = vector.broadcast %73 : vector<1x128xf32> to vector<128x128xf32>
    %75 = arith.mulf %70, %74 : vector<128x128xf32>
    %76 = arith.index_cast %arg1 : i32 to index
    %c0_23 = arith.constant 0 : index
    %c0_24 = arith.constant 0 : index
    %77 = vector.load %arg8[%76, %c0_23, %c0_24] : memref<2x1x128xf32, #tpu.memory_space<vmem>>, vector<1x1x128xf32>
    %78 = vector.shape_cast %77 : vector<1x1x128xf32> to vector<1x128xf32>
    %79 = vector.broadcast %78 : vector<1x128xf32> to vector<128x128xf32>
    %80 = arith.addf %75, %79 : vector<128x128xf32>
    %81 = arith.truncf %80 : vector<128x128xf32> to vector<128x128xbf16>
    %82 = arith.index_cast %arg1 : i32 to index
    %c0_25 = arith.constant 0 : index
    %c0_26 = arith.constant 0 : index
    %83 = vector.load %arg9[%82, %c0_25, %c0_26] : memref<2x128x256xbf16, #tpu.memory_space<vmem>>, vector<1x128x256xbf16>
    %84 = vector.shape_cast %83 : vector<1x128x256xbf16> to vector<128x256xbf16>
    %cst_27 = arith.constant dense<0.000000e+00> : vector<128x256xf32>
    %85 = tpu.matmul %81, %84, %cst_27 {dimension_numbers = #tpu.dot_dimension_numbers<[1], [0], [0], [1], [0, 0, 1, 1], [], []>} : vector<128x128xbf16>, vector<128x256xbf16>, vector<128x256xf32> -> vector<128x256xf32>
    %86 = arith.index_cast %arg1 : i32 to index
    %c0_28 = arith.constant 0 : index
    %c0_29 = arith.constant 0 : index
    %87 = vector.load %arg10[%86, %c0_28, %c0_29] : memref<2x1x256xf32, #tpu.memory_space<vmem>>, vector<1x1x256xf32>
    %88 = vector.shape_cast %87 : vector<1x1x256xf32> to vector<1x256xf32>
    %89 = vector.broadcast %88 : vector<1x256xf32> to vector<128x256xf32>
    %90 = arith.addf %85, %89 : vector<128x256xf32>
    %cst_30 = arith.constant 0.000000e+00 : f32
    %91 = vector.broadcast %cst_30 : f32 to vector<128x256xf32>
    %92 = arith.maximumf %90, %91 : vector<128x256xf32>
    %93 = arith.truncf %92 : vector<128x256xf32> to vector<128x256xbf16>
    %94 = arith.index_cast %arg1 : i32 to index
    %c0_31 = arith.constant 0 : index
    %c0_32 = arith.constant 0 : index
    %95 = vector.load %arg11[%94, %c0_31, %c0_32] : memref<2x256x128xbf16, #tpu.memory_space<vmem>>, vector<1x256x128xbf16>
    %96 = vector.shape_cast %95 : vector<1x256x128xbf16> to vector<256x128xbf16>
    %cst_33 = arith.constant dense<0.000000e+00> : vector<128x128xf32>
    %97 = tpu.matmul %93, %96, %cst_33 {dimension_numbers = #tpu.dot_dimension_numbers<[1], [0], [0], [1], [0, 0, 1, 1], [], []>} : vector<128x256xbf16>, vector<256x128xbf16>, vector<128x128xf32> -> vector<128x128xf32>
    %98 = arith.index_cast %arg1 : i32 to index
    %c0_34 = arith.constant 0 : index
    %c0_35 = arith.constant 0 : index
    %99 = vector.load %arg12[%98, %c0_34, %c0_35] : memref<2x1x128xf32, #tpu.memory_space<vmem>>, vector<1x1x128xf32>
    %100 = vector.shape_cast %99 : vector<1x1x128xf32> to vector<1x128xf32>
    %101 = vector.broadcast %100 : vector<1x128xf32> to vector<128x128xf32>
    %102 = arith.addf %97, %101 : vector<128x128xf32>
    %103 = arith.addf %80, %102 : vector<128x128xf32>
    %cst_36 = arith.constant dense<0.000000e+00> : vector<128xf32>
    %104 = vector.multi_reduction <add>, %103, %cst_36 [1] : vector<128x128xf32> to vector<128xf32>
    %105 = vector.shape_cast %104 : vector<128xf32> to vector<128x1xf32>
    %cst_37 = arith.constant 1.280000e+02 : f32
    %106 = vector.broadcast %cst_37 : f32 to vector<128x1xf32>
    %107 = arith.divf %105, %106 : vector<128x1xf32>
    %108 = vector.broadcast %107 : vector<128x1xf32> to vector<128x128xf32>
    %109 = arith.subf %103, %108 : vector<128x128xf32>
    %110 = arith.mulf %109, %109 : vector<128x128xf32>
    %cst_38 = arith.constant dense<0.000000e+00> : vector<128xf32>
    %111 = vector.multi_reduction <add>, %110, %cst_38 [1] : vector<128x128xf32> to vector<128xf32>
    %112 = vector.shape_cast %111 : vector<128xf32> to vector<128x1xf32>
    %cst_39 = arith.constant 1.280000e+02 : f32
    %113 = vector.broadcast %cst_39 : f32 to vector<128x1xf32>
    %114 = arith.divf %112, %113 : vector<128x1xf32>
    %115 = vector.broadcast %107 : vector<128x1xf32> to vector<128x128xf32>
    %116 = arith.subf %103, %115 : vector<128x128xf32>
    %cst_40 = arith.constant 9.99999974E-6 : f32
    %117 = vector.broadcast %cst_40 : f32 to vector<128x1xf32>
    %118 = arith.addf %114, %117 : vector<128x1xf32>
    %119 = math.rsqrt %118 : vector<128x1xf32>
    %120 = vector.broadcast %119 : vector<128x1xf32> to vector<128x128xf32>
    %121 = arith.mulf %116, %120 : vector<128x128xf32>
    %122 = arith.index_cast %arg1 : i32 to index
    %c0_41 = arith.constant 0 : index
    %c0_42 = arith.constant 0 : index
    %123 = vector.load %arg13[%122, %c0_41, %c0_42] : memref<2x1x128xf32, #tpu.memory_space<vmem>>, vector<1x1x128xf32>
    %124 = vector.shape_cast %123 : vector<1x1x128xf32> to vector<1x128xf32>
    %125 = vector.broadcast %124 : vector<1x128xf32> to vector<128x128xf32>
    %126 = arith.mulf %121, %125 : vector<128x128xf32>
    %127 = arith.index_cast %arg1 : i32 to index
    %c0_43 = arith.constant 0 : index
    %c0_44 = arith.constant 0 : index
    %128 = vector.load %arg14[%127, %c0_43, %c0_44] : memref<2x1x128xf32, #tpu.memory_space<vmem>>, vector<1x1x128xf32>
    %129 = vector.shape_cast %128 : vector<1x1x128xf32> to vector<1x128xf32>
    %130 = vector.broadcast %129 : vector<1x128xf32> to vector<128x128xf32>
    %131 = arith.addf %126, %130 : vector<128x128xf32>
    %c0_45 = arith.constant 0 : index
    %c0_46 = arith.constant 0 : index
    %c0_47 = arith.constant 0 : index
    %132 = vector.load %arg15[%c0_45, %c0_46, %c0_47] : memref<1x128x128xf32, #tpu.memory_space<vmem>>, vector<1x128x128xf32>
    %133 = vector.shape_cast %132 : vector<1x128x128xf32> to vector<128x128xf32>
    %134 = vector.shape_cast %131 : vector<128x128xf32> to vector<1x128x128xf32>
    tpu.vector_store %arg15[%c0_45, %c0_46, %c0_47], %134 {strides = array<i32>} : memref<1x128x128xf32, #tpu.memory_space<vmem>>, vector<1x128x128xf32>,
    return
  }
  func.func @transform_0(%arg0: i32, %arg1: i32) -> (i32, i32, i32) {
    %c0_i32 = arith.constant 0 : i32
    %c0_i32_0 = arith.constant 0 : i32
    %c0_i32_1 = arith.constant 0 : i32
    return %arg0, %c0_i32, %c0_i32_0 : i32, i32, i32
  }
  func.func @transform_1(%arg0: i32, %arg1: i32) -> (i32, i32, i32) {
    %c0_i32 = arith.constant 0 : i32
    %c0_i32_0 = arith.constant 0 : i32
    %c0_i32_1 = arith.constant 0 : i32
    %c0_i32_2 = arith.constant 0 : i32
    return %c0_i32, %c0_i32_0, %c0_i32_1 : i32, i32, i32
  }
  func.func @transform_2(%arg0: i32, %arg1: i32) -> (i32, i32, i32) {
    %c0_i32 = arith.constant 0 : i32
    %c0_i32_0 = arith.constant 0 : i32
    %c0_i32_1 = arith.constant 0 : i32
    %c0_i32_2 = arith.constant 0 : i32
    return %c0_i32, %c0_i32_0, %c0_i32_1 : i32, i32, i32
  }
  func.func @transform_3(%arg0: i32, %arg1: i32) -> (i32, i32, i32) {
    %c0_i32 = arith.constant 0 : i32
    %c0_i32_0 = arith.constant 0 : i32
    %c0_i32_1 = arith.constant 0 : i32
    %c0_i32_2 = arith.constant 0 : i32
    return %c0_i32, %c0_i32_0, %c0_i32_1 : i32, i32, i32
  }
  func.func @transform_4(%arg0: i32, %arg1: i32) -> (i32, i32, i32) {
    %c0_i32 = arith.constant 0 : i32
    %c0_i32_0 = arith.constant 0 : i32
    %c0_i32_1 = arith.constant 0 : i32
    %c0_i32_2 = arith.constant 0 : i32
    return %c0_i32, %c0_i32_0, %c0_i32_1 : i32, i32, i32
  }
  func.func @transform_5(%arg0: i32, %arg1: i32) -> (i32, i32, i32) {
    %c0_i32 = arith.constant 0 : i32
    %c0_i32_0 = arith.constant 0 : i32
    %c0_i32_1 = arith.constant 0 : i32
    %c0_i32_2 = arith.constant 0 : i32
    return %c0_i32, %c0_i32_0, %c0_i32_1 : i32, i32, i32
  }
  func.func @transform_6(%arg0: i32, %arg1: i32) -> (i32, i32, i32) {
    %c0_i32 = arith.constant 0 : i32
    %c0_i32_0 = arith.constant 0 : i32
    %c0_i32_1 = arith.constant 0 : i32
    %c0_i32_2 = arith.constant 0 : i32
    return %c0_i32, %c0_i32_0, %c0_i32_1 : i32, i32, i32
  }
  func.func @transform_7(%arg0: i32, %arg1: i32) -> (i32, i32, i32) {
    %c0_i32 = arith.constant 0 : i32
    %c0_i32_0 = arith.constant 0 : i32
    %c0_i32_1 = arith.constant 0 : i32
    %c0_i32_2 = arith.constant 0 : i32
    return %c0_i32, %c0_i32_0, %c0_i32_1 : i32, i32, i32
  }
  func.func @transform_8(%arg0: i32, %arg1: i32) -> (i32, i32, i32) {
    %c0_i32 = arith.constant 0 : i32
    %c0_i32_0 = arith.constant 0 : i32
    %c0_i32_1 = arith.constant 0 : i32
    %c0_i32_2 = arith.constant 0 : i32
    return %c0_i32, %c0_i32_0, %c0_i32_1 : i32, i32, i32
  }
  func.func @transform_9(%arg0: i32, %arg1: i32) -> (i32, i32, i32) {
    %c0_i32 = arith.constant 0 : i32
    %c0_i32_0 = arith.constant 0 : i32
    %c0_i32_1 = arith.constant 0 : i32
    %c0_i32_2 = arith.constant 0 : i32
    return %c0_i32, %c0_i32_0, %c0_i32_1 : i32, i32, i32
  }
  func.func @transform_10(%arg0: i32, %arg1: i32) -> (i32, i32, i32) {
    %c0_i32 = arith.constant 0 : i32
    %c0_i32_0 = arith.constant 0 : i32
    %c0_i32_1 = arith.constant 0 : i32
    %c0_i32_2 = arith.constant 0 : i32
    return %c0_i32, %c0_i32_0, %c0_i32_1 : i32, i32, i32
  }
  func.func @transform_11(%arg0: i32, %arg1: i32) -> (i32, i32, i32) {
    %c0_i32 = arith.constant 0 : i32
    %c0_i32_0 = arith.constant 0 : i32
    %c0_i32_1 = arith.constant 0 : i32
    %c0_i32_2 = arith.constant 0 : i32
    return %c0_i32, %c0_i32_0, %c0_i32_1 : i32, i32, i32
  }
  func.func @transform_12(%arg0: i32, %arg1: i32) -> (i32, i32, i32) {
    %c0_i32 = arith.constant 0 : i32
    %c0_i32_0 = arith.constant 0 : i32
    %c0_i32_1 = arith.constant 0 : i32
    %c0_i32_2 = arith.constant 0 : i32
    return %c0_i32, %c0_i32_0, %c0_i32_1 : i32, i32, i32
  }
  func.func @transform_13(%arg0: i32, %arg1: i32) -> (i32, i32, i32) {
    %c0_i32 = arith.constant 0 : i32
    %c0_i32_0 = arith.constant 0 : i32
    %c0_i32_1 = arith.constant 0 : i32
    return %arg0, %c0_i32, %c0_i32_0 : i32, i32, i32
  }
}

</mosaic_0001>

<llo_original>
// kernel: tpu_custom_call.1
$region0: #{tpu_custom_call.1}
  #allocation0 [shape = 'u32[]', space=smem, size = 0x4, offset = 0x4, fixed_abs, tag = 'smem constant byte address 0x4 - core index']
  #allocation1 [shape = 'u32[72,128]{1,0:T(1,128)}', space=vmem, size = 0x9000, scoped, tag = 'internal scratch']
  %s0 = inlined_call_operand.hbm [shape: f32[2,128,128], index: 0, kind: input, shape index: {}]
  %s1 = inlined_call_operand.hbm [shape: bf16[2,128,384], index: 1, kind: input, shape index: {}]
  %s2 = inlined_call_operand.hbm [shape: f32[2,1,384], index: 2, kind: input, shape index: {}]
  %s3 = inlined_call_operand.hbm [shape: bf16[2,128,128], index: 3, kind: input, shape index: {}]
  %s4 = inlined_call_operand.vmem [shape: f32[2,1,128], index: 4, kind: input, shape index: {}]
  %s5 = inlined_call_operand.hbm [shape: f32[2,1,128], index: 5, kind: input, shape index: {}]
  %s6 = inlined_call_operand.hbm [shape: f32[2,1,128], index: 6, kind: input, shape index: {}]
  %s7 = inlined_call_operand.hbm [shape: bf16[2,128,256], index: 7, kind: input, shape index: {}]
  %s8 = inlined_call_operand.vmem [shape: f32[2,1,256], index: 8, kind: input, shape index: {}]
  %s9 = inlined_call_operand.hbm [shape: bf16[2,256,128], index: 9, kind: input, shape index: {}]
  %s10 = inlined_call_operand.vmem [shape: f32[2,1,128], index: 10, kind: input, shape index: {}]
  %s11 = inlined_call_operand.vmem [shape: f32[2,1,128], index: 11, kind: input, shape index: {}]
  %s12 = inlined_call_operand.hbm [shape: f32[2,1,128], index: 12, kind: input, shape index: {}]
  %s13 = inlined_call_operand.hbm [shape: f32[2,128,128], index: 13, kind: output, shape index: {}]
  %s14 = sld [smem:[#allocation0]]
  $region125: #{tpu_custom_call.1} parent=0
    _
  %s16 = ssub.s32 1, %s14
  %s17 = scalar_select 0, %s16, %s14
  $region1: #{tpu_custom_call.1} parent=0
    #allocation2 [shape = 'u8[131072]{0}', space=vmem, size = 0x20000, scoped, tag = 'input window, operand 0']
    #allocation3 [shape = 's32[2]{0}', space=sflag, size = 0x8, scoped, tag = 'scoped memory for tpu_custom_call.1']
    #allocation4 [shape = 's32[2]{0}', space=sflag, size = 0x8, scoped, tag = 'scoped memory for tpu_custom_call.1']
    #allocation5 [shape = 'u8[196608]{0}', space=vmem, size = 0x30000, scoped, tag = 'input window, operand 1, single buffered']
    #allocation6 [shape = 's32[1]{0}', space=sflag, size = 0x4, scoped, tag = 'scoped memory for tpu_custom_call.1']
    #allocation7 [shape = 'u8[3072]{0}', space=vmem, size = 0xc00, scoped, tag = 'input window, operand 2, single buffered']
    #allocation8 [shape = 'u8[65536]{0}', space=vmem, size = 0x10000, scoped, tag = 'input window, operand 3, single buffered']
    #allocation9 [shape = 's32[1]{0}', space=sflag, size = 0x4, scoped, tag = 'scoped memory for tpu_custom_call.1']
    #allocation10 [shape = 'u8[1024]{0}', space=vmem, size = 0x400, scoped, tag = 'input window, operand 5, single buffered']
    #allocation11 [shape = 'u8[1024]{0}', space=vmem, size = 0x400, scoped, tag = 'input window, operand 6, single buffered']
    #allocation12 [shape = 's32[1]{0}', space=sflag, size = 0x4, scoped, tag = 'scoped memory for tpu_custom_call.1']
    #allocation13 [shape = 'u8[131072]{0}', space=vmem, size = 0x20000, scoped, tag = 'input window, operand 7, single buffered']
    #allocation14 [shape = 'u8[131072]{0}', space=vmem, size = 0x20000, scoped, tag = 'input window, operand 9, single buffered']
    #allocation15 [shape = 's32[1]{0}', space=sflag, size = 0x4, scoped, tag = 'scoped memory for tpu_custom_call.1']
    #allocation16 [shape = 'u8[1024]{0}', space=vmem, size = 0x400, scoped, tag = 'input window, operand 12, single buffered']
    #allocation17 [shape = 'u8[131072]{0}', space=vmem, size = 0x20000, scoped, tag = 'output window, operand 0']
    %18 = vsyncpa [#allocation3], 0
    %s19 = scalar_lea.sflag [#allocation3], 1
    %20 = vsyncpa %s19, 0
    %21 = vsyncpa [#allocation6], 0
    %22 = vsyncpa [#allocation9], 0
    %23 = vsyncpa [#allocation12], 0
    %24 = vsyncpa [#allocation15], 0
    %25 = vsyncpa [#allocation4], 0
    %s26 = scalar_lea.sflag [#allocation4], 1
    %27 = vsyncpa %s26, 0
    loop: start=0, step=1, limit=6
    $region2: #{tpu_custom_call.1} parent=1 // loop_pre_header
      _
    $region3: #{tpu_custom_call.1} parent=1 // loop_header
      %s29 = sphi 0, %s33
      %p30 = scmp.ge.s32.totalorder %s29, 6
      %s36 = sphi 0, %s48
      %s37 = sphi 0, %s44
      %s38 = sphi 0, %s36
      %s39 = sphi 0, %s37
      %s40 = sphi 0, %s38
      %s41 = sphi 0, %s39
      %s51 = sphi 0, %s53
      %s54 = sphi 0, %s51
      %s55 = sphi 0, %s54
      %s71 = sphi 0, %s55
      %s75 = sphi 0, %s75
      %s77 = sphi 0, %s75
      %s78 = sphi 0, %s77
      %s92 = sphi 0, %s78
      %s96 = sphi 0, %s96
      %s98 = sphi 0, %s96
      %s99 = sphi 0, %s98
      %s113 = sphi 0, %s99
      %s117 = sphi 0, %s117
      %s119 = sphi 0, %s117
      %s120 = sphi 0, %s119
      %s134 = sphi 0, %s120
      %s138 = sphi 0, %s138
      %s140 = sphi 0, %s138
      %s141 = sphi 0, %s140
      %s155 = sphi 0, %s141
      %s159 = sphi 0, %s159
      %s161 = sphi 0, %s159
      %s162 = sphi 0, %s161
      %s176 = sphi 0, %s162
      %s180 = sphi 0, %s180
      %s182 = sphi 0, %s180
      %s183 = sphi 0, %s182
      %s197 = sphi 0, %s183
      %s201 = sphi 0, %s201
      %s203 = sphi 0, %s201
      %s204 = sphi 0, %s203
      %s218 = sphi 0, %s204
      %s222 = sphi 0, %s222
      %s224 = sphi 0, %s222
      %s225 = sphi 0, %s224
      %s239 = sphi 0, %s225
      %s243 = sphi 0, %s243
      %s245 = sphi 0, %s243
      %s246 = sphi 0, %s245
      %s260 = sphi 0, %s246
      %s264 = sphi 0, %s264
      %s266 = sphi 0, %s264
      %s267 = sphi 0, %s266
      %s281 = sphi 0, %s267
      %s285 = sphi 0, %s285
      %s287 = sphi 0, %s285
      %s288 = sphi 0, %s287
      %s302 = sphi 0, %s288
      %s306 = sphi 0, %s306
      %s308 = sphi 0, %s306
      %s309 = sphi 0, %s308
      %s323 = sphi 0, %s309
      %s329 = sphi 0, %s331
      %s332 = sphi 0, %s329
      %s333 = sphi 0, %s332
      %s349 = sphi 0, %s333
    $region4: #{tpu_custom_call.1} parent=1 // loop_header_branch
      %32 = sbr.rel (%p30) target = $region8
    $region5: #{tpu_custom_call.1} parent=1 // loop_body
      %s34 = ssub.s32 %s29, 1
      %s35 = ssub.s32 %s29, 2
      %s42 = sadd.s32 1, %s37
      %p43 = scmp.ge.s32.totalorder %s42, 2
      %s44 = scalar_select %p43, 0, %s42
      %s45 = sadd.s32 1, %s36
      %s46 = scalar_select %p43, %s45, %s36
      %p47 = scmp.ge.s32.totalorder %s46, 2
      %s48 = scalar_select %p47, 0, %s46
      %s49 = ssub.s32 %s36, %s48
      %p50 = scmp.eq.s32.totalorder %s49, 0
      %s52 = sadd.s32 %s51, 1
      %s53 = scalar_select %p50, %s51, %s52
      %p56 = pneg %p50
      %p57 = scmp.eq.s32.totalorder %s29, 3
      %p58 = por %p56, %p57
      %p59 = scmp.ne.s32.totalorder %s51, %s54
      %p60 = scmp.eq.s32.totalorder %s29, 0
      %p61 = por %p59, %p60
      %p62 = scmp.ne.s32.totalorder %s51, %s54
      %p63 = scmp.eq.s32.totalorder %s34, 3
      %p64 = por %p62, %p63
      %p65 = scmp.ne.s32.totalorder %s54, %s55
      %p66 = scmp.eq.s32.totalorder %s34, 0
      %p67 = por %p65, %p66
      %p68 = scmp.ne.s32.totalorder %s54, %s55
      %p69 = scmp.eq.s32.totalorder %s35, 3
      %p70 = por %p68, %p69
      %p72 = scmp.ne.s32.totalorder %s55, %s71
      %p73 = scmp.eq.s32.totalorder %s35, 0
      %p74 = por %p72, %p73
      %s76 = sadd.s32 %s75, 1
      %p79 = scmp.eq.s32.totalorder %s29, 3
      %p80 = scmp.ne.s32.totalorder %s75, %s77
      %p81 = scmp.eq.s32.totalorder %s29, 0
      %p82 = por %p80, %p81
      %p83 = scmp.ne.s32.totalorder %s75, %s77
      %p84 = scmp.eq.s32.totalorder %s34, 3
      %p85 = por %p83, %p84
      %p86 = scmp.ne.s32.totalorder %s77, %s78
      %p87 = scmp.eq.s32.totalorder %s34, 0
      %p88 = por %p86, %p87
      %p89 = scmp.ne.s32.totalorder %s77, %s78
      %p90 = scmp.eq.s32.totalorder %s35, 3
      %p91 = por %p89, %p90
      %p93 = scmp.ne.s32.totalorder %s78, %s92
      %p94 = scmp.eq.s32.totalorder %s35, 0
      %p95 = por %p93, %p94
      %s97 = sadd.s32 %s96, 1
      %p100 = scmp.eq.s32.totalorder %s29, 3
      %p101 = scmp.ne.s32.totalorder %s96, %s98
      %p102 = scmp.eq.s32.totalorder %s29, 0
      %p103 = por %p101, %p102
      %p104 = scmp.ne.s32.totalorder %s96, %s98
      %p105 = scmp.eq.s32.totalorder %s34, 3
      %p106 = por %p104, %p105
      %p107 = scmp.ne.s32.totalorder %s98, %s99
      %p108 = scmp.eq.s32.totalorder %s34, 0
      %p109 = por %p107, %p108
      %p110 = scmp.ne.s32.totalorder %s98, %s99
      %p111 = scmp.eq.s32.totalorder %s35, 3
      %p112 = por %p110, %p111
      %p114 = scmp.ne.s32.totalorder %s99, %s113
      %p115 = scmp.eq.s32.totalorder %s35, 0
      %p116 = por %p114, %p115
      %s118 = sadd.s32 %s117, 1
      %p121 = scmp.eq.s32.totalorder %s29, 3
      %p122 = scmp.ne.s32.totalorder %s117, %s119
      %p123 = scmp.eq.s32.totalorder %s29, 0
      %p124 = por %p122, %p123
      %p125 = scmp.ne.s32.totalorder %s117, %s119
      %p126 = scmp.eq.s32.totalorder %s34, 3
      %p127 = por %p125, %p126
      %p128 = scmp.ne.s32.totalorder %s119, %s120
      %p129 = scmp.eq.s32.totalorder %s34, 0
      %p130 = por %p128, %p129
      %p131 = scmp.ne.s32.totalorder %s119, %s120
      %p132 = scmp.eq.s32.totalorder %s35, 3
      %p133 = por %p131, %p132
      %p135 = scmp.ne.s32.totalorder %s120, %s134
      %p136 = scmp.eq.s32.totalorder %s35, 0
      %p137 = por %p135, %p136
      %s139 = sadd.s32 %s138, 1
      %p142 = scmp.eq.s32.totalorder %s29, 3
      %p143 = scmp.ne.s32.totalorder %s138, %s140
      %p144 = scmp.eq.s32.totalorder %s29, 0
      %p145 = por %p143, %p144
      %p146 = scmp.ne.s32.totalorder %s138, %s140
      %p147 = scmp.eq.s32.totalorder %s34, 3
      %p148 = por %p146, %p147
      %p149 = scmp.ne.s32.totalorder %s140, %s141
      %p150 = scmp.eq.s32.totalorder %s34, 0
      %p151 = por %p149, %p150
      %p152 = scmp.ne.s32.totalorder %s140, %s141
      %p153 = scmp.eq.s32.totalorder %s35, 3
      %p154 = por %p152, %p153
      %p156 = scmp.ne.s32.totalorder %s141, %s155
      %p157 = scmp.eq.s32.totalorder %s35, 0
      %p158 = por %p156, %p157
      %s160 = sadd.s32 %s159, 1
      %p163 = scmp.eq.s32.totalorder %s29, 3
      %p164 = scmp.ne.s32.totalorder %s159, %s161
      %p165 = scmp.eq.s32.totalorder %s29, 0
      %p166 = por %p164, %p165
      %p167 = scmp.ne.s32.totalorder %s159, %s161
      %p168 = scmp.eq.s32.totalorder %s34, 3
      %p169 = por %p167, %p168
      %p170 = scmp.ne.s32.totalorder %s161, %s162
      %p171 = scmp.eq.s32.totalorder %s34, 0
      %p172 = por %p170, %p171
      %p173 = scmp.ne.s32.totalorder %s161, %s162
      %p174 = scmp.eq.s32.totalorder %s35, 3
      %p175 = por %p173, %p174
      %p177 = scmp.ne.s32.totalorder %s162, %s176
      %p178 = scmp.eq.s32.totalorder %s35, 0
      %p179 = por %p177, %p178
      %s181 = sadd.s32 %s180, 1
      %p184 = scmp.eq.s32.totalorder %s29, 3
      %p185 = scmp.ne.s32.totalorder %s180, %s182
      %p186 = scmp.eq.s32.totalorder %s29, 0
      %p187 = por %p185, %p186
      %p188 = scmp.ne.s32.totalorder %s180, %s182
      %p189 = scmp.eq.s32.totalorder %s34, 3
      %p190 = por %p188, %p189
      %p191 = scmp.ne.s32.totalorder %s182, %s183
      %p192 = scmp.eq.s32.totalorder %s34, 0
      %p193 = por %p191, %p192
      %p194 = scmp.ne.s32.totalorder %s182, %s183
      %p195 = scmp.eq.s32.totalorder %s35, 3
      %p196 = por %p194, %p195
      %p198 = scmp.ne.s32.totalorder %s183, %s197
      %p199 = scmp.eq.s32.totalorder %s35, 0
      %p200 = por %p198, %p199
      %s202 = sadd.s32 %s201, 1
      %p205 = scmp.eq.s32.totalorder %s29, 3
      %p206 = scmp.ne.s32.totalorder %s201, %s203
      %p207 = scmp.eq.s32.totalorder %s29, 0
      %p208 = por %p206, %p207
      %p209 = scmp.ne.s32.totalorder %s201, %s203
      %p210 = scmp.eq.s32.totalorder %s34, 3
      %p211 = por %p209, %p210
      %p212 = scmp.ne.s32.totalorder %s203, %s204
      %p213 = scmp.eq.s32.totalorder %s34, 0
      %p214 = por %p212, %p213
      %p215 = scmp.ne.s32.totalorder %s203, %s204
      %p216 = scmp.eq.s32.totalorder %s35, 3
      %p217 = por %p215, %p216
      %p219 = scmp.ne.s32.totalorder %s204, %s218
      %p220 = scmp.eq.s32.totalorder %s35, 0
      %p221 = por %p219, %p220
      %s223 = sadd.s32 %s222, 1
      %p226 = scmp.eq.s32.totalorder %s29, 3
      %p227 = scmp.ne.s32.totalorder %s222, %s224
      %p228 = scmp.eq.s32.totalorder %s29, 0
      %p229 = por %p227, %p228
      %p230 = scmp.ne.s32.totalorder %s222, %s224
      %p231 = scmp.eq.s32.totalorder %s34, 3
      %p232 = por %p230, %p231
      %p233 = scmp.ne.s32.totalorder %s224, %s225
      %p234 = scmp.eq.s32.totalorder %s34, 0
      %p235 = por %p233, %p234
      %p236 = scmp.ne.s32.totalorder %s224, %s225
      %p237 = scmp.eq.s32.totalorder %s35, 3
      %p238 = por %p236, %p237
      %p240 = scmp.ne.s32.totalorder %s225, %s239
      %p241 = scmp.eq.s32.totalorder %s35, 0
      %p242 = por %p240, %p241
      %s244 = sadd.s32 %s243, 1
      %p247 = scmp.eq.s32.totalorder %s29, 3
      %p248 = scmp.ne.s32.totalorder %s243, %s245
      %p249 = scmp.eq.s32.totalorder %s29, 0
      %p250 = por %p248, %p249
      %p251 = scmp.ne.s32.totalorder %s243, %s245
      %p252 = scmp.eq.s32.totalorder %s34, 3
      %p253 = por %p251, %p252
      %p254 = scmp.ne.s32.totalorder %s245, %s246
      %p255 = scmp.eq.s32.totalorder %s34, 0
      %p256 = por %p254, %p255
      %p257 = scmp.ne.s32.totalorder %s245, %s246
      %p258 = scmp.eq.s32.totalorder %s35, 3
      %p259 = por %p257, %p258
      %p261 = scmp.ne.s32.totalorder %s246, %s260
      %p262 = scmp.eq.s32.totalorder %s35, 0
      %p263 = por %p261, %p262
      %s265 = sadd.s32 %s264, 1
      %p268 = scmp.eq.s32.totalorder %s29, 3
      %p269 = scmp.ne.s32.totalorder %s264, %s266
      %p270 = scmp.eq.s32.totalorder %s29, 0
      %p271 = por %p269, %p270
      %p272 = scmp.ne.s32.totalorder %s264, %s266
      %p273 = scmp.eq.s32.totalorder %s34, 3
      %p274 = por %p272, %p273
      %p275 = scmp.ne.s32.totalorder %s266, %s267
      %p276 = scmp.eq.s32.totalorder %s34, 0
      %p277 = por %p275, %p276
      %p278 = scmp.ne.s32.totalorder %s266, %s267
      %p279 = scmp.eq.s32.totalorder %s35, 3
      %p280 = por %p278, %p279
      %p282 = scmp.ne.s32.totalorder %s267, %s281
      %p283 = scmp.eq.s32.totalorder %s35, 0
      %p284 = por %p282, %p283
      %s286 = sadd.s32 %s285, 1
      %p289 = scmp.eq.s32.totalorder %s29, 3
      %p290 = scmp.ne.s32.totalorder %s285, %s287
      %p291 = scmp.eq.s32.totalorder %s29, 0
      %p292 = por %p290, %p291
      %p293 = scmp.ne.s32.totalorder %s285, %s287
      %p294 = scmp.eq.s32.totalorder %s34, 3
      %p295 = por %p293, %p294
      %p296 = scmp.ne.s32.totalorder %s287, %s288
      %p297 = scmp.eq.s32.totalorder %s34, 0
      %p298 = por %p296, %p297
      %p299 = scmp.ne.s32.totalorder %s287, %s288
      %p300 = scmp.eq.s32.totalorder %s35, 3
      %p301 = por %p299, %p300
      %p303 = scmp.ne.s32.totalorder %s288, %s302
      %p304 = scmp.eq.s32.totalorder %s35, 0
      %p305 = por %p303, %p304
      %s307 = sadd.s32 %s306, 1
      %p310 = scmp.eq.s32.totalorder %s29, 3
      %p311 = scmp.ne.s32.totalorder %s306, %s308
      %p312 = scmp.eq.s32.totalorder %s29, 0
      %p313 = por %p311, %p312
      %p314 = scmp.ne.s32.totalorder %s306, %s308
      %p315 = scmp.eq.s32.totalorder %s34, 3
      %p316 = por %p314, %p315
      %p317 = scmp.ne.s32.totalorder %s308, %s309
      %p318 = scmp.eq.s32.totalorder %s34, 0
      %p319 = por %p317, %p318
      %p320 = scmp.ne.s32.totalorder %s308, %s309
      %p321 = scmp.eq.s32.totalorder %s35, 3
      %p322 = por %p320, %p321
      %p324 = scmp.ne.s32.totalorder %s309, %s323
      %p325 = scmp.eq.s32.totalorder %s35, 0
      %p326 = por %p324, %p325
      %s327 = ssub.s32 %s36, %s48
      %p328 = scmp.eq.s32.totalorder %s327, 0
      %s330 = sadd.s32 %s329, 1
      %s331 = scalar_select %p328, %s329, %s330
      %p334 = pneg %p328
      %p335 = scmp.eq.s32.totalorder %s29, 3
      %p336 = por %p334, %p335
      %p337 = scmp.ne.s32.totalorder %s329, %s332
      %p338 = scmp.eq.s32.totalorder %s29, 0
      %p339 = por %p337, %p338
      %p340 = scmp.ne.s32.totalorder %s329, %s332
      %p341 = scmp.eq.s32.totalorder %s34, 3
      %p342 = por %p340, %p341
      %p343 = scmp.ne.s32.totalorder %s332, %s333
      %p344 = scmp.eq.s32.totalorder %s34, 0
      %p345 = por %p343, %p344
      %p346 = scmp.ne.s32.totalorder %s332, %s333
      %p347 = scmp.eq.s32.totalorder %s35, 3
      %p348 = por %p346, %p347
      %p350 = scmp.ne.s32.totalorder %s333, %s349
      %p351 = scmp.eq.s32.totalorder %s35, 0
      %p352 = por %p350, %p351
      %p353 = scmp.le.s32.totalorder 1, %s29
      %p354 = scmp.lt.s32.totalorder %s29, 5
      %p355 = pnand %p353, %p354
      %p356 = pneg %p355
      // Predicated region
      $region9: #{tpu_custom_call.1} parent=5 // pred_check
        _
      $region10: #{tpu_custom_call.1} parent=5 // pred_check_branch
        %358 = sbr.rel (%p355) target = $region12
      $region11: #{tpu_custom_call.1} parent=5 // pred_region
        %s359 = ssub.s32 %s29, 1
        // Predicated region
        $region13: #{tpu_custom_call.1} parent=11 // pred_check
          %p360 = pneg %p88
        $region14: #{tpu_custom_call.1} parent=11 // pred_check_branch
          %362 = sbr.rel (%p360) target = $region16
        $region15: #{tpu_custom_call.1} parent=11 // pred_region
          %364 = vsyncadd [#allocation6], 0
          %s365 = sshll.u32 %s1, 4
          %s366 = int_to_ptr.hbm [resolvable:$true] %s365
          %s367 = sshll.u32 [#allocation5], 4
          %s368 = int_to_ptr.vmem [resolvable:$true] %s367
          %373 = dma.hbm_to_vmem [thread:$0]  %s366, 6144, %s368, [#allocation6], 192, 192, 12
        $region16: #{tpu_custom_call.1} parent=11 // pred_fallthru
          _
        // Predicated region
        $region17: #{tpu_custom_call.1} parent=11 // pred_check
          %p374 = pneg %p109
        $region18: #{tpu_custom_call.1} parent=11 // pred_check_branch
          %376 = sbr.rel (%p374) target = $region20
        $region19: #{tpu_custom_call.1} parent=11 // pred_region
          %378 = vsyncadd [#allocation6], 0
          %s379 = sshll.u32 %s2, 4
          %s380 = int_to_ptr.hbm [resolvable:$true] %s379
          %s381 = sshll.u32 [#allocation7], 4
          %s382 = int_to_ptr.vmem [resolvable:$true] %s381
          %387 = dma.hbm_to_vmem [thread:$0]  %s380, 96, %s382, [#allocation6], 48, 48, 3
        $region20: #{tpu_custom_call.1} parent=11 // pred_fallthru
          _
        // Predicated region
        $region21: #{tpu_custom_call.1} parent=11 // pred_check
          %p388 = pneg %p130
        $region22: #{tpu_custom_call.1} parent=11 // pred_check_branch
          %390 = sbr.rel (%p388) target = $region24
        $region23: #{tpu_custom_call.1} parent=11 // pred_region
          %392 = vsyncadd [#allocation9], 0
          %s393 = sshll.u32 %s3, 4
          %s394 = int_to_ptr.hbm [resolvable:$true] %s393
          %s395 = sshll.u32 [#allocation8], 4
          %s396 = int_to_ptr.vmem [resolvable:$true] %s395
          %401 = dma.hbm_to_vmem [thread:$0]  %s394, 2048, %s396, [#allocation9], 64, 64, 4
        $region24: #{tpu_custom_call.1} parent=11 // pred_fallthru
          _
        // Predicated region
        $region25: #{tpu_custom_call.1} parent=11 // pred_check
          %p402 = pneg %p151
        $region26: #{tpu_custom_call.1} parent=11 // pred_check_branch
          %404 = sbr.rel (%p402) target = $region28
        $region27: #{tpu_custom_call.1} parent=11 // pred_region
          _
        $region28: #{tpu_custom_call.1} parent=11 // pred_fallthru
          _
        // Predicated region
        $region29: #{tpu_custom_call.1} parent=11 // pred_check
          %p405 = pneg %p172
        $region30: #{tpu_custom_call.1} parent=11 // pred_check_branch
          %407 = sbr.rel (%p405) target = $region32
        $region31: #{tpu_custom_call.1} parent=11 // pred_region
          %409 = vsyncadd [#allocation9], 0
          %s410 = sshll.u32 %s5, 4
          %s411 = int_to_ptr.hbm [resolvable:$true] %s410
          %s412 = sshll.u32 [#allocation10], 4
          %s413 = int_to_ptr.vmem [resolvable:$true] %s412
          %418 = dma.hbm_to_vmem [thread:$0]  %s411, 32, %s413, [#allocation9], 16, 16, 1
        $region32: #{tpu_custom_call.1} parent=11 // pred_fallthru
          _
        // Predicated region
        $region33: #{tpu_custom_call.1} parent=11 // pred_check
          %p419 = pneg %p193
        $region34: #{tpu_custom_call.1} parent=11 // pred_check_branch
          %421 = sbr.rel (%p419) target = $region36
        $region35: #{tpu_custom_call.1} parent=11 // pred_region
          %423 = vsyncadd [#allocation12], 0
          %s424 = sshll.u32 %s6, 4
          %s425 = int_to_ptr.hbm [resolvable:$true] %s424
          %s426 = sshll.u32 [#allocation11], 4
          %s427 = int_to_ptr.vmem [resolvable:$true] %s426
          %432 = dma.hbm_to_vmem [thread:$0]  %s425, 32, %s427, [#allocation12], 16, 16, 1
        $region36: #{tpu_custom_call.1} parent=11 // pred_fallthru
          _
        // Predicated region
        $region37: #{tpu_custom_call.1} parent=11 // pred_check
          %p433 = pneg %p214
        $region38: #{tpu_custom_call.1} parent=11 // pred_check_branch
          %435 = sbr.rel (%p433) target = $region40
        $region39: #{tpu_custom_call.1} parent=11 // pred_region
          %437 = vsyncadd [#allocation12], 0
          %s438 = sshll.u32 %s7, 4
          %s439 = int_to_ptr.hbm [resolvable:$true] %s438
          %s440 = sshll.u32 [#allocation13], 4
          %s441 = int_to_ptr.vmem [resolvable:$true] %s440
          %446 = dma.hbm_to_vmem [thread:$0]  %s439, 4096, %s441, [#allocation12], 128, 128, 8
        $region40: #{tpu_custom_call.1} parent=11 // pred_fallthru
          _
        // Predicated region
        $region41: #{tpu_custom_call.1} parent=11 // pred_check
          %p447 = pneg %p235
        $region42: #{tpu_custom_call.1} parent=11 // pred_check_branch
          %449 = sbr.rel (%p447) target = $region44
        $region43: #{tpu_custom_call.1} parent=11 // pred_region
          _
        $region44: #{tpu_custom_call.1} parent=11 // pred_fallthru
          _
        // Predicated region
        $region45: #{tpu_custom_call.1} parent=11 // pred_check
          %p450 = pneg %p256
        $region46: #{tpu_custom_call.1} parent=11 // pred_check_branch
          %452 = sbr.rel (%p450) target = $region48
        $region47: #{tpu_custom_call.1} parent=11 // pred_region
          %454 = vsyncadd [#allocation15], 0
          %s455 = sshll.u32 %s9, 4
          %s456 = int_to_ptr.hbm [resolvable:$true] %s455
          %s457 = sshll.u32 [#allocation14], 4
          %s458 = int_to_ptr.vmem [resolvable:$true] %s457
          %463 = dma.hbm_to_vmem [thread:$0]  %s456, 4096, %s458, [#allocation15], 64, 64, 4
        $region48: #{tpu_custom_call.1} parent=11 // pred_fallthru
          _
        // Predicated region
        $region49: #{tpu_custom_call.1} parent=11 // pred_check
          %p464 = pneg %p277
        $region50: #{tpu_custom_call.1} parent=11 // pred_check_branch
          %466 = sbr.rel (%p464) target = $region52
        $region51: #{tpu_custom_call.1} parent=11 // pred_region
          _
        $region52: #{tpu_custom_call.1} parent=11 // pred_fallthru
          _
        // Predicated region
        $region53: #{tpu_custom_call.1} parent=11 // pred_check
          %p467 = pneg %p298
        $region54: #{tpu_custom_call.1} parent=11 // pred_check_branch
          %469 = sbr.rel (%p467) target = $region56
        $region55: #{tpu_custom_call.1} parent=11 // pred_region
          _
        $region56: #{tpu_custom_call.1} parent=11 // pred_fallthru
          _
        // Predicated region
        $region57: #{tpu_custom_call.1} parent=11 // pred_check
          %p470 = pneg %p319
        $region58: #{tpu_custom_call.1} parent=11 // pred_check_branch
          %472 = sbr.rel (%p470) target = $region60
        $region59: #{tpu_custom_call.1} parent=11 // pred_region
          %474 = vsyncadd [#allocation15], 0
          %s475 = sshll.u32 %s12, 4
          %s476 = int_to_ptr.hbm [resolvable:$true] %s475
          %s477 = sshll.u32 [#allocation16], 4
          %s478 = int_to_ptr.vmem [resolvable:$true] %s477
          %483 = dma.hbm_to_vmem [thread:$0]  %s476, 32, %s478, [#allocation15], 16, 16, 1
        $region60: #{tpu_custom_call.1} parent=11 // pred_fallthru
          _
      $region12: #{tpu_custom_call.1} parent=5 // pred_fallthru
        _
      %p484 = scmp.lt.s32.totalorder %s29, 4
      // Predicated region
      $region61: #{tpu_custom_call.1} parent=5 // pred_check
        %p485 = pneg %p484
      $region62: #{tpu_custom_call.1} parent=5 // pred_check_branch
        %487 = sbr.rel (%p485) target = $region64
      $region63: #{tpu_custom_call.1} parent=5 // pred_region
        // Predicated region
        $region65: #{tpu_custom_call.1} parent=63 // pred_check
          %p488 = pneg %p61
        $region66: #{tpu_custom_call.1} parent=63 // pred_check_branch
          %490 = sbr.rel (%p488) target = $region68
        $region67: #{tpu_custom_call.1} parent=63 // pred_region
          %s491 = sand.u32 %s51, 1
          %s492 = scalar_lea.sflag [#allocation3], %s491
          %s493 = sand.u32 %s51, 1
          %s494 = smul.addr %s493, 128
          %s495 = scalar_lea.vmem [#allocation2], %s494
          %497 = vsyncadd %s492, 0
          %s498 = smul.addr %s36, 16
          %s499 = smul.addr %s498, 8
          %s500 = scalar_lea.hbm %s0, %s499
          %s501 = sshll.u32 %s500, 4
          %s502 = int_to_ptr.hbm [resolvable:$true] %s501
          %s503 = sshll.u32 %s495, 4
          %s504 = int_to_ptr.vmem [resolvable:$true] %s503
          %509 = dma.hbm_to_vmem [thread:$0]  %s502, 2048, %s504, %s492, 128, 128, 8
        $region68: #{tpu_custom_call.1} parent=63 // pred_fallthru
          _
      $region64: #{tpu_custom_call.1} parent=5 // pred_fallthru
        _
      %p510 = scmp.le.s32.totalorder 1, %s29
      %p511 = scmp.lt.s32.totalorder %s29, 5
      %p512 = pnand %p510, %p511
      %p513 = pneg %p512
      // Predicated region
      $region69: #{tpu_custom_call.1} parent=5 // pred_check
        _
      $region70: #{tpu_custom_call.1} parent=5 // pred_check_branch
        %515 = sbr.rel (%p512) target = $region72
      $region71: #{tpu_custom_call.1} parent=5 // pred_region
        %s516 = ssub.s32 %s29, 1
        %s517 = sand.u32 %s54, 1
        %s518 = scalar_lea.sflag [#allocation3], %s517
        %s519 = sand.u32 %s54, 1
        %s520 = smul.addr %s519, 128
        %s521 = scalar_lea.vmem [#allocation2], %s520
        // Predicated region
        $region73: #{tpu_custom_call.1} parent=71 // pred_check
          %p522 = pneg %p67
        $region74: #{tpu_custom_call.1} parent=71 // pred_check_branch
          %524 = sbr.rel (%p522) target = $region76
        $region75: #{tpu_custom_call.1} parent=71 // pred_region
          %526 = dma.done %s518, 2048
        $region76: #{tpu_custom_call.1} parent=71 // pred_fallthru
          _
        // Predicated region
        $region77: #{tpu_custom_call.1} parent=71 // pred_check
          %p527 = pneg %p88
        $region78: #{tpu_custom_call.1} parent=71 // pred_check_branch
          %529 = sbr.rel (%p527) target = $region80
        $region79: #{tpu_custom_call.1} parent=71 // pred_region
          %531 = dma.done [#allocation6], 6144
        $region80: #{tpu_custom_call.1} parent=71 // pred_fallthru
          _
        // Predicated region
        $region81: #{tpu_custom_call.1} parent=71 // pred_check
          %p532 = pneg %p109
        $region82: #{tpu_custom_call.1} parent=71 // pred_check_branch
          %534 = sbr.rel (%p532) target = $region84
        $region83: #{tpu_custom_call.1} parent=71 // pred_region
          %536 = dma.done [#allocation6], 96
        $region84: #{tpu_custom_call.1} parent=71 // pred_fallthru
          _
        // Predicated region
        $region85: #{tpu_custom_call.1} parent=71 // pred_check
          %p537 = pneg %p130
        $region86: #{tpu_custom_call.1} parent=71 // pred_check_branch
          %539 = sbr.rel (%p537) target = $region88
        $region87: #{tpu_custom_call.1} parent=71 // pred_region
          %541 = dma.done [#allocation9], 2048
        $region88: #{tpu_custom_call.1} parent=71 // pred_fallthru
          _
        // Predicated region
        $region89: #{tpu_custom_call.1} parent=71 // pred_check
          %p542 = pneg %p172
        $region90: #{tpu_custom_call.1} parent=71 // pred_check_branch
          %544 = sbr.rel (%p542) target = $region92
        $region91: #{tpu_custom_call.1} parent=71 // pred_region
          %546 = dma.done [#allocation9], 32
        $region92: #{tpu_custom_call.1} parent=71 // pred_fallthru
          _
        // Predicated region
        $region93: #{tpu_custom_call.1} parent=71 // pred_check
          %p547 = pneg %p193
        $region94: #{tpu_custom_call.1} parent=71 // pred_check_branch
          %549 = sbr.rel (%p547) target = $region96
        $region95: #{tpu_custom_call.1} parent=71 // pred_region
          %551 = dma.done [#allocation12], 32
        $region96: #{tpu_custom_call.1} parent=71 // pred_fallthru
          _
        // Predicated region
        $region97: #{tpu_custom_call.1} parent=71 // pred_check
          %p552 = pneg %p214
        $region98: #{tpu_custom_call.1} parent=71 // pred_check_branch
          %554 = sbr.rel (%p552) target = $region100
        $region99: #{tpu_custom_call.1} parent=71 // pred_region
          %556 = dma.done [#allocation12], 4096
        $region100: #{tpu_custom_call.1} parent=71 // pred_fallthru
          _
        // Predicated region
        $region101: #{tpu_custom_call.1} parent=71 // pred_check
          %p557 = pneg %p256
        $region102: #{tpu_custom_call.1} parent=71 // pred_check_branch
          %559 = sbr.rel (%p557) target = $region104
        $region103: #{tpu_custom_call.1} parent=71 // pred_region
          %561 = dma.done [#allocation15], 4096
        $region104: #{tpu_custom_call.1} parent=71 // pred_fallthru
          _
        // Predicated region
        $region105: #{tpu_custom_call.1} parent=71 // pred_check
          %p562 = pneg %p319
        $region106: #{tpu_custom_call.1} parent=71 // pred_check_branch
          %564 = sbr.rel (%p562) target = $region108
        $region107: #{tpu_custom_call.1} parent=71 // pred_region
          %566 = dma.done [#allocation15], 32
        $region108: #{tpu_custom_call.1} parent=71 // pred_fallthru
          _
        %s567 = sand.u32 %s54, 1
        %s568 = scalar_lea.sflag [#allocation3], %s567
        %s569 = sand.u32 %s54, 1
        %s570 = smul.addr %s569, 128
        %s571 = scalar_lea.vmem [#allocation2], %s570
        %p572 = pneg %p67
        %p573 = pneg %p64
        %p574 = pneg %p88
        %p575 = pneg %p85
        %p576 = pneg %p109
        %p577 = pneg %p106
        %p578 = pneg %p130
        %p579 = pneg %p127
        %p580 = pneg %p151
        %p581 = pneg %p148
        %p582 = pneg %p172
        %p583 = pneg %p169
        %p584 = pneg %p193
        %p585 = pneg %p190
        %p586 = pneg %p214
        %p587 = pneg %p211
        %p588 = pneg %p235
        %p589 = pneg %p232
        %p590 = pneg %p256
        %p591 = pneg %p253
        %p592 = pneg %p277
        %p593 = pneg %p274
        %p594 = pneg %p298
        %p595 = pneg %p295
        %p596 = pneg %p319
        %p597 = pneg %p316
        %p598 = pneg %p345
        %p599 = pneg %p342
        %s600 = sand.u32 %s332, 1
        %s601 = scalar_lea.sflag [#allocation4], %s600
        %s602 = sand.u32 %s332, 1
        %s603 = smul.addr %s602, 128
        %s604 = scalar_lea.vmem [#allocation17], %s603
        %p606 = scmp.eq.s32.totalorder %s39, 0
        // Predicated region
        $region109: #{tpu_custom_call.1} parent=71 // pred_check
          %p607 = pneg %p606
        $region110: #{tpu_custom_call.1} parent=71 // pred_check_branch
          %609 = sbr.rel (%p607) target = $region112
        $region111: #{tpu_custom_call.1} parent=71 // pred_region
          %v610 = vld [vmem:[%s521] sm:$0xff]
          %v611 = vld [vmem:[%s521 + $0x8] sm:$0xff]
          %v612 = vld [vmem:[%s521 + $0x10] sm:$0xff]
          %v613 = vld [vmem:[%s521 + $0x18] sm:$0xff]
          %v614 = vld [vmem:[%s521 + $0x20] sm:$0xff]
          %v615 = vld [vmem:[%s521 + $0x28] sm:$0xff]
          %v616 = vld [vmem:[%s521 + $0x30] sm:$0xff]
          %v617 = vld [vmem:[%s521 + $0x38] sm:$0xff]
          %v618 = vld [vmem:[%s521 + $0x40] sm:$0xff]
          %v619 = vld [vmem:[%s521 + $0x48] sm:$0xff]
          %v620 = vld [vmem:[%s521 + $0x50] sm:$0xff]
          %v621 = vld [vmem:[%s521 + $0x58] sm:$0xff]
          %v622 = vld [vmem:[%s521 + $0x60] sm:$0xff]
          %v623 = vld [vmem:[%s521 + $0x68] sm:$0xff]
          %v624 = vld [vmem:[%s521 + $0x70] sm:$0xff]
          %v625 = vld [vmem:[%s521 + $0x78] sm:$0xff]
          %626 = vst [vmem:[%s604] sm:$0xff] %v610
          %627 = vst [vmem:[%s604 + $0x8] sm:$0xff] %v611
          %628 = vst [vmem:[%s604 + $0x10] sm:$0xff] %v612
          %629 = vst [vmem:[%s604 + $0x18] sm:$0xff] %v613
          %630 = vst [vmem:[%s604 + $0x20] sm:$0xff] %v614
          %631 = vst [vmem:[%s604 + $0x28] sm:$0xff] %v615
          %632 = vst [vmem:[%s604 + $0x30] sm:$0xff] %v616
          %633 = vst [vmem:[%s604 + $0x38] sm:$0xff] %v617
          %634 = vst [vmem:[%s604 + $0x40] sm:$0xff] %v618
          %635 = vst [vmem:[%s604 + $0x48] sm:$0xff] %v619
          %636 = vst [vmem:[%s604 + $0x50] sm:$0xff] %v620
          %637 = vst [vmem:[%s604 + $0x58] sm:$0xff] %v621
          %638 = vst [vmem:[%s604 + $0x60] sm:$0xff] %v622
          %639 = vst [vmem:[%s604 + $0x68] sm:$0xff] %v623
          %640 = vst [vmem:[%s604 + $0x70] sm:$0xff] %v624
          %641 = vst [vmem:[%s604 + $0x78] sm:$0xff] %v625
        $region112: #{tpu_custom_call.1} parent=71 // pred_fallthru
          _
        %v642 = vld [vmem:[%s604] sm:$0xff]
        %v643 = vld [vmem:[%s604 + $0x8] sm:$0xff]
        %v644 = vld [vmem:[%s604 + $0x10] sm:$0xff]
        %v645 = vld [vmem:[%s604 + $0x18] sm:$0xff]
        %v646 = vld [vmem:[%s604 + $0x20] sm:$0xff]
        %v647 = vld [vmem:[%s604 + $0x28] sm:$0xff]
        %v648 = vld [vmem:[%s604 + $0x30] sm:$0xff]
        %v649 = vld [vmem:[%s604 + $0x38] sm:$0xff]
        %v650 = vld [vmem:[%s604 + $0x40] sm:$0xff]
        %v651 = vld [vmem:[%s604 + $0x48] sm:$0xff]
        %v652 = vld [vmem:[%s604 + $0x50] sm:$0xff]
        %v653 = vld [vmem:[%s604 + $0x58] sm:$0xff]
        %v654 = vld [vmem:[%s604 + $0x60] sm:$0xff]
        %v655 = vld [vmem:[%s604 + $0x68] sm:$0xff]
        %v656 = vld [vmem:[%s604 + $0x70] sm:$0xff]
        %v657 = vld [vmem:[%s604 + $0x78] sm:$0xff]
        %v658 = vpack.c.bf16 %v643, %v642
        %v659 = vpack.c.bf16 %v645, %v644
        %v660 = vpack.c.bf16 %v647, %v646
        %v661 = vpack.c.bf16 %v649, %v648
        %v662 = vpack.c.bf16 %v651, %v650
        %v663 = vpack.c.bf16 %v653, %v652
        %v664 = vpack.c.bf16 %v655, %v654
        %v665 = vpack.c.bf16 %v657, %v656
        %s666 = smul.u32 %s39, 48
        %s667 = smul.addr %s666, 4
        %s668 = scalar_lea.vmem [#allocation5], %s667
        %v669 = vld [vmem:[%s668] sm:$0xff]
        %v670 = vld [vmem:[%s668 + $0x8] sm:$0xf]
        %v671 = vld [vmem:[%s668 + $0xc] sm:$0xff]
        %v672 = vld [vmem:[%s668 + $0x14] sm:$0xf]
        %v673 = vld [vmem:[%s668 + $0x18] sm:$0xff]
        %v674 = vld [vmem:[%s668 + $0x20] sm:$0xf]
        %v675 = vld [vmem:[%s668 + $0x24] sm:$0xff]
        %v676 = vld [vmem:[%s668 + $0x2c] sm:$0xf]
        %v677 = vld [vmem:[%s668 + $0x30] sm:$0xff]
        %v678 = vld [vmem:[%s668 + $0x38] sm:$0xf]
        %v679 = vld [vmem:[%s668 + $0x3c] sm:$0xff]
        %v680 = vld [vmem:[%s668 + $0x44] sm:$0xf]
        %v681 = vld [vmem:[%s668 + $0x48] sm:$0xff]
        %v682 = vld [vmem:[%s668 + $0x50] sm:$0xf]
        %v683 = vld [vmem:[%s668 + $0x54] sm:$0xff]
        %v684 = vld [vmem:[%s668 + $0x5c] sm:$0xf]
        %v685 = vld [vmem:[%s668 + $0x60] sm:$0xff]
        %v686 = vld [vmem:[%s668 + $0x68] sm:$0xf]
        %v687 = vld [vmem:[%s668 + $0x6c] sm:$0xff]
        %v688 = vld [vmem:[%s668 + $0x74] sm:$0xf]
        %v689 = vld [vmem:[%s668 + $0x78] sm:$0xff]
        %v690 = vld [vmem:[%s668 + $0x80] sm:$0xf]
        %v691 = vld [vmem:[%s668 + $0x84] sm:$0xff]
        %v692 = vld [vmem:[%s668 + $0x8c] sm:$0xf]
        %v693 = vld [vmem:[%s668 + $0x90] sm:$0xff]
        %v694 = vld [vmem:[%s668 + $0x98] sm:$0xf]
        %v695 = vld [vmem:[%s668 + $0x9c] sm:$0xff]
        %v696 = vld [vmem:[%s668 + $0xa4] sm:$0xf]
        %v697 = vld [vmem:[%s668 + $0xa8] sm:$0xff]
        %v698 = vld [vmem:[%s668 + $0xb0] sm:$0xf]
        %v699 = vld [vmem:[%s668 + $0xb4] sm:$0xff]
        %v700 = vld [vmem:[%s668 + $0xbc] sm:$0xf]
        %s701 = smul.u32 %s39, 3
        %s702 = scalar_lea.vmem [#allocation7], %s701
        %v703 = vld [vmem:[%s702] sm:$0x7]
        %v705 = vperm.slane %v703, 0
        %v706 = vperm.slane %v703, 1
        %v707 = vperm.slane %v703, 2
        %v743 = vunpack.c.l.b16 %v669
        %v744 = vunpack.c.h.b16 %v669
        %v745 = vunpack.c.l.b16 %v670
        %v746 = vunpack.c.l.b16 %v671
        %v747 = vunpack.c.h.b16 %v671
        %v748 = vunpack.c.l.b16 %v672
        %v749 = vunpack.c.l.b16 %v673
        %v750 = vunpack.c.h.b16 %v673
        %v751 = vunpack.c.l.b16 %v674
        %v752 = vunpack.c.l.b16 %v675
        %v753 = vunpack.c.h.b16 %v675
        %v754 = vunpack.c.l.b16 %v676
        %v755 = vunpack.c.l.b16 %v677
        %v756 = vunpack.c.h.b16 %v677
        %v757 = vunpack.c.l.b16 %v678
        %v758 = vunpack.c.l.b16 %v679
        %v759 = vunpack.c.h.b16 %v679
        %v760 = vunpack.c.l.b16 %v680
        %v761 = vunpack.c.l.b16 %v681
        %v762 = vunpack.c.h.b16 %v681
        %v763 = vunpack.c.l.b16 %v682
        %v764 = vunpack.c.l.b16 %v683
        %v765 = vunpack.c.h.b16 %v683
        %v766 = vunpack.c.l.b16 %v684
        %v767 = vunpack.c.l.b16 %v685
        %v768 = vunpack.c.h.b16 %v685
        %v769 = vunpack.c.l.b16 %v686
        %v770 = vunpack.c.l.b16 %v687
        %v771 = vunpack.c.h.b16 %v687
        %v772 = vunpack.c.l.b16 %v688
        %v773 = vunpack.c.l.b16 %v689
        %v774 = vunpack.c.h.b16 %v689
        %v775 = vunpack.c.l.b16 %v690
        %v776 = vunpack.c.l.b16 %v691
        %v777 = vunpack.c.h.b16 %v691
        %v778 = vunpack.c.l.b16 %v692
        %v779 = vunpack.c.l.b16 %v693
        %v780 = vunpack.c.h.b16 %v693
        %v781 = vunpack.c.l.b16 %v694
        %v782 = vunpack.c.l.b16 %v695
        %v783 = vunpack.c.h.b16 %v695
        %v784 = vunpack.c.l.b16 %v696
        %v785 = vunpack.c.l.b16 %v697
        %v786 = vunpack.c.h.b16 %v697
        %v787 = vunpack.c.l.b16 %v698
        %v788 = vunpack.c.l.b16 %v699
        %v789 = vunpack.c.h.b16 %v699
        %v790 = vunpack.c.l.b16 %v700
        %v791 = vpack.c.b16 %v746, %v743
        %v792 = vpack.c.b16 %v747, %v744
        %v793 = vpack.c.b16 %v748, %v745
        %v794 = vpack.c.b16 %v752, %v749
        %v795 = vpack.c.b16 %v753, %v750
        %v796 = vpack.c.b16 %v754, %v751
        %v797 = vpack.c.b16 %v758, %v755
        %v798 = vpack.c.b16 %v759, %v756
        %v799 = vpack.c.b16 %v760, %v757
        %v800 = vpack.c.b16 %v764, %v761
        %v801 = vpack.c.b16 %v765, %v762
        %v802 = vpack.c.b16 %v766, %v763
        %v803 = vpack.c.b16 %v770, %v767
        %v804 = vpack.c.b16 %v771, %v768
        %v805 = vpack.c.b16 %v772, %v769
        %v806 = vpack.c.b16 %v776, %v773
        %v807 = vpack.c.b16 %v777, %v774
        %v808 = vpack.c.b16 %v778, %v775
        %v809 = vpack.c.b16 %v782, %v779
        %v810 = vpack.c.b16 %v783, %v780
        %v811 = vpack.c.b16 %v784, %v781
        %v812 = vpack.c.b16 %v788, %v785
        %v813 = vpack.c.b16 %v789, %v786
        %v814 = vpack.c.b16 %v790, %v787
        %839 = vmatpush.bf16.msra.mxu0 %v812
        %840 = vmatpush.bf16.msra.mxu0 %v809
        %841 = vmatpush.bf16.msra.mxu0 %v806
        %842 = vmatpush.bf16.msra.mxu0 %v803
        %843 = vmatpush.bf16.msra.mxu0 %v800
        %844 = vmatpush.bf16.msra.mxu0 %v797
        %845 = vmatpush.bf16.msra.mxu0 %v794
        %846 = vmatpush.bf16.msra.mxu0 %v791
        %847 = vmatmul.bf16.gmra.mxu0 %v658
        %v848 = vpop.f32.mrf.mxu0
        %v849 = vadd.f32 %v705, %v848
        %v850 = vpop.f32.mrf.mxu0
        %v851 = vadd.f32 %v705, %v850
        %852 = vmatmul.bf16.gmra.mxu0 %v659
        %v853 = vpop.f32.mrf.mxu0
        %v854 = vadd.f32 %v705, %v853
        %v855 = vpop.f32.mrf.mxu0
        %v856 = vadd.f32 %v705, %v855
        %857 = vmatmul.bf16.gmra.mxu0 %v660
        %v858 = vpop.f32.mrf.mxu0
        %v859 = vadd.f32 %v705, %v858
        %v860 = vpop.f32.mrf.mxu0
        %v861 = vadd.f32 %v705, %v860
        %862 = vmatmul.bf16.gmra.mxu0 %v661
        %v863 = vpop.f32.mrf.mxu0
        %v864 = vadd.f32 %v705, %v863
        %v865 = vpop.f32.mrf.mxu0
        %v866 = vadd.f32 %v705, %v865
        %867 = vmatmul.bf16.gmra.mxu0 %v662
        %v868 = vpop.f32.mrf.mxu0
        %v869 = vadd.f32 %v705, %v868
        %v870 = vpop.f32.mrf.mxu0
        %v871 = vadd.f32 %v705, %v870
        %872 = vmatmul.bf16.gmra.mxu0 %v663
        %v873 = vpop.f32.mrf.mxu0
        %v874 = vadd.f32 %v705, %v873
        %v875 = vpop.f32.mrf.mxu0
        %v876 = vadd.f32 %v705, %v875
        %877 = vmatmul.bf16.gmra.mxu0 %v664
        %v878 = vpop.f32.mrf.mxu0
        %v879 = vadd.f32 %v705, %v878
        %v880 = vpop.f32.mrf.mxu0
        %v881 = vadd.f32 %v705, %v880
        %882 = vmatmul.bf16.gmra.mxu0 %v665
        %v883 = vpop.f32.mrf.mxu0
        %v884 = vadd.f32 %v705, %v883
        %v885 = vpop.f32.mrf.mxu0
        %v886 = vadd.f32 %v705, %v885
        %887 = vdwg.mxu0
        %888 = vmatpush.bf16.msra.mxu0 %v813
        %889 = vmatpush.bf16.msra.mxu0 %v810
        %890 = vmatpush.bf16.msra.mxu0 %v807
        %891 = vmatpush.bf16.msra.mxu0 %v804
        %892 = vmatpush.bf16.msra.mxu0 %v801
        %893 = vmatpush.bf16.msra.mxu0 %v798
        %894 = vmatpush.bf16.msra.mxu0 %v795
        %895 = vmatpush.bf16.msra.mxu0 %v792
        %896 = vmatmul.bf16.gmra.mxu0 %v658
        %v897 = vpop.f32.mrf.mxu0
        %v898 = vadd.f32 %v706, %v897
        %v899 = vpop.f32.mrf.mxu0
        %v900 = vadd.f32 %v706, %v899
        %901 = vmatmul.bf16.gmra.mxu0 %v659
        %v902 = vpop.f32.mrf.mxu0
        %v903 = vadd.f32 %v706, %v902
        %v904 = vpop.f32.mrf.mxu0
        %v905 = vadd.f32 %v706, %v904
        %906 = vmatmul.bf16.gmra.mxu0 %v660
        %v907 = vpop.f32.mrf.mxu0
        %v908 = vadd.f32 %v706, %v907
        %v909 = vpop.f32.mrf.mxu0
        %v910 = vadd.f32 %v706, %v909
        %911 = vmatmul.bf16.gmra.mxu0 %v661
        %v912 = vpop.f32.mrf.mxu0
        %v913 = vadd.f32 %v706, %v912
        %v914 = vpop.f32.mrf.mxu0
        %v915 = vadd.f32 %v706, %v914
        %916 = vmatmul.bf16.gmra.mxu0 %v662
        %v917 = vpop.f32.mrf.mxu0
        %v918 = vadd.f32 %v706, %v917
        %v919 = vpop.f32.mrf.mxu0
        %v920 = vadd.f32 %v706, %v919
        %921 = vmatmul.bf16.gmra.mxu0 %v663
        %v922 = vpop.f32.mrf.mxu0
        %v923 = vadd.f32 %v706, %v922
        %v924 = vpop.f32.mrf.mxu0
        %v925 = vadd.f32 %v706, %v924
        %926 = vmatmul.bf16.gmra.mxu0 %v664
        %v927 = vpop.f32.mrf.mxu0
        %v928 = vadd.f32 %v706, %v927
        %v929 = vpop.f32.mrf.mxu0
        %v930 = vadd.f32 %v706, %v929
        %931 = vmatmul.bf16.gmra.mxu0 %v665
        %v932 = vpop.f32.mrf.mxu0
        %v933 = vadd.f32 %v706, %v932
        %v934 = vpop.f32.mrf.mxu0
        %v935 = vadd.f32 %v706, %v934
        %936 = vdwg.mxu0
        %937 = vmatpush.bf16.msra.mxu0 %v814
        %938 = vmatpush.bf16.msra.mxu0 %v811
        %939 = vmatpush.bf16.msra.mxu0 %v808
        %940 = vmatpush.bf16.msra.mxu0 %v805
        %941 = vmatpush.bf16.msra.mxu0 %v802
        %942 = vmatpush.bf16.msra.mxu0 %v799
        %943 = vmatpush.bf16.msra.mxu0 %v796
        %944 = vmatpush.bf16.msra.mxu0 %v793
        %945 = vmatmul.bf16.gmra.mxu0 %v658
        %v946 = vpop.f32.mrf.mxu0
        %v947 = vadd.f32 %v707, %v946
        %v948 = vpop.f32.mrf.mxu0
        %v949 = vadd.f32 %v707, %v948
        %950 = vmatmul.bf16.gmra.mxu0 %v659
        %v951 = vpop.f32.mrf.mxu0
        %v952 = vadd.f32 %v707, %v951
        %v953 = vpop.f32.mrf.mxu0
        %v954 = vadd.f32 %v707, %v953
        %955 = vmatmul.bf16.gmra.mxu0 %v660
        %v956 = vpop.f32.mrf.mxu0
        %v957 = vadd.f32 %v707, %v956
        %v958 = vpop.f32.mrf.mxu0
        %v959 = vadd.f32 %v707, %v958
        %960 = vmatmul.bf16.gmra.mxu0 %v661
        %v961 = vpop.f32.mrf.mxu0
        %v962 = vadd.f32 %v707, %v961
        %v963 = vpop.f32.mrf.mxu0
        %v964 = vadd.f32 %v707, %v963
        %965 = vmatmul.bf16.gmra.mxu0 %v662
        %v966 = vpop.f32.mrf.mxu0
        %v967 = vadd.f32 %v707, %v966
        %v968 = vpop.f32.mrf.mxu0
        %v969 = vadd.f32 %v707, %v968
        %970 = vmatmul.bf16.gmra.mxu0 %v663
        %v971 = vpop.f32.mrf.mxu0
        %v972 = vadd.f32 %v707, %v971
        %v973 = vpop.f32.mrf.mxu0
        %v974 = vadd.f32 %v707, %v973
        %975 = vmatmul.bf16.gmra.mxu0 %v664
        %v976 = vpop.f32.mrf.mxu0
        %v977 = vadd.f32 %v707, %v976
        %v978 = vpop.f32.mrf.mxu0
        %v979 = vadd.f32 %v707, %v978
        %980 = vmatmul.bf16.gmra.mxu0 %v665
        %v981 = vpop.f32.mrf.mxu0
        %v982 = vadd.f32 %v707, %v981
        %v983 = vpop.f32.mrf.mxu0
        %v984 = vadd.f32 %v707, %v983
        %985 = vdwg.mxu0
        %v986 = vpack.c.bf16 %v849, %v849
        %v987 = vpack.c.bf16 %v851, %v851
        %v988 = vpack.c.bf16 %v854, %v854
        %v989 = vpack.c.bf16 %v856, %v856
        %v990 = vpack.c.bf16 %v859, %v859
        %v991 = vpack.c.bf16 %v861, %v861
        %v992 = vpack.c.bf16 %v864, %v864
        %v993 = vpack.c.bf16 %v866, %v866
        %v994 = vpack.c.bf16 %v869, %v869
        %v995 = vpack.c.bf16 %v871, %v871
        %v996 = vpack.c.bf16 %v874, %v874
        %v997 = vpack.c.bf16 %v876, %v876
        %v998 = vpack.c.bf16 %v879, %v879
        %v999 = vpack.c.bf16 %v881, %v881
        %v1000 = vpack.c.bf16 %v884, %v884
        %v1001 = vpack.c.bf16 %v886, %v886
        %v1002 = vpack.c.bf16 %v898, %v898
        %v1003 = vpack.c.bf16 %v900, %v900
        %v1004 = vpack.c.bf16 %v903, %v903
        %v1005 = vpack.c.bf16 %v905, %v905
        %v1006 = vpack.c.bf16 %v908, %v908
        %v1007 = vpack.c.bf16 %v910, %v910
        %v1008 = vpack.c.bf16 %v913, %v913
        %v1009 = vpack.c.bf16 %v915, %v915
        %v1010 = vpack.c.bf16 %v918, %v918
        %v1011 = vpack.c.bf16 %v920, %v920
        %v1012 = vpack.c.bf16 %v923, %v923
        %v1013 = vpack.c.bf16 %v925, %v925
        %v1014 = vpack.c.bf16 %v928, %v928
        %v1015 = vpack.c.bf16 %v930, %v930
        %v1016 = vpack.c.bf16 %v933, %v933
        %v1017 = vpack.c.bf16 %v935, %v935
        %v1018 = vpack.c.bf16 %v947, %v947
        %v1019 = vpack.c.bf16 %v949, %v949
        %v1020 = vpack.c.bf16 %v952, %v952
        %v1021 = vpack.c.bf16 %v954, %v954
        %v1022 = vpack.c.bf16 %v957, %v957
        %v1023 = vpack.c.bf16 %v959, %v959
        %v1024 = vpack.c.bf16 %v962, %v962
        %v1025 = vpack.c.bf16 %v964, %v964
        %v1026 = vpack.c.bf16 %v967, %v967
        %v1027 = vpack.c.bf16 %v969, %v969
        %v1028 = vpack.c.bf16 %v972, %v972
        %v1029 = vpack.c.bf16 %v974, %v974
        %v1030 = vpack.c.bf16 %v977, %v977
        %v1031 = vpack.c.bf16 %v979, %v979
        %v1032 = vpack.c.bf16 %v982, %v982
        %v1033 = vpack.c.bf16 %v984, %v984
        %1050 = vrot.lane.b32.xlu0 %v986, 96
        %v1051 = vpop.permute.xlu0 %1050
        %1052 = vrot.lane.b32.xlu0 %v987, 96
        %v1053 = vpop.permute.xlu0 %1052
        %1054 = vrot.lane.b32.xlu0 %v988, 96
        %v1055 = vpop.permute.xlu0 %1054
        %1056 = vrot.lane.b32.xlu0 %v989, 96
        %v1057 = vpop.permute.xlu0 %1056
        %1058 = vrot.lane.b32.xlu0 %v990, 96
        %v1059 = vpop.permute.xlu0 %1058
        %1060 = vrot.lane.b32.xlu0 %v991, 96
        %v1061 = vpop.permute.xlu0 %1060
        %1062 = vrot.lane.b32.xlu0 %v992, 96
        %v1063 = vpop.permute.xlu0 %1062
        %1064 = vrot.lane.b32.xlu0 %v993, 96
        %v1065 = vpop.permute.xlu0 %1064
        %1066 = vrot.lane.b32.xlu0 %v994, 96
        %v1067 = vpop.permute.xlu0 %1066
        %1068 = vrot.lane.b32.xlu0 %v995, 96
        %v1069 = vpop.permute.xlu0 %1068
        %1070 = vrot.lane.b32.xlu0 %v996, 96
        %v1071 = vpop.permute.xlu0 %1070
        %1072 = vrot.lane.b32.xlu0 %v997, 96
        %v1073 = vpop.permute.xlu0 %1072
        %1074 = vrot.lane.b32.xlu0 %v998, 96
        %v1075 = vpop.permute.xlu0 %1074
        %1076 = vrot.lane.b32.xlu0 %v999, 96
        %v1077 = vpop.permute.xlu0 %1076
        %1078 = vrot.lane.b32.xlu0 %v1000, 96
        %v1079 = vpop.permute.xlu0 %1078
        %1080 = vrot.lane.b32.xlu0 %v1001, 96
        %v1081 = vpop.permute.xlu0 %1080
        %1082 = vrot.lane.b32.xlu0 %v986, 64
        %v1083 = vpop.permute.xlu0 %1082
        %1084 = vrot.lane.b32.xlu0 %v987, 64
        %v1085 = vpop.permute.xlu0 %1084
        %1086 = vrot.lane.b32.xlu0 %v988, 64
        %v1087 = vpop.permute.xlu0 %1086
        %1088 = vrot.lane.b32.xlu0 %v989, 64
        %v1089 = vpop.permute.xlu0 %1088
        %1090 = vrot.lane.b32.xlu0 %v990, 64
        %v1091 = vpop.permute.xlu0 %1090
        %1092 = vrot.lane.b32.xlu0 %v991, 64
        %v1093 = vpop.permute.xlu0 %1092
        %1094 = vrot.lane.b32.xlu0 %v992, 64
        %v1095 = vpop.permute.xlu0 %1094
        %1096 = vrot.lane.b32.xlu0 %v993, 64
        %v1097 = vpop.permute.xlu0 %1096
        %1098 = vrot.lane.b32.xlu0 %v994, 64
        %v1099 = vpop.permute.xlu0 %1098
        %1100 = vrot.lane.b32.xlu0 %v995, 64
        %v1101 = vpop.permute.xlu0 %1100
        %1102 = vrot.lane.b32.xlu0 %v996, 64
        %v1103 = vpop.permute.xlu0 %1102
        %1104 = vrot.lane.b32.xlu0 %v997, 64
        %v1105 = vpop.permute.xlu0 %1104
        %1106 = vrot.lane.b32.xlu0 %v998, 64
        %v1107 = vpop.permute.xlu0 %1106
        %1108 = vrot.lane.b32.xlu0 %v999, 64
        %v1109 = vpop.permute.xlu0 %1108
        %1110 = vrot.lane.b32.xlu0 %v1000, 64
        %v1111 = vpop.permute.xlu0 %1110
        %1112 = vrot.lane.b32.xlu0 %v1001, 64
        %v1113 = vpop.permute.xlu0 %1112
        %1114 = vrot.lane.b32.xlu0 %v986, 32
        %v1115 = vpop.permute.xlu0 %1114
        %1116 = vrot.lane.b32.xlu0 %v987, 32
        %v1117 = vpop.permute.xlu0 %1116
        %1118 = vrot.lane.b32.xlu0 %v988, 32
        %v1119 = vpop.permute.xlu0 %1118
        %1120 = vrot.lane.b32.xlu0 %v989, 32
        %v1121 = vpop.permute.xlu0 %1120
        %1122 = vrot.lane.b32.xlu0 %v990, 32
        %v1123 = vpop.permute.xlu0 %1122
        %1124 = vrot.lane.b32.xlu0 %v991, 32
        %v1125 = vpop.permute.xlu0 %1124
        %1126 = vrot.lane.b32.xlu0 %v992, 32
        %v1127 = vpop.permute.xlu0 %1126
        %1128 = vrot.lane.b32.xlu0 %v993, 32
        %v1129 = vpop.permute.xlu0 %1128
        %1130 = vrot.lane.b32.xlu0 %v994, 32
        %v1131 = vpop.permute.xlu0 %1130
        %1132 = vrot.lane.b32.xlu0 %v995, 32
        %v1133 = vpop.permute.xlu0 %1132
        %1134 = vrot.lane.b32.xlu0 %v996, 32
        %v1135 = vpop.permute.xlu0 %1134
        %1136 = vrot.lane.b32.xlu0 %v997, 32
        %v1137 = vpop.permute.xlu0 %1136
        %1138 = vrot.lane.b32.xlu0 %v998, 32
        %v1139 = vpop.permute.xlu0 %1138
        %1140 = vrot.lane.b32.xlu0 %v999, 32
        %v1141 = vpop.permute.xlu0 %1140
        %1142 = vrot.lane.b32.xlu0 %v1000, 32
        %v1143 = vpop.permute.xlu0 %1142
        %1144 = vrot.lane.b32.xlu0 %v1001, 32
        %v1145 = vpop.permute.xlu0 %1144
        %v1148 = vpack.i.b16 %v1051, %v986
        %v1149 = vshrl.u32 %v986, 16
        %v1150 = vshrl.u32 %v1051, 16
        %v1151 = vpack.i.b16 %v1150, %v1149
        %v1154 = vpack.i.b16 %v1115, %v1083
        %v1155 = vshrl.u32 %v1083, 16
        %v1156 = vshrl.u32 %v1115, 16
        %v1157 = vpack.i.b16 %v1156, %v1155
        %v1160 = vpack.i.b16 %v1053, %v987
        %v1161 = vshrl.u32 %v987, 16
        %v1162 = vshrl.u32 %v1053, 16
        %v1163 = vpack.i.b16 %v1162, %v1161
        %v1166 = vpack.i.b16 %v1117, %v1085
        %v1167 = vshrl.u32 %v1085, 16
        %v1168 = vshrl.u32 %v1117, 16
        %v1169 = vpack.i.b16 %v1168, %v1167
        %v1172 = vpack.i.b16 %v1055, %v988
        %v1173 = vshrl.u32 %v988, 16
        %v1174 = vshrl.u32 %v1055, 16
        %v1175 = vpack.i.b16 %v1174, %v1173
        %v1178 = vpack.i.b16 %v1119, %v1087
        %v1179 = vshrl.u32 %v1087, 16
        %v1180 = vshrl.u32 %v1119, 16
        %v1181 = vpack.i.b16 %v1180, %v1179
        %v1184 = vpack.i.b16 %v1057, %v989
        %v1185 = vshrl.u32 %v989, 16
        %v1186 = vshrl.u32 %v1057, 16
        %v1187 = vpack.i.b16 %v1186, %v1185
        %v1190 = vpack.i.b16 %v1121, %v1089
        %v1191 = vshrl.u32 %v1089, 16
        %v1192 = vshrl.u32 %v1121, 16
        %v1193 = vpack.i.b16 %v1192, %v1191
        %v1196 = vpack.i.b16 %v1059, %v990
        %v1197 = vshrl.u32 %v990, 16
        %v1198 = vshrl.u32 %v1059, 16
        %v1199 = vpack.i.b16 %v1198, %v1197
        %v1202 = vpack.i.b16 %v1123, %v1091
        %v1203 = vshrl.u32 %v1091, 16
        %v1204 = vshrl.u32 %v1123, 16
        %v1205 = vpack.i.b16 %v1204, %v1203
        %v1208 = vpack.i.b16 %v1061, %v991
        %v1209 = vshrl.u32 %v991, 16
        %v1210 = vshrl.u32 %v1061, 16
        %v1211 = vpack.i.b16 %v1210, %v1209
        %v1214 = vpack.i.b16 %v1125, %v1093
        %v1215 = vshrl.u32 %v1093, 16
        %v1216 = vshrl.u32 %v1125, 16
        %v1217 = vpack.i.b16 %v1216, %v1215
        %v1220 = vpack.i.b16 %v1063, %v992
        %v1221 = vshrl.u32 %v992, 16
        %v1222 = vshrl.u32 %v1063, 16
        %v1223 = vpack.i.b16 %v1222, %v1221
        %v1226 = vpack.i.b16 %v1127, %v1095
        %v1227 = vshrl.u32 %v1095, 16
        %v1228 = vshrl.u32 %v1127, 16
        %v1229 = vpack.i.b16 %v1228, %v1227
        %v1232 = vpack.i.b16 %v1065, %v993
        %v1233 = vshrl.u32 %v993, 16
        %v1234 = vshrl.u32 %v1065, 16
        %v1235 = vpack.i.b16 %v1234, %v1233
        %v1238 = vpack.i.b16 %v1129, %v1097
        %v1239 = vshrl.u32 %v1097, 16
        %v1240 = vshrl.u32 %v1129, 16
        %v1241 = vpack.i.b16 %v1240, %v1239
        %v1244 = vpack.i.b16 %v1067, %v994
        %v1245 = vshrl.u32 %v994, 16
        %v1246 = vshrl.u32 %v1067, 16
        %v1247 = vpack.i.b16 %v1246, %v1245
        %v1250 = vpack.i.b16 %v1131, %v1099
        %v1251 = vshrl.u32 %v1099, 16
        %v1252 = vshrl.u32 %v1131, 16
        %v1253 = vpack.i.b16 %v1252, %v1251
        %v1256 = vpack.i.b16 %v1069, %v995
        %v1257 = vshrl.u32 %v995, 16
        %v1258 = vshrl.u32 %v1069, 16
        %v1259 = vpack.i.b16 %v1258, %v1257
        %v1262 = vpack.i.b16 %v1133, %v1101
        %v1263 = vshrl.u32 %v1101, 16
        %v1264 = vshrl.u32 %v1133, 16
        %v1265 = vpack.i.b16 %v1264, %v1263
        %v1268 = vpack.i.b16 %v1071, %v996
        %v1269 = vshrl.u32 %v996, 16
        %v1270 = vshrl.u32 %v1071, 16
        %v1271 = vpack.i.b16 %v1270, %v1269
        %v1274 = vpack.i.b16 %v1135, %v1103
        %v1275 = vshrl.u32 %v1103, 16
        %v1276 = vshrl.u32 %v1135, 16
        %v1277 = vpack.i.b16 %v1276, %v1275
        %v1280 = vpack.i.b16 %v1073, %v997
        %v1281 = vshrl.u32 %v997, 16
        %v1282 = vshrl.u32 %v1073, 16
        %v1283 = vpack.i.b16 %v1282, %v1281
        %v1286 = vpack.i.b16 %v1137, %v1105
        %v1287 = vshrl.u32 %v1105, 16
        %v1288 = vshrl.u32 %v1137, 16
        %v1289 = vpack.i.b16 %v1288, %v1287
        %v1292 = vpack.i.b16 %v1075, %v998
        %v1293 = vshrl.u32 %v998, 16
        %v1294 = vshrl.u32 %v1075, 16
        %v1295 = vpack.i.b16 %v1294, %v1293
        %v1298 = vpack.i.b16 %v1139, %v1107
        %v1299 = vshrl.u32 %v1107, 16
        %v1300 = vshrl.u32 %v1139, 16
        %v1301 = vpack.i.b16 %v1300, %v1299
        %v1304 = vpack.i.b16 %v1077, %v999
        %v1305 = vshrl.u32 %v999, 16
        %v1306 = vshrl.u32 %v1077, 16
        %v1307 = vpack.i.b16 %v1306, %v1305
        %v1310 = vpack.i.b16 %v1141, %v1109
        %v1311 = vshrl.u32 %v1109, 16
        %v1312 = vshrl.u32 %v1141, 16
        %v1313 = vpack.i.b16 %v1312, %v1311
        %v1316 = vpack.i.b16 %v1079, %v1000
        %v1317 = vshrl.u32 %v1000, 16
        %v1318 = vshrl.u32 %v1079, 16
        %v1319 = vpack.i.b16 %v1318, %v1317
        %v1322 = vpack.i.b16 %v1143, %v1111
        %v1323 = vshrl.u32 %v1111, 16
        %v1324 = vshrl.u32 %v1143, 16
        %v1325 = vpack.i.b16 %v1324, %v1323
        %v1328 = vpack.i.b16 %v1081, %v1001
        %v1329 = vshrl.u32 %v1001, 16
        %v1330 = vshrl.u32 %v1081, 16
        %v1331 = vpack.i.b16 %v1330, %v1329
        %v1334 = vpack.i.b16 %v1145, %v1113
        %v1335 = vshrl.u32 %v1113, 16
        %v1336 = vshrl.u32 %v1145, 16
        %v1337 = vpack.i.b16 %v1336, %v1335
        %v1340 = vunpack.c.l.s4 1983009808
        %v1341 = vunpack.c.0.s8 %v1340
        %v1342 = vperm.slane %v1148, %v1341
        %v1345 = vunpack.c.l.s4 1983009808
        %v1346 = vunpack.c.0.s8 %v1345
        %v1347 = vperm.slane %v1154, %v1346
        %v1348 = vrot.slane %v1347, 4
        %vm1349 = vcmask 1047556
        %v1350 = vsel %vm1349, %v1348, %v1342
        %v1351 = vrot.slane %v1342, 4
        %v1352 = vsel %vm1349, %v1347, %v1351
        %v1354 = vunpack.c.l.s4 1934713408
        %v1355 = vunpack.c.0.s8 %v1354
        %v1356 = vperm.slane %v1350, %v1355
        %v1358 = vunpack.c.l.s4 1934713408
        %v1359 = vunpack.c.0.s8 %v1358
        %v1360 = vperm.slane %v1352, %v1359
        %v1361 = vrot.slane %v1356, 4
        %v1362 = vsel %vm1349, 0, %v1361
        %v1363 = vrot.slane %v1360, 4
        %v1364 = vsel %vm1349, 0, %v1363
        %v1367 = vunpack.c.l.s4 1983009808
        %v1368 = vunpack.c.0.s8 %v1367
        %v1369 = vperm.slane %v1151, %v1368
        %v1372 = vunpack.c.l.s4 1983009808
        %v1373 = vunpack.c.0.s8 %v1372
        %v1374 = vperm.slane %v1157, %v1373
        %v1375 = vrot.slane %v1374, 4
        %v1376 = vsel %vm1349, %v1375, %v1369
        %v1377 = vrot.slane %v1369, 4
        %v1378 = vsel %vm1349, %v1374, %v1377
        %v1380 = vunpack.c.l.s4 1934713408
        %v1381 = vunpack.c.0.s8 %v1380
        %v1382 = vperm.slane %v1376, %v1381
        %v1384 = vunpack.c.l.s4 1934713408
        %v1385 = vunpack.c.0.s8 %v1384
        %v1386 = vperm.slane %v1378, %v1385
        %v1387 = vrot.slane %v1382, 4
        %v1388 = vsel %vm1349, 0, %v1387
        %v1389 = vrot.slane %v1386, 4
        %v1390 = vsel %vm1349, 0, %v1389
        %v1393 = vunpack.c.l.s4 1983009808
        %v1394 = vunpack.c.0.s8 %v1393
        %v1395 = vperm.slane %v1160, %v1394
        %v1398 = vunpack.c.l.s4 1983009808
        %v1399 = vunpack.c.0.s8 %v1398
        %v1400 = vperm.slane %v1166, %v1399
        %v1401 = vrot.slane %v1400, 4
        %v1402 = vsel %vm1349, %v1401, %v1395
        %v1403 = vrot.slane %v1395, 4
        %v1404 = vsel %vm1349, %v1400, %v1403
        %v1406 = vunpack.c.l.s4 1934713408
        %v1407 = vunpack.c.0.s8 %v1406
        %v1408 = vperm.slane %v1402, %v1407
        %v1410 = vunpack.c.l.s4 1934713408
        %v1411 = vunpack.c.0.s8 %v1410
        %v1412 = vperm.slane %v1404, %v1411
        %v1413 = vrot.slane %v1408, 4
        %v1414 = vsel %vm1349, 0, %v1413
        %v1415 = vrot.slane %v1412, 4
        %v1416 = vsel %vm1349, 0, %v1415
        %v1419 = vunpack.c.l.s4 1983009808
        %v1420 = vunpack.c.0.s8 %v1419
        %v1421 = vperm.slane %v1163, %v1420
        %v1424 = vunpack.c.l.s4 1983009808
        %v1425 = vunpack.c.0.s8 %v1424
        %v1426 = vperm.slane %v1169, %v1425
        %v1427 = vrot.slane %v1426, 4
        %v1428 = vsel %vm1349, %v1427, %v1421
        %v1429 = vrot.slane %v1421, 4
        %v1430 = vsel %vm1349, %v1426, %v1429
        %v1432 = vunpack.c.l.s4 1934713408
        %v1433 = vunpack.c.0.s8 %v1432
        %v1434 = vperm.slane %v1428, %v1433
        %v1436 = vunpack.c.l.s4 1934713408
        %v1437 = vunpack.c.0.s8 %v1436
        %v1438 = vperm.slane %v1430, %v1437
        %v1439 = vrot.slane %v1434, 4
        %v1440 = vsel %vm1349, 0, %v1439
        %v1441 = vrot.slane %v1438, 4
        %v1442 = vsel %vm1349, 0, %v1441
        %v1445 = vunpack.c.l.s4 1983009808
        %v1446 = vunpack.c.0.s8 %v1445
        %v1447 = vperm.slane %v1172, %v1446
        %v1450 = vunpack.c.l.s4 1983009808
        %v1451 = vunpack.c.0.s8 %v1450
        %v1452 = vperm.slane %v1178, %v1451
        %v1453 = vrot.slane %v1452, 4
        %v1454 = vsel %vm1349, %v1453, %v1447
        %v1455 = vrot.slane %v1447, 4
        %v1456 = vsel %vm1349, %v1452, %v1455
        %v1458 = vunpack.c.l.s4 1934713408
        %v1459 = vunpack.c.0.s8 %v1458
        %v1460 = vperm.slane %v1454, %v1459
        %v1462 = vunpack.c.l.s4 1934713408
        %v1463 = vunpack.c.0.s8 %v1462
        %v1464 = vperm.slane %v1456, %v1463
        %v1465 = vrot.slane %v1460, 4
        %v1466 = vsel %vm1349, 0, %v1465
        %v1467 = vrot.slane %v1464, 4
        %v1468 = vsel %vm1349, 0, %v1467
        %v1471 = vunpack.c.l.s4 1983009808
        %v1472 = vunpack.c.0.s8 %v1471
        %v1473 = vperm.slane %v1175, %v1472
        %v1476 = vunpack.c.l.s4 1983009808
        %v1477 = vunpack.c.0.s8 %v1476
        %v1478 = vperm.slane %v1181, %v1477
        %v1479 = vrot.slane %v1478, 4
        %v1480 = vsel %vm1349, %v1479, %v1473
        %v1481 = vrot.slane %v1473, 4
        %v1482 = vsel %vm1349, %v1478, %v1481
        %v1484 = vunpack.c.l.s4 1934713408
        %v1485 = vunpack.c.0.s8 %v1484
        %v1486 = vperm.slane %v1480, %v1485
        %v1488 = vunpack.c.l.s4 1934713408
        %v1489 = vunpack.c.0.s8 %v1488
        %v1490 = vperm.slane %v1482, %v1489
        %v1491 = vrot.slane %v1486, 4
        %v1492 = vsel %vm1349, 0, %v1491
        %v1493 = vrot.slane %v1490, 4
        %v1494 = vsel %vm1349, 0, %v1493
        %v1497 = vunpack.c.l.s4 1983009808
        %v1498 = vunpack.c.0.s8 %v1497
        %v1499 = vperm.slane %v1184, %v1498
        %v1502 = vunpack.c.l.s4 1983009808
        %v1503 = vunpack.c.0.s8 %v1502
        %v1504 = vperm.slane %v1190, %v1503
        %v1505 = vrot.slane %v1504, 4
        %v1506 = vsel %vm1349, %v1505, %v1499
        %v1507 = vrot.slane %v1499, 4
        %v1508 = vsel %vm1349, %v1504, %v1507
        %v1510 = vunpack.c.l.s4 1934713408
        %v1511 = vunpack.c.0.s8 %v1510
        %v1512 = vperm.slane %v1506, %v1511
        %v1514 = vunpack.c.l.s4 1934713408
        %v1515 = vunpack.c.0.s8 %v1514
        %v1516 = vperm.slane %v1508, %v1515
        %v1517 = vrot.slane %v1512, 4
        %v1518 = vsel %vm1349, 0, %v1517
        %v1519 = vrot.slane %v1516, 4
        %v1520 = vsel %vm1349, 0, %v1519
        %v1523 = vunpack.c.l.s4 1983009808
        %v1524 = vunpack.c.0.s8 %v1523
        %v1525 = vperm.slane %v1187, %v1524
        %v1528 = vunpack.c.l.s4 1983009808
        %v1529 = vunpack.c.0.s8 %v1528
        %v1530 = vperm.slane %v1193, %v1529
        %v1531 = vrot.slane %v1530, 4
        %v1532 = vsel %vm1349, %v1531, %v1525
        %v1533 = vrot.slane %v1525, 4
        %v1534 = vsel %vm1349, %v1530, %v1533
        %v1536 = vunpack.c.l.s4 1934713408
        %v1537 = vunpack.c.0.s8 %v1536
        %v1538 = vperm.slane %v1532, %v1537
        %v1540 = vunpack.c.l.s4 1934713408
        %v1541 = vunpack.c.0.s8 %v1540
        %v1542 = vperm.slane %v1534, %v1541
        %v1543 = vrot.slane %v1538, 4
        %v1544 = vsel %vm1349, 0, %v1543
        %v1545 = vrot.slane %v1542, 4
        %v1546 = vsel %vm1349, 0, %v1545
        %v1549 = vunpack.c.l.s4 1983009808
        %v1550 = vunpack.c.0.s8 %v1549
        %v1551 = vperm.slane %v1196, %v1550
        %v1554 = vunpack.c.l.s4 1983009808
        %v1555 = vunpack.c.0.s8 %v1554
        %v1556 = vperm.slane %v1202, %v1555
        %v1557 = vrot.slane %v1556, 4
        %v1558 = vsel %vm1349, %v1557, %v1551
        %v1559 = vrot.slane %v1551, 4
        %v1560 = vsel %vm1349, %v1556, %v1559
        %v1562 = vunpack.c.l.s4 1934713408
        %v1563 = vunpack.c.0.s8 %v1562
        %v1564 = vperm.slane %v1558, %v1563
        %v1566 = vunpack.c.l.s4 1934713408
        %v1567 = vunpack.c.0.s8 %v1566
        %v1568 = vperm.slane %v1560, %v1567
        %v1569 = vrot.slane %v1564, 4
        %v1570 = vsel %vm1349, 0, %v1569
        %v1571 = vrot.slane %v1568, 4
        %v1572 = vsel %vm1349, 0, %v1571
        %v1575 = vunpack.c.l.s4 1983009808
        %v1576 = vunpack.c.0.s8 %v1575
        %v1577 = vperm.slane %v1199, %v1576
        %v1580 = vunpack.c.l.s4 1983009808
        %v1581 = vunpack.c.0.s8 %v1580
        %v1582 = vperm.slane %v1205, %v1581
        %v1583 = vrot.slane %v1582, 4
        %v1584 = vsel %vm1349, %v1583, %v1577
        %v1585 = vrot.slane %v1577, 4
        %v1586 = vsel %vm1349, %v1582, %v1585
        %v1588 = vunpack.c.l.s4 1934713408
        %v1589 = vunpack.c.0.s8 %v1588
        %v1590 = vperm.slane %v1584, %v1589
        %v1592 = vunpack.c.l.s4 1934713408
        %v1593 = vunpack.c.0.s8 %v1592
        %v1594 = vperm.slane %v1586, %v1593
        %v1595 = vrot.slane %v1590, 4
        %v1596 = vsel %vm1349, 0, %v1595
        %v1597 = vrot.slane %v1594, 4
        %v1598 = vsel %vm1349, 0, %v1597
        %v1601 = vunpack.c.l.s4 1983009808
        %v1602 = vunpack.c.0.s8 %v1601
        %v1603 = vperm.slane %v1208, %v1602
        %v1606 = vunpack.c.l.s4 1983009808
        %v1607 = vunpack.c.0.s8 %v1606
        %v1608 = vperm.slane %v1214, %v1607
        %v1609 = vrot.slane %v1608, 4
        %v1610 = vsel %vm1349, %v1609, %v1603
        %v1611 = vrot.slane %v1603, 4
        %v1612 = vsel %vm1349, %v1608, %v1611
        %v1614 = vunpack.c.l.s4 1934713408
        %v1615 = vunpack.c.0.s8 %v1614
        %v1616 = vperm.slane %v1610, %v1615
        %v1618 = vunpack.c.l.s4 1934713408
        %v1619 = vunpack.c.0.s8 %v1618
        %v1620 = vperm.slane %v1612, %v1619
        %v1621 = vrot.slane %v1616, 4
        %v1622 = vsel %vm1349, 0, %v1621
        %v1623 = vrot.slane %v1620, 4
        %v1624 = vsel %vm1349, 0, %v1623
        %v1627 = vunpack.c.l.s4 1983009808
        %v1628 = vunpack.c.0.s8 %v1627
        %v1629 = vperm.slane %v1211, %v1628
        %v1632 = vunpack.c.l.s4 1983009808
        %v1633 = vunpack.c.0.s8 %v1632
        %v1634 = vperm.slane %v1217, %v1633
        %v1635 = vrot.slane %v1634, 4
        %v1636 = vsel %vm1349, %v1635, %v1629
        %v1637 = vrot.slane %v1629, 4
        %v1638 = vsel %vm1349, %v1634, %v1637
        %v1640 = vunpack.c.l.s4 1934713408
        %v1641 = vunpack.c.0.s8 %v1640
        %v1642 = vperm.slane %v1636, %v1641
        %v1644 = vunpack.c.l.s4 1934713408
        %v1645 = vunpack.c.0.s8 %v1644
        %v1646 = vperm.slane %v1638, %v1645
        %v1647 = vrot.slane %v1642, 4
        %v1648 = vsel %vm1349, 0, %v1647
        %v1649 = vrot.slane %v1646, 4
        %v1650 = vsel %vm1349, 0, %v1649
        %v1653 = vunpack.c.l.s4 1983009808
        %v1654 = vunpack.c.0.s8 %v1653
        %v1655 = vperm.slane %v1220, %v1654
        %v1658 = vunpack.c.l.s4 1983009808
        %v1659 = vunpack.c.0.s8 %v1658
        %v1660 = vperm.slane %v1226, %v1659
        %v1661 = vrot.slane %v1660, 4
        %v1662 = vsel %vm1349, %v1661, %v1655
        %v1663 = vrot.slane %v1655, 4
        %v1664 = vsel %vm1349, %v1660, %v1663
        %v1666 = vunpack.c.l.s4 1934713408
        %v1667 = vunpack.c.0.s8 %v1666
        %v1668 = vperm.slane %v1662, %v1667
        %v1670 = vunpack.c.l.s4 1934713408
        %v1671 = vunpack.c.0.s8 %v1670
        %v1672 = vperm.slane %v1664, %v1671
        %v1673 = vrot.slane %v1668, 4
        %v1674 = vsel %vm1349, 0, %v1673
        %v1675 = vrot.slane %v1672, 4
        %v1676 = vsel %vm1349, 0, %v1675
        %v1679 = vunpack.c.l.s4 1983009808
        %v1680 = vunpack.c.0.s8 %v1679
        %v1681 = vperm.slane %v1223, %v1680
        %v1684 = vunpack.c.l.s4 1983009808
        %v1685 = vunpack.c.0.s8 %v1684
        %v1686 = vperm.slane %v1229, %v1685
        %v1687 = vrot.slane %v1686, 4
        %v1688 = vsel %vm1349, %v1687, %v1681
        %v1689 = vrot.slane %v1681, 4
        %v1690 = vsel %vm1349, %v1686, %v1689
        %v1692 = vunpack.c.l.s4 1934713408
        %v1693 = vunpack.c.0.s8 %v1692
        %v1694 = vperm.slane %v1688, %v1693
        %v1696 = vunpack.c.l.s4 1934713408
        %v1697 = vunpack.c.0.s8 %v1696
        %v1698 = vperm.slane %v1690, %v1697
        %v1699 = vrot.slane %v1694, 4
        %v1700 = vsel %vm1349, 0, %v1699
        %v1701 = vrot.slane %v1698, 4
        %v1702 = vsel %vm1349, 0, %v1701
        %v1705 = vunpack.c.l.s4 1983009808
        %v1706 = vunpack.c.0.s8 %v1705
        %v1707 = vperm.slane %v1232, %v1706
        %v1710 = vunpack.c.l.s4 1983009808
        %v1711 = vunpack.c.0.s8 %v1710
        %v1712 = vperm.slane %v1238, %v1711
        %v1713 = vrot.slane %v1712, 4
        %v1714 = vsel %vm1349, %v1713, %v1707
        %v1715 = vrot.slane %v1707, 4
        %v1716 = vsel %vm1349, %v1712, %v1715
        %v1718 = vunpack.c.l.s4 1934713408
        %v1719 = vunpack.c.0.s8 %v1718
        %v1720 = vperm.slane %v1714, %v1719
        %v1722 = vunpack.c.l.s4 1934713408
        %v1723 = vunpack.c.0.s8 %v1722
        %v1724 = vperm.slane %v1716, %v1723
        %v1725 = vrot.slane %v1720, 4
        %v1726 = vsel %vm1349, 0, %v1725
        %v1727 = vrot.slane %v1724, 4
        %v1728 = vsel %vm1349, 0, %v1727
        %v1731 = vunpack.c.l.s4 1983009808
        %v1732 = vunpack.c.0.s8 %v1731
        %v1733 = vperm.slane %v1235, %v1732
        %v1736 = vunpack.c.l.s4 1983009808
        %v1737 = vunpack.c.0.s8 %v1736
        %v1738 = vperm.slane %v1241, %v1737
        %v1739 = vrot.slane %v1738, 4
        %v1740 = vsel %vm1349, %v1739, %v1733
        %v1741 = vrot.slane %v1733, 4
        %v1742 = vsel %vm1349, %v1738, %v1741
        %v1744 = vunpack.c.l.s4 1934713408
        %v1745 = vunpack.c.0.s8 %v1744
        %v1746 = vperm.slane %v1740, %v1745
        %v1748 = vunpack.c.l.s4 1934713408
        %v1749 = vunpack.c.0.s8 %v1748
        %v1750 = vperm.slane %v1742, %v1749
        %v1751 = vrot.slane %v1746, 4
        %v1752 = vsel %vm1349, 0, %v1751
        %v1753 = vrot.slane %v1750, 4
        %v1754 = vsel %vm1349, 0, %v1753
        %v1757 = vunpack.c.l.s4 1983009808
        %v1758 = vunpack.c.0.s8 %v1757
        %v1759 = vperm.slane %v1244, %v1758
        %v1762 = vunpack.c.l.s4 1983009808
        %v1763 = vunpack.c.0.s8 %v1762
        %v1764 = vperm.slane %v1250, %v1763
        %v1765 = vrot.slane %v1764, 4
        %v1766 = vsel %vm1349, %v1765, %v1759
        %v1767 = vrot.slane %v1759, 4
        %v1768 = vsel %vm1349, %v1764, %v1767
        %v1770 = vunpack.c.l.s4 1934713408
        %v1771 = vunpack.c.0.s8 %v1770
        %v1772 = vperm.slane %v1766, %v1771
        %v1774 = vunpack.c.l.s4 1934713408
        %v1775 = vunpack.c.0.s8 %v1774
        %v1776 = vperm.slane %v1768, %v1775
        %v1777 = vrot.slane %v1772, 4
        %v1778 = vsel %vm1349, 0, %v1777
        %v1779 = vrot.slane %v1776, 4
        %v1780 = vsel %vm1349, 0, %v1779
        %v1783 = vunpack.c.l.s4 1983009808
        %v1784 = vunpack.c.0.s8 %v1783
        %v1785 = vperm.slane %v1247, %v1784
        %v1788 = vunpack.c.l.s4 1983009808
        %v1789 = vunpack.c.0.s8 %v1788
        %v1790 = vperm.slane %v1253, %v1789
        %v1791 = vrot.slane %v1790, 4
        %v1792 = vsel %vm1349, %v1791, %v1785
        %v1793 = vrot.slane %v1785, 4
        %v1794 = vsel %vm1349, %v1790, %v1793
        %v1796 = vunpack.c.l.s4 1934713408
        %v1797 = vunpack.c.0.s8 %v1796
        %v1798 = vperm.slane %v1792, %v1797
        %v1800 = vunpack.c.l.s4 1934713408
        %v1801 = vunpack.c.0.s8 %v1800
        %v1802 = vperm.slane %v1794, %v1801
        %v1803 = vrot.slane %v1798, 4
        %v1804 = vsel %vm1349, 0, %v1803
        %v1805 = vrot.slane %v1802, 4
        %v1806 = vsel %vm1349, 0, %v1805
        %v1809 = vunpack.c.l.s4 1983009808
        %v1810 = vunpack.c.0.s8 %v1809
        %v1811 = vperm.slane %v1256, %v1810
        %v1814 = vunpack.c.l.s4 1983009808
        %v1815 = vunpack.c.0.s8 %v1814
        %v1816 = vperm.slane %v1262, %v1815
        %v1817 = vrot.slane %v1816, 4
        %v1818 = vsel %vm1349, %v1817, %v1811
        %v1819 = vrot.slane %v1811, 4
        %v1820 = vsel %vm1349, %v1816, %v1819
        %v1822 = vunpack.c.l.s4 1934713408
        %v1823 = vunpack.c.0.s8 %v1822
        %v1824 = vperm.slane %v1818, %v1823
        %v1826 = vunpack.c.l.s4 1934713408
        %v1827 = vunpack.c.0.s8 %v1826
        %v1828 = vperm.slane %v1820, %v1827
        %v1829 = vrot.slane %v1824, 4
        %v1830 = vsel %vm1349, 0, %v1829
        %v1831 = vrot.slane %v1828, 4
        %v1832 = vsel %vm1349, 0, %v1831
        %v1835 = vunpack.c.l.s4 1983009808
        %v1836 = vunpack.c.0.s8 %v1835
        %v1837 = vperm.slane %v1259, %v1836
        %v1840 = vunpack.c.l.s4 1983009808
        %v1841 = vunpack.c.0.s8 %v1840
        %v1842 = vperm.slane %v1265, %v1841
        %v1843 = vrot.slane %v1842, 4
        %v1844 = vsel %vm1349, %v1843, %v1837
        %v1845 = vrot.slane %v1837, 4
        %v1846 = vsel %vm1349, %v1842, %v1845
        %v1848 = vunpack.c.l.s4 1934713408
        %v1849 = vunpack.c.0.s8 %v1848
        %v1850 = vperm.slane %v1844, %v1849
        %v1852 = vunpack.c.l.s4 1934713408
        %v1853 = vunpack.c.0.s8 %v1852
        %v1854 = vperm.slane %v1846, %v1853
        %v1855 = vrot.slane %v1850, 4
        %v1856 = vsel %vm1349, 0, %v1855
        %v1857 = vrot.slane %v1854, 4
        %v1858 = vsel %vm1349, 0, %v1857
        %v1861 = vunpack.c.l.s4 1983009808
        %v1862 = vunpack.c.0.s8 %v1861
        %v1863 = vperm.slane %v1268, %v1862
        %v1866 = vunpack.c.l.s4 1983009808
        %v1867 = vunpack.c.0.s8 %v1866
        %v1868 = vperm.slane %v1274, %v1867
        %v1869 = vrot.slane %v1868, 4
        %v1870 = vsel %vm1349, %v1869, %v1863
        %v1871 = vrot.slane %v1863, 4
        %v1872 = vsel %vm1349, %v1868, %v1871
        %v1874 = vunpack.c.l.s4 1934713408
        %v1875 = vunpack.c.0.s8 %v1874
        %v1876 = vperm.slane %v1870, %v1875
        %v1878 = vunpack.c.l.s4 1934713408
        %v1879 = vunpack.c.0.s8 %v1878
        %v1880 = vperm.slane %v1872, %v1879
        %v1881 = vrot.slane %v1876, 4
        %v1882 = vsel %vm1349, 0, %v1881
        %v1883 = vrot.slane %v1880, 4
        %v1884 = vsel %vm1349, 0, %v1883
        %v1887 = vunpack.c.l.s4 1983009808
        %v1888 = vunpack.c.0.s8 %v1887
        %v1889 = vperm.slane %v1271, %v1888
        %v1892 = vunpack.c.l.s4 1983009808
        %v1893 = vunpack.c.0.s8 %v1892
        %v1894 = vperm.slane %v1277, %v1893
        %v1895 = vrot.slane %v1894, 4
        %v1896 = vsel %vm1349, %v1895, %v1889
        %v1897 = vrot.slane %v1889, 4
        %v1898 = vsel %vm1349, %v1894, %v1897
        %v1900 = vunpack.c.l.s4 1934713408
        %v1901 = vunpack.c.0.s8 %v1900
        %v1902 = vperm.slane %v1896, %v1901
        %v1904 = vunpack.c.l.s4 1934713408
        %v1905 = vunpack.c.0.s8 %v1904
        %v1906 = vperm.slane %v1898, %v1905
        %v1907 = vrot.slane %v1902, 4
        %v1908 = vsel %vm1349, 0, %v1907
        %v1909 = vrot.slane %v1906, 4
        %v1910 = vsel %vm1349, 0, %v1909
        %v1913 = vunpack.c.l.s4 1983009808
        %v1914 = vunpack.c.0.s8 %v1913
        %v1915 = vperm.slane %v1280, %v1914
        %v1918 = vunpack.c.l.s4 1983009808
        %v1919 = vunpack.c.0.s8 %v1918
        %v1920 = vperm.slane %v1286, %v1919
        %v1921 = vrot.slane %v1920, 4
        %v1922 = vsel %vm1349, %v1921, %v1915
        %v1923 = vrot.slane %v1915, 4
        %v1924 = vsel %vm1349, %v1920, %v1923
        %v1926 = vunpack.c.l.s4 1934713408
        %v1927 = vunpack.c.0.s8 %v1926
        %v1928 = vperm.slane %v1922, %v1927
        %v1930 = vunpack.c.l.s4 1934713408
        %v1931 = vunpack.c.0.s8 %v1930
        %v1932 = vperm.slane %v1924, %v1931
        %v1933 = vrot.slane %v1928, 4
        %v1934 = vsel %vm1349, 0, %v1933
        %v1935 = vrot.slane %v1932, 4
        %v1936 = vsel %vm1349, 0, %v1935
        %v1939 = vunpack.c.l.s4 1983009808
        %v1940 = vunpack.c.0.s8 %v1939
        %v1941 = vperm.slane %v1283, %v1940
        %v1944 = vunpack.c.l.s4 1983009808
        %v1945 = vunpack.c.0.s8 %v1944
        %v1946 = vperm.slane %v1289, %v1945
        %v1947 = vrot.slane %v1946, 4
        %v1948 = vsel %vm1349, %v1947, %v1941
        %v1949 = vrot.slane %v1941, 4
        %v1950 = vsel %vm1349, %v1946, %v1949
        %v1952 = vunpack.c.l.s4 1934713408
        %v1953 = vunpack.c.0.s8 %v1952
        %v1954 = vperm.slane %v1948, %v1953
        %v1956 = vunpack.c.l.s4 1934713408
        %v1957 = vunpack.c.0.s8 %v1956
        %v1958 = vperm.slane %v1950, %v1957
        %v1959 = vrot.slane %v1954, 4
        %v1960 = vsel %vm1349, 0, %v1959
        %v1961 = vrot.slane %v1958, 4
        %v1962 = vsel %vm1349, 0, %v1961
        %v1965 = vunpack.c.l.s4 1983009808
        %v1966 = vunpack.c.0.s8 %v1965
        %v1967 = vperm.slane %v1292, %v1966
        %v1970 = vunpack.c.l.s4 1983009808
        %v1971 = vunpack.c.0.s8 %v1970
        %v1972 = vperm.slane %v1298, %v1971
        %v1973 = vrot.slane %v1972, 4
        %v1974 = vsel %vm1349, %v1973, %v1967
        %v1975 = vrot.slane %v1967, 4
        %v1976 = vsel %vm1349, %v1972, %v1975
        %v1978 = vunpack.c.l.s4 1934713408
        %v1979 = vunpack.c.0.s8 %v1978
        %v1980 = vperm.slane %v1974, %v1979
        %v1982 = vunpack.c.l.s4 1934713408
        %v1983 = vunpack.c.0.s8 %v1982
        %v1984 = vperm.slane %v1976, %v1983
        %v1985 = vrot.slane %v1980, 4
        %v1986 = vsel %vm1349, 0, %v1985
        %v1987 = vrot.slane %v1984, 4
        %v1988 = vsel %vm1349, 0, %v1987
        %v1991 = vunpack.c.l.s4 1983009808
        %v1992 = vunpack.c.0.s8 %v1991
        %v1993 = vperm.slane %v1295, %v1992
        %v1996 = vunpack.c.l.s4 1983009808
        %v1997 = vunpack.c.0.s8 %v1996
        %v1998 = vperm.slane %v1301, %v1997
        %v1999 = vrot.slane %v1998, 4
        %v2000 = vsel %vm1349, %v1999, %v1993
        %v2001 = vrot.slane %v1993, 4
        %v2002 = vsel %vm1349, %v1998, %v2001
        %v2004 = vunpack.c.l.s4 1934713408
        %v2005 = vunpack.c.0.s8 %v2004
        %v2006 = vperm.slane %v2000, %v2005
        %v2008 = vunpack.c.l.s4 1934713408
        %v2009 = vunpack.c.0.s8 %v2008
        %v2010 = vperm.slane %v2002, %v2009
        %v2011 = vrot.slane %v2006, 4
        %v2012 = vsel %vm1349, 0, %v2011
        %v2013 = vrot.slane %v2010, 4
        %v2014 = vsel %vm1349, 0, %v2013
        %v2017 = vunpack.c.l.s4 1983009808
        %v2018 = vunpack.c.0.s8 %v2017
        %v2019 = vperm.slane %v1304, %v2018
        %v2022 = vunpack.c.l.s4 1983009808
        %v2023 = vunpack.c.0.s8 %v2022
        %v2024 = vperm.slane %v1310, %v2023
        %v2025 = vrot.slane %v2024, 4
        %v2026 = vsel %vm1349, %v2025, %v2019
        %v2027 = vrot.slane %v2019, 4
        %v2028 = vsel %vm1349, %v2024, %v2027
        %v2030 = vunpack.c.l.s4 1934713408
        %v2031 = vunpack.c.0.s8 %v2030
        %v2032 = vperm.slane %v2026, %v2031
        %v2034 = vunpack.c.l.s4 1934713408
        %v2035 = vunpack.c.0.s8 %v2034
        %v2036 = vperm.slane %v2028, %v2035
        %v2037 = vrot.slane %v2032, 4
        %v2038 = vsel %vm1349, 0, %v2037
        %v2039 = vrot.slane %v2036, 4
        %v2040 = vsel %vm1349, 0, %v2039
        %v2043 = vunpack.c.l.s4 1983009808
        %v2044 = vunpack.c.0.s8 %v2043
        %v2045 = vperm.slane %v1307, %v2044
        %v2048 = vunpack.c.l.s4 1983009808
        %v2049 = vunpack.c.0.s8 %v2048
        %v2050 = vperm.slane %v1313, %v2049
        %v2051 = vrot.slane %v2050, 4
        %v2052 = vsel %vm1349, %v2051, %v2045
        %v2053 = vrot.slane %v2045, 4
        %v2054 = vsel %vm1349, %v2050, %v2053
        %v2056 = vunpack.c.l.s4 1934713408
        %v2057 = vunpack.c.0.s8 %v2056
        %v2058 = vperm.slane %v2052, %v2057
        %v2060 = vunpack.c.l.s4 1934713408
        %v2061 = vunpack.c.0.s8 %v2060
        %v2062 = vperm.slane %v2054, %v2061
        %v2063 = vrot.slane %v2058, 4
        %v2064 = vsel %vm1349, 0, %v2063
        %v2065 = vrot.slane %v2062, 4
        %v2066 = vsel %vm1349, 0, %v2065
        %v2069 = vunpack.c.l.s4 1983009808
        %v2070 = vunpack.c.0.s8 %v2069
        %v2071 = vperm.slane %v1316, %v2070
        %v2074 = vunpack.c.l.s4 1983009808
        %v2075 = vunpack.c.0.s8 %v2074
        %v2076 = vperm.slane %v1322, %v2075
        %v2077 = vrot.slane %v2076, 4
        %v2078 = vsel %vm1349, %v2077, %v2071
        %v2079 = vrot.slane %v2071, 4
        %v2080 = vsel %vm1349, %v2076, %v2079
        %v2082 = vunpack.c.l.s4 1934713408
        %v2083 = vunpack.c.0.s8 %v2082
        %v2084 = vperm.slane %v2078, %v2083
        %v2086 = vunpack.c.l.s4 1934713408
        %v2087 = vunpack.c.0.s8 %v2086
        %v2088 = vperm.slane %v2080, %v2087
        %v2089 = vrot.slane %v2084, 4
        %v2090 = vsel %vm1349, 0, %v2089
        %v2091 = vrot.slane %v2088, 4
        %v2092 = vsel %vm1349, 0, %v2091
        %v2095 = vunpack.c.l.s4 1983009808
        %v2096 = vunpack.c.0.s8 %v2095
        %v2097 = vperm.slane %v1319, %v2096
        %v2100 = vunpack.c.l.s4 1983009808
        %v2101 = vunpack.c.0.s8 %v2100
        %v2102 = vperm.slane %v1325, %v2101
        %v2103 = vrot.slane %v2102, 4
        %v2104 = vsel %vm1349, %v2103, %v2097
        %v2105 = vrot.slane %v2097, 4
        %v2106 = vsel %vm1349, %v2102, %v2105
        %v2108 = vunpack.c.l.s4 1934713408
        %v2109 = vunpack.c.0.s8 %v2108
        %v2110 = vperm.slane %v2104, %v2109
        %v2112 = vunpack.c.l.s4 1934713408
        %v2113 = vunpack.c.0.s8 %v2112
        %v2114 = vperm.slane %v2106, %v2113
        %v2115 = vrot.slane %v2110, 4
        %v2116 = vsel %vm1349, 0, %v2115
        %v2117 = vrot.slane %v2114, 4
        %v2118 = vsel %vm1349, 0, %v2117
        %v2121 = vunpack.c.l.s4 1983009808
        %v2122 = vunpack.c.0.s8 %v2121
        %v2123 = vperm.slane %v1328, %v2122
        %v2126 = vunpack.c.l.s4 1983009808
        %v2127 = vunpack.c.0.s8 %v2126
        %v2128 = vperm.slane %v1334, %v2127
        %v2129 = vrot.slane %v2128, 4
        %v2130 = vsel %vm1349, %v2129, %v2123
        %v2131 = vrot.slane %v2123, 4
        %v2132 = vsel %vm1349, %v2128, %v2131
        %v2134 = vunpack.c.l.s4 1934713408
        %v2135 = vunpack.c.0.s8 %v2134
        %v2136 = vperm.slane %v2130, %v2135
        %v2138 = vunpack.c.l.s4 1934713408
        %v2139 = vunpack.c.0.s8 %v2138
        %v2140 = vperm.slane %v2132, %v2139
        %v2141 = vrot.slane %v2136, 4
        %v2142 = vsel %vm1349, 0, %v2141
        %v2143 = vrot.slane %v2140, 4
        %v2144 = vsel %vm1349, 0, %v2143
        %v2147 = vunpack.c.l.s4 1983009808
        %v2148 = vunpack.c.0.s8 %v2147
        %v2149 = vperm.slane %v1331, %v2148
        %v2152 = vunpack.c.l.s4 1983009808
        %v2153 = vunpack.c.0.s8 %v2152
        %v2154 = vperm.slane %v1337, %v2153
        %v2155 = vrot.slane %v2154, 4
        %v2156 = vsel %vm1349, %v2155, %v2149
        %v2157 = vrot.slane %v2149, 4
        %v2158 = vsel %vm1349, %v2154, %v2157
        %v2160 = vunpack.c.l.s4 1934713408
        %v2161 = vunpack.c.0.s8 %v2160
        %v2162 = vperm.slane %v2156, %v2161
        %v2164 = vunpack.c.l.s4 1934713408
        %v2165 = vunpack.c.0.s8 %v2164
        %v2166 = vperm.slane %v2158, %v2165
        %v2167 = vrot.slane %v2162, 4
        %v2168 = vsel %vm1349, 0, %v2167
        %v2169 = vrot.slane %v2166, 4
        %v2170 = vsel %vm1349, 0, %v2169
        %v2171 = vsel %vm1349, %v1363, %v1356
        %v2173 = vunpack.c.l.s4 1983009808
        %v2174 = vunpack.c.0.s8 %v2173
        %v2175 = vperm.slane %v2171, %v2174
        %v2176 = vrot.slane %v1364, 4
        %v2177 = vsel %vm1349, %v2176, %v1362
        %v2179 = vunpack.c.l.s4 1983009808
        %v2180 = vunpack.c.0.s8 %v2179
        %v2181 = vperm.slane %v2177, %v2180
        %v2182 = vrot.slane %v2181, 4
        %v2183 = vsel %vm1349, %v2182, %v2175
        %v2185 = vunpack.c.l.s4 1934713408
        %v2186 = vunpack.c.0.s8 %v2185
        %v2187 = vperm.slane %v2183, %v2186
        %v2188 = vrot.slane %v2187, 4
        %v2189 = vsel %vm1349, 0, %v2188
        %v2190 = vsel %vm1349, %v1389, %v1382
        %v2192 = vunpack.c.l.s4 1983009808
        %v2193 = vunpack.c.0.s8 %v2192
        %v2194 = vperm.slane %v2190, %v2193
        %v2195 = vrot.slane %v1390, 4
        %v2196 = vsel %vm1349, %v2195, %v1388
        %v2198 = vunpack.c.l.s4 1983009808
        %v2199 = vunpack.c.0.s8 %v2198
        %v2200 = vperm.slane %v2196, %v2199
        %v2201 = vrot.slane %v2200, 4
        %v2202 = vsel %vm1349, %v2201, %v2194
        %v2204 = vunpack.c.l.s4 1934713408
        %v2205 = vunpack.c.0.s8 %v2204
        %v2206 = vperm.slane %v2202, %v2205
        %v2207 = vrot.slane %v2206, 4
        %v2208 = vsel %vm1349, 0, %v2207
        %v2209 = vsel %vm1349, %v1415, %v1408
        %v2211 = vunpack.c.l.s4 1983009808
        %v2212 = vunpack.c.0.s8 %v2211
        %v2213 = vperm.slane %v2209, %v2212
        %v2214 = vrot.slane %v1416, 4
        %v2215 = vsel %vm1349, %v2214, %v1414
        %v2217 = vunpack.c.l.s4 1983009808
        %v2218 = vunpack.c.0.s8 %v2217
        %v2219 = vperm.slane %v2215, %v2218
        %v2220 = vrot.slane %v2219, 4
        %v2221 = vsel %vm1349, %v2220, %v2213
        %v2223 = vunpack.c.l.s4 1934713408
        %v2224 = vunpack.c.0.s8 %v2223
        %v2225 = vperm.slane %v2221, %v2224
        %v2226 = vrot.slane %v2225, 4
        %v2227 = vsel %vm1349, 0, %v2226
        %v2228 = vsel %vm1349, %v1441, %v1434
        %v2230 = vunpack.c.l.s4 1983009808
        %v2231 = vunpack.c.0.s8 %v2230
        %v2232 = vperm.slane %v2228, %v2231
        %v2233 = vrot.slane %v1442, 4
        %v2234 = vsel %vm1349, %v2233, %v1440
        %v2236 = vunpack.c.l.s4 1983009808
        %v2237 = vunpack.c.0.s8 %v2236
        %v2238 = vperm.slane %v2234, %v2237
        %v2239 = vrot.slane %v2238, 4
        %v2240 = vsel %vm1349, %v2239, %v2232
        %v2242 = vunpack.c.l.s4 1934713408
        %v2243 = vunpack.c.0.s8 %v2242
        %v2244 = vperm.slane %v2240, %v2243
        %v2245 = vrot.slane %v2244, 4
        %v2246 = vsel %vm1349, 0, %v2245
        %v2247 = vsel %vm1349, %v1467, %v1460
        %v2249 = vunpack.c.l.s4 1983009808
        %v2250 = vunpack.c.0.s8 %v2249
        %v2251 = vperm.slane %v2247, %v2250
        %v2252 = vrot.slane %v1468, 4
        %v2253 = vsel %vm1349, %v2252, %v1466
        %v2255 = vunpack.c.l.s4 1983009808
        %v2256 = vunpack.c.0.s8 %v2255
        %v2257 = vperm.slane %v2253, %v2256
        %v2258 = vrot.slane %v2257, 4
        %v2259 = vsel %vm1349, %v2258, %v2251
        %v2261 = vunpack.c.l.s4 1934713408
        %v2262 = vunpack.c.0.s8 %v2261
        %v2263 = vperm.slane %v2259, %v2262
        %v2264 = vrot.slane %v2263, 4
        %v2265 = vsel %vm1349, 0, %v2264
        %v2266 = vsel %vm1349, %v1493, %v1486
        %v2268 = vunpack.c.l.s4 1983009808
        %v2269 = vunpack.c.0.s8 %v2268
        %v2270 = vperm.slane %v2266, %v2269
        %v2271 = vrot.slane %v1494, 4
        %v2272 = vsel %vm1349, %v2271, %v1492
        %v2274 = vunpack.c.l.s4 1983009808
        %v2275 = vunpack.c.0.s8 %v2274
        %v2276 = vperm.slane %v2272, %v2275
        %v2277 = vrot.slane %v2276, 4
        %v2278 = vsel %vm1349, %v2277, %v2270
        %v2280 = vunpack.c.l.s4 1934713408
        %v2281 = vunpack.c.0.s8 %v2280
        %v2282 = vperm.slane %v2278, %v2281
        %v2283 = vrot.slane %v2282, 4
        %v2284 = vsel %vm1349, 0, %v2283
        %v2285 = vsel %vm1349, %v1519, %v1512
        %v2287 = vunpack.c.l.s4 1983009808
        %v2288 = vunpack.c.0.s8 %v2287
        %v2289 = vperm.slane %v2285, %v2288
        %v2290 = vrot.slane %v1520, 4
        %v2291 = vsel %vm1349, %v2290, %v1518
        %v2293 = vunpack.c.l.s4 1983009808
        %v2294 = vunpack.c.0.s8 %v2293
        %v2295 = vperm.slane %v2291, %v2294
        %v2296 = vrot.slane %v2295, 4
        %v2297 = vsel %vm1349, %v2296, %v2289
        %v2299 = vunpack.c.l.s4 1934713408
        %v2300 = vunpack.c.0.s8 %v2299
        %v2301 = vperm.slane %v2297, %v2300
        %v2302 = vrot.slane %v2301, 4
        %v2303 = vsel %vm1349, 0, %v2302
        %v2304 = vsel %vm1349, %v1545, %v1538
        %v2306 = vunpack.c.l.s4 1983009808
        %v2307 = vunpack.c.0.s8 %v2306
        %v2308 = vperm.slane %v2304, %v2307
        %v2309 = vrot.slane %v1546, 4
        %v2310 = vsel %vm1349, %v2309, %v1544
        %v2312 = vunpack.c.l.s4 1983009808
        %v2313 = vunpack.c.0.s8 %v2312
        %v2314 = vperm.slane %v2310, %v2313
        %v2315 = vrot.slane %v2314, 4
        %v2316 = vsel %vm1349, %v2315, %v2308
        %v2318 = vunpack.c.l.s4 1934713408
        %v2319 = vunpack.c.0.s8 %v2318
        %v2320 = vperm.slane %v2316, %v2319
        %v2321 = vrot.slane %v2320, 4
        %v2322 = vsel %vm1349, 0, %v2321
        %v2323 = vsel %vm1349, %v1571, %v1564
        %v2325 = vunpack.c.l.s4 1983009808
        %v2326 = vunpack.c.0.s8 %v2325
        %v2327 = vperm.slane %v2323, %v2326
        %v2328 = vrot.slane %v1572, 4
        %v2329 = vsel %vm1349, %v2328, %v1570
        %v2331 = vunpack.c.l.s4 1983009808
        %v2332 = vunpack.c.0.s8 %v2331
        %v2333 = vperm.slane %v2329, %v2332
        %v2334 = vrot.slane %v2333, 4
        %v2335 = vsel %vm1349, %v2334, %v2327
        %v2337 = vunpack.c.l.s4 1934713408
        %v2338 = vunpack.c.0.s8 %v2337
        %v2339 = vperm.slane %v2335, %v2338
        %v2340 = vrot.slane %v2339, 4
        %v2341 = vsel %vm1349, 0, %v2340
        %v2342 = vsel %vm1349, %v1597, %v1590
        %v2344 = vunpack.c.l.s4 1983009808
        %v2345 = vunpack.c.0.s8 %v2344
        %v2346 = vperm.slane %v2342, %v2345
        %v2347 = vrot.slane %v1598, 4
        %v2348 = vsel %vm1349, %v2347, %v1596
        %v2350 = vunpack.c.l.s4 1983009808
        %v2351 = vunpack.c.0.s8 %v2350
        %v2352 = vperm.slane %v2348, %v2351
        %v2353 = vrot.slane %v2352, 4
        %v2354 = vsel %vm1349, %v2353, %v2346
        %v2356 = vunpack.c.l.s4 1934713408
        %v2357 = vunpack.c.0.s8 %v2356
        %v2358 = vperm.slane %v2354, %v2357
        %v2359 = vrot.slane %v2358, 4
        %v2360 = vsel %vm1349, 0, %v2359
        %v2361 = vsel %vm1349, %v1623, %v1616
        %v2363 = vunpack.c.l.s4 1983009808
        %v2364 = vunpack.c.0.s8 %v2363
        %v2365 = vperm.slane %v2361, %v2364
        %v2366 = vrot.slane %v1624, 4
        %v2367 = vsel %vm1349, %v2366, %v1622
        %v2369 = vunpack.c.l.s4 1983009808
        %v2370 = vunpack.c.0.s8 %v2369
        %v2371 = vperm.slane %v2367, %v2370
        %v2372 = vrot.slane %v2371, 4
        %v2373 = vsel %vm1349, %v2372, %v2365
        %v2375 = vunpack.c.l.s4 1934713408
        %v2376 = vunpack.c.0.s8 %v2375
        %v2377 = vperm.slane %v2373, %v2376
        %v2378 = vrot.slane %v2377, 4
        %v2379 = vsel %vm1349, 0, %v2378
        %v2380 = vsel %vm1349, %v1649, %v1642
        %v2382 = vunpack.c.l.s4 1983009808
        %v2383 = vunpack.c.0.s8 %v2382
        %v2384 = vperm.slane %v2380, %v2383
        %v2385 = vrot.slane %v1650, 4
        %v2386 = vsel %vm1349, %v2385, %v1648
        %v2388 = vunpack.c.l.s4 1983009808
        %v2389 = vunpack.c.0.s8 %v2388
        %v2390 = vperm.slane %v2386, %v2389
        %v2391 = vrot.slane %v2390, 4
        %v2392 = vsel %vm1349, %v2391, %v2384
        %v2394 = vunpack.c.l.s4 1934713408
        %v2395 = vunpack.c.0.s8 %v2394
        %v2396 = vperm.slane %v2392, %v2395
        %v2397 = vrot.slane %v2396, 4
        %v2398 = vsel %vm1349, 0, %v2397
        %v2399 = vsel %vm1349, %v1675, %v1668
        %v2401 = vunpack.c.l.s4 1983009808
        %v2402 = vunpack.c.0.s8 %v2401
        %v2403 = vperm.slane %v2399, %v2402
        %v2404 = vrot.slane %v1676, 4
        %v2405 = vsel %vm1349, %v2404, %v1674
        %v2407 = vunpack.c.l.s4 1983009808
        %v2408 = vunpack.c.0.s8 %v2407
        %v2409 = vperm.slane %v2405, %v2408
        %v2410 = vrot.slane %v2409, 4
        %v2411 = vsel %vm1349, %v2410, %v2403
        %v2413 = vunpack.c.l.s4 1934713408
        %v2414 = vunpack.c.0.s8 %v2413
        %v2415 = vperm.slane %v2411, %v2414
        %v2416 = vrot.slane %v2415, 4
        %v2417 = vsel %vm1349, 0, %v2416
        %v2418 = vsel %vm1349, %v1701, %v1694
        %v2420 = vunpack.c.l.s4 1983009808
        %v2421 = vunpack.c.0.s8 %v2420
        %v2422 = vperm.slane %v2418, %v2421
        %v2423 = vrot.slane %v1702, 4
        %v2424 = vsel %vm1349, %v2423, %v1700
        %v2426 = vunpack.c.l.s4 1983009808
        %v2427 = vunpack.c.0.s8 %v2426
        %v2428 = vperm.slane %v2424, %v2427
        %v2429 = vrot.slane %v2428, 4
        %v2430 = vsel %vm1349, %v2429, %v2422
        %v2432 = vunpack.c.l.s4 1934713408
        %v2433 = vunpack.c.0.s8 %v2432
        %v2434 = vperm.slane %v2430, %v2433
        %v2435 = vrot.slane %v2434, 4
        %v2436 = vsel %vm1349, 0, %v2435
        %v2437 = vsel %vm1349, %v1727, %v1720
        %v2439 = vunpack.c.l.s4 1983009808
        %v2440 = vunpack.c.0.s8 %v2439
        %v2441 = vperm.slane %v2437, %v2440
        %v2442 = vrot.slane %v1728, 4
        %v2443 = vsel %vm1349, %v2442, %v1726
        %v2445 = vunpack.c.l.s4 1983009808
        %v2446 = vunpack.c.0.s8 %v2445
        %v2447 = vperm.slane %v2443, %v2446
        %v2448 = vrot.slane %v2447, 4
        %v2449 = vsel %vm1349, %v2448, %v2441
        %v2451 = vunpack.c.l.s4 1934713408
        %v2452 = vunpack.c.0.s8 %v2451
        %v2453 = vperm.slane %v2449, %v2452
        %v2454 = vrot.slane %v2453, 4
        %v2455 = vsel %vm1349, 0, %v2454
        %v2456 = vsel %vm1349, %v1753, %v1746
        %v2458 = vunpack.c.l.s4 1983009808
        %v2459 = vunpack.c.0.s8 %v2458
        %v2460 = vperm.slane %v2456, %v2459
        %v2461 = vrot.slane %v1754, 4
        %v2462 = vsel %vm1349, %v2461, %v1752
        %v2464 = vunpack.c.l.s4 1983009808
        %v2465 = vunpack.c.0.s8 %v2464
        %v2466 = vperm.slane %v2462, %v2465
        %v2467 = vrot.slane %v2466, 4
        %v2468 = vsel %vm1349, %v2467, %v2460
        %v2470 = vunpack.c.l.s4 1934713408
        %v2471 = vunpack.c.0.s8 %v2470
        %v2472 = vperm.slane %v2468, %v2471
        %v2473 = vrot.slane %v2472, 4
        %v2474 = vsel %vm1349, 0, %v2473
        %v2475 = vsel %vm1349, %v1779, %v1772
        %v2477 = vunpack.c.l.s4 1983009808
        %v2478 = vunpack.c.0.s8 %v2477
        %v2479 = vperm.slane %v2475, %v2478
        %v2480 = vrot.slane %v1780, 4
        %v2481 = vsel %vm1349, %v2480, %v1778
        %v2483 = vunpack.c.l.s4 1983009808
        %v2484 = vunpack.c.0.s8 %v2483
        %v2485 = vperm.slane %v2481, %v2484
        %v2486 = vrot.slane %v2485, 4
        %v2487 = vsel %vm1349, %v2486, %v2479
        %v2489 = vunpack.c.l.s4 1934713408
        %v2490 = vunpack.c.0.s8 %v2489
        %v2491 = vperm.slane %v2487, %v2490
        %v2492 = vrot.slane %v2491, 4
        %v2493 = vsel %vm1349, 0, %v2492
        %v2494 = vsel %vm1349, %v1805, %v1798
        %v2496 = vunpack.c.l.s4 1983009808
        %v2497 = vunpack.c.0.s8 %v2496
        %v2498 = vperm.slane %v2494, %v2497
        %v2499 = vrot.slane %v1806, 4
        %v2500 = vsel %vm1349, %v2499, %v1804
        %v2502 = vunpack.c.l.s4 1983009808
        %v2503 = vunpack.c.0.s8 %v2502
        %v2504 = vperm.slane %v2500, %v2503
        %v2505 = vrot.slane %v2504, 4
        %v2506 = vsel %vm1349, %v2505, %v2498
        %v2508 = vunpack.c.l.s4 1934713408
        %v2509 = vunpack.c.0.s8 %v2508
        %v2510 = vperm.slane %v2506, %v2509
        %v2511 = vrot.slane %v2510, 4
        %v2512 = vsel %vm1349, 0, %v2511
        %v2513 = vsel %vm1349, %v1831, %v1824
        %v2515 = vunpack.c.l.s4 1983009808
        %v2516 = vunpack.c.0.s8 %v2515
        %v2517 = vperm.slane %v2513, %v2516
        %v2518 = vrot.slane %v1832, 4
        %v2519 = vsel %vm1349, %v2518, %v1830
        %v2521 = vunpack.c.l.s4 1983009808
        %v2522 = vunpack.c.0.s8 %v2521
        %v2523 = vperm.slane %v2519, %v2522
        %v2524 = vrot.slane %v2523, 4
        %v2525 = vsel %vm1349, %v2524, %v2517
        %v2527 = vunpack.c.l.s4 1934713408
        %v2528 = vunpack.c.0.s8 %v2527
        %v2529 = vperm.slane %v2525, %v2528
        %v2530 = vrot.slane %v2529, 4
        %v2531 = vsel %vm1349, 0, %v2530
        %v2532 = vsel %vm1349, %v1857, %v1850
        %v2534 = vunpack.c.l.s4 1983009808
        %v2535 = vunpack.c.0.s8 %v2534
        %v2536 = vperm.slane %v2532, %v2535
        %v2537 = vrot.slane %v1858, 4
        %v2538 = vsel %vm1349, %v2537, %v1856
        %v2540 = vunpack.c.l.s4 1983009808
        %v2541 = vunpack.c.0.s8 %v2540
        %v2542 = vperm.slane %v2538, %v2541
        %v2543 = vrot.slane %v2542, 4
        %v2544 = vsel %vm1349, %v2543, %v2536
        %v2546 = vunpack.c.l.s4 1934713408
        %v2547 = vunpack.c.0.s8 %v2546
        %v2548 = vperm.slane %v2544, %v2547
        %v2549 = vrot.slane %v2548, 4
        %v2550 = vsel %vm1349, 0, %v2549
        %v2551 = vsel %vm1349, %v1883, %v1876
        %v2553 = vunpack.c.l.s4 1983009808
        %v2554 = vunpack.c.0.s8 %v2553
        %v2555 = vperm.slane %v2551, %v2554
        %v2556 = vrot.slane %v1884, 4
        %v2557 = vsel %vm1349, %v2556, %v1882
        %v2559 = vunpack.c.l.s4 1983009808
        %v2560 = vunpack.c.0.s8 %v2559
        %v2561 = vperm.slane %v2557, %v2560
        %v2562 = vrot.slane %v2561, 4
        %v2563 = vsel %vm1349, %v2562, %v2555
        %v2565 = vunpack.c.l.s4 1934713408
        %v2566 = vunpack.c.0.s8 %v2565
        %v2567 = vperm.slane %v2563, %v2566
        %v2568 = vrot.slane %v2567, 4
        %v2569 = vsel %vm1349, 0, %v2568
        %v2570 = vsel %vm1349, %v1909, %v1902
        %v2572 = vunpack.c.l.s4 1983009808
        %v2573 = vunpack.c.0.s8 %v2572
        %v2574 = vperm.slane %v2570, %v2573
        %v2575 = vrot.slane %v1910, 4
        %v2576 = vsel %vm1349, %v2575, %v1908
        %v2578 = vunpack.c.l.s4 1983009808
        %v2579 = vunpack.c.0.s8 %v2578
        %v2580 = vperm.slane %v2576, %v2579
        %v2581 = vrot.slane %v2580, 4
        %v2582 = vsel %vm1349, %v2581, %v2574
        %v2584 = vunpack.c.l.s4 1934713408
        %v2585 = vunpack.c.0.s8 %v2584
        %v2586 = vperm.slane %v2582, %v2585
        %v2587 = vrot.slane %v2586, 4
        %v2588 = vsel %vm1349, 0, %v2587
        %v2589 = vsel %vm1349, %v1935, %v1928
        %v2591 = vunpack.c.l.s4 1983009808
        %v2592 = vunpack.c.0.s8 %v2591
        %v2593 = vperm.slane %v2589, %v2592
        %v2594 = vrot.slane %v1936, 4
        %v2595 = vsel %vm1349, %v2594, %v1934
        %v2597 = vunpack.c.l.s4 1983009808
        %v2598 = vunpack.c.0.s8 %v2597
        %v2599 = vperm.slane %v2595, %v2598
        %v2600 = vrot.slane %v2599, 4
        %v2601 = vsel %vm1349, %v2600, %v2593
        %v2603 = vunpack.c.l.s4 1934713408
        %v2604 = vunpack.c.0.s8 %v2603
        %v2605 = vperm.slane %v2601, %v2604
        %v2606 = vrot.slane %v2605, 4
        %v2607 = vsel %vm1349, 0, %v2606
        %v2608 = vsel %vm1349, %v1961, %v1954
        %v2610 = vunpack.c.l.s4 1983009808
        %v2611 = vunpack.c.0.s8 %v2610
        %v2612 = vperm.slane %v2608, %v2611
        %v2613 = vrot.slane %v1962, 4
        %v2614 = vsel %vm1349, %v2613, %v1960
        %v2616 = vunpack.c.l.s4 1983009808
        %v2617 = vunpack.c.0.s8 %v2616
        %v2618 = vperm.slane %v2614, %v2617
        %v2619 = vrot.slane %v2618, 4
        %v2620 = vsel %vm1349, %v2619, %v2612
        %v2622 = vunpack.c.l.s4 1934713408
        %v2623 = vunpack.c.0.s8 %v2622
        %v2624 = vperm.slane %v2620, %v2623
        %v2625 = vrot.slane %v2624, 4
        %v2626 = vsel %vm1349, 0, %v2625
        %v2627 = vsel %vm1349, %v1987, %v1980
        %v2629 = vunpack.c.l.s4 1983009808
        %v2630 = vunpack.c.0.s8 %v2629
        %v2631 = vperm.slane %v2627, %v2630
        %v2632 = vrot.slane %v1988, 4
        %v2633 = vsel %vm1349, %v2632, %v1986
        %v2635 = vunpack.c.l.s4 1983009808
        %v2636 = vunpack.c.0.s8 %v2635
        %v2637 = vperm.slane %v2633, %v2636
        %v2638 = vrot.slane %v2637, 4
        %v2639 = vsel %vm1349, %v2638, %v2631
        %v2641 = vunpack.c.l.s4 1934713408
        %v2642 = vunpack.c.0.s8 %v2641
        %v2643 = vperm.slane %v2639, %v2642
        %v2644 = vrot.slane %v2643, 4
        %v2645 = vsel %vm1349, 0, %v2644
        %v2646 = vsel %vm1349, %v2013, %v2006
        %v2648 = vunpack.c.l.s4 1983009808
        %v2649 = vunpack.c.0.s8 %v2648
        %v2650 = vperm.slane %v2646, %v2649
        %v2651 = vrot.slane %v2014, 4
        %v2652 = vsel %vm1349, %v2651, %v2012
        %v2654 = vunpack.c.l.s4 1983009808
        %v2655 = vunpack.c.0.s8 %v2654
        %v2656 = vperm.slane %v2652, %v2655
        %v2657 = vrot.slane %v2656, 4
        %v2658 = vsel %vm1349, %v2657, %v2650
        %v2660 = vunpack.c.l.s4 1934713408
        %v2661 = vunpack.c.0.s8 %v2660
        %v2662 = vperm.slane %v2658, %v2661
        %v2663 = vrot.slane %v2662, 4
        %v2664 = vsel %vm1349, 0, %v2663
        %v2665 = vsel %vm1349, %v2039, %v2032
        %v2667 = vunpack.c.l.s4 1983009808
        %v2668 = vunpack.c.0.s8 %v2667
        %v2669 = vperm.slane %v2665, %v2668
        %v2670 = vrot.slane %v2040, 4
        %v2671 = vsel %vm1349, %v2670, %v2038
        %v2673 = vunpack.c.l.s4 1983009808
        %v2674 = vunpack.c.0.s8 %v2673
        %v2675 = vperm.slane %v2671, %v2674
        %v2676 = vrot.slane %v2675, 4
        %v2677 = vsel %vm1349, %v2676, %v2669
        %v2679 = vunpack.c.l.s4 1934713408
        %v2680 = vunpack.c.0.s8 %v2679
        %v2681 = vperm.slane %v2677, %v2680
        %v2682 = vrot.slane %v2681, 4
        %v2683 = vsel %vm1349, 0, %v2682
        %v2684 = vsel %vm1349, %v2065, %v2058
        %v2686 = vunpack.c.l.s4 1983009808
        %v2687 = vunpack.c.0.s8 %v2686
        %v2688 = vperm.slane %v2684, %v2687
        %v2689 = vrot.slane %v2066, 4
        %v2690 = vsel %vm1349, %v2689, %v2064
        %v2692 = vunpack.c.l.s4 1983009808
        %v2693 = vunpack.c.0.s8 %v2692
        %v2694 = vperm.slane %v2690, %v2693
        %v2695 = vrot.slane %v2694, 4
        %v2696 = vsel %vm1349, %v2695, %v2688
        %v2698 = vunpack.c.l.s4 1934713408
        %v2699 = vunpack.c.0.s8 %v2698
        %v2700 = vperm.slane %v2696, %v2699
        %v2701 = vrot.slane %v2700, 4
        %v2702 = vsel %vm1349, 0, %v2701
        %v2703 = vsel %vm1349, %v2091, %v2084
        %v2705 = vunpack.c.l.s4 1983009808
        %v2706 = vunpack.c.0.s8 %v2705
        %v2707 = vperm.slane %v2703, %v2706
        %v2708 = vrot.slane %v2092, 4
        %v2709 = vsel %vm1349, %v2708, %v2090
        %v2711 = vunpack.c.l.s4 1983009808
        %v2712 = vunpack.c.0.s8 %v2711
        %v2713 = vperm.slane %v2709, %v2712
        %v2714 = vrot.slane %v2713, 4
        %v2715 = vsel %vm1349, %v2714, %v2707
        %v2717 = vunpack.c.l.s4 1934713408
        %v2718 = vunpack.c.0.s8 %v2717
        %v2719 = vperm.slane %v2715, %v2718
        %v2720 = vrot.slane %v2719, 4
        %v2721 = vsel %vm1349, 0, %v2720
        %v2722 = vsel %vm1349, %v2117, %v2110
        %v2724 = vunpack.c.l.s4 1983009808
        %v2725 = vunpack.c.0.s8 %v2724
        %v2726 = vperm.slane %v2722, %v2725
        %v2727 = vrot.slane %v2118, 4
        %v2728 = vsel %vm1349, %v2727, %v2116
        %v2730 = vunpack.c.l.s4 1983009808
        %v2731 = vunpack.c.0.s8 %v2730
        %v2732 = vperm.slane %v2728, %v2731
        %v2733 = vrot.slane %v2732, 4
        %v2734 = vsel %vm1349, %v2733, %v2726
        %v2736 = vunpack.c.l.s4 1934713408
        %v2737 = vunpack.c.0.s8 %v2736
        %v2738 = vperm.slane %v2734, %v2737
        %v2739 = vrot.slane %v2738, 4
        %v2740 = vsel %vm1349, 0, %v2739
        %v2741 = vsel %vm1349, %v2143, %v2136
        %v2743 = vunpack.c.l.s4 1983009808
        %v2744 = vunpack.c.0.s8 %v2743
        %v2745 = vperm.slane %v2741, %v2744
        %v2746 = vrot.slane %v2144, 4
        %v2747 = vsel %vm1349, %v2746, %v2142
        %v2749 = vunpack.c.l.s4 1983009808
        %v2750 = vunpack.c.0.s8 %v2749
        %v2751 = vperm.slane %v2747, %v2750
        %v2752 = vrot.slane %v2751, 4
        %v2753 = vsel %vm1349, %v2752, %v2745
        %v2755 = vunpack.c.l.s4 1934713408
        %v2756 = vunpack.c.0.s8 %v2755
        %v2757 = vperm.slane %v2753, %v2756
        %v2758 = vrot.slane %v2757, 4
        %v2759 = vsel %vm1349, 0, %v2758
        %v2760 = vsel %vm1349, %v2169, %v2162
        %v2762 = vunpack.c.l.s4 1983009808
        %v2763 = vunpack.c.0.s8 %v2762
        %v2764 = vperm.slane %v2760, %v2763
        %v2765 = vrot.slane %v2170, 4
        %v2766 = vsel %vm1349, %v2765, %v2168
        %v2768 = vunpack.c.l.s4 1983009808
        %v2769 = vunpack.c.0.s8 %v2768
        %v2770 = vperm.slane %v2766, %v2769
        %v2771 = vrot.slane %v2770, 4
        %v2772 = vsel %vm1349, %v2771, %v2764
        %v2774 = vunpack.c.l.s4 1934713408
        %v2775 = vunpack.c.0.s8 %v2774
        %v2776 = vperm.slane %v2772, %v2775
        %v2777 = vrot.slane %v2776, 4
        %v2778 = vsel %vm1349, 0, %v2777
        %v2781 = vpack.i.b16 %v2206, %v2187
        %v2782 = vshrl.u32 %v2187, 16
        %v2783 = vshrl.u32 %v2206, 16
        %v2784 = vpack.i.b16 %v2783, %v2782
        %v2787 = vpack.i.b16 %v2208, %v2189
        %v2788 = vshrl.u32 %v2189, 16
        %v2789 = vshrl.u32 %v2208, 16
        %v2790 = vpack.i.b16 %v2789, %v2788
        %v2793 = vpack.i.b16 %v2244, %v2225
        %v2794 = vshrl.u32 %v2225, 16
        %v2795 = vshrl.u32 %v2244, 16
        %v2796 = vpack.i.b16 %v2795, %v2794
        %v2799 = vpack.i.b16 %v2246, %v2227
        %v2800 = vshrl.u32 %v2227, 16
        %v2801 = vshrl.u32 %v2246, 16
        %v2802 = vpack.i.b16 %v2801, %v2800
        %v2805 = vpack.i.b16 %v2282, %v2263
        %v2806 = vshrl.u32 %v2263, 16
        %v2807 = vshrl.u32 %v2282, 16
        %v2808 = vpack.i.b16 %v2807, %v2806
        %v2811 = vpack.i.b16 %v2284, %v2265
        %v2812 = vshrl.u32 %v2265, 16
        %v2813 = vshrl.u32 %v2284, 16
        %v2814 = vpack.i.b16 %v2813, %v2812
        %v2817 = vpack.i.b16 %v2320, %v2301
        %v2818 = vshrl.u32 %v2301, 16
        %v2819 = vshrl.u32 %v2320, 16
        %v2820 = vpack.i.b16 %v2819, %v2818
        %v2823 = vpack.i.b16 %v2322, %v2303
        %v2824 = vshrl.u32 %v2303, 16
        %v2825 = vshrl.u32 %v2322, 16
        %v2826 = vpack.i.b16 %v2825, %v2824
        %v2829 = vpack.i.b16 %v2358, %v2339
        %v2830 = vshrl.u32 %v2339, 16
        %v2831 = vshrl.u32 %v2358, 16
        %v2832 = vpack.i.b16 %v2831, %v2830
        %v2835 = vpack.i.b16 %v2360, %v2341
        %v2836 = vshrl.u32 %v2341, 16
        %v2837 = vshrl.u32 %v2360, 16
        %v2838 = vpack.i.b16 %v2837, %v2836
        %v2841 = vpack.i.b16 %v2396, %v2377
        %v2842 = vshrl.u32 %v2377, 16
        %v2843 = vshrl.u32 %v2396, 16
        %v2844 = vpack.i.b16 %v2843, %v2842
        %v2847 = vpack.i.b16 %v2398, %v2379
        %v2848 = vshrl.u32 %v2379, 16
        %v2849 = vshrl.u32 %v2398, 16
        %v2850 = vpack.i.b16 %v2849, %v2848
        %v2853 = vpack.i.b16 %v2434, %v2415
        %v2854 = vshrl.u32 %v2415, 16
        %v2855 = vshrl.u32 %v2434, 16
        %v2856 = vpack.i.b16 %v2855, %v2854
        %v2859 = vpack.i.b16 %v2436, %v2417
        %v2860 = vshrl.u32 %v2417, 16
        %v2861 = vshrl.u32 %v2436, 16
        %v2862 = vpack.i.b16 %v2861, %v2860
        %v2865 = vpack.i.b16 %v2472, %v2453
        %v2866 = vshrl.u32 %v2453, 16
        %v2867 = vshrl.u32 %v2472, 16
        %v2868 = vpack.i.b16 %v2867, %v2866
        %v2871 = vpack.i.b16 %v2474, %v2455
        %v2872 = vshrl.u32 %v2455, 16
        %v2873 = vshrl.u32 %v2474, 16
        %v2874 = vpack.i.b16 %v2873, %v2872
        %v2877 = vpack.i.b16 %v2510, %v2491
        %v2878 = vshrl.u32 %v2491, 16
        %v2879 = vshrl.u32 %v2510, 16
        %v2880 = vpack.i.b16 %v2879, %v2878
        %v2883 = vpack.i.b16 %v2512, %v2493
        %v2884 = vshrl.u32 %v2493, 16
        %v2885 = vshrl.u32 %v2512, 16
        %v2886 = vpack.i.b16 %v2885, %v2884
        %v2889 = vpack.i.b16 %v2548, %v2529
        %v2890 = vshrl.u32 %v2529, 16
        %v2891 = vshrl.u32 %v2548, 16
        %v2892 = vpack.i.b16 %v2891, %v2890
        %v2895 = vpack.i.b16 %v2550, %v2531
        %v2896 = vshrl.u32 %v2531, 16
        %v2897 = vshrl.u32 %v2550, 16
        %v2898 = vpack.i.b16 %v2897, %v2896
        %v2901 = vpack.i.b16 %v2586, %v2567
        %v2902 = vshrl.u32 %v2567, 16
        %v2903 = vshrl.u32 %v2586, 16
        %v2904 = vpack.i.b16 %v2903, %v2902
        %v2907 = vpack.i.b16 %v2588, %v2569
        %v2908 = vshrl.u32 %v2569, 16
        %v2909 = vshrl.u32 %v2588, 16
        %v2910 = vpack.i.b16 %v2909, %v2908
        %v2913 = vpack.i.b16 %v2624, %v2605
        %v2914 = vshrl.u32 %v2605, 16
        %v2915 = vshrl.u32 %v2624, 16
        %v2916 = vpack.i.b16 %v2915, %v2914
        %v2919 = vpack.i.b16 %v2626, %v2607
        %v2920 = vshrl.u32 %v2607, 16
        %v2921 = vshrl.u32 %v2626, 16
        %v2922 = vpack.i.b16 %v2921, %v2920
        %v2925 = vpack.i.b16 %v2662, %v2643
        %v2926 = vshrl.u32 %v2643, 16
        %v2927 = vshrl.u32 %v2662, 16
        %v2928 = vpack.i.b16 %v2927, %v2926
        %v2931 = vpack.i.b16 %v2664, %v2645
        %v2932 = vshrl.u32 %v2645, 16
        %v2933 = vshrl.u32 %v2664, 16
        %v2934 = vpack.i.b16 %v2933, %v2932
        %v2937 = vpack.i.b16 %v2700, %v2681
        %v2938 = vshrl.u32 %v2681, 16
        %v2939 = vshrl.u32 %v2700, 16
        %v2940 = vpack.i.b16 %v2939, %v2938
        %v2943 = vpack.i.b16 %v2702, %v2683
        %v2944 = vshrl.u32 %v2683, 16
        %v2945 = vshrl.u32 %v2702, 16
        %v2946 = vpack.i.b16 %v2945, %v2944
        %v2949 = vpack.i.b16 %v2738, %v2719
        %v2950 = vshrl.u32 %v2719, 16
        %v2951 = vshrl.u32 %v2738, 16
        %v2952 = vpack.i.b16 %v2951, %v2950
        %v2955 = vpack.i.b16 %v2740, %v2721
        %v2956 = vshrl.u32 %v2721, 16
        %v2957 = vshrl.u32 %v2740, 16
        %v2958 = vpack.i.b16 %v2957, %v2956
        %v2961 = vpack.i.b16 %v2776, %v2757
        %v2962 = vshrl.u32 %v2757, 16
        %v2963 = vshrl.u32 %v2776, 16
        %v2964 = vpack.i.b16 %v2963, %v2962
        %v2967 = vpack.i.b16 %v2778, %v2759
        %v2968 = vshrl.u32 %v2759, 16
        %v2969 = vshrl.u32 %v2778, 16
        %v2970 = vpack.i.b16 %v2969, %v2968
        %2987 = vrot.lane.b32.xlu0 %v1002, 96
        %v2988 = vpop.permute.xlu0 %2987
        %2989 = vrot.lane.b32.xlu0 %v1003, 96
        %v2990 = vpop.permute.xlu0 %2989
        %2991 = vrot.lane.b32.xlu0 %v1004, 96
        %v2992 = vpop.permute.xlu0 %2991
        %2993 = vrot.lane.b32.xlu0 %v1005, 96
        %v2994 = vpop.permute.xlu0 %2993
        %2995 = vrot.lane.b32.xlu0 %v1006, 96
        %v2996 = vpop.permute.xlu0 %2995
        %2997 = vrot.lane.b32.xlu0 %v1007, 96
        %v2998 = vpop.permute.xlu0 %2997
        %2999 = vrot.lane.b32.xlu0 %v1008, 96
        %v3000 = vpop.permute.xlu0 %2999
        %3001 = vrot.lane.b32.xlu0 %v1009, 96
        %v3002 = vpop.permute.xlu0 %3001
        %3003 = vrot.lane.b32.xlu0 %v1010, 96
        %v3004 = vpop.permute.xlu0 %3003
        %3005 = vrot.lane.b32.xlu0 %v1011, 96
        %v3006 = vpop.permute.xlu0 %3005
        %3007 = vrot.lane.b32.xlu0 %v1012, 96
        %v3008 = vpop.permute.xlu0 %3007
        %3009 = vrot.lane.b32.xlu0 %v1013, 96
        %v3010 = vpop.permute.xlu0 %3009
        %3011 = vrot.lane.b32.xlu0 %v1014, 96
        %v3012 = vpop.permute.xlu0 %3011
        %3013 = vrot.lane.b32.xlu0 %v1015, 96
        %v3014 = vpop.permute.xlu0 %3013
        %3015 = vrot.lane.b32.xlu0 %v1016, 96
        %v3016 = vpop.permute.xlu0 %3015
        %3017 = vrot.lane.b32.xlu0 %v1017, 96
        %v3018 = vpop.permute.xlu0 %3017
        %3019 = vrot.lane.b32.xlu0 %v1002, 64
        %v3020 = vpop.permute.xlu0 %3019
        %3021 = vrot.lane.b32.xlu0 %v1003, 64
        %v3022 = vpop.permute.xlu0 %3021
        %3023 = vrot.lane.b32.xlu0 %v1004, 64
        %v3024 = vpop.permute.xlu0 %3023
        %3025 = vrot.lane.b32.xlu0 %v1005, 64
        %v3026 = vpop.permute.xlu0 %3025
        %3027 = vrot.lane.b32.xlu0 %v1006, 64
        %v3028 = vpop.permute.xlu0 %3027
        %3029 = vrot.lane.b32.xlu0 %v1007, 64
        %v3030 = vpop.permute.xlu0 %3029
        %3031 = vrot.lane.b32.xlu0 %v1008, 64
        %v3032 = vpop.permute.xlu0 %3031
        %3033 = vrot.lane.b32.xlu0 %v1009, 64
        %v3034 = vpop.permute.xlu0 %3033
        %3035 = vrot.lane.b32.xlu0 %v1010, 64
        %v3036 = vpop.permute.xlu0 %3035
        %3037 = vrot.lane.b32.xlu0 %v1011, 64
        %v3038 = vpop.permute.xlu0 %3037
        %3039 = vrot.lane.b32.xlu0 %v1012, 64
        %v3040 = vpop.permute.xlu0 %3039
        %3041 = vrot.lane.b32.xlu0 %v1013, 64
        %v3042 = vpop.permute.xlu0 %3041
        %3043 = vrot.lane.b32.xlu0 %v1014, 64
        %v3044 = vpop.permute.xlu0 %3043
        %3045 = vrot.lane.b32.xlu0 %v1015, 64
        %v3046 = vpop.permute.xlu0 %3045
        %3047 = vrot.lane.b32.xlu0 %v1016, 64
        %v3048 = vpop.permute.xlu0 %3047
        %3049 = vrot.lane.b32.xlu0 %v1017, 64
        %v3050 = vpop.permute.xlu0 %3049
        %3051 = vrot.lane.b32.xlu0 %v1002, 32
        %v3052 = vpop.permute.xlu0 %3051
        %3053 = vrot.lane.b32.xlu0 %v1003, 32
        %v3054 = vpop.permute.xlu0 %3053
        %3055 = vrot.lane.b32.xlu0 %v1004, 32
        %v3056 = vpop.permute.xlu0 %3055
        %3057 = vrot.lane.b32.xlu0 %v1005, 32
        %v3058 = vpop.permute.xlu0 %3057
        %3059 = vrot.lane.b32.xlu0 %v1006, 32
        %v3060 = vpop.permute.xlu0 %3059
        %3061 = vrot.lane.b32.xlu0 %v1007, 32
        %v3062 = vpop.permute.xlu0 %3061
        %3063 = vrot.lane.b32.xlu0 %v1008, 32
        %v3064 = vpop.permute.xlu0 %3063
        %3065 = vrot.lane.b32.xlu0 %v1009, 32
        %v3066 = vpop.permute.xlu0 %3065
        %3067 = vrot.lane.b32.xlu0 %v1010, 32
        %v3068 = vpop.permute.xlu0 %3067
        %3069 = vrot.lane.b32.xlu0 %v1011, 32
        %v3070 = vpop.permute.xlu0 %3069
        %3071 = vrot.lane.b32.xlu0 %v1012, 32
        %v3072 = vpop.permute.xlu0 %3071
        %3073 = vrot.lane.b32.xlu0 %v1013, 32
        %v3074 = vpop.permute.xlu0 %3073
        %3075 = vrot.lane.b32.xlu0 %v1014, 32
        %v3076 = vpop.permute.xlu0 %3075
        %3077 = vrot.lane.b32.xlu0 %v1015, 32
        %v3078 = vpop.permute.xlu0 %3077
        %3079 = vrot.lane.b32.xlu0 %v1016, 32
        %v3080 = vpop.permute.xlu0 %3079
        %3081 = vrot.lane.b32.xlu0 %v1017, 32
        %v3082 = vpop.permute.xlu0 %3081
        %v3085 = vpack.i.b16 %v2988, %v1002
        %v3086 = vshrl.u32 %v1002, 16
        %v3087 = vshrl.u32 %v2988, 16
        %v3088 = vpack.i.b16 %v3087, %v3086
        %v3091 = vpack.i.b16 %v3052, %v3020
        %v3092 = vshrl.u32 %v3020, 16
        %v3093 = vshrl.u32 %v3052, 16
        %v3094 = vpack.i.b16 %v3093, %v3092
        %v3097 = vpack.i.b16 %v2990, %v1003
        %v3098 = vshrl.u32 %v1003, 16
        %v3099 = vshrl.u32 %v2990, 16
        %v3100 = vpack.i.b16 %v3099, %v3098
        %v3103 = vpack.i.b16 %v3054, %v3022
        %v3104 = vshrl.u32 %v3022, 16
        %v3105 = vshrl.u32 %v3054, 16
        %v3106 = vpack.i.b16 %v3105, %v3104
        %v3109 = vpack.i.b16 %v2992, %v1004
        %v3110 = vshrl.u32 %v1004, 16
        %v3111 = vshrl.u32 %v2992, 16
        %v3112 = vpack.i.b16 %v3111, %v3110
        %v3115 = vpack.i.b16 %v3056, %v3024
        %v3116 = vshrl.u32 %v3024, 16
        %v3117 = vshrl.u32 %v3056, 16
        %v3118 = vpack.i.b16 %v3117, %v3116
        %v3121 = vpack.i.b16 %v2994, %v1005
        %v3122 = vshrl.u32 %v1005, 16
        %v3123 = vshrl.u32 %v2994, 16
        %v3124 = vpack.i.b16 %v3123, %v3122
        %v3127 = vpack.i.b16 %v3058, %v3026
        %v3128 = vshrl.u32 %v3026, 16
        %v3129 = vshrl.u32 %v3058, 16
        %v3130 = vpack.i.b16 %v3129, %v3128
        %v3133 = vpack.i.b16 %v2996, %v1006
        %v3134 = vshrl.u32 %v1006, 16
        %v3135 = vshrl.u32 %v2996, 16
        %v3136 = vpack.i.b16 %v3135, %v3134
        %v3139 = vpack.i.b16 %v3060, %v3028
        %v3140 = vshrl.u32 %v3028, 16
        %v3141 = vshrl.u32 %v3060, 16
        %v3142 = vpack.i.b16 %v3141, %v3140
        %v3145 = vpack.i.b16 %v2998, %v1007
        %v3146 = vshrl.u32 %v1007, 16
        %v3147 = vshrl.u32 %v2998, 16
        %v3148 = vpack.i.b16 %v3147, %v3146
        %v3151 = vpack.i.b16 %v3062, %v3030
        %v3152 = vshrl.u32 %v3030, 16
        %v3153 = vshrl.u32 %v3062, 16
        %v3154 = vpack.i.b16 %v3153, %v3152
        %v3157 = vpack.i.b16 %v3000, %v1008
        %v3158 = vshrl.u32 %v1008, 16
        %v3159 = vshrl.u32 %v3000, 16
        %v3160 = vpack.i.b16 %v3159, %v3158
        %v3163 = vpack.i.b16 %v3064, %v3032
        %v3164 = vshrl.u32 %v3032, 16
        %v3165 = vshrl.u32 %v3064, 16
        %v3166 = vpack.i.b16 %v3165, %v3164
        %v3169 = vpack.i.b16 %v3002, %v1009
        %v3170 = vshrl.u32 %v1009, 16
        %v3171 = vshrl.u32 %v3002, 16
        %v3172 = vpack.i.b16 %v3171, %v3170
        %v3175 = vpack.i.b16 %v3066, %v3034
        %v3176 = vshrl.u32 %v3034, 16
        %v3177 = vshrl.u32 %v3066, 16
        %v3178 = vpack.i.b16 %v3177, %v3176
        %v3181 = vpack.i.b16 %v3004, %v1010
        %v3182 = vshrl.u32 %v1010, 16
        %v3183 = vshrl.u32 %v3004, 16
        %v3184 = vpack.i.b16 %v3183, %v3182
        %v3187 = vpack.i.b16 %v3068, %v3036
        %v3188 = vshrl.u32 %v3036, 16
        %v3189 = vshrl.u32 %v3068, 16
        %v3190 = vpack.i.b16 %v3189, %v3188
        %v3193 = vpack.i.b16 %v3006, %v1011
        %v3194 = vshrl.u32 %v1011, 16
        %v3195 = vshrl.u32 %v3006, 16
        %v3196 = vpack.i.b16 %v3195, %v3194
        %v3199 = vpack.i.b16 %v3070, %v3038
        %v3200 = vshrl.u32 %v3038, 16
        %v3201 = vshrl.u32 %v3070, 16
        %v3202 = vpack.i.b16 %v3201, %v3200
        %v3205 = vpack.i.b16 %v3008, %v1012
        %v3206 = vshrl.u32 %v1012, 16
        %v3207 = vshrl.u32 %v3008, 16
        %v3208 = vpack.i.b16 %v3207, %v3206
        %v3211 = vpack.i.b16 %v3072, %v3040
        %v3212 = vshrl.u32 %v3040, 16
        %v3213 = vshrl.u32 %v3072, 16
        %v3214 = vpack.i.b16 %v3213, %v3212
        %v3217 = vpack.i.b16 %v3010, %v1013
        %v3218 = vshrl.u32 %v1013, 16
        %v3219 = vshrl.u32 %v3010, 16
        %v3220 = vpack.i.b16 %v3219, %v3218
        %v3223 = vpack.i.b16 %v3074, %v3042
        %v3224 = vshrl.u32 %v3042, 16
        %v3225 = vshrl.u32 %v3074, 16
        %v3226 = vpack.i.b16 %v3225, %v3224
        %v3229 = vpack.i.b16 %v3012, %v1014
        %v3230 = vshrl.u32 %v1014, 16
        %v3231 = vshrl.u32 %v3012, 16
        %v3232 = vpack.i.b16 %v3231, %v3230
        %v3235 = vpack.i.b16 %v3076, %v3044
        %v3236 = vshrl.u32 %v3044, 16
        %v3237 = vshrl.u32 %v3076, 16
        %v3238 = vpack.i.b16 %v3237, %v3236
        %v3241 = vpack.i.b16 %v3014, %v1015
        %v3242 = vshrl.u32 %v1015, 16
        %v3243 = vshrl.u32 %v3014, 16
        %v3244 = vpack.i.b16 %v3243, %v3242
        %v3247 = vpack.i.b16 %v3078, %v3046
        %v3248 = vshrl.u32 %v3046, 16
        %v3249 = vshrl.u32 %v3078, 16
        %v3250 = vpack.i.b16 %v3249, %v3248
        %v3253 = vpack.i.b16 %v3016, %v1016
        %v3254 = vshrl.u32 %v1016, 16
        %v3255 = vshrl.u32 %v3016, 16
        %v3256 = vpack.i.b16 %v3255, %v3254
        %v3259 = vpack.i.b16 %v3080, %v3048
        %v3260 = vshrl.u32 %v3048, 16
        %v3261 = vshrl.u32 %v3080, 16
        %v3262 = vpack.i.b16 %v3261, %v3260
        %v3265 = vpack.i.b16 %v3018, %v1017
        %v3266 = vshrl.u32 %v1017, 16
        %v3267 = vshrl.u32 %v3018, 16
        %v3268 = vpack.i.b16 %v3267, %v3266
        %v3271 = vpack.i.b16 %v3082, %v3050
        %v3272 = vshrl.u32 %v3050, 16
        %v3273 = vshrl.u32 %v3082, 16
        %v3274 = vpack.i.b16 %v3273, %v3272
        %v3277 = vunpack.c.l.s4 1983009808
        %v3278 = vunpack.c.0.s8 %v3277
        %v3279 = vperm.slane %v3085, %v3278
        %v3282 = vunpack.c.l.s4 1983009808
        %v3283 = vunpack.c.0.s8 %v3282
        %v3284 = vperm.slane %v3091, %v3283
        %v3285 = vrot.slane %v3284, 4
        %v3286 = vsel %vm1349, %v3285, %v3279
        %v3287 = vrot.slane %v3279, 4
        %v3288 = vsel %vm1349, %v3284, %v3287
        %v3290 = vunpack.c.l.s4 1934713408
        %v3291 = vunpack.c.0.s8 %v3290
        %v3292 = vperm.slane %v3286, %v3291
        %v3294 = vunpack.c.l.s4 1934713408
        %v3295 = vunpack.c.0.s8 %v3294
        %v3296 = vperm.slane %v3288, %v3295
        %v3297 = vrot.slane %v3292, 4
        %v3298 = vsel %vm1349, 0, %v3297
        %v3299 = vrot.slane %v3296, 4
        %v3300 = vsel %vm1349, 0, %v3299
        %v3303 = vunpack.c.l.s4 1983009808
        %v3304 = vunpack.c.0.s8 %v3303
        %v3305 = vperm.slane %v3088, %v3304
        %v3308 = vunpack.c.l.s4 1983009808
        %v3309 = vunpack.c.0.s8 %v3308
        %v3310 = vperm.slane %v3094, %v3309
        %v3311 = vrot.slane %v3310, 4
        %v3312 = vsel %vm1349, %v3311, %v3305
        %v3313 = vrot.slane %v3305, 4
        %v3314 = vsel %vm1349, %v3310, %v3313
        %v3316 = vunpack.c.l.s4 1934713408
        %v3317 = vunpack.c.0.s8 %v3316
        %v3318 = vperm.slane %v3312, %v3317
        %v3320 = vunpack.c.l.s4 1934713408
        %v3321 = vunpack.c.0.s8 %v3320
        %v3322 = vperm.slane %v3314, %v3321
        %v3323 = vrot.slane %v3318, 4
        %v3324 = vsel %vm1349, 0, %v3323
        %v3325 = vrot.slane %v3322, 4
        %v3326 = vsel %vm1349, 0, %v3325
        %v3329 = vunpack.c.l.s4 1983009808
        %v3330 = vunpack.c.0.s8 %v3329
        %v3331 = vperm.slane %v3097, %v3330
        %v3334 = vunpack.c.l.s4 1983009808
        %v3335 = vunpack.c.0.s8 %v3334
        %v3336 = vperm.slane %v3103, %v3335
        %v3337 = vrot.slane %v3336, 4
        %v3338 = vsel %vm1349, %v3337, %v3331
        %v3339 = vrot.slane %v3331, 4
        %v3340 = vsel %vm1349, %v3336, %v3339
        %v3342 = vunpack.c.l.s4 1934713408
        %v3343 = vunpack.c.0.s8 %v3342
        %v3344 = vperm.slane %v3338, %v3343
        %v3346 = vunpack.c.l.s4 1934713408
        %v3347 = vunpack.c.0.s8 %v3346
        %v3348 = vperm.slane %v3340, %v3347
        %v3349 = vrot.slane %v3344, 4
        %v3350 = vsel %vm1349, 0, %v3349
        %v3351 = vrot.slane %v3348, 4
        %v3352 = vsel %vm1349, 0, %v3351
        %v3355 = vunpack.c.l.s4 1983009808
        %v3356 = vunpack.c.0.s8 %v3355
        %v3357 = vperm.slane %v3100, %v3356
        %v3360 = vunpack.c.l.s4 1983009808
        %v3361 = vunpack.c.0.s8 %v3360
        %v3362 = vperm.slane %v3106, %v3361
        %v3363 = vrot.slane %v3362, 4
        %v3364 = vsel %vm1349, %v3363, %v3357
        %v3365 = vrot.slane %v3357, 4
        %v3366 = vsel %vm1349, %v3362, %v3365
        %v3368 = vunpack.c.l.s4 1934713408
        %v3369 = vunpack.c.0.s8 %v3368
        %v3370 = vperm.slane %v3364, %v3369
        %v3372 = vunpack.c.l.s4 1934713408
        %v3373 = vunpack.c.0.s8 %v3372
        %v3374 = vperm.slane %v3366, %v3373
        %v3375 = vrot.slane %v3370, 4
        %v3376 = vsel %vm1349, 0, %v3375
        %v3377 = vrot.slane %v3374, 4
        %v3378 = vsel %vm1349, 0, %v3377
        %v3381 = vunpack.c.l.s4 1983009808
        %v3382 = vunpack.c.0.s8 %v3381
        %v3383 = vperm.slane %v3109, %v3382
        %v3386 = vunpack.c.l.s4 1983009808
        %v3387 = vunpack.c.0.s8 %v3386
        %v3388 = vperm.slane %v3115, %v3387
        %v3389 = vrot.slane %v3388, 4
        %v3390 = vsel %vm1349, %v3389, %v3383
        %v3391 = vrot.slane %v3383, 4
        %v3392 = vsel %vm1349, %v3388, %v3391
        %v3394 = vunpack.c.l.s4 1934713408
        %v3395 = vunpack.c.0.s8 %v3394
        %v3396 = vperm.slane %v3390, %v3395
        %v3398 = vunpack.c.l.s4 1934713408
        %v3399 = vunpack.c.0.s8 %v3398
        %v3400 = vperm.slane %v3392, %v3399
        %v3401 = vrot.slane %v3396, 4
        %v3402 = vsel %vm1349, 0, %v3401
        %v3403 = vrot.slane %v3400, 4
        %v3404 = vsel %vm1349, 0, %v3403
        %v3407 = vunpack.c.l.s4 1983009808
        %v3408 = vunpack.c.0.s8 %v3407
        %v3409 = vperm.slane %v3112, %v3408
        %v3412 = vunpack.c.l.s4 1983009808
        %v3413 = vunpack.c.0.s8 %v3412
        %v3414 = vperm.slane %v3118, %v3413
        %v3415 = vrot.slane %v3414, 4
        %v3416 = vsel %vm1349, %v3415, %v3409
        %v3417 = vrot.slane %v3409, 4
        %v3418 = vsel %vm1349, %v3414, %v3417
        %v3420 = vunpack.c.l.s4 1934713408
        %v3421 = vunpack.c.0.s8 %v3420
        %v3422 = vperm.slane %v3416, %v3421
        %v3424 = vunpack.c.l.s4 1934713408
        %v3425 = vunpack.c.0.s8 %v3424
        %v3426 = vperm.slane %v3418, %v3425
        %v3427 = vrot.slane %v3422, 4
        %v3428 = vsel %vm1349, 0, %v3427
        %v3429 = vrot.slane %v3426, 4
        %v3430 = vsel %vm1349, 0, %v3429
        %v3433 = vunpack.c.l.s4 1983009808
        %v3434 = vunpack.c.0.s8 %v3433
        %v3435 = vperm.slane %v3121, %v3434
        %v3438 = vunpack.c.l.s4 1983009808
        %v3439 = vunpack.c.0.s8 %v3438
        %v3440 = vperm.slane %v3127, %v3439
        %v3441 = vrot.slane %v3440, 4
        %v3442 = vsel %vm1349, %v3441, %v3435
        %v3443 = vrot.slane %v3435, 4
        %v3444 = vsel %vm1349, %v3440, %v3443
        %v3446 = vunpack.c.l.s4 1934713408
        %v3447 = vunpack.c.0.s8 %v3446
        %v3448 = vperm.slane %v3442, %v3447
        %v3450 = vunpack.c.l.s4 1934713408
        %v3451 = vunpack.c.0.s8 %v3450
        %v3452 = vperm.slane %v3444, %v3451
        %v3453 = vrot.slane %v3448, 4
        %v3454 = vsel %vm1349, 0, %v3453
        %v3455 = vrot.slane %v3452, 4
        %v3456 = vsel %vm1349, 0, %v3455
        %v3459 = vunpack.c.l.s4 1983009808
        %v3460 = vunpack.c.0.s8 %v3459
        %v3461 = vperm.slane %v3124, %v3460
        %v3464 = vunpack.c.l.s4 1983009808
        %v3465 = vunpack.c.0.s8 %v3464
        %v3466 = vperm.slane %v3130, %v3465
        %v3467 = vrot.slane %v3466, 4
        %v3468 = vsel %vm1349, %v3467, %v3461
        %v3469 = vrot.slane %v3461, 4
        %v3470 = vsel %vm1349, %v3466, %v3469
        %v3472 = vunpack.c.l.s4 1934713408
        %v3473 = vunpack.c.0.s8 %v3472
        %v3474 = vperm.slane %v3468, %v3473
        %v3476 = vunpack.c.l.s4 1934713408
        %v3477 = vunpack.c.0.s8 %v3476
        %v3478 = vperm.slane %v3470, %v3477
        %v3479 = vrot.slane %v3474, 4
        %v3480 = vsel %vm1349, 0, %v3479
        %v3481 = vrot.slane %v3478, 4
        %v3482 = vsel %vm1349, 0, %v3481
        %v3485 = vunpack.c.l.s4 1983009808
        %v3486 = vunpack.c.0.s8 %v3485
        %v3487 = vperm.slane %v3133, %v3486
        %v3490 = vunpack.c.l.s4 1983009808
        %v3491 = vunpack.c.0.s8 %v3490
        %v3492 = vperm.slane %v3139, %v3491
        %v3493 = vrot.slane %v3492, 4
        %v3494 = vsel %vm1349, %v3493, %v3487
        %v3495 = vrot.slane %v3487, 4
        %v3496 = vsel %vm1349, %v3492, %v3495
        %v3498 = vunpack.c.l.s4 1934713408
        %v3499 = vunpack.c.0.s8 %v3498
        %v3500 = vperm.slane %v3494, %v3499
        %v3502 = vunpack.c.l.s4 1934713408
        %v3503 = vunpack.c.0.s8 %v3502
        %v3504 = vperm.slane %v3496, %v3503
        %v3505 = vrot.slane %v3500, 4
        %v3506 = vsel %vm1349, 0, %v3505
        %v3507 = vrot.slane %v3504, 4
        %v3508 = vsel %vm1349, 0, %v3507
        %v3511 = vunpack.c.l.s4 1983009808
        %v3512 = vunpack.c.0.s8 %v3511
        %v3513 = vperm.slane %v3136, %v3512
        %v3516 = vunpack.c.l.s4 1983009808
        %v3517 = vunpack.c.0.s8 %v3516
        %v3518 = vperm.slane %v3142, %v3517
        %v3519 = vrot.slane %v3518, 4
        %v3520 = vsel %vm1349, %v3519, %v3513
        %v3521 = vrot.slane %v3513, 4
        %v3522 = vsel %vm1349, %v3518, %v3521
        %v3524 = vunpack.c.l.s4 1934713408
        %v3525 = vunpack.c.0.s8 %v3524
        %v3526 = vperm.slane %v3520, %v3525
        %v3528 = vunpack.c.l.s4 1934713408
        %v3529 = vunpack.c.0.s8 %v3528
        %v3530 = vperm.slane %v3522, %v3529
        %v3531 = vrot.slane %v3526, 4
        %v3532 = vsel %vm1349, 0, %v3531
        %v3533 = vrot.slane %v3530, 4
        %v3534 = vsel %vm1349, 0, %v3533
        %v3537 = vunpack.c.l.s4 1983009808
        %v3538 = vunpack.c.0.s8 %v3537
        %v3539 = vperm.slane %v3145, %v3538
        %v3542 = vunpack.c.l.s4 1983009808
        %v3543 = vunpack.c.0.s8 %v3542
        %v3544 = vperm.slane %v3151, %v3543
        %v3545 = vrot.slane %v3544, 4
        %v3546 = vsel %vm1349, %v3545, %v3539
        %v3547 = vrot.slane %v3539, 4
        %v3548 = vsel %vm1349, %v3544, %v3547
        %v3550 = vunpack.c.l.s4 1934713408
        %v3551 = vunpack.c.0.s8 %v3550
        %v3552 = vperm.slane %v3546, %v3551
        %v3554 = vunpack.c.l.s4 1934713408
        %v3555 = vunpack.c.0.s8 %v3554
        %v3556 = vperm.slane %v3548, %v3555
        %v3557 = vrot.slane %v3552, 4
        %v3558 = vsel %vm1349, 0, %v3557
        %v3559 = vrot.slane %v3556, 4
        %v3560 = vsel %vm1349, 0, %v3559
        %v3563 = vunpack.c.l.s4 1983009808
        %v3564 = vunpack.c.0.s8 %v3563
        %v3565 = vperm.slane %v3148, %v3564
        %v3568 = vunpack.c.l.s4 1983009808
        %v3569 = vunpack.c.0.s8 %v3568
        %v3570 = vperm.slane %v3154, %v3569
        %v3571 = vrot.slane %v3570, 4
        %v3572 = vsel %vm1349, %v3571, %v3565
        %v3573 = vrot.slane %v3565, 4
        %v3574 = vsel %vm1349, %v3570, %v3573
        %v3576 = vunpack.c.l.s4 1934713408
        %v3577 = vunpack.c.0.s8 %v3576
        %v3578 = vperm.slane %v3572, %v3577
        %v3580 = vunpack.c.l.s4 1934713408
        %v3581 = vunpack.c.0.s8 %v3580
        %v3582 = vperm.slane %v3574, %v3581
        %v3583 = vrot.slane %v3578, 4
        %v3584 = vsel %vm1349, 0, %v3583
        %v3585 = vrot.slane %v3582, 4
        %v3586 = vsel %vm1349, 0, %v3585
        %v3589 = vunpack.c.l.s4 1983009808
        %v3590 = vunpack.c.0.s8 %v3589
        %v3591 = vperm.slane %v3157, %v3590
        %v3594 = vunpack.c.l.s4 1983009808
        %v3595 = vunpack.c.0.s8 %v3594
        %v3596 = vperm.slane %v3163, %v3595
        %v3597 = vrot.slane %v3596, 4
        %v3598 = vsel %vm1349, %v3597, %v3591
        %v3599 = vrot.slane %v3591, 4
        %v3600 = vsel %vm1349, %v3596, %v3599
        %v3602 = vunpack.c.l.s4 1934713408
        %v3603 = vunpack.c.0.s8 %v3602
        %v3604 = vperm.slane %v3598, %v3603
        %v3606 = vunpack.c.l.s4 1934713408
        %v3607 = vunpack.c.0.s8 %v3606
        %v3608 = vperm.slane %v3600, %v3607
        %v3609 = vrot.slane %v3604, 4
        %v3610 = vsel %vm1349, 0, %v3609
        %v3611 = vrot.slane %v3608, 4
        %v3612 = vsel %vm1349, 0, %v3611
        %v3615 = vunpack.c.l.s4 1983009808
        %v3616 = vunpack.c.0.s8 %v3615
        %v3617 = vperm.slane %v3160, %v3616
        %v3620 = vunpack.c.l.s4 1983009808
        %v3621 = vunpack.c.0.s8 %v3620
        %v3622 = vperm.slane %v3166, %v3621
        %v3623 = vrot.slane %v3622, 4
        %v3624 = vsel %vm1349, %v3623, %v3617
        %v3625 = vrot.slane %v3617, 4
        %v3626 = vsel %vm1349, %v3622, %v3625
        %v3628 = vunpack.c.l.s4 1934713408
        %v3629 = vunpack.c.0.s8 %v3628
        %v3630 = vperm.slane %v3624, %v3629
        %v3632 = vunpack.c.l.s4 1934713408
        %v3633 = vunpack.c.0.s8 %v3632
        %v3634 = vperm.slane %v3626, %v3633
        %v3635 = vrot.slane %v3630, 4
        %v3636 = vsel %vm1349, 0, %v3635
        %v3637 = vrot.slane %v3634, 4
        %v3638 = vsel %vm1349, 0, %v3637
        %v3641 = vunpack.c.l.s4 1983009808
        %v3642 = vunpack.c.0.s8 %v3641
        %v3643 = vperm.slane %v3169, %v3642
        %v3646 = vunpack.c.l.s4 1983009808
        %v3647 = vunpack.c.0.s8 %v3646
        %v3648 = vperm.slane %v3175, %v3647
        %v3649 = vrot.slane %v3648, 4
        %v3650 = vsel %vm1349, %v3649, %v3643
        %v3651 = vrot.slane %v3643, 4
        %v3652 = vsel %vm1349, %v3648, %v3651
        %v3654 = vunpack.c.l.s4 1934713408
        %v3655 = vunpack.c.0.s8 %v3654
        %v3656 = vperm.slane %v3650, %v3655
        %v3658 = vunpack.c.l.s4 1934713408
        %v3659 = vunpack.c.0.s8 %v3658
        %v3660 = vperm.slane %v3652, %v3659
        %v3661 = vrot.slane %v3656, 4
        %v3662 = vsel %vm1349, 0, %v3661
        %v3663 = vrot.slane %v3660, 4
        %v3664 = vsel %vm1349, 0, %v3663
        %v3667 = vunpack.c.l.s4 1983009808
        %v3668 = vunpack.c.0.s8 %v3667
        %v3669 = vperm.slane %v3172, %v3668
        %v3672 = vunpack.c.l.s4 1983009808
        %v3673 = vunpack.c.0.s8 %v3672
        %v3674 = vperm.slane %v3178, %v3673
        %v3675 = vrot.slane %v3674, 4
        %v3676 = vsel %vm1349, %v3675, %v3669
        %v3677 = vrot.slane %v3669, 4
        %v3678 = vsel %vm1349, %v3674, %v3677
        %v3680 = vunpack.c.l.s4 1934713408
        %v3681 = vunpack.c.0.s8 %v3680
        %v3682 = vperm.slane %v3676, %v3681
        %v3684 = vunpack.c.l.s4 1934713408
        %v3685 = vunpack.c.0.s8 %v3684
        %v3686 = vperm.slane %v3678, %v3685
        %v3687 = vrot.slane %v3682, 4
        %v3688 = vsel %vm1349, 0, %v3687
        %v3689 = vrot.slane %v3686, 4
        %v3690 = vsel %vm1349, 0, %v3689
        %v3693 = vunpack.c.l.s4 1983009808
        %v3694 = vunpack.c.0.s8 %v3693
        %v3695 = vperm.slane %v3181, %v3694
        %v3698 = vunpack.c.l.s4 1983009808
        %v3699 = vunpack.c.0.s8 %v3698
        %v3700 = vperm.slane %v3187, %v3699
        %v3701 = vrot.slane %v3700, 4
        %v3702 = vsel %vm1349, %v3701, %v3695
        %v3703 = vrot.slane %v3695, 4
        %v3704 = vsel %vm1349, %v3700, %v3703
        %v3706 = vunpack.c.l.s4 1934713408
        %v3707 = vunpack.c.0.s8 %v3706
        %v3708 = vperm.slane %v3702, %v3707
        %v3710 = vunpack.c.l.s4 1934713408
        %v3711 = vunpack.c.0.s8 %v3710
        %v3712 = vperm.slane %v3704, %v3711
        %v3713 = vrot.slane %v3708, 4
        %v3714 = vsel %vm1349, 0, %v3713
        %v3715 = vrot.slane %v3712, 4
        %v3716 = vsel %vm1349, 0, %v3715
        %v3719 = vunpack.c.l.s4 1983009808
        %v3720 = vunpack.c.0.s8 %v3719
        %v3721 = vperm.slane %v3184, %v3720
        %v3724 = vunpack.c.l.s4 1983009808
        %v3725 = vunpack.c.0.s8 %v3724
        %v3726 = vperm.slane %v3190, %v3725
        %v3727 = vrot.slane %v3726, 4
        %v3728 = vsel %vm1349, %v3727, %v3721
        %v3729 = vrot.slane %v3721, 4
        %v3730 = vsel %vm1349, %v3726, %v3729
        %v3732 = vunpack.c.l.s4 1934713408
        %v3733 = vunpack.c.0.s8 %v3732
        %v3734 = vperm.slane %v3728, %v3733
        %v3736 = vunpack.c.l.s4 1934713408
        %v3737 = vunpack.c.0.s8 %v3736
        %v3738 = vperm.slane %v3730, %v3737
        %v3739 = vrot.slane %v3734, 4
        %v3740 = vsel %vm1349, 0, %v3739
        %v3741 = vrot.slane %v3738, 4
        %v3742 = vsel %vm1349, 0, %v3741
        %v3745 = vunpack.c.l.s4 1983009808
        %v3746 = vunpack.c.0.s8 %v3745
        %v3747 = vperm.slane %v3193, %v3746
        %v3750 = vunpack.c.l.s4 1983009808
        %v3751 = vunpack.c.0.s8 %v3750
        %v3752 = vperm.slane %v3199, %v3751
        %v3753 = vrot.slane %v3752, 4
        %v3754 = vsel %vm1349, %v3753, %v3747
        %v3755 = vrot.slane %v3747, 4
        %v3756 = vsel %vm1349, %v3752, %v3755
        %v3758 = vunpack.c.l.s4 1934713408
        %v3759 = vunpack.c.0.s8 %v3758
        %v3760 = vperm.slane %v3754, %v3759
        %v3762 = vunpack.c.l.s4 1934713408
        %v3763 = vunpack.c.0.s8 %v3762
        %v3764 = vperm.slane %v3756, %v3763
        %v3765 = vrot.slane %v3760, 4
        %v3766 = vsel %vm1349, 0, %v3765
        %v3767 = vrot.slane %v3764, 4
        %v3768 = vsel %vm1349, 0, %v3767
        %v3771 = vunpack.c.l.s4 1983009808
        %v3772 = vunpack.c.0.s8 %v3771
        %v3773 = vperm.slane %v3196, %v3772
        %v3776 = vunpack.c.l.s4 1983009808
        %v3777 = vunpack.c.0.s8 %v3776
        %v3778 = vperm.slane %v3202, %v3777
        %v3779 = vrot.slane %v3778, 4
        %v3780 = vsel %vm1349, %v3779, %v3773
        %v3781 = vrot.slane %v3773, 4
        %v3782 = vsel %vm1349, %v3778, %v3781
        %v3784 = vunpack.c.l.s4 1934713408
        %v3785 = vunpack.c.0.s8 %v3784
        %v3786 = vperm.slane %v3780, %v3785
        %v3788 = vunpack.c.l.s4 1934713408
        %v3789 = vunpack.c.0.s8 %v3788
        %v3790 = vperm.slane %v3782, %v3789
        %v3791 = vrot.slane %v3786, 4
        %v3792 = vsel %vm1349, 0, %v3791
        %v3793 = vrot.slane %v3790, 4
        %v3794 = vsel %vm1349, 0, %v3793
        %v3797 = vunpack.c.l.s4 1983009808
        %v3798 = vunpack.c.0.s8 %v3797
        %v3799 = vperm.slane %v3205, %v3798
        %v3802 = vunpack.c.l.s4 1983009808
        %v3803 = vunpack.c.0.s8 %v3802
        %v3804 = vperm.slane %v3211, %v3803
        %v3805 = vrot.slane %v3804, 4
        %v3806 = vsel %vm1349, %v3805, %v3799
        %v3807 = vrot.slane %v3799, 4
        %v3808 = vsel %vm1349, %v3804, %v3807
        %v3810 = vunpack.c.l.s4 1934713408
        %v3811 = vunpack.c.0.s8 %v3810
        %v3812 = vperm.slane %v3806, %v3811
        %v3814 = vunpack.c.l.s4 1934713408
        %v3815 = vunpack.c.0.s8 %v3814
        %v3816 = vperm.slane %v3808, %v3815
        %v3817 = vrot.slane %v3812, 4
        %v3818 = vsel %vm1349, 0, %v3817
        %v3819 = vrot.slane %v3816, 4
        %v3820 = vsel %vm1349, 0, %v3819
        %v3823 = vunpack.c.l.s4 1983009808
        %v3824 = vunpack.c.0.s8 %v3823
        %v3825 = vperm.slane %v3208, %v3824
        %v3828 = vunpack.c.l.s4 1983009808
        %v3829 = vunpack.c.0.s8 %v3828
        %v3830 = vperm.slane %v3214, %v3829
        %v3831 = vrot.slane %v3830, 4
        %v3832 = vsel %vm1349, %v3831, %v3825
        %v3833 = vrot.slane %v3825, 4
        %v3834 = vsel %vm1349, %v3830, %v3833
        %v3836 = vunpack.c.l.s4 1934713408
        %v3837 = vunpack.c.0.s8 %v3836
        %v3838 = vperm.slane %v3832, %v3837
        %v3840 = vunpack.c.l.s4 1934713408
        %v3841 = vunpack.c.0.s8 %v3840
        %v3842 = vperm.slane %v3834, %v3841
        %v3843 = vrot.slane %v3838, 4
        %v3844 = vsel %vm1349, 0, %v3843
        %v3845 = vrot.slane %v3842, 4
        %v3846 = vsel %vm1349, 0, %v3845
        %v3849 = vunpack.c.l.s4 1983009808
        %v3850 = vunpack.c.0.s8 %v3849
        %v3851 = vperm.slane %v3217, %v3850
        %v3854 = vunpack.c.l.s4 1983009808
        %v3855 = vunpack.c.0.s8 %v3854
        %v3856 = vperm.slane %v3223, %v3855
        %v3857 = vrot.slane %v3856, 4
        %v3858 = vsel %vm1349, %v3857, %v3851
        %v3859 = vrot.slane %v3851, 4
        %v3860 = vsel %vm1349, %v3856, %v3859
        %v3862 = vunpack.c.l.s4 1934713408
        %v3863 = vunpack.c.0.s8 %v3862
        %v3864 = vperm.slane %v3858, %v3863
        %v3866 = vunpack.c.l.s4 1934713408
        %v3867 = vunpack.c.0.s8 %v3866
        %v3868 = vperm.slane %v3860, %v3867
        %v3869 = vrot.slane %v3864, 4
        %v3870 = vsel %vm1349, 0, %v3869
        %v3871 = vrot.slane %v3868, 4
        %v3872 = vsel %vm1349, 0, %v3871
        %v3875 = vunpack.c.l.s4 1983009808
        %v3876 = vunpack.c.0.s8 %v3875
        %v3877 = vperm.slane %v3220, %v3876
        %v3880 = vunpack.c.l.s4 1983009808
        %v3881 = vunpack.c.0.s8 %v3880
        %v3882 = vperm.slane %v3226, %v3881
        %v3883 = vrot.slane %v3882, 4
        %v3884 = vsel %vm1349, %v3883, %v3877
        %v3885 = vrot.slane %v3877, 4
        %v3886 = vsel %vm1349, %v3882, %v3885
        %v3888 = vunpack.c.l.s4 1934713408
        %v3889 = vunpack.c.0.s8 %v3888
        %v3890 = vperm.slane %v3884, %v3889
        %v3892 = vunpack.c.l.s4 1934713408
        %v3893 = vunpack.c.0.s8 %v3892
        %v3894 = vperm.slane %v3886, %v3893
        %v3895 = vrot.slane %v3890, 4
        %v3896 = vsel %vm1349, 0, %v3895
        %v3897 = vrot.slane %v3894, 4
        %v3898 = vsel %vm1349, 0, %v3897
        %v3901 = vunpack.c.l.s4 1983009808
        %v3902 = vunpack.c.0.s8 %v3901
        %v3903 = vperm.slane %v3229, %v3902
        %v3906 = vunpack.c.l.s4 1983009808
        %v3907 = vunpack.c.0.s8 %v3906
        %v3908 = vperm.slane %v3235, %v3907
        %v3909 = vrot.slane %v3908, 4
        %v3910 = vsel %vm1349, %v3909, %v3903
        %v3911 = vrot.slane %v3903, 4
        %v3912 = vsel %vm1349, %v3908, %v3911
        %v3914 = vunpack.c.l.s4 1934713408
        %v3915 = vunpack.c.0.s8 %v3914
        %v3916 = vperm.slane %v3910, %v3915
        %v3918 = vunpack.c.l.s4 1934713408
        %v3919 = vunpack.c.0.s8 %v3918
        %v3920 = vperm.slane %v3912, %v3919
        %v3921 = vrot.slane %v3916, 4
        %v3922 = vsel %vm1349, 0, %v3921
        %v3923 = vrot.slane %v3920, 4
        %v3924 = vsel %vm1349, 0, %v3923
        %v3927 = vunpack.c.l.s4 1983009808
        %v3928 = vunpack.c.0.s8 %v3927
        %v3929 = vperm.slane %v3232, %v3928
        %v3932 = vunpack.c.l.s4 1983009808
        %v3933 = vunpack.c.0.s8 %v3932
        %v3934 = vperm.slane %v3238, %v3933
        %v3935 = vrot.slane %v3934, 4
        %v3936 = vsel %vm1349, %v3935, %v3929
        %v3937 = vrot.slane %v3929, 4
        %v3938 = vsel %vm1349, %v3934, %v3937
        %v3940 = vunpack.c.l.s4 1934713408
        %v3941 = vunpack.c.0.s8 %v3940
        %v3942 = vperm.slane %v3936, %v3941
        %v3944 = vunpack.c.l.s4 1934713408
        %v3945 = vunpack.c.0.s8 %v3944
        %v3946 = vperm.slane %v3938, %v3945
        %v3947 = vrot.slane %v3942, 4
        %v3948 = vsel %vm1349, 0, %v3947
        %v3949 = vrot.slane %v3946, 4
        %v3950 = vsel %vm1349, 0, %v3949
        %v3953 = vunpack.c.l.s4 1983009808
        %v3954 = vunpack.c.0.s8 %v3953
        %v3955 = vperm.slane %v3241, %v3954
        %v3958 = vunpack.c.l.s4 1983009808
        %v3959 = vunpack.c.0.s8 %v3958
        %v3960 = vperm.slane %v3247, %v3959
        %v3961 = vrot.slane %v3960, 4
        %v3962 = vsel %vm1349, %v3961, %v3955
        %v3963 = vrot.slane %v3955, 4
        %v3964 = vsel %vm1349, %v3960, %v3963
        %v3966 = vunpack.c.l.s4 1934713408
        %v3967 = vunpack.c.0.s8 %v3966
        %v3968 = vperm.slane %v3962, %v3967
        %v3970 = vunpack.c.l.s4 1934713408
        %v3971 = vunpack.c.0.s8 %v3970
        %v3972 = vperm.slane %v3964, %v3971
        %v3973 = vrot.slane %v3968, 4
        %v3974 = vsel %vm1349, 0, %v3973
        %v3975 = vrot.slane %v3972, 4
        %v3976 = vsel %vm1349, 0, %v3975
        %v3979 = vunpack.c.l.s4 1983009808
        %v3980 = vunpack.c.0.s8 %v3979
        %v3981 = vperm.slane %v3244, %v3980
        %v3984 = vunpack.c.l.s4 1983009808
        %v3985 = vunpack.c.0.s8 %v3984
        %v3986 = vperm.slane %v3250, %v3985
        %v3987 = vrot.slane %v3986, 4
        %v3988 = vsel %vm1349, %v3987, %v3981
        %v3989 = vrot.slane %v3981, 4
        %v3990 = vsel %vm1349, %v3986, %v3989
        %v3992 = vunpack.c.l.s4 1934713408
        %v3993 = vunpack.c.0.s8 %v3992
        %v3994 = vperm.slane %v3988, %v3993
        %v3996 = vunpack.c.l.s4 1934713408
        %v3997 = vunpack.c.0.s8 %v3996
        %v3998 = vperm.slane %v3990, %v3997
        %v3999 = vrot.slane %v3994, 4
        %v4000 = vsel %vm1349, 0, %v3999
        %v4001 = vrot.slane %v3998, 4
        %v4002 = vsel %vm1349, 0, %v4001
        %v4005 = vunpack.c.l.s4 1983009808
        %v4006 = vunpack.c.0.s8 %v4005
        %v4007 = vperm.slane %v3253, %v4006
        %v4010 = vunpack.c.l.s4 1983009808
        %v4011 = vunpack.c.0.s8 %v4010
        %v4012 = vperm.slane %v3259, %v4011
        %v4013 = vrot.slane %v4012, 4
        %v4014 = vsel %vm1349, %v4013, %v4007
        %v4015 = vrot.slane %v4007, 4
        %v4016 = vsel %vm1349, %v4012, %v4015
        %v4018 = vunpack.c.l.s4 1934713408
        %v4019 = vunpack.c.0.s8 %v4018
        %v4020 = vperm.slane %v4014, %v4019
        %v4022 = vunpack.c.l.s4 1934713408
        %v4023 = vunpack.c.0.s8 %v4022
        %v4024 = vperm.slane %v4016, %v4023
        %v4025 = vrot.slane %v4020, 4
        %v4026 = vsel %vm1349, 0, %v4025
        %v4027 = vrot.slane %v4024, 4
        %v4028 = vsel %vm1349, 0, %v4027
        %v4031 = vunpack.c.l.s4 1983009808
        %v4032 = vunpack.c.0.s8 %v4031
        %v4033 = vperm.slane %v3256, %v4032
        %v4036 = vunpack.c.l.s4 1983009808
        %v4037 = vunpack.c.0.s8 %v4036
        %v4038 = vperm.slane %v3262, %v4037
        %v4039 = vrot.slane %v4038, 4
        %v4040 = vsel %vm1349, %v4039, %v4033
        %v4041 = vrot.slane %v4033, 4
        %v4042 = vsel %vm1349, %v4038, %v4041
        %v4044 = vunpack.c.l.s4 1934713408
        %v4045 = vunpack.c.0.s8 %v4044
        %v4046 = vperm.slane %v4040, %v4045
        %v4048 = vunpack.c.l.s4 1934713408
        %v4049 = vunpack.c.0.s8 %v4048
        %v4050 = vperm.slane %v4042, %v4049
        %v4051 = vrot.slane %v4046, 4
        %v4052 = vsel %vm1349, 0, %v4051
        %v4053 = vrot.slane %v4050, 4
        %v4054 = vsel %vm1349, 0, %v4053
        %v4057 = vunpack.c.l.s4 1983009808
        %v4058 = vunpack.c.0.s8 %v4057
        %v4059 = vperm.slane %v3265, %v4058
        %v4062 = vunpack.c.l.s4 1983009808
        %v4063 = vunpack.c.0.s8 %v4062
        %v4064 = vperm.slane %v3271, %v4063
        %v4065 = vrot.slane %v4064, 4
        %v4066 = vsel %vm1349, %v4065, %v4059
        %v4067 = vrot.slane %v4059, 4
        %v4068 = vsel %vm1349, %v4064, %v4067
        %v4070 = vunpack.c.l.s4 1934713408
        %v4071 = vunpack.c.0.s8 %v4070
        %v4072 = vperm.slane %v4066, %v4071
        %v4074 = vunpack.c.l.s4 1934713408
        %v4075 = vunpack.c.0.s8 %v4074
        %v4076 = vperm.slane %v4068, %v4075
        %v4077 = vrot.slane %v4072, 4
        %v4078 = vsel %vm1349, 0, %v4077
        %v4079 = vrot.slane %v4076, 4
        %v4080 = vsel %vm1349, 0, %v4079
        %v4083 = vunpack.c.l.s4 1983009808
        %v4084 = vunpack.c.0.s8 %v4083
        %v4085 = vperm.slane %v3268, %v4084
        %v4088 = vunpack.c.l.s4 1983009808
        %v4089 = vunpack.c.0.s8 %v4088
        %v4090 = vperm.slane %v3274, %v4089
        %v4091 = vrot.slane %v4090, 4
        %v4092 = vsel %vm1349, %v4091, %v4085
        %v4093 = vrot.slane %v4085, 4
        %v4094 = vsel %vm1349, %v4090, %v4093
        %v4096 = vunpack.c.l.s4 1934713408
        %v4097 = vunpack.c.0.s8 %v4096
        %v4098 = vperm.slane %v4092, %v4097
        %v4100 = vunpack.c.l.s4 1934713408
        %v4101 = vunpack.c.0.s8 %v4100
        %v4102 = vperm.slane %v4094, %v4101
        %v4103 = vrot.slane %v4098, 4
        %v4104 = vsel %vm1349, 0, %v4103
        %v4105 = vrot.slane %v4102, 4
        %v4106 = vsel %vm1349, 0, %v4105
        %v4107 = vsel %vm1349, %v3299, %v3292
        %v4109 = vunpack.c.l.s4 1983009808
        %v4110 = vunpack.c.0.s8 %v4109
        %v4111 = vperm.slane %v4107, %v4110
        %v4112 = vrot.slane %v3300, 4
        %v4113 = vsel %vm1349, %v4112, %v3298
        %v4115 = vunpack.c.l.s4 1983009808
        %v4116 = vunpack.c.0.s8 %v4115
        %v4117 = vperm.slane %v4113, %v4116
        %v4118 = vrot.slane %v4117, 4
        %v4119 = vsel %vm1349, %v4118, %v4111
        %v4121 = vunpack.c.l.s4 1934713408
        %v4122 = vunpack.c.0.s8 %v4121
        %v4123 = vperm.slane %v4119, %v4122
        %v4124 = vrot.slane %v4123, 4
        %v4125 = vsel %vm1349, 0, %v4124
        %v4126 = vsel %vm1349, %v3325, %v3318
        %v4128 = vunpack.c.l.s4 1983009808
        %v4129 = vunpack.c.0.s8 %v4128
        %v4130 = vperm.slane %v4126, %v4129
        %v4131 = vrot.slane %v3326, 4
        %v4132 = vsel %vm1349, %v4131, %v3324
        %v4134 = vunpack.c.l.s4 1983009808
        %v4135 = vunpack.c.0.s8 %v4134
        %v4136 = vperm.slane %v4132, %v4135
        %v4137 = vrot.slane %v4136, 4
        %v4138 = vsel %vm1349, %v4137, %v4130
        %v4140 = vunpack.c.l.s4 1934713408
        %v4141 = vunpack.c.0.s8 %v4140
        %v4142 = vperm.slane %v4138, %v4141
        %v4143 = vrot.slane %v4142, 4
        %v4144 = vsel %vm1349, 0, %v4143
        %v4145 = vsel %vm1349, %v3351, %v3344
        %v4147 = vunpack.c.l.s4 1983009808
        %v4148 = vunpack.c.0.s8 %v4147
        %v4149 = vperm.slane %v4145, %v4148
        %v4150 = vrot.slane %v3352, 4
        %v4151 = vsel %vm1349, %v4150, %v3350
        %v4153 = vunpack.c.l.s4 1983009808
        %v4154 = vunpack.c.0.s8 %v4153
        %v4155 = vperm.slane %v4151, %v4154
        %v4156 = vrot.slane %v4155, 4
        %v4157 = vsel %vm1349, %v4156, %v4149
        %v4159 = vunpack.c.l.s4 1934713408
        %v4160 = vunpack.c.0.s8 %v4159
        %v4161 = vperm.slane %v4157, %v4160
        %v4162 = vrot.slane %v4161, 4
        %v4163 = vsel %vm1349, 0, %v4162
        %v4164 = vsel %vm1349, %v3377, %v3370
        %v4166 = vunpack.c.l.s4 1983009808
        %v4167 = vunpack.c.0.s8 %v4166
        %v4168 = vperm.slane %v4164, %v4167
        %v4169 = vrot.slane %v3378, 4
        %v4170 = vsel %vm1349, %v4169, %v3376
        %v4172 = vunpack.c.l.s4 1983009808
        %v4173 = vunpack.c.0.s8 %v4172
        %v4174 = vperm.slane %v4170, %v4173
        %v4175 = vrot.slane %v4174, 4
        %v4176 = vsel %vm1349, %v4175, %v4168
        %v4178 = vunpack.c.l.s4 1934713408
        %v4179 = vunpack.c.0.s8 %v4178
        %v4180 = vperm.slane %v4176, %v4179
        %v4181 = vrot.slane %v4180, 4
        %v4182 = vsel %vm1349, 0, %v4181
        %v4183 = vsel %vm1349, %v3403, %v3396
        %v4185 = vunpack.c.l.s4 1983009808
        %v4186 = vunpack.c.0.s8 %v4185
        %v4187 = vperm.slane %v4183, %v4186
        %v4188 = vrot.slane %v3404, 4
        %v4189 = vsel %vm1349, %v4188, %v3402
        %v4191 = vunpack.c.l.s4 1983009808
        %v4192 = vunpack.c.0.s8 %v4191
        %v4193 = vperm.slane %v4189, %v4192
        %v4194 = vrot.slane %v4193, 4
        %v4195 = vsel %vm1349, %v4194, %v4187
        %v4197 = vunpack.c.l.s4 1934713408
        %v4198 = vunpack.c.0.s8 %v4197
        %v4199 = vperm.slane %v4195, %v4198
        %v4200 = vrot.slane %v4199, 4
        %v4201 = vsel %vm1349, 0, %v4200
        %v4202 = vsel %vm1349, %v3429, %v3422
        %v4204 = vunpack.c.l.s4 1983009808
        %v4205 = vunpack.c.0.s8 %v4204
        %v4206 = vperm.slane %v4202, %v4205
        %v4207 = vrot.slane %v3430, 4
        %v4208 = vsel %vm1349, %v4207, %v3428
        %v4210 = vunpack.c.l.s4 1983009808
        %v4211 = vunpack.c.0.s8 %v4210
        %v4212 = vperm.slane %v4208, %v4211
        %v4213 = vrot.slane %v4212, 4
        %v4214 = vsel %vm1349, %v4213, %v4206
        %v4216 = vunpack.c.l.s4 1934713408
        %v4217 = vunpack.c.0.s8 %v4216
        %v4218 = vperm.slane %v4214, %v4217
        %v4219 = vrot.slane %v4218, 4
        %v4220 = vsel %vm1349, 0, %v4219
        %v4221 = vsel %vm1349, %v3455, %v3448
        %v4223 = vunpack.c.l.s4 1983009808
        %v4224 = vunpack.c.0.s8 %v4223
        %v4225 = vperm.slane %v4221, %v4224
        %v4226 = vrot.slane %v3456, 4
        %v4227 = vsel %vm1349, %v4226, %v3454
        %v4229 = vunpack.c.l.s4 1983009808
        %v4230 = vunpack.c.0.s8 %v4229
        %v4231 = vperm.slane %v4227, %v4230
        %v4232 = vrot.slane %v4231, 4
        %v4233 = vsel %vm1349, %v4232, %v4225
        %v4235 = vunpack.c.l.s4 1934713408
        %v4236 = vunpack.c.0.s8 %v4235
        %v4237 = vperm.slane %v4233, %v4236
        %v4238 = vrot.slane %v4237, 4
        %v4239 = vsel %vm1349, 0, %v4238
        %v4240 = vsel %vm1349, %v3481, %v3474
        %v4242 = vunpack.c.l.s4 1983009808
        %v4243 = vunpack.c.0.s8 %v4242
        %v4244 = vperm.slane %v4240, %v4243
        %v4245 = vrot.slane %v3482, 4
        %v4246 = vsel %vm1349, %v4245, %v3480
        %v4248 = vunpack.c.l.s4 1983009808
        %v4249 = vunpack.c.0.s8 %v4248
        %v4250 = vperm.slane %v4246, %v4249
        %v4251 = vrot.slane %v4250, 4
        %v4252 = vsel %vm1349, %v4251, %v4244
        %v4254 = vunpack.c.l.s4 1934713408
        %v4255 = vunpack.c.0.s8 %v4254
        %v4256 = vperm.slane %v4252, %v4255
        %v4257 = vrot.slane %v4256, 4
        %v4258 = vsel %vm1349, 0, %v4257
        %v4259 = vsel %vm1349, %v3507, %v3500
        %v4261 = vunpack.c.l.s4 1983009808
        %v4262 = vunpack.c.0.s8 %v4261
        %v4263 = vperm.slane %v4259, %v4262
        %v4264 = vrot.slane %v3508, 4
        %v4265 = vsel %vm1349, %v4264, %v3506
        %v4267 = vunpack.c.l.s4 1983009808
        %v4268 = vunpack.c.0.s8 %v4267
        %v4269 = vperm.slane %v4265, %v4268
        %v4270 = vrot.slane %v4269, 4
        %v4271 = vsel %vm1349, %v4270, %v4263
        %v4273 = vunpack.c.l.s4 1934713408
        %v4274 = vunpack.c.0.s8 %v4273
        %v4275 = vperm.slane %v4271, %v4274
        %v4276 = vrot.slane %v4275, 4
        %v4277 = vsel %vm1349, 0, %v4276
        %v4278 = vsel %vm1349, %v3533, %v3526
        %v4280 = vunpack.c.l.s4 1983009808
        %v4281 = vunpack.c.0.s8 %v4280
        %v4282 = vperm.slane %v4278, %v4281
        %v4283 = vrot.slane %v3534, 4
        %v4284 = vsel %vm1349, %v4283, %v3532
        %v4286 = vunpack.c.l.s4 1983009808
        %v4287 = vunpack.c.0.s8 %v4286
        %v4288 = vperm.slane %v4284, %v4287
        %v4289 = vrot.slane %v4288, 4
        %v4290 = vsel %vm1349, %v4289, %v4282
        %v4292 = vunpack.c.l.s4 1934713408
        %v4293 = vunpack.c.0.s8 %v4292
        %v4294 = vperm.slane %v4290, %v4293
        %v4295 = vrot.slane %v4294, 4
        %v4296 = vsel %vm1349, 0, %v4295
        %v4297 = vsel %vm1349, %v3559, %v3552
        %v4299 = vunpack.c.l.s4 1983009808
        %v4300 = vunpack.c.0.s8 %v4299
        %v4301 = vperm.slane %v4297, %v4300
        %v4302 = vrot.slane %v3560, 4
        %v4303 = vsel %vm1349, %v4302, %v3558
        %v4305 = vunpack.c.l.s4 1983009808
        %v4306 = vunpack.c.0.s8 %v4305
        %v4307 = vperm.slane %v4303, %v4306
        %v4308 = vrot.slane %v4307, 4
        %v4309 = vsel %vm1349, %v4308, %v4301
        %v4311 = vunpack.c.l.s4 1934713408
        %v4312 = vunpack.c.0.s8 %v4311
        %v4313 = vperm.slane %v4309, %v4312
        %v4314 = vrot.slane %v4313, 4
        %v4315 = vsel %vm1349, 0, %v4314
        %v4316 = vsel %vm1349, %v3585, %v3578
        %v4318 = vunpack.c.l.s4 1983009808
        %v4319 = vunpack.c.0.s8 %v4318
        %v4320 = vperm.slane %v4316, %v4319
        %v4321 = vrot.slane %v3586, 4
        %v4322 = vsel %vm1349, %v4321, %v3584
        %v4324 = vunpack.c.l.s4 1983009808
        %v4325 = vunpack.c.0.s8 %v4324
        %v4326 = vperm.slane %v4322, %v4325
        %v4327 = vrot.slane %v4326, 4
        %v4328 = vsel %vm1349, %v4327, %v4320
        %v4330 = vunpack.c.l.s4 1934713408
        %v4331 = vunpack.c.0.s8 %v4330
        %v4332 = vperm.slane %v4328, %v4331
        %v4333 = vrot.slane %v4332, 4
        %v4334 = vsel %vm1349, 0, %v4333
        %v4335 = vsel %vm1349, %v3611, %v3604
        %v4337 = vunpack.c.l.s4 1983009808
        %v4338 = vunpack.c.0.s8 %v4337
        %v4339 = vperm.slane %v4335, %v4338
        %v4340 = vrot.slane %v3612, 4
        %v4341 = vsel %vm1349, %v4340, %v3610
        %v4343 = vunpack.c.l.s4 1983009808
        %v4344 = vunpack.c.0.s8 %v4343
        %v4345 = vperm.slane %v4341, %v4344
        %v4346 = vrot.slane %v4345, 4
        %v4347 = vsel %vm1349, %v4346, %v4339
        %v4349 = vunpack.c.l.s4 1934713408
        %v4350 = vunpack.c.0.s8 %v4349
        %v4351 = vperm.slane %v4347, %v4350
        %v4352 = vrot.slane %v4351, 4
        %v4353 = vsel %vm1349, 0, %v4352
        %v4354 = vsel %vm1349, %v3637, %v3630
        %v4356 = vunpack.c.l.s4 1983009808
        %v4357 = vunpack.c.0.s8 %v4356
        %v4358 = vperm.slane %v4354, %v4357
        %v4359 = vrot.slane %v3638, 4
        %v4360 = vsel %vm1349, %v4359, %v3636
        %v4362 = vunpack.c.l.s4 1983009808
        %v4363 = vunpack.c.0.s8 %v4362
        %v4364 = vperm.slane %v4360, %v4363
        %v4365 = vrot.slane %v4364, 4
        %v4366 = vsel %vm1349, %v4365, %v4358
        %v4368 = vunpack.c.l.s4 1934713408
        %v4369 = vunpack.c.0.s8 %v4368
        %v4370 = vperm.slane %v4366, %v4369
        %v4371 = vrot.slane %v4370, 4
        %v4372 = vsel %vm1349, 0, %v4371
        %v4373 = vsel %vm1349, %v3663, %v3656
        %v4375 = vunpack.c.l.s4 1983009808
        %v4376 = vunpack.c.0.s8 %v4375
        %v4377 = vperm.slane %v4373, %v4376
        %v4378 = vrot.slane %v3664, 4
        %v4379 = vsel %vm1349, %v4378, %v3662
        %v4381 = vunpack.c.l.s4 1983009808
        %v4382 = vunpack.c.0.s8 %v4381
        %v4383 = vperm.slane %v4379, %v4382
        %v4384 = vrot.slane %v4383, 4
        %v4385 = vsel %vm1349, %v4384, %v4377
        %v4387 = vunpack.c.l.s4 1934713408
        %v4388 = vunpack.c.0.s8 %v4387
        %v4389 = vperm.slane %v4385, %v4388
        %v4390 = vrot.slane %v4389, 4
        %v4391 = vsel %vm1349, 0, %v4390
        %v4392 = vsel %vm1349, %v3689, %v3682
        %v4394 = vunpack.c.l.s4 1983009808
        %v4395 = vunpack.c.0.s8 %v4394
        %v4396 = vperm.slane %v4392, %v4395
        %v4397 = vrot.slane %v3690, 4
        %v4398 = vsel %vm1349, %v4397, %v3688
        %v4400 = vunpack.c.l.s4 1983009808
        %v4401 = vunpack.c.0.s8 %v4400
        %v4402 = vperm.slane %v4398, %v4401
        %v4403 = vrot.slane %v4402, 4
        %v4404 = vsel %vm1349, %v4403, %v4396
        %v4406 = vunpack.c.l.s4 1934713408
        %v4407 = vunpack.c.0.s8 %v4406
        %v4408 = vperm.slane %v4404, %v4407
        %v4409 = vrot.slane %v4408, 4
        %v4410 = vsel %vm1349, 0, %v4409
        %v4411 = vsel %vm1349, %v3715, %v3708
        %v4413 = vunpack.c.l.s4 1983009808
        %v4414 = vunpack.c.0.s8 %v4413
        %v4415 = vperm.slane %v4411, %v4414
        %v4416 = vrot.slane %v3716, 4
        %v4417 = vsel %vm1349, %v4416, %v3714
        %v4419 = vunpack.c.l.s4 1983009808
        %v4420 = vunpack.c.0.s8 %v4419
        %v4421 = vperm.slane %v4417, %v4420
        %v4422 = vrot.slane %v4421, 4
        %v4423 = vsel %vm1349, %v4422, %v4415
        %v4425 = vunpack.c.l.s4 1934713408
        %v4426 = vunpack.c.0.s8 %v4425
        %v4427 = vperm.slane %v4423, %v4426
        %v4428 = vrot.slane %v4427, 4
        %v4429 = vsel %vm1349, 0, %v4428
        %v4430 = vsel %vm1349, %v3741, %v3734
        %v4432 = vunpack.c.l.s4 1983009808
        %v4433 = vunpack.c.0.s8 %v4432
        %v4434 = vperm.slane %v4430, %v4433
        %v4435 = vrot.slane %v3742, 4
        %v4436 = vsel %vm1349, %v4435, %v3740
        %v4438 = vunpack.c.l.s4 1983009808
        %v4439 = vunpack.c.0.s8 %v4438
        %v4440 = vperm.slane %v4436, %v4439
        %v4441 = vrot.slane %v4440, 4
        %v4442 = vsel %vm1349, %v4441, %v4434
        %v4444 = vunpack.c.l.s4 1934713408
        %v4445 = vunpack.c.0.s8 %v4444
        %v4446 = vperm.slane %v4442, %v4445
        %v4447 = vrot.slane %v4446, 4
        %v4448 = vsel %vm1349, 0, %v4447
        %v4449 = vsel %vm1349, %v3767, %v3760
        %v4451 = vunpack.c.l.s4 1983009808
        %v4452 = vunpack.c.0.s8 %v4451
        %v4453 = vperm.slane %v4449, %v4452
        %v4454 = vrot.slane %v3768, 4
        %v4455 = vsel %vm1349, %v4454, %v3766
        %v4457 = vunpack.c.l.s4 1983009808
        %v4458 = vunpack.c.0.s8 %v4457
        %v4459 = vperm.slane %v4455, %v4458
        %v4460 = vrot.slane %v4459, 4
        %v4461 = vsel %vm1349, %v4460, %v4453
        %v4463 = vunpack.c.l.s4 1934713408
        %v4464 = vunpack.c.0.s8 %v4463
        %v4465 = vperm.slane %v4461, %v4464
        %v4466 = vrot.slane %v4465, 4
        %v4467 = vsel %vm1349, 0, %v4466
        %v4468 = vsel %vm1349, %v3793, %v3786
        %v4470 = vunpack.c.l.s4 1983009808
        %v4471 = vunpack.c.0.s8 %v4470
        %v4472 = vperm.slane %v4468, %v4471
        %v4473 = vrot.slane %v3794, 4
        %v4474 = vsel %vm1349, %v4473, %v3792
        %v4476 = vunpack.c.l.s4 1983009808
        %v4477 = vunpack.c.0.s8 %v4476
        %v4478 = vperm.slane %v4474, %v4477
        %v4479 = vrot.slane %v4478, 4
        %v4480 = vsel %vm1349, %v4479, %v4472
        %v4482 = vunpack.c.l.s4 1934713408
        %v4483 = vunpack.c.0.s8 %v4482
        %v4484 = vperm.slane %v4480, %v4483
        %v4485 = vrot.slane %v4484, 4
        %v4486 = vsel %vm1349, 0, %v4485
        %v4487 = vsel %vm1349, %v3819, %v3812
        %v4489 = vunpack.c.l.s4 1983009808
        %v4490 = vunpack.c.0.s8 %v4489
        %v4491 = vperm.slane %v4487, %v4490
        %v4492 = vrot.slane %v3820, 4
        %v4493 = vsel %vm1349, %v4492, %v3818
        %v4495 = vunpack.c.l.s4 1983009808
        %v4496 = vunpack.c.0.s8 %v4495
        %v4497 = vperm.slane %v4493, %v4496
        %v4498 = vrot.slane %v4497, 4
        %v4499 = vsel %vm1349, %v4498, %v4491
        %v4501 = vunpack.c.l.s4 1934713408
        %v4502 = vunpack.c.0.s8 %v4501
        %v4503 = vperm.slane %v4499, %v4502
        %v4504 = vrot.slane %v4503, 4
        %v4505 = vsel %vm1349, 0, %v4504
        %v4506 = vsel %vm1349, %v3845, %v3838
        %v4508 = vunpack.c.l.s4 1983009808
        %v4509 = vunpack.c.0.s8 %v4508
        %v4510 = vperm.slane %v4506, %v4509
        %v4511 = vrot.slane %v3846, 4
        %v4512 = vsel %vm1349, %v4511, %v3844
        %v4514 = vunpack.c.l.s4 1983009808
        %v4515 = vunpack.c.0.s8 %v4514
        %v4516 = vperm.slane %v4512, %v4515
        %v4517 = vrot.slane %v4516, 4
        %v4518 = vsel %vm1349, %v4517, %v4510
        %v4520 = vunpack.c.l.s4 1934713408
        %v4521 = vunpack.c.0.s8 %v4520
        %v4522 = vperm.slane %v4518, %v4521
        %v4523 = vrot.slane %v4522, 4
        %v4524 = vsel %vm1349, 0, %v4523
        %v4525 = vsel %vm1349, %v3871, %v3864
        %v4527 = vunpack.c.l.s4 1983009808
        %v4528 = vunpack.c.0.s8 %v4527
        %v4529 = vperm.slane %v4525, %v4528
        %v4530 = vrot.slane %v3872, 4
        %v4531 = vsel %vm1349, %v4530, %v3870
        %v4533 = vunpack.c.l.s4 1983009808
        %v4534 = vunpack.c.0.s8 %v4533
        %v4535 = vperm.slane %v4531, %v4534
        %v4536 = vrot.slane %v4535, 4
        %v4537 = vsel %vm1349, %v4536, %v4529
        %v4539 = vunpack.c.l.s4 1934713408
        %v4540 = vunpack.c.0.s8 %v4539
        %v4541 = vperm.slane %v4537, %v4540
        %v4542 = vrot.slane %v4541, 4
        %v4543 = vsel %vm1349, 0, %v4542
        %v4544 = vsel %vm1349, %v3897, %v3890
        %v4546 = vunpack.c.l.s4 1983009808
        %v4547 = vunpack.c.0.s8 %v4546
        %v4548 = vperm.slane %v4544, %v4547
        %v4549 = vrot.slane %v3898, 4
        %v4550 = vsel %vm1349, %v4549, %v3896
        %v4552 = vunpack.c.l.s4 1983009808
        %v4553 = vunpack.c.0.s8 %v4552
        %v4554 = vperm.slane %v4550, %v4553
        %v4555 = vrot.slane %v4554, 4
        %v4556 = vsel %vm1349, %v4555, %v4548
        %v4558 = vunpack.c.l.s4 1934713408
        %v4559 = vunpack.c.0.s8 %v4558
        %v4560 = vperm.slane %v4556, %v4559
        %v4561 = vrot.slane %v4560, 4
        %v4562 = vsel %vm1349, 0, %v4561
        %v4563 = vsel %vm1349, %v3923, %v3916
        %v4565 = vunpack.c.l.s4 1983009808
        %v4566 = vunpack.c.0.s8 %v4565
        %v4567 = vperm.slane %v4563, %v4566
        %v4568 = vrot.slane %v3924, 4
        %v4569 = vsel %vm1349, %v4568, %v3922
        %v4571 = vunpack.c.l.s4 1983009808
        %v4572 = vunpack.c.0.s8 %v4571
        %v4573 = vperm.slane %v4569, %v4572
        %v4574 = vrot.slane %v4573, 4
        %v4575 = vsel %vm1349, %v4574, %v4567
        %v4577 = vunpack.c.l.s4 1934713408
        %v4578 = vunpack.c.0.s8 %v4577
        %v4579 = vperm.slane %v4575, %v4578
        %v4580 = vrot.slane %v4579, 4
        %v4581 = vsel %vm1349, 0, %v4580
        %v4582 = vsel %vm1349, %v3949, %v3942
        %v4584 = vunpack.c.l.s4 1983009808
        %v4585 = vunpack.c.0.s8 %v4584
        %v4586 = vperm.slane %v4582, %v4585
        %v4587 = vrot.slane %v3950, 4
        %v4588 = vsel %vm1349, %v4587, %v3948
        %v4590 = vunpack.c.l.s4 1983009808
        %v4591 = vunpack.c.0.s8 %v4590
        %v4592 = vperm.slane %v4588, %v4591
        %v4593 = vrot.slane %v4592, 4
        %v4594 = vsel %vm1349, %v4593, %v4586
        %v4596 = vunpack.c.l.s4 1934713408
        %v4597 = vunpack.c.0.s8 %v4596
        %v4598 = vperm.slane %v4594, %v4597
        %v4599 = vrot.slane %v4598, 4
        %v4600 = vsel %vm1349, 0, %v4599
        %v4601 = vsel %vm1349, %v3975, %v3968
        %v4603 = vunpack.c.l.s4 1983009808
        %v4604 = vunpack.c.0.s8 %v4603
        %v4605 = vperm.slane %v4601, %v4604
        %v4606 = vrot.slane %v3976, 4
        %v4607 = vsel %vm1349, %v4606, %v3974
        %v4609 = vunpack.c.l.s4 1983009808
        %v4610 = vunpack.c.0.s8 %v4609
        %v4611 = vperm.slane %v4607, %v4610
        %v4612 = vrot.slane %v4611, 4
        %v4613 = vsel %vm1349, %v4612, %v4605
        %v4615 = vunpack.c.l.s4 1934713408
        %v4616 = vunpack.c.0.s8 %v4615
        %v4617 = vperm.slane %v4613, %v4616
        %v4618 = vrot.slane %v4617, 4
        %v4619 = vsel %vm1349, 0, %v4618
        %v4620 = vsel %vm1349, %v4001, %v3994
        %v4622 = vunpack.c.l.s4 1983009808
        %v4623 = vunpack.c.0.s8 %v4622
        %v4624 = vperm.slane %v4620, %v4623
        %v4625 = vrot.slane %v4002, 4
        %v4626 = vsel %vm1349, %v4625, %v4000
        %v4628 = vunpack.c.l.s4 1983009808
        %v4629 = vunpack.c.0.s8 %v4628
        %v4630 = vperm.slane %v4626, %v4629
        %v4631 = vrot.slane %v4630, 4
        %v4632 = vsel %vm1349, %v4631, %v4624
        %v4634 = vunpack.c.l.s4 1934713408
        %v4635 = vunpack.c.0.s8 %v4634
        %v4636 = vperm.slane %v4632, %v4635
        %v4637 = vrot.slane %v4636, 4
        %v4638 = vsel %vm1349, 0, %v4637
        %v4639 = vsel %vm1349, %v4027, %v4020
        %v4641 = vunpack.c.l.s4 1983009808
        %v4642 = vunpack.c.0.s8 %v4641
        %v4643 = vperm.slane %v4639, %v4642
        %v4644 = vrot.slane %v4028, 4
        %v4645 = vsel %vm1349, %v4644, %v4026
        %v4647 = vunpack.c.l.s4 1983009808
        %v4648 = vunpack.c.0.s8 %v4647
        %v4649 = vperm.slane %v4645, %v4648
        %v4650 = vrot.slane %v4649, 4
        %v4651 = vsel %vm1349, %v4650, %v4643
        %v4653 = vunpack.c.l.s4 1934713408
        %v4654 = vunpack.c.0.s8 %v4653
        %v4655 = vperm.slane %v4651, %v4654
        %v4656 = vrot.slane %v4655, 4
        %v4657 = vsel %vm1349, 0, %v4656
        %v4658 = vsel %vm1349, %v4053, %v4046
        %v4660 = vunpack.c.l.s4 1983009808
        %v4661 = vunpack.c.0.s8 %v4660
        %v4662 = vperm.slane %v4658, %v4661
        %v4663 = vrot.slane %v4054, 4
        %v4664 = vsel %vm1349, %v4663, %v4052
        %v4666 = vunpack.c.l.s4 1983009808
        %v4667 = vunpack.c.0.s8 %v4666
        %v4668 = vperm.slane %v4664, %v4667
        %v4669 = vrot.slane %v4668, 4
        %v4670 = vsel %vm1349, %v4669, %v4662
        %v4672 = vunpack.c.l.s4 1934713408
        %v4673 = vunpack.c.0.s8 %v4672
        %v4674 = vperm.slane %v4670, %v4673
        %v4675 = vrot.slane %v4674, 4
        %v4676 = vsel %vm1349, 0, %v4675
        %v4677 = vsel %vm1349, %v4079, %v4072
        %v4679 = vunpack.c.l.s4 1983009808
        %v4680 = vunpack.c.0.s8 %v4679
        %v4681 = vperm.slane %v4677, %v4680
        %v4682 = vrot.slane %v4080, 4
        %v4683 = vsel %vm1349, %v4682, %v4078
        %v4685 = vunpack.c.l.s4 1983009808
        %v4686 = vunpack.c.0.s8 %v4685
        %v4687 = vperm.slane %v4683, %v4686
        %v4688 = vrot.slane %v4687, 4
        %v4689 = vsel %vm1349, %v4688, %v4681
        %v4691 = vunpack.c.l.s4 1934713408
        %v4692 = vunpack.c.0.s8 %v4691
        %v4693 = vperm.slane %v4689, %v4692
        %v4694 = vrot.slane %v4693, 4
        %v4695 = vsel %vm1349, 0, %v4694
        %v4696 = vsel %vm1349, %v4105, %v4098
        %v4698 = vunpack.c.l.s4 1983009808
        %v4699 = vunpack.c.0.s8 %v4698
        %v4700 = vperm.slane %v4696, %v4699
        %v4701 = vrot.slane %v4106, 4
        %v4702 = vsel %vm1349, %v4701, %v4104
        %v4704 = vunpack.c.l.s4 1983009808
        %v4705 = vunpack.c.0.s8 %v4704
        %v4706 = vperm.slane %v4702, %v4705
        %v4707 = vrot.slane %v4706, 4
        %v4708 = vsel %vm1349, %v4707, %v4700
        %v4710 = vunpack.c.l.s4 1934713408
        %v4711 = vunpack.c.0.s8 %v4710
        %v4712 = vperm.slane %v4708, %v4711
        %v4713 = vrot.slane %v4712, 4
        %v4714 = vsel %vm1349, 0, %v4713
        %v4717 = vpack.i.b16 %v4142, %v4123
        %v4718 = vshrl.u32 %v4123, 16
        %v4719 = vshrl.u32 %v4142, 16
        %v4720 = vpack.i.b16 %v4719, %v4718
        %v4723 = vpack.i.b16 %v4144, %v4125
        %v4724 = vshrl.u32 %v4125, 16
        %v4725 = vshrl.u32 %v4144, 16
        %v4726 = vpack.i.b16 %v4725, %v4724
        %v4729 = vpack.i.b16 %v4180, %v4161
        %v4730 = vshrl.u32 %v4161, 16
        %v4731 = vshrl.u32 %v4180, 16
        %v4732 = vpack.i.b16 %v4731, %v4730
        %v4735 = vpack.i.b16 %v4182, %v4163
        %v4736 = vshrl.u32 %v4163, 16
        %v4737 = vshrl.u32 %v4182, 16
        %v4738 = vpack.i.b16 %v4737, %v4736
        %v4741 = vpack.i.b16 %v4218, %v4199
        %v4742 = vshrl.u32 %v4199, 16
        %v4743 = vshrl.u32 %v4218, 16
        %v4744 = vpack.i.b16 %v4743, %v4742
        %v4747 = vpack.i.b16 %v4220, %v4201
        %v4748 = vshrl.u32 %v4201, 16
        %v4749 = vshrl.u32 %v4220, 16
        %v4750 = vpack.i.b16 %v4749, %v4748
        %v4753 = vpack.i.b16 %v4256, %v4237
        %v4754 = vshrl.u32 %v4237, 16
        %v4755 = vshrl.u32 %v4256, 16
        %v4756 = vpack.i.b16 %v4755, %v4754
        %v4759 = vpack.i.b16 %v4258, %v4239
        %v4760 = vshrl.u32 %v4239, 16
        %v4761 = vshrl.u32 %v4258, 16
        %v4762 = vpack.i.b16 %v4761, %v4760
        %v4765 = vpack.i.b16 %v4294, %v4275
        %v4766 = vshrl.u32 %v4275, 16
        %v4767 = vshrl.u32 %v4294, 16
        %v4768 = vpack.i.b16 %v4767, %v4766
        %v4771 = vpack.i.b16 %v4296, %v4277
        %v4772 = vshrl.u32 %v4277, 16
        %v4773 = vshrl.u32 %v4296, 16
        %v4774 = vpack.i.b16 %v4773, %v4772
        %v4777 = vpack.i.b16 %v4332, %v4313
        %v4778 = vshrl.u32 %v4313, 16
        %v4779 = vshrl.u32 %v4332, 16
        %v4780 = vpack.i.b16 %v4779, %v4778
        %v4783 = vpack.i.b16 %v4334, %v4315
        %v4784 = vshrl.u32 %v4315, 16
        %v4785 = vshrl.u32 %v4334, 16
        %v4786 = vpack.i.b16 %v4785, %v4784
        %v4789 = vpack.i.b16 %v4370, %v4351
        %v4790 = vshrl.u32 %v4351, 16
        %v4791 = vshrl.u32 %v4370, 16
        %v4792 = vpack.i.b16 %v4791, %v4790
        %v4795 = vpack.i.b16 %v4372, %v4353
        %v4796 = vshrl.u32 %v4353, 16
        %v4797 = vshrl.u32 %v4372, 16
        %v4798 = vpack.i.b16 %v4797, %v4796
        %v4801 = vpack.i.b16 %v4408, %v4389
        %v4802 = vshrl.u32 %v4389, 16
        %v4803 = vshrl.u32 %v4408, 16
        %v4804 = vpack.i.b16 %v4803, %v4802
        %v4807 = vpack.i.b16 %v4410, %v4391
        %v4808 = vshrl.u32 %v4391, 16
        %v4809 = vshrl.u32 %v4410, 16
        %v4810 = vpack.i.b16 %v4809, %v4808
        %v4813 = vpack.i.b16 %v4446, %v4427
        %v4814 = vshrl.u32 %v4427, 16
        %v4815 = vshrl.u32 %v4446, 16
        %v4816 = vpack.i.b16 %v4815, %v4814
        %v4819 = vpack.i.b16 %v4448, %v4429
        %v4820 = vshrl.u32 %v4429, 16
        %v4821 = vshrl.u32 %v4448, 16
        %v4822 = vpack.i.b16 %v4821, %v4820
        %v4825 = vpack.i.b16 %v4484, %v4465
        %v4826 = vshrl.u32 %v4465, 16
        %v4827 = vshrl.u32 %v4484, 16
        %v4828 = vpack.i.b16 %v4827, %v4826
        %v4831 = vpack.i.b16 %v4486, %v4467
        %v4832 = vshrl.u32 %v4467, 16
        %v4833 = vshrl.u32 %v4486, 16
        %v4834 = vpack.i.b16 %v4833, %v4832
        %v4837 = vpack.i.b16 %v4522, %v4503
        %v4838 = vshrl.u32 %v4503, 16
        %v4839 = vshrl.u32 %v4522, 16
        %v4840 = vpack.i.b16 %v4839, %v4838
        %v4843 = vpack.i.b16 %v4524, %v4505
        %v4844 = vshrl.u32 %v4505, 16
        %v4845 = vshrl.u32 %v4524, 16
        %v4846 = vpack.i.b16 %v4845, %v4844
        %v4849 = vpack.i.b16 %v4560, %v4541
        %v4850 = vshrl.u32 %v4541, 16
        %v4851 = vshrl.u32 %v4560, 16
        %v4852 = vpack.i.b16 %v4851, %v4850
        %v4855 = vpack.i.b16 %v4562, %v4543
        %v4856 = vshrl.u32 %v4543, 16
        %v4857 = vshrl.u32 %v4562, 16
        %v4858 = vpack.i.b16 %v4857, %v4856
        %v4861 = vpack.i.b16 %v4598, %v4579
        %v4862 = vshrl.u32 %v4579, 16
        %v4863 = vshrl.u32 %v4598, 16
        %v4864 = vpack.i.b16 %v4863, %v4862
        %v4867 = vpack.i.b16 %v4600, %v4581
        %v4868 = vshrl.u32 %v4581, 16
        %v4869 = vshrl.u32 %v4600, 16
        %v4870 = vpack.i.b16 %v4869, %v4868
        %v4873 = vpack.i.b16 %v4636, %v4617
        %v4874 = vshrl.u32 %v4617, 16
        %v4875 = vshrl.u32 %v4636, 16
        %v4876 = vpack.i.b16 %v4875, %v4874
        %v4879 = vpack.i.b16 %v4638, %v4619
        %v4880 = vshrl.u32 %v4619, 16
        %v4881 = vshrl.u32 %v4638, 16
        %v4882 = vpack.i.b16 %v4881, %v4880
        %v4885 = vpack.i.b16 %v4674, %v4655
        %v4886 = vshrl.u32 %v4655, 16
        %v4887 = vshrl.u32 %v4674, 16
        %v4888 = vpack.i.b16 %v4887, %v4886
        %v4891 = vpack.i.b16 %v4676, %v4657
        %v4892 = vshrl.u32 %v4657, 16
        %v4893 = vshrl.u32 %v4676, 16
        %v4894 = vpack.i.b16 %v4893, %v4892
        %v4897 = vpack.i.b16 %v4712, %v4693
        %v4898 = vshrl.u32 %v4693, 16
        %v4899 = vshrl.u32 %v4712, 16
        %v4900 = vpack.i.b16 %v4899, %v4898
        %v4903 = vpack.i.b16 %v4714, %v4695
        %v4904 = vshrl.u32 %v4695, 16
        %v4905 = vshrl.u32 %v4714, 16
        %v4906 = vpack.i.b16 %v4905, %v4904
        %4923 = vrot.lane.b32.xlu0 %v1018, 96
        %v4924 = vpop.permute.xlu0 %4923
        %4925 = vrot.lane.b32.xlu0 %v1019, 96
        %v4926 = vpop.permute.xlu0 %4925
        %4927 = vrot.lane.b32.xlu0 %v1020, 96
        %v4928 = vpop.permute.xlu0 %4927
        %4929 = vrot.lane.b32.xlu0 %v1021, 96
        %v4930 = vpop.permute.xlu0 %4929
        %4931 = vrot.lane.b32.xlu0 %v1022, 96
        %v4932 = vpop.permute.xlu0 %4931
        %4933 = vrot.lane.b32.xlu0 %v1023, 96
        %v4934 = vpop.permute.xlu0 %4933
        %4935 = vrot.lane.b32.xlu0 %v1024, 96
        %v4936 = vpop.permute.xlu0 %4935
        %4937 = vrot.lane.b32.xlu0 %v1025, 96
        %v4938 = vpop.permute.xlu0 %4937
        %4939 = vrot.lane.b32.xlu0 %v1026, 96
        %v4940 = vpop.permute.xlu0 %4939
        %4941 = vrot.lane.b32.xlu0 %v1027, 96
        %v4942 = vpop.permute.xlu0 %4941
        %4943 = vrot.lane.b32.xlu0 %v1028, 96
        %v4944 = vpop.permute.xlu0 %4943
        %4945 = vrot.lane.b32.xlu0 %v1029, 96
        %v4946 = vpop.permute.xlu0 %4945
        %4947 = vrot.lane.b32.xlu0 %v1030, 96
        %v4948 = vpop.permute.xlu0 %4947
        %4949 = vrot.lane.b32.xlu0 %v1031, 96
        %v4950 = vpop.permute.xlu0 %4949
        %4951 = vrot.lane.b32.xlu0 %v1032, 96
        %v4952 = vpop.permute.xlu0 %4951
        %4953 = vrot.lane.b32.xlu0 %v1033, 96
        %v4954 = vpop.permute.xlu0 %4953
        %4955 = vrot.lane.b32.xlu0 %v1018, 64
        %v4956 = vpop.permute.xlu0 %4955
        %4957 = vrot.lane.b32.xlu0 %v1019, 64
        %v4958 = vpop.permute.xlu0 %4957
        %4959 = vrot.lane.b32.xlu0 %v1020, 64
        %v4960 = vpop.permute.xlu0 %4959
        %4961 = vrot.lane.b32.xlu0 %v1021, 64
        %v4962 = vpop.permute.xlu0 %4961
        %4963 = vrot.lane.b32.xlu0 %v1022, 64
        %v4964 = vpop.permute.xlu0 %4963
        %4965 = vrot.lane.b32.xlu0 %v1023, 64
        %v4966 = vpop.permute.xlu0 %4965
        %4967 = vrot.lane.b32.xlu0 %v1024, 64
        %v4968 = vpop.permute.xlu0 %4967
        %4969 = vrot.lane.b32.xlu0 %v1025, 64
        %v4970 = vpop.permute.xlu0 %4969
        %4971 = vrot.lane.b32.xlu0 %v1026, 64
        %v4972 = vpop.permute.xlu0 %4971
        %4973 = vrot.lane.b32.xlu0 %v1027, 64
        %v4974 = vpop.permute.xlu0 %4973
        %4975 = vrot.lane.b32.xlu0 %v1028, 64
        %v4976 = vpop.permute.xlu0 %4975
        %4977 = vrot.lane.b32.xlu0 %v1029, 64
        %v4978 = vpop.permute.xlu0 %4977
        %4979 = vrot.lane.b32.xlu0 %v1030, 64
        %v4980 = vpop.permute.xlu0 %4979
        %4981 = vrot.lane.b32.xlu0 %v1031, 64
        %v4982 = vpop.permute.xlu0 %4981
        %4983 = vrot.lane.b32.xlu0 %v1032, 64
        %v4984 = vpop.permute.xlu0 %4983
        %4985 = vrot.lane.b32.xlu0 %v1033, 64
        %v4986 = vpop.permute.xlu0 %4985
        %4987 = vrot.lane.b32.xlu0 %v1018, 32
        %v4988 = vpop.permute.xlu0 %4987
        %4989 = vrot.lane.b32.xlu0 %v1019, 32
        %v4990 = vpop.permute.xlu0 %4989
        %4991 = vrot.lane.b32.xlu0 %v1020, 32
        %v4992 = vpop.permute.xlu0 %4991
        %4993 = vrot.lane.b32.xlu0 %v1021, 32
        %v4994 = vpop.permute.xlu0 %4993
        %4995 = vrot.lane.b32.xlu0 %v1022, 32
        %v4996 = vpop.permute.xlu0 %4995
        %4997 = vrot.lane.b32.xlu0 %v1023, 32
        %v4998 = vpop.permute.xlu0 %4997
        %4999 = vrot.lane.b32.xlu0 %v1024, 32
        %v5000 = vpop.permute.xlu0 %4999
        %5001 = vrot.lane.b32.xlu0 %v1025, 32
        %v5002 = vpop.permute.xlu0 %5001
        %5003 = vrot.lane.b32.xlu0 %v1026, 32
        %v5004 = vpop.permute.xlu0 %5003
        %5005 = vrot.lane.b32.xlu0 %v1027, 32
        %v5006 = vpop.permute.xlu0 %5005
        %5007 = vrot.lane.b32.xlu0 %v1028, 32
        %v5008 = vpop.permute.xlu0 %5007
        %5009 = vrot.lane.b32.xlu0 %v1029, 32
        %v5010 = vpop.permute.xlu0 %5009
        %5011 = vrot.lane.b32.xlu0 %v1030, 32
        %v5012 = vpop.permute.xlu0 %5011
        %5013 = vrot.lane.b32.xlu0 %v1031, 32
        %v5014 = vpop.permute.xlu0 %5013
        %5015 = vrot.lane.b32.xlu0 %v1032, 32
        %v5016 = vpop.permute.xlu0 %5015
        %5017 = vrot.lane.b32.xlu0 %v1033, 32
        %v5018 = vpop.permute.xlu0 %5017
        %v5021 = vpack.i.b16 %v4924, %v1018
        %v5022 = vshrl.u32 %v1018, 16
        %v5023 = vshrl.u32 %v4924, 16
        %v5024 = vpack.i.b16 %v5023, %v5022
        %v5027 = vpack.i.b16 %v4988, %v4956
        %v5028 = vshrl.u32 %v4956, 16
        %v5029 = vshrl.u32 %v4988, 16
        %v5030 = vpack.i.b16 %v5029, %v5028
        %v5033 = vpack.i.b16 %v4926, %v1019
        %v5034 = vshrl.u32 %v1019, 16
        %v5035 = vshrl.u32 %v4926, 16
        %v5036 = vpack.i.b16 %v5035, %v5034
        %v5039 = vpack.i.b16 %v4990, %v4958
        %v5040 = vshrl.u32 %v4958, 16
        %v5041 = vshrl.u32 %v4990, 16
        %v5042 = vpack.i.b16 %v5041, %v5040
        %v5045 = vpack.i.b16 %v4928, %v1020
        %v5046 = vshrl.u32 %v1020, 16
        %v5047 = vshrl.u32 %v4928, 16
        %v5048 = vpack.i.b16 %v5047, %v5046
        %v5051 = vpack.i.b16 %v4992, %v4960
        %v5052 = vshrl.u32 %v4960, 16
        %v5053 = vshrl.u32 %v4992, 16
        %v5054 = vpack.i.b16 %v5053, %v5052
        %v5057 = vpack.i.b16 %v4930, %v1021
        %v5058 = vshrl.u32 %v1021, 16
        %v5059 = vshrl.u32 %v4930, 16
        %v5060 = vpack.i.b16 %v5059, %v5058
        %v5063 = vpack.i.b16 %v4994, %v4962
        %v5064 = vshrl.u32 %v4962, 16
        %v5065 = vshrl.u32 %v4994, 16
        %v5066 = vpack.i.b16 %v5065, %v5064
        %v5069 = vpack.i.b16 %v4932, %v1022
        %v5070 = vshrl.u32 %v1022, 16
        %v5071 = vshrl.u32 %v4932, 16
        %v5072 = vpack.i.b16 %v5071, %v5070
        %v5075 = vpack.i.b16 %v4996, %v4964
        %v5076 = vshrl.u32 %v4964, 16
        %v5077 = vshrl.u32 %v4996, 16
        %v5078 = vpack.i.b16 %v5077, %v5076
        %v5081 = vpack.i.b16 %v4934, %v1023
        %v5082 = vshrl.u32 %v1023, 16
        %v5083 = vshrl.u32 %v4934, 16
        %v5084 = vpack.i.b16 %v5083, %v5082
        %v5087 = vpack.i.b16 %v4998, %v4966
        %v5088 = vshrl.u32 %v4966, 16
        %v5089 = vshrl.u32 %v4998, 16
        %v5090 = vpack.i.b16 %v5089, %v5088
        %v5093 = vpack.i.b16 %v4936, %v1024
        %v5094 = vshrl.u32 %v1024, 16
        %v5095 = vshrl.u32 %v4936, 16
        %v5096 = vpack.i.b16 %v5095, %v5094
        %v5099 = vpack.i.b16 %v5000, %v4968
        %v5100 = vshrl.u32 %v4968, 16
        %v5101 = vshrl.u32 %v5000, 16
        %v5102 = vpack.i.b16 %v5101, %v5100
        %v5105 = vpack.i.b16 %v4938, %v1025
        %v5106 = vshrl.u32 %v1025, 16
        %v5107 = vshrl.u32 %v4938, 16
        %v5108 = vpack.i.b16 %v5107, %v5106
        %v5111 = vpack.i.b16 %v5002, %v4970
        %v5112 = vshrl.u32 %v4970, 16
        %v5113 = vshrl.u32 %v5002, 16
        %v5114 = vpack.i.b16 %v5113, %v5112
        %v5117 = vpack.i.b16 %v4940, %v1026
        %v5118 = vshrl.u32 %v1026, 16
        %v5119 = vshrl.u32 %v4940, 16
        %v5120 = vpack.i.b16 %v5119, %v5118
        %v5123 = vpack.i.b16 %v5004, %v4972
        %v5124 = vshrl.u32 %v4972, 16
        %v5125 = vshrl.u32 %v5004, 16
        %v5126 = vpack.i.b16 %v5125, %v5124
        %v5129 = vpack.i.b16 %v4942, %v1027
        %v5130 = vshrl.u32 %v1027, 16
        %v5131 = vshrl.u32 %v4942, 16
        %v5132 = vpack.i.b16 %v5131, %v5130
        %v5135 = vpack.i.b16 %v5006, %v4974
        %v5136 = vshrl.u32 %v4974, 16
        %v5137 = vshrl.u32 %v5006, 16
        %v5138 = vpack.i.b16 %v5137, %v5136
        %v5141 = vpack.i.b16 %v4944, %v1028
        %v5142 = vshrl.u32 %v1028, 16
        %v5143 = vshrl.u32 %v4944, 16
        %v5144 = vpack.i.b16 %v5143, %v5142
        %v5147 = vpack.i.b16 %v5008, %v4976
        %v5148 = vshrl.u32 %v4976, 16
        %v5149 = vshrl.u32 %v5008, 16
        %v5150 = vpack.i.b16 %v5149, %v5148
        %v5153 = vpack.i.b16 %v4946, %v1029
        %v5154 = vshrl.u32 %v1029, 16
        %v5155 = vshrl.u32 %v4946, 16
        %v5156 = vpack.i.b16 %v5155, %v5154
        %v5159 = vpack.i.b16 %v5010, %v4978
        %v5160 = vshrl.u32 %v4978, 16
        %v5161 = vshrl.u32 %v5010, 16
        %v5162 = vpack.i.b16 %v5161, %v5160
        %v5165 = vpack.i.b16 %v4948, %v1030
        %v5166 = vshrl.u32 %v1030, 16
        %v5167 = vshrl.u32 %v4948, 16
        %v5168 = vpack.i.b16 %v5167, %v5166
        %v5171 = vpack.i.b16 %v5012, %v4980
        %v5172 = vshrl.u32 %v4980, 16
        %v5173 = vshrl.u32 %v5012, 16
        %v5174 = vpack.i.b16 %v5173, %v5172
        %v5177 = vpack.i.b16 %v4950, %v1031
        %v5178 = vshrl.u32 %v1031, 16
        %v5179 = vshrl.u32 %v4950, 16
        %v5180 = vpack.i.b16 %v5179, %v5178
        %v5183 = vpack.i.b16 %v5014, %v4982
        %v5184 = vshrl.u32 %v4982, 16
        %v5185 = vshrl.u32 %v5014, 16
        %v5186 = vpack.i.b16 %v5185, %v5184
        %v5189 = vpack.i.b16 %v4952, %v1032
        %v5190 = vshrl.u32 %v1032, 16
        %v5191 = vshrl.u32 %v4952, 16
        %v5192 = vpack.i.b16 %v5191, %v5190
        %v5195 = vpack.i.b16 %v5016, %v4984
        %v5196 = vshrl.u32 %v4984, 16
        %v5197 = vshrl.u32 %v5016, 16
        %v5198 = vpack.i.b16 %v5197, %v5196
        %v5201 = vpack.i.b16 %v4954, %v1033
        %v5202 = vshrl.u32 %v1033, 16
        %v5203 = vshrl.u32 %v4954, 16
        %v5204 = vpack.i.b16 %v5203, %v5202
        %v5207 = vpack.i.b16 %v5018, %v4986
        %v5208 = vshrl.u32 %v4986, 16
        %v5209 = vshrl.u32 %v5018, 16
        %v5210 = vpack.i.b16 %v5209, %v5208
        %v5213 = vunpack.c.l.s4 1983009808
        %v5214 = vunpack.c.0.s8 %v5213
        %v5215 = vperm.slane %v5021, %v5214
        %v5218 = vunpack.c.l.s4 1983009808
        %v5219 = vunpack.c.0.s8 %v5218
        %v5220 = vperm.slane %v5027, %v5219
        %v5221 = vrot.slane %v5220, 4
        %v5222 = vsel %vm1349, %v5221, %v5215
        %v5223 = vrot.slane %v5215, 4
        %v5224 = vsel %vm1349, %v5220, %v5223
        %v5226 = vunpack.c.l.s4 1934713408
        %v5227 = vunpack.c.0.s8 %v5226
        %v5228 = vperm.slane %v5222, %v5227
        %v5230 = vunpack.c.l.s4 1934713408
        %v5231 = vunpack.c.0.s8 %v5230
        %v5232 = vperm.slane %v5224, %v5231
        %v5233 = vrot.slane %v5228, 4
        %v5234 = vsel %vm1349, 0, %v5233
        %v5235 = vrot.slane %v5232, 4
        %v5236 = vsel %vm1349, 0, %v5235
        %v5239 = vunpack.c.l.s4 1983009808
        %v5240 = vunpack.c.0.s8 %v5239
        %v5241 = vperm.slane %v5024, %v5240
        %v5244 = vunpack.c.l.s4 1983009808
        %v5245 = vunpack.c.0.s8 %v5244
        %v5246 = vperm.slane %v5030, %v5245
        %v5247 = vrot.slane %v5246, 4
        %v5248 = vsel %vm1349, %v5247, %v5241
        %v5249 = vrot.slane %v5241, 4
        %v5250 = vsel %vm1349, %v5246, %v5249
        %v5252 = vunpack.c.l.s4 1934713408
        %v5253 = vunpack.c.0.s8 %v5252
        %v5254 = vperm.slane %v5248, %v5253
        %v5256 = vunpack.c.l.s4 1934713408
        %v5257 = vunpack.c.0.s8 %v5256
        %v5258 = vperm.slane %v5250, %v5257
        %v5259 = vrot.slane %v5254, 4
        %v5260 = vsel %vm1349, 0, %v5259
        %v5261 = vrot.slane %v5258, 4
        %v5262 = vsel %vm1349, 0, %v5261
        %v5265 = vunpack.c.l.s4 1983009808
        %v5266 = vunpack.c.0.s8 %v5265
        %v5267 = vperm.slane %v5033, %v5266
        %v5270 = vunpack.c.l.s4 1983009808
        %v5271 = vunpack.c.0.s8 %v5270
        %v5272 = vperm.slane %v5039, %v5271
        %v5273 = vrot.slane %v5272, 4
        %v5274 = vsel %vm1349, %v5273, %v5267
        %v5275 = vrot.slane %v5267, 4
        %v5276 = vsel %vm1349, %v5272, %v5275
        %v5278 = vunpack.c.l.s4 1934713408
        %v5279 = vunpack.c.0.s8 %v5278
        %v5280 = vperm.slane %v5274, %v5279
        %v5282 = vunpack.c.l.s4 1934713408
        %v5283 = vunpack.c.0.s8 %v5282
        %v5284 = vperm.slane %v5276, %v5283
        %v5285 = vrot.slane %v5280, 4
        %v5286 = vsel %vm1349, 0, %v5285
        %v5287 = vrot.slane %v5284, 4
        %v5288 = vsel %vm1349, 0, %v5287
        %v5291 = vunpack.c.l.s4 1983009808
        %v5292 = vunpack.c.0.s8 %v5291
        %v5293 = vperm.slane %v5036, %v5292
        %v5296 = vunpack.c.l.s4 1983009808
        %v5297 = vunpack.c.0.s8 %v5296
        %v5298 = vperm.slane %v5042, %v5297
        %v5299 = vrot.slane %v5298, 4
        %v5300 = vsel %vm1349, %v5299, %v5293
        %v5301 = vrot.slane %v5293, 4
        %v5302 = vsel %vm1349, %v5298, %v5301
        %v5304 = vunpack.c.l.s4 1934713408
        %v5305 = vunpack.c.0.s8 %v5304
        %v5306 = vperm.slane %v5300, %v5305
        %v5308 = vunpack.c.l.s4 1934713408
        %v5309 = vunpack.c.0.s8 %v5308
        %v5310 = vperm.slane %v5302, %v5309
        %v5311 = vrot.slane %v5306, 4
        %v5312 = vsel %vm1349, 0, %v5311
        %v5313 = vrot.slane %v5310, 4
        %v5314 = vsel %vm1349, 0, %v5313
        %v5317 = vunpack.c.l.s4 1983009808
        %v5318 = vunpack.c.0.s8 %v5317
        %v5319 = vperm.slane %v5045, %v5318
        %v5322 = vunpack.c.l.s4 1983009808
        %v5323 = vunpack.c.0.s8 %v5322
        %v5324 = vperm.slane %v5051, %v5323
        %v5325 = vrot.slane %v5324, 4
        %v5326 = vsel %vm1349, %v5325, %v5319
        %v5327 = vrot.slane %v5319, 4
        %v5328 = vsel %vm1349, %v5324, %v5327
        %v5330 = vunpack.c.l.s4 1934713408
        %v5331 = vunpack.c.0.s8 %v5330
        %v5332 = vperm.slane %v5326, %v5331
        %v5334 = vunpack.c.l.s4 1934713408
        %v5335 = vunpack.c.0.s8 %v5334
        %v5336 = vperm.slane %v5328, %v5335
        %v5337 = vrot.slane %v5332, 4
        %v5338 = vsel %vm1349, 0, %v5337
        %v5339 = vrot.slane %v5336, 4
        %v5340 = vsel %vm1349, 0, %v5339
        %v5343 = vunpack.c.l.s4 1983009808
        %v5344 = vunpack.c.0.s8 %v5343
        %v5345 = vperm.slane %v5048, %v5344
        %v5348 = vunpack.c.l.s4 1983009808
        %v5349 = vunpack.c.0.s8 %v5348
        %v5350 = vperm.slane %v5054, %v5349
        %v5351 = vrot.slane %v5350, 4
        %v5352 = vsel %vm1349, %v5351, %v5345
        %v5353 = vrot.slane %v5345, 4
        %v5354 = vsel %vm1349, %v5350, %v5353
        %v5356 = vunpack.c.l.s4 1934713408
        %v5357 = vunpack.c.0.s8 %v5356
        %v5358 = vperm.slane %v5352, %v5357
        %v5360 = vunpack.c.l.s4 1934713408
        %v5361 = vunpack.c.0.s8 %v5360
        %v5362 = vperm.slane %v5354, %v5361
        %v5363 = vrot.slane %v5358, 4
        %v5364 = vsel %vm1349, 0, %v5363
        %v5365 = vrot.slane %v5362, 4
        %v5366 = vsel %vm1349, 0, %v5365
        %v5369 = vunpack.c.l.s4 1983009808
        %v5370 = vunpack.c.0.s8 %v5369
        %v5371 = vperm.slane %v5057, %v5370
        %v5374 = vunpack.c.l.s4 1983009808
        %v5375 = vunpack.c.0.s8 %v5374
        %v5376 = vperm.slane %v5063, %v5375
        %v5377 = vrot.slane %v5376, 4
        %v5378 = vsel %vm1349, %v5377, %v5371
        %v5379 = vrot.slane %v5371, 4
        %v5380 = vsel %vm1349, %v5376, %v5379
        %v5382 = vunpack.c.l.s4 1934713408
        %v5383 = vunpack.c.0.s8 %v5382
        %v5384 = vperm.slane %v5378, %v5383
        %v5386 = vunpack.c.l.s4 1934713408
        %v5387 = vunpack.c.0.s8 %v5386
        %v5388 = vperm.slane %v5380, %v5387
        %v5389 = vrot.slane %v5384, 4
        %v5390 = vsel %vm1349, 0, %v5389
        %v5391 = vrot.slane %v5388, 4
        %v5392 = vsel %vm1349, 0, %v5391
        %v5395 = vunpack.c.l.s4 1983009808
        %v5396 = vunpack.c.0.s8 %v5395
        %v5397 = vperm.slane %v5060, %v5396
        %v5400 = vunpack.c.l.s4 1983009808
        %v5401 = vunpack.c.0.s8 %v5400
        %v5402 = vperm.slane %v5066, %v5401
        %v5403 = vrot.slane %v5402, 4
        %v5404 = vsel %vm1349, %v5403, %v5397
        %v5405 = vrot.slane %v5397, 4
        %v5406 = vsel %vm1349, %v5402, %v5405
        %v5408 = vunpack.c.l.s4 1934713408
        %v5409 = vunpack.c.0.s8 %v5408
        %v5410 = vperm.slane %v5404, %v5409
        %v5412 = vunpack.c.l.s4 1934713408
        %v5413 = vunpack.c.0.s8 %v5412
        %v5414 = vperm.slane %v5406, %v5413
        %v5415 = vrot.slane %v5410, 4
        %v5416 = vsel %vm1349, 0, %v5415
        %v5417 = vrot.slane %v5414, 4
        %v5418 = vsel %vm1349, 0, %v5417
        %v5421 = vunpack.c.l.s4 1983009808
        %v5422 = vunpack.c.0.s8 %v5421
        %v5423 = vperm.slane %v5069, %v5422
        %v5426 = vunpack.c.l.s4 1983009808
        %v5427 = vunpack.c.0.s8 %v5426
        %v5428 = vperm.slane %v5075, %v5427
        %v5429 = vrot.slane %v5428, 4
        %v5430 = vsel %vm1349, %v5429, %v5423
        %v5431 = vrot.slane %v5423, 4
        %v5432 = vsel %vm1349, %v5428, %v5431
        %v5434 = vunpack.c.l.s4 1934713408
        %v5435 = vunpack.c.0.s8 %v5434
        %v5436 = vperm.slane %v5430, %v5435
        %v5438 = vunpack.c.l.s4 1934713408
        %v5439 = vunpack.c.0.s8 %v5438
        %v5440 = vperm.slane %v5432, %v5439
        %v5441 = vrot.slane %v5436, 4
        %v5442 = vsel %vm1349, 0, %v5441
        %v5443 = vrot.slane %v5440, 4
        %v5444 = vsel %vm1349, 0, %v5443
        %v5447 = vunpack.c.l.s4 1983009808
        %v5448 = vunpack.c.0.s8 %v5447
        %v5449 = vperm.slane %v5072, %v5448
        %v5452 = vunpack.c.l.s4 1983009808
        %v5453 = vunpack.c.0.s8 %v5452
        %v5454 = vperm.slane %v5078, %v5453
        %v5455 = vrot.slane %v5454, 4
        %v5456 = vsel %vm1349, %v5455, %v5449
        %v5457 = vrot.slane %v5449, 4
        %v5458 = vsel %vm1349, %v5454, %v5457
        %v5460 = vunpack.c.l.s4 1934713408
        %v5461 = vunpack.c.0.s8 %v5460
        %v5462 = vperm.slane %v5456, %v5461
        %v5464 = vunpack.c.l.s4 1934713408
        %v5465 = vunpack.c.0.s8 %v5464
        %v5466 = vperm.slane %v5458, %v5465
        %v5467 = vrot.slane %v5462, 4
        %v5468 = vsel %vm1349, 0, %v5467
        %v5469 = vrot.slane %v5466, 4
        %v5470 = vsel %vm1349, 0, %v5469
        %v5473 = vunpack.c.l.s4 1983009808
        %v5474 = vunpack.c.0.s8 %v5473
        %v5475 = vperm.slane %v5081, %v5474
        %v5478 = vunpack.c.l.s4 1983009808
        %v5479 = vunpack.c.0.s8 %v5478
        %v5480 = vperm.slane %v5087, %v5479
        %v5481 = vrot.slane %v5480, 4
        %v5482 = vsel %vm1349, %v5481, %v5475
        %v5483 = vrot.slane %v5475, 4
        %v5484 = vsel %vm1349, %v5480, %v5483
        %v5486 = vunpack.c.l.s4 1934713408
        %v5487 = vunpack.c.0.s8 %v5486
        %v5488 = vperm.slane %v5482, %v5487
        %v5490 = vunpack.c.l.s4 1934713408
        %v5491 = vunpack.c.0.s8 %v5490
        %v5492 = vperm.slane %v5484, %v5491
        %v5493 = vrot.slane %v5488, 4
        %v5494 = vsel %vm1349, 0, %v5493
        %v5495 = vrot.slane %v5492, 4
        %v5496 = vsel %vm1349, 0, %v5495
        %v5499 = vunpack.c.l.s4 1983009808
        %v5500 = vunpack.c.0.s8 %v5499
        %v5501 = vperm.slane %v5084, %v5500
        %v5504 = vunpack.c.l.s4 1983009808
        %v5505 = vunpack.c.0.s8 %v5504
        %v5506 = vperm.slane %v5090, %v5505
        %v5507 = vrot.slane %v5506, 4
        %v5508 = vsel %vm1349, %v5507, %v5501
        %v5509 = vrot.slane %v5501, 4
        %v5510 = vsel %vm1349, %v5506, %v5509
        %v5512 = vunpack.c.l.s4 1934713408
        %v5513 = vunpack.c.0.s8 %v5512
        %v5514 = vperm.slane %v5508, %v5513
        %v5516 = vunpack.c.l.s4 1934713408
        %v5517 = vunpack.c.0.s8 %v5516
        %v5518 = vperm.slane %v5510, %v5517
        %v5519 = vrot.slane %v5514, 4
        %v5520 = vsel %vm1349, 0, %v5519
        %v5521 = vrot.slane %v5518, 4
        %v5522 = vsel %vm1349, 0, %v5521
        %v5525 = vunpack.c.l.s4 1983009808
        %v5526 = vunpack.c.0.s8 %v5525
        %v5527 = vperm.slane %v5093, %v5526
        %v5530 = vunpack.c.l.s4 1983009808
        %v5531 = vunpack.c.0.s8 %v5530
        %v5532 = vperm.slane %v5099, %v5531
        %v5533 = vrot.slane %v5532, 4
        %v5534 = vsel %vm1349, %v5533, %v5527
        %v5535 = vrot.slane %v5527, 4
        %v5536 = vsel %vm1349, %v5532, %v5535
        %v5538 = vunpack.c.l.s4 1934713408
        %v5539 = vunpack.c.0.s8 %v5538
        %v5540 = vperm.slane %v5534, %v5539
        %v5542 = vunpack.c.l.s4 1934713408
        %v5543 = vunpack.c.0.s8 %v5542
        %v5544 = vperm.slane %v5536, %v5543
        %v5545 = vrot.slane %v5540, 4
        %v5546 = vsel %vm1349, 0, %v5545
        %v5547 = vrot.slane %v5544, 4
        %v5548 = vsel %vm1349, 0, %v5547
        %v5551 = vunpack.c.l.s4 1983009808
        %v5552 = vunpack.c.0.s8 %v5551
        %v5553 = vperm.slane %v5096, %v5552
        %v5556 = vunpack.c.l.s4 1983009808
        %v5557 = vunpack.c.0.s8 %v5556
        %v5558 = vperm.slane %v5102, %v5557
        %v5559 = vrot.slane %v5558, 4
        %v5560 = vsel %vm1349, %v5559, %v5553
        %v5561 = vrot.slane %v5553, 4
        %v5562 = vsel %vm1349, %v5558, %v5561
        %v5564 = vunpack.c.l.s4 1934713408
        %v5565 = vunpack.c.0.s8 %v5564
        %v5566 = vperm.slane %v5560, %v5565
        %v5568 = vunpack.c.l.s4 1934713408
        %v5569 = vunpack.c.0.s8 %v5568
        %v5570 = vperm.slane %v5562, %v5569
        %v5571 = vrot.slane %v5566, 4
        %v5572 = vsel %vm1349, 0, %v5571
        %v5573 = vrot.slane %v5570, 4
        %v5574 = vsel %vm1349, 0, %v5573
        %v5577 = vunpack.c.l.s4 1983009808
        %v5578 = vunpack.c.0.s8 %v5577
        %v5579 = vperm.slane %v5105, %v5578
        %v5582 = vunpack.c.l.s4 1983009808
        %v5583 = vunpack.c.0.s8 %v5582
        %v5584 = vperm.slane %v5111, %v5583
        %v5585 = vrot.slane %v5584, 4
        %v5586 = vsel %vm1349, %v5585, %v5579
        %v5587 = vrot.slane %v5579, 4
        %v5588 = vsel %vm1349, %v5584, %v5587
        %v5590 = vunpack.c.l.s4 1934713408
        %v5591 = vunpack.c.0.s8 %v5590
        %v5592 = vperm.slane %v5586, %v5591
        %v5594 = vunpack.c.l.s4 1934713408
        %v5595 = vunpack.c.0.s8 %v5594
        %v5596 = vperm.slane %v5588, %v5595
        %v5597 = vrot.slane %v5592, 4
        %v5598 = vsel %vm1349, 0, %v5597
        %v5599 = vrot.slane %v5596, 4
        %v5600 = vsel %vm1349, 0, %v5599
        %v5603 = vunpack.c.l.s4 1983009808
        %v5604 = vunpack.c.0.s8 %v5603
        %v5605 = vperm.slane %v5108, %v5604
        %v5608 = vunpack.c.l.s4 1983009808
        %v5609 = vunpack.c.0.s8 %v5608
        %v5610 = vperm.slane %v5114, %v5609
        %v5611 = vrot.slane %v5610, 4
        %v5612 = vsel %vm1349, %v5611, %v5605
        %v5613 = vrot.slane %v5605, 4
        %v5614 = vsel %vm1349, %v5610, %v5613
        %v5616 = vunpack.c.l.s4 1934713408
        %v5617 = vunpack.c.0.s8 %v5616
        %v5618 = vperm.slane %v5612, %v5617
        %v5620 = vunpack.c.l.s4 1934713408
        %v5621 = vunpack.c.0.s8 %v5620
        %v5622 = vperm.slane %v5614, %v5621
        %v5623 = vrot.slane %v5618, 4
        %v5624 = vsel %vm1349, 0, %v5623
        %v5625 = vrot.slane %v5622, 4
        %v5626 = vsel %vm1349, 0, %v5625
        %v5629 = vunpack.c.l.s4 1983009808
        %v5630 = vunpack.c.0.s8 %v5629
        %v5631 = vperm.slane %v5117, %v5630
        %v5634 = vunpack.c.l.s4 1983009808
        %v5635 = vunpack.c.0.s8 %v5634
        %v5636 = vperm.slane %v5123, %v5635
        %v5637 = vrot.slane %v5636, 4
        %v5638 = vsel %vm1349, %v5637, %v5631
        %v5639 = vrot.slane %v5631, 4
        %v5640 = vsel %vm1349, %v5636, %v5639
        %v5642 = vunpack.c.l.s4 1934713408
        %v5643 = vunpack.c.0.s8 %v5642
        %v5644 = vperm.slane %v5638, %v5643
        %v5646 = vunpack.c.l.s4 1934713408
        %v5647 = vunpack.c.0.s8 %v5646
        %v5648 = vperm.slane %v5640, %v5647
        %v5649 = vrot.slane %v5644, 4
        %v5650 = vsel %vm1349, 0, %v5649
        %v5651 = vrot.slane %v5648, 4
        %v5652 = vsel %vm1349, 0, %v5651
        %v5655 = vunpack.c.l.s4 1983009808
        %v5656 = vunpack.c.0.s8 %v5655
        %v5657 = vperm.slane %v5120, %v5656
        %v5660 = vunpack.c.l.s4 1983009808
        %v5661 = vunpack.c.0.s8 %v5660
        %v5662 = vperm.slane %v5126, %v5661
        %v5663 = vrot.slane %v5662, 4
        %v5664 = vsel %vm1349, %v5663, %v5657
        %v5665 = vrot.slane %v5657, 4
        %v5666 = vsel %vm1349, %v5662, %v5665
        %v5668 = vunpack.c.l.s4 1934713408
        %v5669 = vunpack.c.0.s8 %v5668
        %v5670 = vperm.slane %v5664, %v5669
        %v5672 = vunpack.c.l.s4 1934713408
        %v5673 = vunpack.c.0.s8 %v5672
        %v5674 = vperm.slane %v5666, %v5673
        %v5675 = vrot.slane %v5670, 4
        %v5676 = vsel %vm1349, 0, %v5675
        %v5677 = vrot.slane %v5674, 4
        %v5678 = vsel %vm1349, 0, %v5677
        %v5681 = vunpack.c.l.s4 1983009808
        %v5682 = vunpack.c.0.s8 %v5681
        %v5683 = vperm.slane %v5129, %v5682
        %v5686 = vunpack.c.l.s4 1983009808
        %v5687 = vunpack.c.0.s8 %v5686
        %v5688 = vperm.slane %v5135, %v5687
        %v5689 = vrot.slane %v5688, 4
        %v5690 = vsel %vm1349, %v5689, %v5683
        %v5691 = vrot.slane %v5683, 4
        %v5692 = vsel %vm1349, %v5688, %v5691
        %v5694 = vunpack.c.l.s4 1934713408
        %v5695 = vunpack.c.0.s8 %v5694
        %v5696 = vperm.slane %v5690, %v5695
        %v5698 = vunpack.c.l.s4 1934713408
        %v5699 = vunpack.c.0.s8 %v5698
        %v5700 = vperm.slane %v5692, %v5699
        %v5701 = vrot.slane %v5696, 4
        %v5702 = vsel %vm1349, 0, %v5701
        %v5703 = vrot.slane %v5700, 4
        %v5704 = vsel %vm1349, 0, %v5703
        %v5707 = vunpack.c.l.s4 1983009808
        %v5708 = vunpack.c.0.s8 %v5707
        %v5709 = vperm.slane %v5132, %v5708
        %v5712 = vunpack.c.l.s4 1983009808
        %v5713 = vunpack.c.0.s8 %v5712
        %v5714 = vperm.slane %v5138, %v5713
        %v5715 = vrot.slane %v5714, 4
        %v5716 = vsel %vm1349, %v5715, %v5709
        %v5717 = vrot.slane %v5709, 4
        %v5718 = vsel %vm1349, %v5714, %v5717
        %v5720 = vunpack.c.l.s4 1934713408
        %v5721 = vunpack.c.0.s8 %v5720
        %v5722 = vperm.slane %v5716, %v5721
        %v5724 = vunpack.c.l.s4 1934713408
        %v5725 = vunpack.c.0.s8 %v5724
        %v5726 = vperm.slane %v5718, %v5725
        %v5727 = vrot.slane %v5722, 4
        %v5728 = vsel %vm1349, 0, %v5727
        %v5729 = vrot.slane %v5726, 4
        %v5730 = vsel %vm1349, 0, %v5729
        %v5733 = vunpack.c.l.s4 1983009808
        %v5734 = vunpack.c.0.s8 %v5733
        %v5735 = vperm.slane %v5141, %v5734
        %v5738 = vunpack.c.l.s4 1983009808
        %v5739 = vunpack.c.0.s8 %v5738
        %v5740 = vperm.slane %v5147, %v5739
        %v5741 = vrot.slane %v5740, 4
        %v5742 = vsel %vm1349, %v5741, %v5735
        %v5743 = vrot.slane %v5735, 4
        %v5744 = vsel %vm1349, %v5740, %v5743
        %v5746 = vunpack.c.l.s4 1934713408
        %v5747 = vunpack.c.0.s8 %v5746
        %v5748 = vperm.slane %v5742, %v5747
        %v5750 = vunpack.c.l.s4 1934713408
        %v5751 = vunpack.c.0.s8 %v5750
        %v5752 = vperm.slane %v5744, %v5751
        %v5753 = vrot.slane %v5748, 4
        %v5754 = vsel %vm1349, 0, %v5753
        %v5755 = vrot.slane %v5752, 4
        %v5756 = vsel %vm1349, 0, %v5755
        %v5759 = vunpack.c.l.s4 1983009808
        %v5760 = vunpack.c.0.s8 %v5759
        %v5761 = vperm.slane %v5144, %v5760
        %v5764 = vunpack.c.l.s4 1983009808
        %v5765 = vunpack.c.0.s8 %v5764
        %v5766 = vperm.slane %v5150, %v5765
        %v5767 = vrot.slane %v5766, 4
        %v5768 = vsel %vm1349, %v5767, %v5761
        %v5769 = vrot.slane %v5761, 4
        %v5770 = vsel %vm1349, %v5766, %v5769
        %v5772 = vunpack.c.l.s4 1934713408
        %v5773 = vunpack.c.0.s8 %v5772
        %v5774 = vperm.slane %v5768, %v5773
        %v5776 = vunpack.c.l.s4 1934713408
        %v5777 = vunpack.c.0.s8 %v5776
        %v5778 = vperm.slane %v5770, %v5777
        %v5779 = vrot.slane %v5774, 4
        %v5780 = vsel %vm1349, 0, %v5779
        %v5781 = vrot.slane %v5778, 4
        %v5782 = vsel %vm1349, 0, %v5781
        %v5785 = vunpack.c.l.s4 1983009808
        %v5786 = vunpack.c.0.s8 %v5785
        %v5787 = vperm.slane %v5153, %v5786
        %v5790 = vunpack.c.l.s4 1983009808
        %v5791 = vunpack.c.0.s8 %v5790
        %v5792 = vperm.slane %v5159, %v5791
        %v5793 = vrot.slane %v5792, 4
        %v5794 = vsel %vm1349, %v5793, %v5787
        %v5795 = vrot.slane %v5787, 4
        %v5796 = vsel %vm1349, %v5792, %v5795
        %v5798 = vunpack.c.l.s4 1934713408
        %v5799 = vunpack.c.0.s8 %v5798
        %v5800 = vperm.slane %v5794, %v5799
        %v5802 = vunpack.c.l.s4 1934713408
        %v5803 = vunpack.c.0.s8 %v5802
        %v5804 = vperm.slane %v5796, %v5803
        %v5805 = vrot.slane %v5800, 4
        %v5806 = vsel %vm1349, 0, %v5805
        %v5807 = vrot.slane %v5804, 4
        %v5808 = vsel %vm1349, 0, %v5807
        %v5811 = vunpack.c.l.s4 1983009808
        %v5812 = vunpack.c.0.s8 %v5811
        %v5813 = vperm.slane %v5156, %v5812
        %v5816 = vunpack.c.l.s4 1983009808
        %v5817 = vunpack.c.0.s8 %v5816
        %v5818 = vperm.slane %v5162, %v5817
        %v5819 = vrot.slane %v5818, 4
        %v5820 = vsel %vm1349, %v5819, %v5813
        %v5821 = vrot.slane %v5813, 4
        %v5822 = vsel %vm1349, %v5818, %v5821
        %v5824 = vunpack.c.l.s4 1934713408
        %v5825 = vunpack.c.0.s8 %v5824
        %v5826 = vperm.slane %v5820, %v5825
        %v5828 = vunpack.c.l.s4 1934713408
        %v5829 = vunpack.c.0.s8 %v5828
        %v5830 = vperm.slane %v5822, %v5829
        %v5831 = vrot.slane %v5826, 4
        %v5832 = vsel %vm1349, 0, %v5831
        %v5833 = vrot.slane %v5830, 4
        %v5834 = vsel %vm1349, 0, %v5833
        %v5837 = vunpack.c.l.s4 1983009808
        %v5838 = vunpack.c.0.s8 %v5837
        %v5839 = vperm.slane %v5165, %v5838
        %v5842 = vunpack.c.l.s4 1983009808
        %v5843 = vunpack.c.0.s8 %v5842
        %v5844 = vperm.slane %v5171, %v5843
        %v5845 = vrot.slane %v5844, 4
        %v5846 = vsel %vm1349, %v5845, %v5839
        %v5847 = vrot.slane %v5839, 4
        %v5848 = vsel %vm1349, %v5844, %v5847
        %v5850 = vunpack.c.l.s4 1934713408
        %v5851 = vunpack.c.0.s8 %v5850
        %v5852 = vperm.slane %v5846, %v5851
        %v5854 = vunpack.c.l.s4 1934713408
        %v5855 = vunpack.c.0.s8 %v5854
        %v5856 = vperm.slane %v5848, %v5855
        %v5857 = vrot.slane %v5852, 4
        %v5858 = vsel %vm1349, 0, %v5857
        %v5859 = vrot.slane %v5856, 4
        %v5860 = vsel %vm1349, 0, %v5859
        %v5863 = vunpack.c.l.s4 1983009808
        %v5864 = vunpack.c.0.s8 %v5863
        %v5865 = vperm.slane %v5168, %v5864
        %v5868 = vunpack.c.l.s4 1983009808
        %v5869 = vunpack.c.0.s8 %v5868
        %v5870 = vperm.slane %v5174, %v5869
        %v5871 = vrot.slane %v5870, 4
        %v5872 = vsel %vm1349, %v5871, %v5865
        %v5873 = vrot.slane %v5865, 4
        %v5874 = vsel %vm1349, %v5870, %v5873
        %v5876 = vunpack.c.l.s4 1934713408
        %v5877 = vunpack.c.0.s8 %v5876
        %v5878 = vperm.slane %v5872, %v5877
        %v5880 = vunpack.c.l.s4 1934713408
        %v5881 = vunpack.c.0.s8 %v5880
        %v5882 = vperm.slane %v5874, %v5881
        %v5883 = vrot.slane %v5878, 4
        %v5884 = vsel %vm1349, 0, %v5883
        %v5885 = vrot.slane %v5882, 4
        %v5886 = vsel %vm1349, 0, %v5885
        %v5889 = vunpack.c.l.s4 1983009808
        %v5890 = vunpack.c.0.s8 %v5889
        %v5891 = vperm.slane %v5177, %v5890
        %v5894 = vunpack.c.l.s4 1983009808
        %v5895 = vunpack.c.0.s8 %v5894
        %v5896 = vperm.slane %v5183, %v5895
        %v5897 = vrot.slane %v5896, 4
        %v5898 = vsel %vm1349, %v5897, %v5891
        %v5899 = vrot.slane %v5891, 4
        %v5900 = vsel %vm1349, %v5896, %v5899
        %v5902 = vunpack.c.l.s4 1934713408
        %v5903 = vunpack.c.0.s8 %v5902
        %v5904 = vperm.slane %v5898, %v5903
        %v5906 = vunpack.c.l.s4 1934713408
        %v5907 = vunpack.c.0.s8 %v5906
        %v5908 = vperm.slane %v5900, %v5907
        %v5909 = vrot.slane %v5904, 4
        %v5910 = vsel %vm1349, 0, %v5909
        %v5911 = vrot.slane %v5908, 4
        %v5912 = vsel %vm1349, 0, %v5911
        %v5915 = vunpack.c.l.s4 1983009808
        %v5916 = vunpack.c.0.s8 %v5915
        %v5917 = vperm.slane %v5180, %v5916
        %v5920 = vunpack.c.l.s4 1983009808
        %v5921 = vunpack.c.0.s8 %v5920
        %v5922 = vperm.slane %v5186, %v5921
        %v5923 = vrot.slane %v5922, 4
        %v5924 = vsel %vm1349, %v5923, %v5917
        %v5925 = vrot.slane %v5917, 4
        %v5926 = vsel %vm1349, %v5922, %v5925
        %v5928 = vunpack.c.l.s4 1934713408
        %v5929 = vunpack.c.0.s8 %v5928
        %v5930 = vperm.slane %v5924, %v5929
        %v5932 = vunpack.c.l.s4 1934713408
        %v5933 = vunpack.c.0.s8 %v5932
        %v5934 = vperm.slane %v5926, %v5933
        %v5935 = vrot.slane %v5930, 4
        %v5936 = vsel %vm1349, 0, %v5935
        %v5937 = vrot.slane %v5934, 4
        %v5938 = vsel %vm1349, 0, %v5937
        %v5941 = vunpack.c.l.s4 1983009808
        %v5942 = vunpack.c.0.s8 %v5941
        %v5943 = vperm.slane %v5189, %v5942
        %v5946 = vunpack.c.l.s4 1983009808
        %v5947 = vunpack.c.0.s8 %v5946
        %v5948 = vperm.slane %v5195, %v5947
        %v5949 = vrot.slane %v5948, 4
        %v5950 = vsel %vm1349, %v5949, %v5943
        %v5951 = vrot.slane %v5943, 4
        %v5952 = vsel %vm1349, %v5948, %v5951
        %v5954 = vunpack.c.l.s4 1934713408
        %v5955 = vunpack.c.0.s8 %v5954
        %v5956 = vperm.slane %v5950, %v5955
        %v5958 = vunpack.c.l.s4 1934713408
        %v5959 = vunpack.c.0.s8 %v5958
        %v5960 = vperm.slane %v5952, %v5959
        %v5961 = vrot.slane %v5956, 4
        %v5962 = vsel %vm1349, 0, %v5961
        %v5963 = vrot.slane %v5960, 4
        %v5964 = vsel %vm1349, 0, %v5963
        %v5967 = vunpack.c.l.s4 1983009808
        %v5968 = vunpack.c.0.s8 %v5967
        %v5969 = vperm.slane %v5192, %v5968
        %v5972 = vunpack.c.l.s4 1983009808
        %v5973 = vunpack.c.0.s8 %v5972
        %v5974 = vperm.slane %v5198, %v5973
        %v5975 = vrot.slane %v5974, 4
        %v5976 = vsel %vm1349, %v5975, %v5969
        %v5977 = vrot.slane %v5969, 4
        %v5978 = vsel %vm1349, %v5974, %v5977
        %v5980 = vunpack.c.l.s4 1934713408
        %v5981 = vunpack.c.0.s8 %v5980
        %v5982 = vperm.slane %v5976, %v5981
        %v5984 = vunpack.c.l.s4 1934713408
        %v5985 = vunpack.c.0.s8 %v5984
        %v5986 = vperm.slane %v5978, %v5985
        %v5987 = vrot.slane %v5982, 4
        %v5988 = vsel %vm1349, 0, %v5987
        %v5989 = vrot.slane %v5986, 4
        %v5990 = vsel %vm1349, 0, %v5989
        %v5993 = vunpack.c.l.s4 1983009808
        %v5994 = vunpack.c.0.s8 %v5993
        %v5995 = vperm.slane %v5201, %v5994
        %v5998 = vunpack.c.l.s4 1983009808
        %v5999 = vunpack.c.0.s8 %v5998
        %v6000 = vperm.slane %v5207, %v5999
        %v6001 = vrot.slane %v6000, 4
        %v6002 = vsel %vm1349, %v6001, %v5995
        %v6003 = vrot.slane %v5995, 4
        %v6004 = vsel %vm1349, %v6000, %v6003
        %v6006 = vunpack.c.l.s4 1934713408
        %v6007 = vunpack.c.0.s8 %v6006
        %v6008 = vperm.slane %v6002, %v6007
        %v6010 = vunpack.c.l.s4 1934713408
        %v6011 = vunpack.c.0.s8 %v6010
        %v6012 = vperm.slane %v6004, %v6011
        %v6013 = vrot.slane %v6008, 4
        %v6014 = vsel %vm1349, 0, %v6013
        %v6015 = vrot.slane %v6012, 4
        %v6016 = vsel %vm1349, 0, %v6015
        %v6019 = vunpack.c.l.s4 1983009808
        %v6020 = vunpack.c.0.s8 %v6019
        %v6021 = vperm.slane %v5204, %v6020
        %v6024 = vunpack.c.l.s4 1983009808
        %v6025 = vunpack.c.0.s8 %v6024
        %v6026 = vperm.slane %v5210, %v6025
        %v6027 = vrot.slane %v6026, 4
        %v6028 = vsel %vm1349, %v6027, %v6021
        %v6029 = vrot.slane %v6021, 4
        %v6030 = vsel %vm1349, %v6026, %v6029
        %v6032 = vunpack.c.l.s4 1934713408
        %v6033 = vunpack.c.0.s8 %v6032
        %v6034 = vperm.slane %v6028, %v6033
        %v6036 = vunpack.c.l.s4 1934713408
        %v6037 = vunpack.c.0.s8 %v6036
        %v6038 = vperm.slane %v6030, %v6037
        %v6039 = vrot.slane %v6034, 4
        %v6040 = vsel %vm1349, 0, %v6039
        %v6041 = vrot.slane %v6038, 4
        %v6042 = vsel %vm1349, 0, %v6041
        %v6043 = vsel %vm1349, %v5235, %v5228
        %v6045 = vunpack.c.l.s4 1983009808
        %v6046 = vunpack.c.0.s8 %v6045
        %v6047 = vperm.slane %v6043, %v6046
        %v6048 = vrot.slane %v5236, 4
        %v6049 = vsel %vm1349, %v6048, %v5234
        %v6051 = vunpack.c.l.s4 1983009808
        %v6052 = vunpack.c.0.s8 %v6051
        %v6053 = vperm.slane %v6049, %v6052
        %v6054 = vrot.slane %v6053, 4
        %v6055 = vsel %vm1349, %v6054, %v6047
        %v6057 = vunpack.c.l.s4 1934713408
        %v6058 = vunpack.c.0.s8 %v6057
        %v6059 = vperm.slane %v6055, %v6058
        %v6060 = vrot.slane %v6059, 4
        %v6061 = vsel %vm1349, 0, %v6060
        %v6062 = vsel %vm1349, %v5261, %v5254
        %v6064 = vunpack.c.l.s4 1983009808
        %v6065 = vunpack.c.0.s8 %v6064
        %v6066 = vperm.slane %v6062, %v6065
        %v6067 = vrot.slane %v5262, 4
        %v6068 = vsel %vm1349, %v6067, %v5260
        %v6070 = vunpack.c.l.s4 1983009808
        %v6071 = vunpack.c.0.s8 %v6070
        %v6072 = vperm.slane %v6068, %v6071
        %v6073 = vrot.slane %v6072, 4
        %v6074 = vsel %vm1349, %v6073, %v6066
        %v6076 = vunpack.c.l.s4 1934713408
        %v6077 = vunpack.c.0.s8 %v6076
        %v6078 = vperm.slane %v6074, %v6077
        %v6079 = vrot.slane %v6078, 4
        %v6080 = vsel %vm1349, 0, %v6079
        %v6081 = vsel %vm1349, %v5287, %v5280
        %v6083 = vunpack.c.l.s4 1983009808
        %v6084 = vunpack.c.0.s8 %v6083
        %v6085 = vperm.slane %v6081, %v6084
        %v6086 = vrot.slane %v5288, 4
        %v6087 = vsel %vm1349, %v6086, %v5286
        %v6089 = vunpack.c.l.s4 1983009808
        %v6090 = vunpack.c.0.s8 %v6089
        %v6091 = vperm.slane %v6087, %v6090
        %v6092 = vrot.slane %v6091, 4
        %v6093 = vsel %vm1349, %v6092, %v6085
        %v6095 = vunpack.c.l.s4 1934713408
        %v6096 = vunpack.c.0.s8 %v6095
        %v6097 = vperm.slane %v6093, %v6096
        %v6098 = vrot.slane %v6097, 4
        %v6099 = vsel %vm1349, 0, %v6098
        %v6100 = vsel %vm1349, %v5313, %v5306
        %v6102 = vunpack.c.l.s4 1983009808
        %v6103 = vunpack.c.0.s8 %v6102
        %v6104 = vperm.slane %v6100, %v6103
        %v6105 = vrot.slane %v5314, 4
        %v6106 = vsel %vm1349, %v6105, %v5312
        %v6108 = vunpack.c.l.s4 1983009808
        %v6109 = vunpack.c.0.s8 %v6108
        %v6110 = vperm.slane %v6106, %v6109
        %v6111 = vrot.slane %v6110, 4
        %v6112 = vsel %vm1349, %v6111, %v6104
        %v6114 = vunpack.c.l.s4 1934713408
        %v6115 = vunpack.c.0.s8 %v6114
        %v6116 = vperm.slane %v6112, %v6115
        %v6117 = vrot.slane %v6116, 4
        %v6118 = vsel %vm1349, 0, %v6117
        %v6119 = vsel %vm1349, %v5339, %v5332
        %v6121 = vunpack.c.l.s4 1983009808
        %v6122 = vunpack.c.0.s8 %v6121
        %v6123 = vperm.slane %v6119, %v6122
        %v6124 = vrot.slane %v5340, 4
        %v6125 = vsel %vm1349, %v6124, %v5338
        %v6127 = vunpack.c.l.s4 1983009808
        %v6128 = vunpack.c.0.s8 %v6127
        %v6129 = vperm.slane %v6125, %v6128
        %v6130 = vrot.slane %v6129, 4
        %v6131 = vsel %vm1349, %v6130, %v6123
        %v6133 = vunpack.c.l.s4 1934713408
        %v6134 = vunpack.c.0.s8 %v6133
        %v6135 = vperm.slane %v6131, %v6134
        %v6136 = vrot.slane %v6135, 4
        %v6137 = vsel %vm1349, 0, %v6136
        %v6138 = vsel %vm1349, %v5365, %v5358
        %v6140 = vunpack.c.l.s4 1983009808
        %v6141 = vunpack.c.0.s8 %v6140
        %v6142 = vperm.slane %v6138, %v6141
        %v6143 = vrot.slane %v5366, 4
        %v6144 = vsel %vm1349, %v6143, %v5364
        %v6146 = vunpack.c.l.s4 1983009808
        %v6147 = vunpack.c.0.s8 %v6146
        %v6148 = vperm.slane %v6144, %v6147
        %v6149 = vrot.slane %v6148, 4
        %v6150 = vsel %vm1349, %v6149, %v6142
        %v6152 = vunpack.c.l.s4 1934713408
        %v6153 = vunpack.c.0.s8 %v6152
        %v6154 = vperm.slane %v6150, %v6153
        %v6155 = vrot.slane %v6154, 4
        %v6156 = vsel %vm1349, 0, %v6155
        %v6157 = vsel %vm1349, %v5391, %v5384
        %v6159 = vunpack.c.l.s4 1983009808
        %v6160 = vunpack.c.0.s8 %v6159
        %v6161 = vperm.slane %v6157, %v6160
        %v6162 = vrot.slane %v5392, 4
        %v6163 = vsel %vm1349, %v6162, %v5390
        %v6165 = vunpack.c.l.s4 1983009808
        %v6166 = vunpack.c.0.s8 %v6165
        %v6167 = vperm.slane %v6163, %v6166
        %v6168 = vrot.slane %v6167, 4
        %v6169 = vsel %vm1349, %v6168, %v6161
        %v6171 = vunpack.c.l.s4 1934713408
        %v6172 = vunpack.c.0.s8 %v6171
        %v6173 = vperm.slane %v6169, %v6172
        %v6174 = vrot.slane %v6173, 4
        %v6175 = vsel %vm1349, 0, %v6174
        %v6176 = vsel %vm1349, %v5417, %v5410
        %v6178 = vunpack.c.l.s4 1983009808
        %v6179 = vunpack.c.0.s8 %v6178
        %v6180 = vperm.slane %v6176, %v6179
        %v6181 = vrot.slane %v5418, 4
        %v6182 = vsel %vm1349, %v6181, %v5416
        %v6184 = vunpack.c.l.s4 1983009808
        %v6185 = vunpack.c.0.s8 %v6184
        %v6186 = vperm.slane %v6182, %v6185
        %v6187 = vrot.slane %v6186, 4
        %v6188 = vsel %vm1349, %v6187, %v6180
        %v6190 = vunpack.c.l.s4 1934713408
        %v6191 = vunpack.c.0.s8 %v6190
        %v6192 = vperm.slane %v6188, %v6191
        %v6193 = vrot.slane %v6192, 4
        %v6194 = vsel %vm1349, 0, %v6193
        %v6195 = vsel %vm1349, %v5443, %v5436
        %v6197 = vunpack.c.l.s4 1983009808
        %v6198 = vunpack.c.0.s8 %v6197
        %v6199 = vperm.slane %v6195, %v6198
        %v6200 = vrot.slane %v5444, 4
        %v6201 = vsel %vm1349, %v6200, %v5442
        %v6203 = vunpack.c.l.s4 1983009808
        %v6204 = vunpack.c.0.s8 %v6203
        %v6205 = vperm.slane %v6201, %v6204
        %v6206 = vrot.slane %v6205, 4
        %v6207 = vsel %vm1349, %v6206, %v6199
        %v6209 = vunpack.c.l.s4 1934713408
        %v6210 = vunpack.c.0.s8 %v6209
        %v6211 = vperm.slane %v6207, %v6210
        %v6212 = vrot.slane %v6211, 4
        %v6213 = vsel %vm1349, 0, %v6212
        %v6214 = vsel %vm1349, %v5469, %v5462
        %v6216 = vunpack.c.l.s4 1983009808
        %v6217 = vunpack.c.0.s8 %v6216
        %v6218 = vperm.slane %v6214, %v6217
        %v6219 = vrot.slane %v5470, 4
        %v6220 = vsel %vm1349, %v6219, %v5468
        %v6222 = vunpack.c.l.s4 1983009808
        %v6223 = vunpack.c.0.s8 %v6222
        %v6224 = vperm.slane %v6220, %v6223
        %v6225 = vrot.slane %v6224, 4
        %v6226 = vsel %vm1349, %v6225, %v6218
        %v6228 = vunpack.c.l.s4 1934713408
        %v6229 = vunpack.c.0.s8 %v6228
        %v6230 = vperm.slane %v6226, %v6229
        %v6231 = vrot.slane %v6230, 4
        %v6232 = vsel %vm1349, 0, %v6231
        %v6233 = vsel %vm1349, %v5495, %v5488
        %v6235 = vunpack.c.l.s4 1983009808
        %v6236 = vunpack.c.0.s8 %v6235
        %v6237 = vperm.slane %v6233, %v6236
        %v6238 = vrot.slane %v5496, 4
        %v6239 = vsel %vm1349, %v6238, %v5494
        %v6241 = vunpack.c.l.s4 1983009808
        %v6242 = vunpack.c.0.s8 %v6241
        %v6243 = vperm.slane %v6239, %v6242
        %v6244 = vrot.slane %v6243, 4
        %v6245 = vsel %vm1349, %v6244, %v6237
        %v6247 = vunpack.c.l.s4 1934713408
        %v6248 = vunpack.c.0.s8 %v6247
        %v6249 = vperm.slane %v6245, %v6248
        %v6250 = vrot.slane %v6249, 4
        %v6251 = vsel %vm1349, 0, %v6250
        %v6252 = vsel %vm1349, %v5521, %v5514
        %v6254 = vunpack.c.l.s4 1983009808
        %v6255 = vunpack.c.0.s8 %v6254
        %v6256 = vperm.slane %v6252, %v6255
        %v6257 = vrot.slane %v5522, 4
        %v6258 = vsel %vm1349, %v6257, %v5520
        %v6260 = vunpack.c.l.s4 1983009808
        %v6261 = vunpack.c.0.s8 %v6260
        %v6262 = vperm.slane %v6258, %v6261
        %v6263 = vrot.slane %v6262, 4
        %v6264 = vsel %vm1349, %v6263, %v6256
        %v6266 = vunpack.c.l.s4 1934713408
        %v6267 = vunpack.c.0.s8 %v6266
        %v6268 = vperm.slane %v6264, %v6267
        %v6269 = vrot.slane %v6268, 4
        %v6270 = vsel %vm1349, 0, %v6269
        %v6271 = vsel %vm1349, %v5547, %v5540
        %v6273 = vunpack.c.l.s4 1983009808
        %v6274 = vunpack.c.0.s8 %v6273
        %v6275 = vperm.slane %v6271, %v6274
        %v6276 = vrot.slane %v5548, 4
        %v6277 = vsel %vm1349, %v6276, %v5546
        %v6279 = vunpack.c.l.s4 1983009808
        %v6280 = vunpack.c.0.s8 %v6279
        %v6281 = vperm.slane %v6277, %v6280
        %v6282 = vrot.slane %v6281, 4
        %v6283 = vsel %vm1349, %v6282, %v6275
        %v6285 = vunpack.c.l.s4 1934713408
        %v6286 = vunpack.c.0.s8 %v6285
        %v6287 = vperm.slane %v6283, %v6286
        %v6288 = vrot.slane %v6287, 4
        %v6289 = vsel %vm1349, 0, %v6288
        %v6290 = vsel %vm1349, %v5573, %v5566
        %v6292 = vunpack.c.l.s4 1983009808
        %v6293 = vunpack.c.0.s8 %v6292
        %v6294 = vperm.slane %v6290, %v6293
        %v6295 = vrot.slane %v5574, 4
        %v6296 = vsel %vm1349, %v6295, %v5572
        %v6298 = vunpack.c.l.s4 1983009808
        %v6299 = vunpack.c.0.s8 %v6298
        %v6300 = vperm.slane %v6296, %v6299
        %v6301 = vrot.slane %v6300, 4
        %v6302 = vsel %vm1349, %v6301, %v6294
        %v6304 = vunpack.c.l.s4 1934713408
        %v6305 = vunpack.c.0.s8 %v6304
        %v6306 = vperm.slane %v6302, %v6305
        %v6307 = vrot.slane %v6306, 4
        %v6308 = vsel %vm1349, 0, %v6307
        %v6309 = vsel %vm1349, %v5599, %v5592
        %v6311 = vunpack.c.l.s4 1983009808
        %v6312 = vunpack.c.0.s8 %v6311
        %v6313 = vperm.slane %v6309, %v6312
        %v6314 = vrot.slane %v5600, 4
        %v6315 = vsel %vm1349, %v6314, %v5598
        %v6317 = vunpack.c.l.s4 1983009808
        %v6318 = vunpack.c.0.s8 %v6317
        %v6319 = vperm.slane %v6315, %v6318
        %v6320 = vrot.slane %v6319, 4
        %v6321 = vsel %vm1349, %v6320, %v6313
        %v6323 = vunpack.c.l.s4 1934713408
        %v6324 = vunpack.c.0.s8 %v6323
        %v6325 = vperm.slane %v6321, %v6324
        %v6326 = vrot.slane %v6325, 4
        %v6327 = vsel %vm1349, 0, %v6326
        %v6328 = vsel %vm1349, %v5625, %v5618
        %v6330 = vunpack.c.l.s4 1983009808
        %v6331 = vunpack.c.0.s8 %v6330
        %v6332 = vperm.slane %v6328, %v6331
        %v6333 = vrot.slane %v5626, 4
        %v6334 = vsel %vm1349, %v6333, %v5624
        %v6336 = vunpack.c.l.s4 1983009808
        %v6337 = vunpack.c.0.s8 %v6336
        %v6338 = vperm.slane %v6334, %v6337
        %v6339 = vrot.slane %v6338, 4
        %v6340 = vsel %vm1349, %v6339, %v6332
        %v6342 = vunpack.c.l.s4 1934713408
        %v6343 = vunpack.c.0.s8 %v6342
        %v6344 = vperm.slane %v6340, %v6343
        %v6345 = vrot.slane %v6344, 4
        %v6346 = vsel %vm1349, 0, %v6345
        %v6347 = vsel %vm1349, %v5651, %v5644
        %v6349 = vunpack.c.l.s4 1983009808
        %v6350 = vunpack.c.0.s8 %v6349
        %v6351 = vperm.slane %v6347, %v6350
        %v6352 = vrot.slane %v5652, 4
        %v6353 = vsel %vm1349, %v6352, %v5650
        %v6355 = vunpack.c.l.s4 1983009808
        %v6356 = vunpack.c.0.s8 %v6355
        %v6357 = vperm.slane %v6353, %v6356
        %v6358 = vrot.slane %v6357, 4
        %v6359 = vsel %vm1349, %v6358, %v6351
        %v6361 = vunpack.c.l.s4 1934713408
        %v6362 = vunpack.c.0.s8 %v6361
        %v6363 = vperm.slane %v6359, %v6362
        %v6364 = vrot.slane %v6363, 4
        %v6365 = vsel %vm1349, 0, %v6364
        %v6366 = vsel %vm1349, %v5677, %v5670
        %v6368 = vunpack.c.l.s4 1983009808
        %v6369 = vunpack.c.0.s8 %v6368
        %v6370 = vperm.slane %v6366, %v6369
        %v6371 = vrot.slane %v5678, 4
        %v6372 = vsel %vm1349, %v6371, %v5676
        %v6374 = vunpack.c.l.s4 1983009808
        %v6375 = vunpack.c.0.s8 %v6374
        %v6376 = vperm.slane %v6372, %v6375
        %v6377 = vrot.slane %v6376, 4
        %v6378 = vsel %vm1349, %v6377, %v6370
        %v6380 = vunpack.c.l.s4 1934713408
        %v6381 = vunpack.c.0.s8 %v6380
        %v6382 = vperm.slane %v6378, %v6381
        %v6383 = vrot.slane %v6382, 4
        %v6384 = vsel %vm1349, 0, %v6383
        %v6385 = vsel %vm1349, %v5703, %v5696
        %v6387 = vunpack.c.l.s4 1983009808
        %v6388 = vunpack.c.0.s8 %v6387
        %v6389 = vperm.slane %v6385, %v6388
        %v6390 = vrot.slane %v5704, 4
        %v6391 = vsel %vm1349, %v6390, %v5702
        %v6393 = vunpack.c.l.s4 1983009808
        %v6394 = vunpack.c.0.s8 %v6393
        %v6395 = vperm.slane %v6391, %v6394
        %v6396 = vrot.slane %v6395, 4
        %v6397 = vsel %vm1349, %v6396, %v6389
        %v6399 = vunpack.c.l.s4 1934713408
        %v6400 = vunpack.c.0.s8 %v6399
        %v6401 = vperm.slane %v6397, %v6400
        %v6402 = vrot.slane %v6401, 4
        %v6403 = vsel %vm1349, 0, %v6402
        %v6404 = vsel %vm1349, %v5729, %v5722
        %v6406 = vunpack.c.l.s4 1983009808
        %v6407 = vunpack.c.0.s8 %v6406
        %v6408 = vperm.slane %v6404, %v6407
        %v6409 = vrot.slane %v5730, 4
        %v6410 = vsel %vm1349, %v6409, %v5728
        %v6412 = vunpack.c.l.s4 1983009808
        %v6413 = vunpack.c.0.s8 %v6412
        %v6414 = vperm.slane %v6410, %v6413
        %v6415 = vrot.slane %v6414, 4
        %v6416 = vsel %vm1349, %v6415, %v6408
        %v6418 = vunpack.c.l.s4 1934713408
        %v6419 = vunpack.c.0.s8 %v6418
        %v6420 = vperm.slane %v6416, %v6419
        %v6421 = vrot.slane %v6420, 4
        %v6422 = vsel %vm1349, 0, %v6421
        %v6423 = vsel %vm1349, %v5755, %v5748
        %v6425 = vunpack.c.l.s4 1983009808
        %v6426 = vunpack.c.0.s8 %v6425
        %v6427 = vperm.slane %v6423, %v6426
        %v6428 = vrot.slane %v5756, 4
        %v6429 = vsel %vm1349, %v6428, %v5754
        %v6431 = vunpack.c.l.s4 1983009808
        %v6432 = vunpack.c.0.s8 %v6431
        %v6433 = vperm.slane %v6429, %v6432
        %v6434 = vrot.slane %v6433, 4
        %v6435 = vsel %vm1349, %v6434, %v6427
        %v6437 = vunpack.c.l.s4 1934713408
        %v6438 = vunpack.c.0.s8 %v6437
        %v6439 = vperm.slane %v6435, %v6438
        %v6440 = vrot.slane %v6439, 4
        %v6441 = vsel %vm1349, 0, %v6440
        %v6442 = vsel %vm1349, %v5781, %v5774
        %v6444 = vunpack.c.l.s4 1983009808
        %v6445 = vunpack.c.0.s8 %v6444
        %v6446 = vperm.slane %v6442, %v6445
        %v6447 = vrot.slane %v5782, 4
        %v6448 = vsel %vm1349, %v6447, %v5780
        %v6450 = vunpack.c.l.s4 1983009808
        %v6451 = vunpack.c.0.s8 %v6450
        %v6452 = vperm.slane %v6448, %v6451
        %v6453 = vrot.slane %v6452, 4
        %v6454 = vsel %vm1349, %v6453, %v6446
        %v6456 = vunpack.c.l.s4 1934713408
        %v6457 = vunpack.c.0.s8 %v6456
        %v6458 = vperm.slane %v6454, %v6457
        %v6459 = vrot.slane %v6458, 4
        %v6460 = vsel %vm1349, 0, %v6459
        %v6461 = vsel %vm1349, %v5807, %v5800
        %v6463 = vunpack.c.l.s4 1983009808
        %v6464 = vunpack.c.0.s8 %v6463
        %v6465 = vperm.slane %v6461, %v6464
        %v6466 = vrot.slane %v5808, 4
        %v6467 = vsel %vm1349, %v6466, %v5806
        %v6469 = vunpack.c.l.s4 1983009808
        %v6470 = vunpack.c.0.s8 %v6469
        %v6471 = vperm.slane %v6467, %v6470
        %v6472 = vrot.slane %v6471, 4
        %v6473 = vsel %vm1349, %v6472, %v6465
        %v6475 = vunpack.c.l.s4 1934713408
        %v6476 = vunpack.c.0.s8 %v6475
        %v6477 = vperm.slane %v6473, %v6476
        %v6478 = vrot.slane %v6477, 4
        %v6479 = vsel %vm1349, 0, %v6478
        %v6480 = vsel %vm1349, %v5833, %v5826
        %v6482 = vunpack.c.l.s4 1983009808
        %v6483 = vunpack.c.0.s8 %v6482
        %v6484 = vperm.slane %v6480, %v6483
        %v6485 = vrot.slane %v5834, 4
        %v6486 = vsel %vm1349, %v6485, %v5832
        %v6488 = vunpack.c.l.s4 1983009808
        %v6489 = vunpack.c.0.s8 %v6488
        %v6490 = vperm.slane %v6486, %v6489
        %v6491 = vrot.slane %v6490, 4
        %v6492 = vsel %vm1349, %v6491, %v6484
        %v6494 = vunpack.c.l.s4 1934713408
        %v6495 = vunpack.c.0.s8 %v6494
        %v6496 = vperm.slane %v6492, %v6495
        %v6497 = vrot.slane %v6496, 4
        %v6498 = vsel %vm1349, 0, %v6497
        %v6499 = vsel %vm1349, %v5859, %v5852
        %v6501 = vunpack.c.l.s4 1983009808
        %v6502 = vunpack.c.0.s8 %v6501
        %v6503 = vperm.slane %v6499, %v6502
        %v6504 = vrot.slane %v5860, 4
        %v6505 = vsel %vm1349, %v6504, %v5858
        %v6507 = vunpack.c.l.s4 1983009808
        %v6508 = vunpack.c.0.s8 %v6507
        %v6509 = vperm.slane %v6505, %v6508
        %v6510 = vrot.slane %v6509, 4
        %v6511 = vsel %vm1349, %v6510, %v6503
        %v6513 = vunpack.c.l.s4 1934713408
        %v6514 = vunpack.c.0.s8 %v6513
        %v6515 = vperm.slane %v6511, %v6514
        %v6516 = vrot.slane %v6515, 4
        %v6517 = vsel %vm1349, 0, %v6516
        %v6518 = vsel %vm1349, %v5885, %v5878
        %v6520 = vunpack.c.l.s4 1983009808
        %v6521 = vunpack.c.0.s8 %v6520
        %v6522 = vperm.slane %v6518, %v6521
        %v6523 = vrot.slane %v5886, 4
        %v6524 = vsel %vm1349, %v6523, %v5884
        %v6526 = vunpack.c.l.s4 1983009808
        %v6527 = vunpack.c.0.s8 %v6526
        %v6528 = vperm.slane %v6524, %v6527
        %v6529 = vrot.slane %v6528, 4
        %v6530 = vsel %vm1349, %v6529, %v6522
        %v6532 = vunpack.c.l.s4 1934713408
        %v6533 = vunpack.c.0.s8 %v6532
        %v6534 = vperm.slane %v6530, %v6533
        %v6535 = vrot.slane %v6534, 4
        %v6536 = vsel %vm1349, 0, %v6535
        %v6537 = vsel %vm1349, %v5911, %v5904
        %v6539 = vunpack.c.l.s4 1983009808
        %v6540 = vunpack.c.0.s8 %v6539
        %v6541 = vperm.slane %v6537, %v6540
        %v6542 = vrot.slane %v5912, 4
        %v6543 = vsel %vm1349, %v6542, %v5910
        %v6545 = vunpack.c.l.s4 1983009808
        %v6546 = vunpack.c.0.s8 %v6545
        %v6547 = vperm.slane %v6543, %v6546
        %v6548 = vrot.slane %v6547, 4
        %v6549 = vsel %vm1349, %v6548, %v6541
        %v6551 = vunpack.c.l.s4 1934713408
        %v6552 = vunpack.c.0.s8 %v6551
        %v6553 = vperm.slane %v6549, %v6552
        %v6554 = vrot.slane %v6553, 4
        %v6555 = vsel %vm1349, 0, %v6554
        %v6556 = vsel %vm1349, %v5937, %v5930
        %v6558 = vunpack.c.l.s4 1983009808
        %v6559 = vunpack.c.0.s8 %v6558
        %v6560 = vperm.slane %v6556, %v6559
        %v6561 = vrot.slane %v5938, 4
        %v6562 = vsel %vm1349, %v6561, %v5936
        %v6564 = vunpack.c.l.s4 1983009808
        %v6565 = vunpack.c.0.s8 %v6564
        %v6566 = vperm.slane %v6562, %v6565
        %v6567 = vrot.slane %v6566, 4
        %v6568 = vsel %vm1349, %v6567, %v6560
        %v6570 = vunpack.c.l.s4 1934713408
        %v6571 = vunpack.c.0.s8 %v6570
        %v6572 = vperm.slane %v6568, %v6571
        %v6573 = vrot.slane %v6572, 4
        %v6574 = vsel %vm1349, 0, %v6573
        %v6575 = vsel %vm1349, %v5963, %v5956
        %v6577 = vunpack.c.l.s4 1983009808
        %v6578 = vunpack.c.0.s8 %v6577
        %v6579 = vperm.slane %v6575, %v6578
        %v6580 = vrot.slane %v5964, 4
        %v6581 = vsel %vm1349, %v6580, %v5962
        %v6583 = vunpack.c.l.s4 1983009808
        %v6584 = vunpack.c.0.s8 %v6583
        %v6585 = vperm.slane %v6581, %v6584
        %v6586 = vrot.slane %v6585, 4
        %v6587 = vsel %vm1349, %v6586, %v6579
        %v6589 = vunpack.c.l.s4 1934713408
        %v6590 = vunpack.c.0.s8 %v6589
        %v6591 = vperm.slane %v6587, %v6590
        %v6592 = vrot.slane %v6591, 4
        %v6593 = vsel %vm1349, 0, %v6592
        %v6594 = vsel %vm1349, %v5989, %v5982
        %v6596 = vunpack.c.l.s4 1983009808
        %v6597 = vunpack.c.0.s8 %v6596
        %v6598 = vperm.slane %v6594, %v6597
        %v6599 = vrot.slane %v5990, 4
        %v6600 = vsel %vm1349, %v6599, %v5988
        %v6602 = vunpack.c.l.s4 1983009808
        %v6603 = vunpack.c.0.s8 %v6602
        %v6604 = vperm.slane %v6600, %v6603
        %v6605 = vrot.slane %v6604, 4
        %v6606 = vsel %vm1349, %v6605, %v6598
        %v6608 = vunpack.c.l.s4 1934713408
        %v6609 = vunpack.c.0.s8 %v6608
        %v6610 = vperm.slane %v6606, %v6609
        %v6611 = vrot.slane %v6610, 4
        %v6612 = vsel %vm1349, 0, %v6611
        %v6613 = vsel %vm1349, %v6015, %v6008
        %v6615 = vunpack.c.l.s4 1983009808
        %v6616 = vunpack.c.0.s8 %v6615
        %v6617 = vperm.slane %v6613, %v6616
        %v6618 = vrot.slane %v6016, 4
        %v6619 = vsel %vm1349, %v6618, %v6014
        %v6621 = vunpack.c.l.s4 1983009808
        %v6622 = vunpack.c.0.s8 %v6621
        %v6623 = vperm.slane %v6619, %v6622
        %v6624 = vrot.slane %v6623, 4
        %v6625 = vsel %vm1349, %v6624, %v6617
        %v6627 = vunpack.c.l.s4 1934713408
        %v6628 = vunpack.c.0.s8 %v6627
        %v6629 = vperm.slane %v6625, %v6628
        %v6630 = vrot.slane %v6629, 4
        %v6631 = vsel %vm1349, 0, %v6630
        %v6632 = vsel %vm1349, %v6041, %v6034
        %v6634 = vunpack.c.l.s4 1983009808
        %v6635 = vunpack.c.0.s8 %v6634
        %v6636 = vperm.slane %v6632, %v6635
        %v6637 = vrot.slane %v6042, 4
        %v6638 = vsel %vm1349, %v6637, %v6040
        %v6640 = vunpack.c.l.s4 1983009808
        %v6641 = vunpack.c.0.s8 %v6640
        %v6642 = vperm.slane %v6638, %v6641
        %v6643 = vrot.slane %v6642, 4
        %v6644 = vsel %vm1349, %v6643, %v6636
        %v6646 = vunpack.c.l.s4 1934713408
        %v6647 = vunpack.c.0.s8 %v6646
        %v6648 = vperm.slane %v6644, %v6647
        %v6649 = vrot.slane %v6648, 4
        %v6650 = vsel %vm1349, 0, %v6649
        %v6653 = vpack.i.b16 %v6078, %v6059
        %v6654 = vshrl.u32 %v6059, 16
        %v6655 = vshrl.u32 %v6078, 16
        %v6656 = vpack.i.b16 %v6655, %v6654
        %v6659 = vpack.i.b16 %v6080, %v6061
        %v6660 = vshrl.u32 %v6061, 16
        %v6661 = vshrl.u32 %v6080, 16
        %v6662 = vpack.i.b16 %v6661, %v6660
        %v6665 = vpack.i.b16 %v6116, %v6097
        %v6666 = vshrl.u32 %v6097, 16
        %v6667 = vshrl.u32 %v6116, 16
        %v6668 = vpack.i.b16 %v6667, %v6666
        %v6671 = vpack.i.b16 %v6118, %v6099
        %v6672 = vshrl.u32 %v6099, 16
        %v6673 = vshrl.u32 %v6118, 16
        %v6674 = vpack.i.b16 %v6673, %v6672
        %v6677 = vpack.i.b16 %v6154, %v6135
        %v6678 = vshrl.u32 %v6135, 16
        %v6679 = vshrl.u32 %v6154, 16
        %v6680 = vpack.i.b16 %v6679, %v6678
        %v6683 = vpack.i.b16 %v6156, %v6137
        %v6684 = vshrl.u32 %v6137, 16
        %v6685 = vshrl.u32 %v6156, 16
        %v6686 = vpack.i.b16 %v6685, %v6684
        %v6689 = vpack.i.b16 %v6192, %v6173
        %v6690 = vshrl.u32 %v6173, 16
        %v6691 = vshrl.u32 %v6192, 16
        %v6692 = vpack.i.b16 %v6691, %v6690
        %v6695 = vpack.i.b16 %v6194, %v6175
        %v6696 = vshrl.u32 %v6175, 16
        %v6697 = vshrl.u32 %v6194, 16
        %v6698 = vpack.i.b16 %v6697, %v6696
        %v6701 = vpack.i.b16 %v6230, %v6211
        %v6702 = vshrl.u32 %v6211, 16
        %v6703 = vshrl.u32 %v6230, 16
        %v6704 = vpack.i.b16 %v6703, %v6702
        %v6707 = vpack.i.b16 %v6232, %v6213
        %v6708 = vshrl.u32 %v6213, 16
        %v6709 = vshrl.u32 %v6232, 16
        %v6710 = vpack.i.b16 %v6709, %v6708
        %v6713 = vpack.i.b16 %v6268, %v6249
        %v6714 = vshrl.u32 %v6249, 16
        %v6715 = vshrl.u32 %v6268, 16
        %v6716 = vpack.i.b16 %v6715, %v6714
        %v6719 = vpack.i.b16 %v6270, %v6251
        %v6720 = vshrl.u32 %v6251, 16
        %v6721 = vshrl.u32 %v6270, 16
        %v6722 = vpack.i.b16 %v6721, %v6720
        %v6725 = vpack.i.b16 %v6306, %v6287
        %v6726 = vshrl.u32 %v6287, 16
        %v6727 = vshrl.u32 %v6306, 16
        %v6728 = vpack.i.b16 %v6727, %v6726
        %v6731 = vpack.i.b16 %v6308, %v6289
        %v6732 = vshrl.u32 %v6289, 16
        %v6733 = vshrl.u32 %v6308, 16
        %v6734 = vpack.i.b16 %v6733, %v6732
        %v6737 = vpack.i.b16 %v6344, %v6325
        %v6738 = vshrl.u32 %v6325, 16
        %v6739 = vshrl.u32 %v6344, 16
        %v6740 = vpack.i.b16 %v6739, %v6738
        %v6743 = vpack.i.b16 %v6346, %v6327
        %v6744 = vshrl.u32 %v6327, 16
        %v6745 = vshrl.u32 %v6346, 16
        %v6746 = vpack.i.b16 %v6745, %v6744
        %v6749 = vpack.i.b16 %v6382, %v6363
        %v6750 = vshrl.u32 %v6363, 16
        %v6751 = vshrl.u32 %v6382, 16
        %v6752 = vpack.i.b16 %v6751, %v6750
        %v6755 = vpack.i.b16 %v6384, %v6365
        %v6756 = vshrl.u32 %v6365, 16
        %v6757 = vshrl.u32 %v6384, 16
        %v6758 = vpack.i.b16 %v6757, %v6756
        %v6761 = vpack.i.b16 %v6420, %v6401
        %v6762 = vshrl.u32 %v6401, 16
        %v6763 = vshrl.u32 %v6420, 16
        %v6764 = vpack.i.b16 %v6763, %v6762
        %v6767 = vpack.i.b16 %v6422, %v6403
        %v6768 = vshrl.u32 %v6403, 16
        %v6769 = vshrl.u32 %v6422, 16
        %v6770 = vpack.i.b16 %v6769, %v6768
        %v6773 = vpack.i.b16 %v6458, %v6439
        %v6774 = vshrl.u32 %v6439, 16
        %v6775 = vshrl.u32 %v6458, 16
        %v6776 = vpack.i.b16 %v6775, %v6774
        %v6779 = vpack.i.b16 %v6460, %v6441
        %v6780 = vshrl.u32 %v6441, 16
        %v6781 = vshrl.u32 %v6460, 16
        %v6782 = vpack.i.b16 %v6781, %v6780
        %v6785 = vpack.i.b16 %v6496, %v6477
        %v6786 = vshrl.u32 %v6477, 16
        %v6787 = vshrl.u32 %v6496, 16
        %v6788 = vpack.i.b16 %v6787, %v6786
        %v6791 = vpack.i.b16 %v6498, %v6479
        %v6792 = vshrl.u32 %v6479, 16
        %v6793 = vshrl.u32 %v6498, 16
        %v6794 = vpack.i.b16 %v6793, %v6792
        %v6797 = vpack.i.b16 %v6534, %v6515
        %v6798 = vshrl.u32 %v6515, 16
        %v6799 = vshrl.u32 %v6534, 16
        %v6800 = vpack.i.b16 %v6799, %v6798
        %v6803 = vpack.i.b16 %v6536, %v6517
        %v6804 = vshrl.u32 %v6517, 16
        %v6805 = vshrl.u32 %v6536, 16
        %v6806 = vpack.i.b16 %v6805, %v6804
        %v6809 = vpack.i.b16 %v6572, %v6553
        %v6810 = vshrl.u32 %v6553, 16
        %v6811 = vshrl.u32 %v6572, 16
        %v6812 = vpack.i.b16 %v6811, %v6810
        %v6815 = vpack.i.b16 %v6574, %v6555
        %v6816 = vshrl.u32 %v6555, 16
        %v6817 = vshrl.u32 %v6574, 16
        %v6818 = vpack.i.b16 %v6817, %v6816
        %v6821 = vpack.i.b16 %v6610, %v6591
        %v6822 = vshrl.u32 %v6591, 16
        %v6823 = vshrl.u32 %v6610, 16
        %v6824 = vpack.i.b16 %v6823, %v6822
        %v6827 = vpack.i.b16 %v6612, %v6593
        %v6828 = vshrl.u32 %v6593, 16
        %v6829 = vshrl.u32 %v6612, 16
        %v6830 = vpack.i.b16 %v6829, %v6828
        %v6833 = vpack.i.b16 %v6648, %v6629
        %v6834 = vshrl.u32 %v6629, 16
        %v6835 = vshrl.u32 %v6648, 16
        %v6836 = vpack.i.b16 %v6835, %v6834
        %v6839 = vpack.i.b16 %v6650, %v6631
        %v6840 = vshrl.u32 %v6631, 16
        %v6841 = vshrl.u32 %v6650, 16
        %v6842 = vpack.i.b16 %v6841, %v6840
        %v6843 = vunpack.c.l.b16 %v2781
        %v6844 = vunpack.c.l.b16 %v2793
        %v6845 = vunpack.c.l.b16 %v2805
        %v6846 = vunpack.c.l.b16 %v2817
        %v6847 = vunpack.c.l.b16 %v2829
        %v6848 = vunpack.c.l.b16 %v2841
        %v6849 = vunpack.c.l.b16 %v2853
        %v6850 = vunpack.c.l.b16 %v2865
        %v6851 = vunpack.c.l.b16 %v2877
        %v6852 = vunpack.c.l.b16 %v2889
        %v6853 = vunpack.c.l.b16 %v2901
        %v6854 = vunpack.c.l.b16 %v2913
        %v6855 = vunpack.c.l.b16 %v2925
        %v6856 = vunpack.c.l.b16 %v2937
        %v6857 = vunpack.c.l.b16 %v2949
        %v6858 = vunpack.c.l.b16 %v2961
        %v6859 = vpack.c.b16 %v6844, %v6843
        %v6860 = vpack.c.b16 %v6846, %v6845
        %v6861 = vpack.c.b16 %v6848, %v6847
        %v6862 = vpack.c.b16 %v6850, %v6849
        %v6863 = vpack.c.b16 %v6852, %v6851
        %v6864 = vpack.c.b16 %v6854, %v6853
        %v6865 = vpack.c.b16 %v6856, %v6855
        %v6866 = vpack.c.b16 %v6858, %v6857
        %v6867 = vunpack.c.l.b16 %v4717
        %v6868 = vunpack.c.l.b16 %v4729
        %v6869 = vunpack.c.l.b16 %v4741
        %v6870 = vunpack.c.l.b16 %v4753
        %v6871 = vunpack.c.l.b16 %v4765
        %v6872 = vunpack.c.l.b16 %v4777
        %v6873 = vunpack.c.l.b16 %v4789
        %v6874 = vunpack.c.l.b16 %v4801
        %v6875 = vunpack.c.l.b16 %v4813
        %v6876 = vunpack.c.l.b16 %v4825
        %v6877 = vunpack.c.l.b16 %v4837
        %v6878 = vunpack.c.l.b16 %v4849
        %v6879 = vunpack.c.l.b16 %v4861
        %v6880 = vunpack.c.l.b16 %v4873
        %v6881 = vunpack.c.l.b16 %v4885
        %v6882 = vunpack.c.l.b16 %v4897
        %v6883 = vpack.c.b16 %v6868, %v6867
        %v6884 = vpack.c.b16 %v6870, %v6869
        %v6885 = vpack.c.b16 %v6872, %v6871
        %v6886 = vpack.c.b16 %v6874, %v6873
        %v6887 = vpack.c.b16 %v6876, %v6875
        %v6888 = vpack.c.b16 %v6878, %v6877
        %v6889 = vpack.c.b16 %v6880, %v6879
        %v6890 = vpack.c.b16 %v6882, %v6881
        %vm6891 = vcmask 261120
        %v6893 = vsel %vm6891, %v6859, 0
        %v6896 = vsel %vm6891, %v6860, 0
        %v6899 = vsel %vm6891, %v6861, 0
        %v6902 = vsel %vm6891, %v6862, 0
        %v6905 = vsel %vm6891, %v6863, 0
        %v6908 = vsel %vm6891, %v6864, 0
        %v6911 = vsel %vm6891, %v6865, 0
        %v6914 = vsel %vm6891, %v6866, 0
        %v6917 = vsel %vm6891, %v6883, 0
        %v6920 = vsel %vm6891, %v6884, 0
        %v6923 = vsel %vm6891, %v6885, 0
        %v6926 = vsel %vm6891, %v6886, 0
        %v6929 = vsel %vm6891, %v6887, 0
        %v6932 = vsel %vm6891, %v6888, 0
        %v6935 = vsel %vm6891, %v6889, 0
        %v6938 = vsel %vm6891, %v6890, 0
        %6940 = vmatpush.bf16.xpose.msra.mxu0 %v6938
        %6941 = vmatpush.bf16.xpose.msra.mxu0 %v6935
        %6942 = vmatpush.bf16.xpose.msra.mxu0 %v6932
        %6943 = vmatpush.bf16.xpose.msra.mxu0 %v6929
        %6944 = vmatpush.bf16.xpose.msra.mxu0 %v6926
        %6945 = vmatpush.bf16.xpose.msra.mxu0 %v6923
        %6946 = vmatpush.bf16.xpose.msra.mxu0 %v6920
        %6947 = vmatpush.bf16.xpose.msra.mxu0 %v6917
        %6948 = vmatmul.bf16.gmra.mxu0 %v6893
        %v6949 = vpop.f32.mrf.mxu0
        %v6950 = vadd.f32 0.0, %v6949
        %v6951 = vpop.f32.mrf.mxu0
        %v6952 = vadd.f32 0.0, %v6951
        %6953 = vmatmul.bf16.gmra.mxu0 %v6896
        %v6954 = vpop.f32.mrf.mxu0
        %v6955 = vadd.f32 0.0, %v6954
        %v6956 = vpop.f32.mrf.mxu0
        %v6957 = vadd.f32 0.0, %v6956
        %6958 = vmatmul.bf16.gmra.mxu0 %v6899
        %v6959 = vpop.f32.mrf.mxu0
        %v6960 = vadd.f32 0.0, %v6959
        %v6961 = vpop.f32.mrf.mxu0
        %v6962 = vadd.f32 0.0, %v6961
        %6963 = vmatmul.bf16.gmra.mxu0 %v6902
        %v6964 = vpop.f32.mrf.mxu0
        %v6965 = vadd.f32 0.0, %v6964
        %v6966 = vpop.f32.mrf.mxu0
        %v6967 = vadd.f32 0.0, %v6966
        %6968 = vmatmul.bf16.gmra.mxu0 %v6905
        %v6969 = vpop.f32.mrf.mxu0
        %v6970 = vadd.f32 0.0, %v6969
        %v6971 = vpop.f32.mrf.mxu0
        %v6972 = vadd.f32 0.0, %v6971
        %6973 = vmatmul.bf16.gmra.mxu0 %v6908
        %v6974 = vpop.f32.mrf.mxu0
        %v6975 = vadd.f32 0.0, %v6974
        %v6976 = vpop.f32.mrf.mxu0
        %v6977 = vadd.f32 0.0, %v6976
        %6978 = vmatmul.bf16.gmra.mxu0 %v6911
        %v6979 = vpop.f32.mrf.mxu0
        %v6980 = vadd.f32 0.0, %v6979
        %v6981 = vpop.f32.mrf.mxu0
        %v6982 = vadd.f32 0.0, %v6981
        %6983 = vmatmul.bf16.gmra.mxu0 %v6914
        %v6984 = vpop.f32.mrf.mxu0
        %v6985 = vadd.f32 0.0, %v6984
        %v6986 = vpop.f32.mrf.mxu0
        %v6987 = vadd.f32 0.0, %v6986
        %6988 = vdwg.mxu0
        %v6989 = vunpack.c.l.b16 %v2784
        %v6990 = vunpack.c.l.b16 %v2796
        %v6991 = vunpack.c.l.b16 %v2808
        %v6992 = vunpack.c.l.b16 %v2820
        %v6993 = vunpack.c.l.b16 %v2832
        %v6994 = vunpack.c.l.b16 %v2844
        %v6995 = vunpack.c.l.b16 %v2856
        %v6996 = vunpack.c.l.b16 %v2868
        %v6997 = vunpack.c.l.b16 %v2880
        %v6998 = vunpack.c.l.b16 %v2892
        %v6999 = vunpack.c.l.b16 %v2904
        %v7000 = vunpack.c.l.b16 %v2916
        %v7001 = vunpack.c.l.b16 %v2928
        %v7002 = vunpack.c.l.b16 %v2940
        %v7003 = vunpack.c.l.b16 %v2952
        %v7004 = vunpack.c.l.b16 %v2964
        %v7005 = vpack.c.b16 %v6990, %v6989
        %v7006 = vpack.c.b16 %v6992, %v6991
        %v7007 = vpack.c.b16 %v6994, %v6993
        %v7008 = vpack.c.b16 %v6996, %v6995
        %v7009 = vpack.c.b16 %v6998, %v6997
        %v7010 = vpack.c.b16 %v7000, %v6999
        %v7011 = vpack.c.b16 %v7002, %v7001
        %v7012 = vpack.c.b16 %v7004, %v7003
        %v7013 = vunpack.c.l.b16 %v4720
        %v7014 = vunpack.c.l.b16 %v4732
        %v7015 = vunpack.c.l.b16 %v4744
        %v7016 = vunpack.c.l.b16 %v4756
        %v7017 = vunpack.c.l.b16 %v4768
        %v7018 = vunpack.c.l.b16 %v4780
        %v7019 = vunpack.c.l.b16 %v4792
        %v7020 = vunpack.c.l.b16 %v4804
        %v7021 = vunpack.c.l.b16 %v4816
        %v7022 = vunpack.c.l.b16 %v4828
        %v7023 = vunpack.c.l.b16 %v4840
        %v7024 = vunpack.c.l.b16 %v4852
        %v7025 = vunpack.c.l.b16 %v4864
        %v7026 = vunpack.c.l.b16 %v4876
        %v7027 = vunpack.c.l.b16 %v4888
        %v7028 = vunpack.c.l.b16 %v4900
        %v7029 = vpack.c.b16 %v7014, %v7013
        %v7030 = vpack.c.b16 %v7016, %v7015
        %v7031 = vpack.c.b16 %v7018, %v7017
        %v7032 = vpack.c.b16 %v7020, %v7019
        %v7033 = vpack.c.b16 %v7022, %v7021
        %v7034 = vpack.c.b16 %v7024, %v7023
        %v7035 = vpack.c.b16 %v7026, %v7025
        %v7036 = vpack.c.b16 %v7028, %v7027
        %v7038 = vsel %vm6891, %v7005, 0
        %v7041 = vsel %vm6891, %v7006, 0
        %v7044 = vsel %vm6891, %v7007, 0
        %v7047 = vsel %vm6891, %v7008, 0
        %v7050 = vsel %vm6891, %v7009, 0
        %v7053 = vsel %vm6891, %v7010, 0
        %v7056 = vsel %vm6891, %v7011, 0
        %v7059 = vsel %vm6891, %v7012, 0
        %v7062 = vsel %vm6891, %v7029, 0
        %v7065 = vsel %vm6891, %v7030, 0
        %v7068 = vsel %vm6891, %v7031, 0
        %v7071 = vsel %vm6891, %v7032, 0
        %v7074 = vsel %vm6891, %v7033, 0
        %v7077 = vsel %vm6891, %v7034, 0
        %v7080 = vsel %vm6891, %v7035, 0
        %v7083 = vsel %vm6891, %v7036, 0
        %7085 = vmatpush.bf16.xpose.msra.mxu0 %v7083
        %7086 = vmatpush.bf16.xpose.msra.mxu0 %v7080
        %7087 = vmatpush.bf16.xpose.msra.mxu0 %v7077
        %7088 = vmatpush.bf16.xpose.msra.mxu0 %v7074
        %7089 = vmatpush.bf16.xpose.msra.mxu0 %v7071
        %7090 = vmatpush.bf16.xpose.msra.mxu0 %v7068
        %7091 = vmatpush.bf16.xpose.msra.mxu0 %v7065
        %7092 = vmatpush.bf16.xpose.msra.mxu0 %v7062
        %7093 = vmatmul.bf16.gmra.mxu0 %v7038
        %v7094 = vpop.f32.mrf.mxu0
        %v7095 = vadd.f32 0.0, %v7094
        %v7096 = vpop.f32.mrf.mxu0
        %v7097 = vadd.f32 0.0, %v7096
        %7098 = vmatmul.bf16.gmra.mxu0 %v7041
        %v7099 = vpop.f32.mrf.mxu0
        %v7100 = vadd.f32 0.0, %v7099
        %v7101 = vpop.f32.mrf.mxu0
        %v7102 = vadd.f32 0.0, %v7101
        %7103 = vmatmul.bf16.gmra.mxu0 %v7044
        %v7104 = vpop.f32.mrf.mxu0
        %v7105 = vadd.f32 0.0, %v7104
        %v7106 = vpop.f32.mrf.mxu0
        %v7107 = vadd.f32 0.0, %v7106
        %7108 = vmatmul.bf16.gmra.mxu0 %v7047
        %v7109 = vpop.f32.mrf.mxu0
        %v7110 = vadd.f32 0.0, %v7109
        %v7111 = vpop.f32.mrf.mxu0
        %v7112 = vadd.f32 0.0, %v7111
        %7113 = vmatmul.bf16.gmra.mxu0 %v7050
        %v7114 = vpop.f32.mrf.mxu0
        %v7115 = vadd.f32 0.0, %v7114
        %v7116 = vpop.f32.mrf.mxu0
        %v7117 = vadd.f32 0.0, %v7116
        %7118 = vmatmul.bf16.gmra.mxu0 %v7053
        %v7119 = vpop.f32.mrf.mxu0
        %v7120 = vadd.f32 0.0, %v7119
        %v7121 = vpop.f32.mrf.mxu0
        %v7122 = vadd.f32 0.0, %v7121
        %7123 = vmatmul.bf16.gmra.mxu0 %v7056
        %v7124 = vpop.f32.mrf.mxu0
        %v7125 = vadd.f32 0.0, %v7124
        %v7126 = vpop.f32.mrf.mxu0
        %v7127 = vadd.f32 0.0, %v7126
        %7128 = vmatmul.bf16.gmra.mxu0 %v7059
        %v7129 = vpop.f32.mrf.mxu0
        %v7130 = vadd.f32 0.0, %v7129
        %v7131 = vpop.f32.mrf.mxu0
        %v7132 = vadd.f32 0.0, %v7131
        %7133 = vdwg.mxu0
        %v7134 = vunpack.c.l.b16 %v2787
        %v7135 = vunpack.c.l.b16 %v2799
        %v7136 = vunpack.c.l.b16 %v2811
        %v7137 = vunpack.c.l.b16 %v2823
        %v7138 = vunpack.c.l.b16 %v2835
        %v7139 = vunpack.c.l.b16 %v2847
        %v7140 = vunpack.c.l.b16 %v2859
        %v7141 = vunpack.c.l.b16 %v2871
        %v7142 = vunpack.c.l.b16 %v2883
        %v7143 = vunpack.c.l.b16 %v2895
        %v7144 = vunpack.c.l.b16 %v2907
        %v7145 = vunpack.c.l.b16 %v2919
        %v7146 = vunpack.c.l.b16 %v2931
        %v7147 = vunpack.c.l.b16 %v2943
        %v7148 = vunpack.c.l.b16 %v2955
        %v7149 = vunpack.c.l.b16 %v2967
        %v7150 = vpack.c.b16 %v7135, %v7134
        %v7151 = vpack.c.b16 %v7137, %v7136
        %v7152 = vpack.c.b16 %v7139, %v7138
        %v7153 = vpack.c.b16 %v7141, %v7140
        %v7154 = vpack.c.b16 %v7143, %v7142
        %v7155 = vpack.c.b16 %v7145, %v7144
        %v7156 = vpack.c.b16 %v7147, %v7146
        %v7157 = vpack.c.b16 %v7149, %v7148
        %v7158 = vunpack.c.l.b16 %v4723
        %v7159 = vunpack.c.l.b16 %v4735
        %v7160 = vunpack.c.l.b16 %v4747
        %v7161 = vunpack.c.l.b16 %v4759
        %v7162 = vunpack.c.l.b16 %v4771
        %v7163 = vunpack.c.l.b16 %v4783
        %v7164 = vunpack.c.l.b16 %v4795
        %v7165 = vunpack.c.l.b16 %v4807
        %v7166 = vunpack.c.l.b16 %v4819
        %v7167 = vunpack.c.l.b16 %v4831
        %v7168 = vunpack.c.l.b16 %v4843
        %v7169 = vunpack.c.l.b16 %v4855
        %v7170 = vunpack.c.l.b16 %v4867
        %v7171 = vunpack.c.l.b16 %v4879
        %v7172 = vunpack.c.l.b16 %v4891
        %v7173 = vunpack.c.l.b16 %v4903
        %v7174 = vpack.c.b16 %v7159, %v7158
        %v7175 = vpack.c.b16 %v7161, %v7160
        %v7176 = vpack.c.b16 %v7163, %v7162
        %v7177 = vpack.c.b16 %v7165, %v7164
        %v7178 = vpack.c.b16 %v7167, %v7166
        %v7179 = vpack.c.b16 %v7169, %v7168
        %v7180 = vpack.c.b16 %v7171, %v7170
        %v7181 = vpack.c.b16 %v7173, %v7172
        %v7183 = vsel %vm6891, %v7150, 0
        %v7186 = vsel %vm6891, %v7151, 0
        %v7189 = vsel %vm6891, %v7152, 0
        %v7192 = vsel %vm6891, %v7153, 0
        %v7195 = vsel %vm6891, %v7154, 0
        %v7198 = vsel %vm6891, %v7155, 0
        %v7201 = vsel %vm6891, %v7156, 0
        %v7204 = vsel %vm6891, %v7157, 0
        %v7207 = vsel %vm6891, %v7174, 0
        %v7210 = vsel %vm6891, %v7175, 0
        %v7213 = vsel %vm6891, %v7176, 0
        %v7216 = vsel %vm6891, %v7177, 0
        %v7219 = vsel %vm6891, %v7178, 0
        %v7222 = vsel %vm6891, %v7179, 0
        %v7225 = vsel %vm6891, %v7180, 0
        %v7228 = vsel %vm6891, %v7181, 0
        %7230 = vmatpush.bf16.xpose.msra.mxu0 %v7228
        %7231 = vmatpush.bf16.xpose.msra.mxu0 %v7225
        %7232 = vmatpush.bf16.xpose.msra.mxu0 %v7222
        %7233 = vmatpush.bf16.xpose.msra.mxu0 %v7219
        %7234 = vmatpush.bf16.xpose.msra.mxu0 %v7216
        %7235 = vmatpush.bf16.xpose.msra.mxu0 %v7213
        %7236 = vmatpush.bf16.xpose.msra.mxu0 %v7210
        %7237 = vmatpush.bf16.xpose.msra.mxu0 %v7207
        %7238 = vmatmul.bf16.gmra.mxu0 %v7183
        %v7239 = vpop.f32.mrf.mxu0
        %v7240 = vadd.f32 0.0, %v7239
        %v7241 = vpop.f32.mrf.mxu0
        %v7242 = vadd.f32 0.0, %v7241
        %7243 = vmatmul.bf16.gmra.mxu0 %v7186
        %v7244 = vpop.f32.mrf.mxu0
        %v7245 = vadd.f32 0.0, %v7244
        %v7246 = vpop.f32.mrf.mxu0
        %v7247 = vadd.f32 0.0, %v7246
        %7248 = vmatmul.bf16.gmra.mxu0 %v7189
        %v7249 = vpop.f32.mrf.mxu0
        %v7250 = vadd.f32 0.0, %v7249
        %v7251 = vpop.f32.mrf.mxu0
        %v7252 = vadd.f32 0.0, %v7251
        %7253 = vmatmul.bf16.gmra.mxu0 %v7192
        %v7254 = vpop.f32.mrf.mxu0
        %v7255 = vadd.f32 0.0, %v7254
        %v7256 = vpop.f32.mrf.mxu0
        %v7257 = vadd.f32 0.0, %v7256
        %7258 = vmatmul.bf16.gmra.mxu0 %v7195
        %v7259 = vpop.f32.mrf.mxu0
        %v7260 = vadd.f32 0.0, %v7259
        %v7261 = vpop.f32.mrf.mxu0
        %v7262 = vadd.f32 0.0, %v7261
        %7263 = vmatmul.bf16.gmra.mxu0 %v7198
        %v7264 = vpop.f32.mrf.mxu0
        %v7265 = vadd.f32 0.0, %v7264
        %v7266 = vpop.f32.mrf.mxu0
        %v7267 = vadd.f32 0.0, %v7266
        %7268 = vmatmul.bf16.gmra.mxu0 %v7201
        %v7269 = vpop.f32.mrf.mxu0
        %v7270 = vadd.f32 0.0, %v7269
        %v7271 = vpop.f32.mrf.mxu0
        %v7272 = vadd.f32 0.0, %v7271
        %7273 = vmatmul.bf16.gmra.mxu0 %v7204
        %v7274 = vpop.f32.mrf.mxu0
        %v7275 = vadd.f32 0.0, %v7274
        %v7276 = vpop.f32.mrf.mxu0
        %v7277 = vadd.f32 0.0, %v7276
        %7278 = vdwg.mxu0
        %v7279 = vunpack.c.l.b16 %v2790
        %v7280 = vunpack.c.l.b16 %v2802
        %v7281 = vunpack.c.l.b16 %v2814
        %v7282 = vunpack.c.l.b16 %v2826
        %v7283 = vunpack.c.l.b16 %v2838
        %v7284 = vunpack.c.l.b16 %v2850
        %v7285 = vunpack.c.l.b16 %v2862
        %v7286 = vunpack.c.l.b16 %v2874
        %v7287 = vunpack.c.l.b16 %v2886
        %v7288 = vunpack.c.l.b16 %v2898
        %v7289 = vunpack.c.l.b16 %v2910
        %v7290 = vunpack.c.l.b16 %v2922
        %v7291 = vunpack.c.l.b16 %v2934
        %v7292 = vunpack.c.l.b16 %v2946
        %v7293 = vunpack.c.l.b16 %v2958
        %v7294 = vunpack.c.l.b16 %v2970
        %v7295 = vpack.c.b16 %v7280, %v7279
        %v7296 = vpack.c.b16 %v7282, %v7281
        %v7297 = vpack.c.b16 %v7284, %v7283
        %v7298 = vpack.c.b16 %v7286, %v7285
        %v7299 = vpack.c.b16 %v7288, %v7287
        %v7300 = vpack.c.b16 %v7290, %v7289
        %v7301 = vpack.c.b16 %v7292, %v7291
        %v7302 = vpack.c.b16 %v7294, %v7293
        %v7303 = vunpack.c.l.b16 %v4726
        %v7304 = vunpack.c.l.b16 %v4738
        %v7305 = vunpack.c.l.b16 %v4750
        %v7306 = vunpack.c.l.b16 %v4762
        %v7307 = vunpack.c.l.b16 %v4774
        %v7308 = vunpack.c.l.b16 %v4786
        %v7309 = vunpack.c.l.b16 %v4798
        %v7310 = vunpack.c.l.b16 %v4810
        %v7311 = vunpack.c.l.b16 %v4822
        %v7312 = vunpack.c.l.b16 %v4834
        %v7313 = vunpack.c.l.b16 %v4846
        %v7314 = vunpack.c.l.b16 %v4858
        %v7315 = vunpack.c.l.b16 %v4870
        %v7316 = vunpack.c.l.b16 %v4882
        %v7317 = vunpack.c.l.b16 %v4894
        %v7318 = vunpack.c.l.b16 %v4906
        %v7319 = vpack.c.b16 %v7304, %v7303
        %v7320 = vpack.c.b16 %v7306, %v7305
        %v7321 = vpack.c.b16 %v7308, %v7307
        %v7322 = vpack.c.b16 %v7310, %v7309
        %v7323 = vpack.c.b16 %v7312, %v7311
        %v7324 = vpack.c.b16 %v7314, %v7313
        %v7325 = vpack.c.b16 %v7316, %v7315
        %v7326 = vpack.c.b16 %v7318, %v7317
        %v7328 = vsel %vm6891, %v7295, 0
        %v7331 = vsel %vm6891, %v7296, 0
        %v7334 = vsel %vm6891, %v7297, 0
        %v7337 = vsel %vm6891, %v7298, 0
        %v7340 = vsel %vm6891, %v7299, 0
        %v7343 = vsel %vm6891, %v7300, 0
        %v7346 = vsel %vm6891, %v7301, 0
        %v7349 = vsel %vm6891, %v7302, 0
        %v7352 = vsel %vm6891, %v7319, 0
        %v7355 = vsel %vm6891, %v7320, 0
        %v7358 = vsel %vm6891, %v7321, 0
        %v7361 = vsel %vm6891, %v7322, 0
        %v7364 = vsel %vm6891, %v7323, 0
        %v7367 = vsel %vm6891, %v7324, 0
        %v7370 = vsel %vm6891, %v7325, 0
        %v7373 = vsel %vm6891, %v7326, 0
        %7375 = vmatpush.bf16.xpose.msra.mxu0 %v7373
        %7376 = vmatpush.bf16.xpose.msra.mxu0 %v7370
        %7377 = vmatpush.bf16.xpose.msra.mxu0 %v7367
        %7378 = vmatpush.bf16.xpose.msra.mxu0 %v7364
        %7379 = vmatpush.bf16.xpose.msra.mxu0 %v7361
        %7380 = vmatpush.bf16.xpose.msra.mxu0 %v7358
        %7381 = vmatpush.bf16.xpose.msra.mxu0 %v7355
        %7382 = vmatpush.bf16.xpose.msra.mxu0 %v7352
        %7383 = vmatmul.bf16.gmra.mxu0 %v7328
        %v7384 = vpop.f32.mrf.mxu0
        %v7385 = vadd.f32 0.0, %v7384
        %v7386 = vpop.f32.mrf.mxu0
        %v7387 = vadd.f32 0.0, %v7386
        %7388 = vmatmul.bf16.gmra.mxu0 %v7331
        %v7389 = vpop.f32.mrf.mxu0
        %v7390 = vadd.f32 0.0, %v7389
        %v7391 = vpop.f32.mrf.mxu0
        %v7392 = vadd.f32 0.0, %v7391
        %7393 = vmatmul.bf16.gmra.mxu0 %v7334
        %v7394 = vpop.f32.mrf.mxu0
        %v7395 = vadd.f32 0.0, %v7394
        %v7396 = vpop.f32.mrf.mxu0
        %v7397 = vadd.f32 0.0, %v7396
        %7398 = vmatmul.bf16.gmra.mxu0 %v7337
        %v7399 = vpop.f32.mrf.mxu0
        %v7400 = vadd.f32 0.0, %v7399
        %v7401 = vpop.f32.mrf.mxu0
        %v7402 = vadd.f32 0.0, %v7401
        %7403 = vmatmul.bf16.gmra.mxu0 %v7340
        %v7404 = vpop.f32.mrf.mxu0
        %v7405 = vadd.f32 0.0, %v7404
        %v7406 = vpop.f32.mrf.mxu0
        %v7407 = vadd.f32 0.0, %v7406
        %7408 = vmatmul.bf16.gmra.mxu0 %v7343
        %v7409 = vpop.f32.mrf.mxu0
        %v7410 = vadd.f32 0.0, %v7409
        %v7411 = vpop.f32.mrf.mxu0
        %v7412 = vadd.f32 0.0, %v7411
        %7413 = vmatmul.bf16.gmra.mxu0 %v7346
        %v7414 = vpop.f32.mrf.mxu0
        %v7415 = vadd.f32 0.0, %v7414
        %v7416 = vpop.f32.mrf.mxu0
        %v7417 = vadd.f32 0.0, %v7416
        %7418 = vmatmul.bf16.gmra.mxu0 %v7349
        %v7419 = vpop.f32.mrf.mxu0
        %v7420 = vadd.f32 0.0, %v7419
        %v7421 = vpop.f32.mrf.mxu0
        %v7422 = vadd.f32 0.0, %v7421
        %7423 = vdwg.mxu0
        %7424 = vmax.xlane.f32.xlu0 %v6950
        %v7425 = vpop.xlane.xlu0 %7424
        %7426 = vmax.xlane.f32.xlu0 %v6952
        %v7427 = vpop.xlane.xlu0 %7426
        %7428 = vmax.xlane.f32.xlu0 %v6955
        %v7429 = vpop.xlane.xlu0 %7428
        %7430 = vmax.xlane.f32.xlu0 %v6957
        %v7431 = vpop.xlane.xlu0 %7430
        %7432 = vmax.xlane.f32.xlu0 %v6960
        %v7433 = vpop.xlane.xlu0 %7432
        %7434 = vmax.xlane.f32.xlu0 %v6962
        %v7435 = vpop.xlane.xlu0 %7434
        %7436 = vmax.xlane.f32.xlu0 %v6965
        %v7437 = vpop.xlane.xlu0 %7436
        %7438 = vmax.xlane.f32.xlu0 %v6967
        %v7439 = vpop.xlane.xlu0 %7438
        %7440 = vmax.xlane.f32.xlu0 %v6970
        %v7441 = vpop.xlane.xlu0 %7440
        %7442 = vmax.xlane.f32.xlu0 %v6972
        %v7443 = vpop.xlane.xlu0 %7442
        %7444 = vmax.xlane.f32.xlu0 %v6975
        %v7445 = vpop.xlane.xlu0 %7444
        %7446 = vmax.xlane.f32.xlu0 %v6977
        %v7447 = vpop.xlane.xlu0 %7446
        %7448 = vmax.xlane.f32.xlu0 %v6980
        %v7449 = vpop.xlane.xlu0 %7448
        %7450 = vmax.xlane.f32.xlu0 %v6982
        %v7451 = vpop.xlane.xlu0 %7450
        %7452 = vmax.xlane.f32.xlu0 %v6985
        %v7453 = vpop.xlane.xlu0 %7452
        %7454 = vmax.xlane.f32.xlu0 %v6987
        %v7455 = vpop.xlane.xlu0 %7454
        %7456 = vmax.xlane.f32.xlu0 %v7095
        %v7457 = vpop.xlane.xlu0 %7456
        %7458 = vmax.xlane.f32.xlu0 %v7097
        %v7459 = vpop.xlane.xlu0 %7458
        %7460 = vmax.xlane.f32.xlu0 %v7100
        %v7461 = vpop.xlane.xlu0 %7460
        %7462 = vmax.xlane.f32.xlu0 %v7102
        %v7463 = vpop.xlane.xlu0 %7462
        %7464 = vmax.xlane.f32.xlu0 %v7105
        %v7465 = vpop.xlane.xlu0 %7464
        %7466 = vmax.xlane.f32.xlu0 %v7107
        %v7467 = vpop.xlane.xlu0 %7466
        %7468 = vmax.xlane.f32.xlu0 %v7110
        %v7469 = vpop.xlane.xlu0 %7468
        %7470 = vmax.xlane.f32.xlu0 %v7112
        %v7471 = vpop.xlane.xlu0 %7470
        %7472 = vmax.xlane.f32.xlu0 %v7115
        %v7473 = vpop.xlane.xlu0 %7472
        %7474 = vmax.xlane.f32.xlu0 %v7117
        %v7475 = vpop.xlane.xlu0 %7474
        %7476 = vmax.xlane.f32.xlu0 %v7120
        %v7477 = vpop.xlane.xlu0 %7476
        %7478 = vmax.xlane.f32.xlu0 %v7122
        %v7479 = vpop.xlane.xlu0 %7478
        %7480 = vmax.xlane.f32.xlu0 %v7125
        %v7481 = vpop.xlane.xlu0 %7480
        %7482 = vmax.xlane.f32.xlu0 %v7127
        %v7483 = vpop.xlane.xlu0 %7482
        %7484 = vmax.xlane.f32.xlu0 %v7130
        %v7485 = vpop.xlane.xlu0 %7484
        %7486 = vmax.xlane.f32.xlu0 %v7132
        %v7487 = vpop.xlane.xlu0 %7486
        %7488 = vmax.xlane.f32.xlu0 %v7240
        %v7489 = vpop.xlane.xlu0 %7488
        %7490 = vmax.xlane.f32.xlu0 %v7242
        %v7491 = vpop.xlane.xlu0 %7490
        %7492 = vmax.xlane.f32.xlu0 %v7245
        %v7493 = vpop.xlane.xlu0 %7492
        %7494 = vmax.xlane.f32.xlu0 %v7247
        %v7495 = vpop.xlane.xlu0 %7494
        %7496 = vmax.xlane.f32.xlu0 %v7250
        %v7497 = vpop.xlane.xlu0 %7496
        %7498 = vmax.xlane.f32.xlu0 %v7252
        %v7499 = vpop.xlane.xlu0 %7498
        %7500 = vmax.xlane.f32.xlu0 %v7255
        %v7501 = vpop.xlane.xlu0 %7500
        %7502 = vmax.xlane.f32.xlu0 %v7257
        %v7503 = vpop.xlane.xlu0 %7502
        %7504 = vmax.xlane.f32.xlu0 %v7260
        %v7505 = vpop.xlane.xlu0 %7504
        %7506 = vmax.xlane.f32.xlu0 %v7262
        %v7507 = vpop.xlane.xlu0 %7506
        %7508 = vmax.xlane.f32.xlu0 %v7265
        %v7509 = vpop.xlane.xlu0 %7508
        %7510 = vmax.xlane.f32.xlu0 %v7267
        %v7511 = vpop.xlane.xlu0 %7510
        %7512 = vmax.xlane.f32.xlu0 %v7270
        %v7513 = vpop.xlane.xlu0 %7512
        %7514 = vmax.xlane.f32.xlu0 %v7272
        %v7515 = vpop.xlane.xlu0 %7514
        %7516 = vmax.xlane.f32.xlu0 %v7275
        %v7517 = vpop.xlane.xlu0 %7516
        %7518 = vmax.xlane.f32.xlu0 %v7277
        %v7519 = vpop.xlane.xlu0 %7518
        %7520 = vmax.xlane.f32.xlu0 %v7385
        %v7521 = vpop.xlane.xlu0 %7520
        %7522 = vmax.xlane.f32.xlu0 %v7387
        %v7523 = vpop.xlane.xlu0 %7522
        %7524 = vmax.xlane.f32.xlu0 %v7390
        %v7525 = vpop.xlane.xlu0 %7524
        %7526 = vmax.xlane.f32.xlu0 %v7392
        %v7527 = vpop.xlane.xlu0 %7526
        %7528 = vmax.xlane.f32.xlu0 %v7395
        %v7529 = vpop.xlane.xlu0 %7528
        %7530 = vmax.xlane.f32.xlu0 %v7397
        %v7531 = vpop.xlane.xlu0 %7530
        %7532 = vmax.xlane.f32.xlu0 %v7400
        %v7533 = vpop.xlane.xlu0 %7532
        %7534 = vmax.xlane.f32.xlu0 %v7402
        %v7535 = vpop.xlane.xlu0 %7534
        %7536 = vmax.xlane.f32.xlu0 %v7405
        %v7537 = vpop.xlane.xlu0 %7536
        %7538 = vmax.xlane.f32.xlu0 %v7407
        %v7539 = vpop.xlane.xlu0 %7538
        %7540 = vmax.xlane.f32.xlu0 %v7410
        %v7541 = vpop.xlane.xlu0 %7540
        %7542 = vmax.xlane.f32.xlu0 %v7412
        %v7543 = vpop.xlane.xlu0 %7542
        %7544 = vmax.xlane.f32.xlu0 %v7415
        %v7545 = vpop.xlane.xlu0 %7544
        %7546 = vmax.xlane.f32.xlu0 %v7417
        %v7547 = vpop.xlane.xlu0 %7546
        %7548 = vmax.xlane.f32.xlu0 %v7420
        %v7549 = vpop.xlane.xlu0 %7548
        %7550 = vmax.xlane.f32.xlu0 %v7422
        %v7551 = vpop.xlane.xlu0 %7550
        %v7552 = vsub.f32 %v6950, %v7425
        %v7553 = vsub.f32 %v6952, %v7427
        %v7554 = vsub.f32 %v6955, %v7429
        %v7555 = vsub.f32 %v6957, %v7431
        %v7556 = vsub.f32 %v6960, %v7433
        %v7557 = vsub.f32 %v6962, %v7435
        %v7558 = vsub.f32 %v6965, %v7437
        %v7559 = vsub.f32 %v6967, %v7439
        %v7560 = vsub.f32 %v6970, %v7441
        %v7561 = vsub.f32 %v6972, %v7443
        %v7562 = vsub.f32 %v6975, %v7445
        %v7563 = vsub.f32 %v6977, %v7447
        %v7564 = vsub.f32 %v6980, %v7449
        %v7565 = vsub.f32 %v6982, %v7451
        %v7566 = vsub.f32 %v6985, %v7453
        %v7567 = vsub.f32 %v6987, %v7455
        %v7568 = vsub.f32 %v7095, %v7457
        %v7569 = vsub.f32 %v7097, %v7459
        %v7570 = vsub.f32 %v7100, %v7461
        %v7571 = vsub.f32 %v7102, %v7463
        %v7572 = vsub.f32 %v7105, %v7465
        %v7573 = vsub.f32 %v7107, %v7467
        %v7574 = vsub.f32 %v7110, %v7469
        %v7575 = vsub.f32 %v7112, %v7471
        %v7576 = vsub.f32 %v7115, %v7473
        %v7577 = vsub.f32 %v7117, %v7475
        %v7578 = vsub.f32 %v7120, %v7477
        %v7579 = vsub.f32 %v7122, %v7479
        %v7580 = vsub.f32 %v7125, %v7481
        %v7581 = vsub.f32 %v7127, %v7483
        %v7582 = vsub.f32 %v7130, %v7485
        %v7583 = vsub.f32 %v7132, %v7487
        %v7584 = vsub.f32 %v7240, %v7489
        %v7585 = vsub.f32 %v7242, %v7491
        %v7586 = vsub.f32 %v7245, %v7493
        %v7587 = vsub.f32 %v7247, %v7495
        %v7588 = vsub.f32 %v7250, %v7497
        %v7589 = vsub.f32 %v7252, %v7499
        %v7590 = vsub.f32 %v7255, %v7501
        %v7591 = vsub.f32 %v7257, %v7503
        %v7592 = vsub.f32 %v7260, %v7505
        %v7593 = vsub.f32 %v7262, %v7507
        %v7594 = vsub.f32 %v7265, %v7509
        %v7595 = vsub.f32 %v7267, %v7511
        %v7596 = vsub.f32 %v7270, %v7513
        %v7597 = vsub.f32 %v7272, %v7515
        %v7598 = vsub.f32 %v7275, %v7517
        %v7599 = vsub.f32 %v7277, %v7519
        %v7600 = vsub.f32 %v7385, %v7521
        %v7601 = vsub.f32 %v7387, %v7523
        %v7602 = vsub.f32 %v7390, %v7525
        %v7603 = vsub.f32 %v7392, %v7527
        %v7604 = vsub.f32 %v7395, %v7529
        %v7605 = vsub.f32 %v7397, %v7531
        %v7606 = vsub.f32 %v7400, %v7533
        %v7607 = vsub.f32 %v7402, %v7535
        %v7608 = vsub.f32 %v7405, %v7537
        %v7609 = vsub.f32 %v7407, %v7539
        %v7610 = vsub.f32 %v7410, %v7541
        %v7611 = vsub.f32 %v7412, %v7543
        %v7612 = vsub.f32 %v7415, %v7545
        %v7613 = vsub.f32 %v7417, %v7547
        %v7614 = vsub.f32 %v7420, %v7549
        %v7615 = vsub.f32 %v7422, %v7551
        %v7616 = vmul.f32 %v7552, 1.442695
        %v7617 = vpow.pop %v7616
        %v7618 = vmul.f32 %v7553, 1.442695
        %v7619 = vpow.pop %v7618
        %v7620 = vmul.f32 %v7554, 1.442695
        %v7621 = vpow.pop %v7620
        %v7622 = vmul.f32 %v7555, 1.442695
        %v7623 = vpow.pop %v7622
        %v7624 = vmul.f32 %v7556, 1.442695
        %v7625 = vpow.pop %v7624
        %v7626 = vmul.f32 %v7557, 1.442695
        %v7627 = vpow.pop %v7626
        %v7628 = vmul.f32 %v7558, 1.442695
        %v7629 = vpow.pop %v7628
        %v7630 = vmul.f32 %v7559, 1.442695
        %v7631 = vpow.pop %v7630
        %v7632 = vmul.f32 %v7560, 1.442695
        %v7633 = vpow.pop %v7632
        %v7634 = vmul.f32 %v7561, 1.442695
        %v7635 = vpow.pop %v7634
        %v7636 = vmul.f32 %v7562, 1.442695
        %v7637 = vpow.pop %v7636
        %v7638 = vmul.f32 %v7563, 1.442695
        %v7639 = vpow.pop %v7638
        %v7640 = vmul.f32 %v7564, 1.442695
        %v7641 = vpow.pop %v7640
        %v7642 = vmul.f32 %v7565, 1.442695
        %v7643 = vpow.pop %v7642
        %v7644 = vmul.f32 %v7566, 1.442695
        %v7645 = vpow.pop %v7644
        %v7646 = vmul.f32 %v7567, 1.442695
        %v7647 = vpow.pop %v7646
        %v7648 = vmul.f32 %v7568, 1.442695
        %v7649 = vpow.pop %v7648
        %v7650 = vmul.f32 %v7569, 1.442695
        %v7651 = vpow.pop %v7650
        %v7652 = vmul.f32 %v7570, 1.442695
        %v7653 = vpow.pop %v7652
        %v7654 = vmul.f32 %v7571, 1.442695
        %v7655 = vpow.pop %v7654
        %v7656 = vmul.f32 %v7572, 1.442695
        %v7657 = vpow.pop %v7656
        %v7658 = vmul.f32 %v7573, 1.442695
        %v7659 = vpow.pop %v7658
        %v7660 = vmul.f32 %v7574, 1.442695
        %v7661 = vpow.pop %v7660
        %v7662 = vmul.f32 %v7575, 1.442695
        %v7663 = vpow.pop %v7662
        %v7664 = vmul.f32 %v7576, 1.442695
        %v7665 = vpow.pop %v7664
        %v7666 = vmul.f32 %v7577, 1.442695
        %v7667 = vpow.pop %v7666
        %v7668 = vmul.f32 %v7578, 1.442695
        %v7669 = vpow.pop %v7668
        %v7670 = vmul.f32 %v7579, 1.442695
        %v7671 = vpow.pop %v7670
        %v7672 = vmul.f32 %v7580, 1.442695
        %v7673 = vpow.pop %v7672
        %v7674 = vmul.f32 %v7581, 1.442695
        %v7675 = vpow.pop %v7674
        %v7676 = vmul.f32 %v7582, 1.442695
        %v7677 = vpow.pop %v7676
        %v7678 = vmul.f32 %v7583, 1.442695
        %v7679 = vpow.pop %v7678
        %v7680 = vmul.f32 %v7584, 1.442695
        %v7681 = vpow.pop %v7680
        %v7682 = vmul.f32 %v7585, 1.442695
        %v7683 = vpow.pop %v7682
        %v7684 = vmul.f32 %v7586, 1.442695
        %v7685 = vpow.pop %v7684
        %v7686 = vmul.f32 %v7587, 1.442695
        %v7687 = vpow.pop %v7686
        %v7688 = vmul.f32 %v7588, 1.442695
        %v7689 = vpow.pop %v7688
        %v7690 = vmul.f32 %v7589, 1.442695
        %v7691 = vpow.pop %v7690
        %v7692 = vmul.f32 %v7590, 1.442695
        %v7693 = vpow.pop %v7692
        %v7694 = vmul.f32 %v7591, 1.442695
        %v7695 = vpow.pop %v7694
        %v7696 = vmul.f32 %v7592, 1.442695
        %v7697 = vpow.pop %v7696
        %v7698 = vmul.f32 %v7593, 1.442695
        %v7699 = vpow.pop %v7698
        %v7700 = vmul.f32 %v7594, 1.442695
        %v7701 = vpow.pop %v7700
        %v7702 = vmul.f32 %v7595, 1.442695
        %v7703 = vpow.pop %v7702
        %v7704 = vmul.f32 %v7596, 1.442695
        %v7705 = vpow.pop %v7704
        %v7706 = vmul.f32 %v7597, 1.442695
        %v7707 = vpow.pop %v7706
        %v7708 = vmul.f32 %v7598, 1.442695
        %v7709 = vpow.pop %v7708
        %v7710 = vmul.f32 %v7599, 1.442695
        %v7711 = vpow.pop %v7710
        %v7712 = vmul.f32 %v7600, 1.442695
        %v7713 = vpow.pop %v7712
        %v7714 = vmul.f32 %v7601, 1.442695
        %v7715 = vpow.pop %v7714
        %v7716 = vmul.f32 %v7602, 1.442695
        %v7717 = vpow.pop %v7716
        %v7718 = vmul.f32 %v7603, 1.442695
        %v7719 = vpow.pop %v7718
        %v7720 = vmul.f32 %v7604, 1.442695
        %v7721 = vpow.pop %v7720
        %v7722 = vmul.f32 %v7605, 1.442695
        %v7723 = vpow.pop %v7722
        %v7724 = vmul.f32 %v7606, 1.442695
        %v7725 = vpow.pop %v7724
        %v7726 = vmul.f32 %v7607, 1.442695
        %v7727 = vpow.pop %v7726
        %v7728 = vmul.f32 %v7608, 1.442695
        %v7729 = vpow.pop %v7728
        %v7730 = vmul.f32 %v7609, 1.442695
        %v7731 = vpow.pop %v7730
        %v7732 = vmul.f32 %v7610, 1.442695
        %v7733 = vpow.pop %v7732
        %v7734 = vmul.f32 %v7611, 1.442695
        %v7735 = vpow.pop %v7734
        %v7736 = vmul.f32 %v7612, 1.442695
        %v7737 = vpow.pop %v7736
        %v7738 = vmul.f32 %v7613, 1.442695
        %v7739 = vpow.pop %v7738
        %v7740 = vmul.f32 %v7614, 1.442695
        %v7741 = vpow.pop %v7740
        %v7742 = vmul.f32 %v7615, 1.442695
        %v7743 = vpow.pop %v7742
        %7744 = vadd.xlane.f32.xlu0 %v7617
        %v7745 = vpop.xlane.xlu0 %7744
        %7746 = vadd.xlane.f32.xlu0 %v7619
        %v7747 = vpop.xlane.xlu0 %7746
        %7748 = vadd.xlane.f32.xlu0 %v7621
        %v7749 = vpop.xlane.xlu0 %7748
        %7750 = vadd.xlane.f32.xlu0 %v7623
        %v7751 = vpop.xlane.xlu0 %7750
        %7752 = vadd.xlane.f32.xlu0 %v7625
        %v7753 = vpop.xlane.xlu0 %7752
        %7754 = vadd.xlane.f32.xlu0 %v7627
        %v7755 = vpop.xlane.xlu0 %7754
        %7756 = vadd.xlane.f32.xlu0 %v7629
        %v7757 = vpop.xlane.xlu0 %7756
        %7758 = vadd.xlane.f32.xlu0 %v7631
        %v7759 = vpop.xlane.xlu0 %7758
        %7760 = vadd.xlane.f32.xlu0 %v7633
        %v7761 = vpop.xlane.xlu0 %7760
        %7762 = vadd.xlane.f32.xlu0 %v7635
        %v7763 = vpop.xlane.xlu0 %7762
        %7764 = vadd.xlane.f32.xlu0 %v7637
        %v7765 = vpop.xlane.xlu0 %7764
        %7766 = vadd.xlane.f32.xlu0 %v7639
        %v7767 = vpop.xlane.xlu0 %7766
        %7768 = vadd.xlane.f32.xlu0 %v7641
        %v7769 = vpop.xlane.xlu0 %7768
        %7770 = vadd.xlane.f32.xlu0 %v7643
        %v7771 = vpop.xlane.xlu0 %7770
        %7772 = vadd.xlane.f32.xlu0 %v7645
        %v7773 = vpop.xlane.xlu0 %7772
        %7774 = vadd.xlane.f32.xlu0 %v7647
        %v7775 = vpop.xlane.xlu0 %7774
        %7776 = vadd.xlane.f32.xlu0 %v7649
        %v7777 = vpop.xlane.xlu0 %7776
        %7778 = vadd.xlane.f32.xlu0 %v7651
        %v7779 = vpop.xlane.xlu0 %7778
        %7780 = vadd.xlane.f32.xlu0 %v7653
        %v7781 = vpop.xlane.xlu0 %7780
        %7782 = vadd.xlane.f32.xlu0 %v7655
        %v7783 = vpop.xlane.xlu0 %7782
        %7784 = vadd.xlane.f32.xlu0 %v7657
        %v7785 = vpop.xlane.xlu0 %7784
        %7786 = vadd.xlane.f32.xlu0 %v7659
        %v7787 = vpop.xlane.xlu0 %7786
        %7788 = vadd.xlane.f32.xlu0 %v7661
        %v7789 = vpop.xlane.xlu0 %7788
        %7790 = vadd.xlane.f32.xlu0 %v7663
        %v7791 = vpop.xlane.xlu0 %7790
        %7792 = vadd.xlane.f32.xlu0 %v7665
        %v7793 = vpop.xlane.xlu0 %7792
        %7794 = vadd.xlane.f32.xlu0 %v7667
        %v7795 = vpop.xlane.xlu0 %7794
        %7796 = vadd.xlane.f32.xlu0 %v7669
        %v7797 = vpop.xlane.xlu0 %7796
        %7798 = vadd.xlane.f32.xlu0 %v7671
        %v7799 = vpop.xlane.xlu0 %7798
        %7800 = vadd.xlane.f32.xlu0 %v7673
        %v7801 = vpop.xlane.xlu0 %7800
        %7802 = vadd.xlane.f32.xlu0 %v7675
        %v7803 = vpop.xlane.xlu0 %7802
        %7804 = vadd.xlane.f32.xlu0 %v7677
        %v7805 = vpop.xlane.xlu0 %7804
        %7806 = vadd.xlane.f32.xlu0 %v7679
        %v7807 = vpop.xlane.xlu0 %7806
        %7808 = vadd.xlane.f32.xlu0 %v7681
        %v7809 = vpop.xlane.xlu0 %7808
        %7810 = vadd.xlane.f32.xlu0 %v7683
        %v7811 = vpop.xlane.xlu0 %7810
        %7812 = vadd.xlane.f32.xlu0 %v7685
        %v7813 = vpop.xlane.xlu0 %7812
        %7814 = vadd.xlane.f32.xlu0 %v7687
        %v7815 = vpop.xlane.xlu0 %7814
        %7816 = vadd.xlane.f32.xlu0 %v7689
        %v7817 = vpop.xlane.xlu0 %7816
        %7818 = vadd.xlane.f32.xlu0 %v7691
        %v7819 = vpop.xlane.xlu0 %7818
        %7820 = vadd.xlane.f32.xlu0 %v7693
        %v7821 = vpop.xlane.xlu0 %7820
        %7822 = vadd.xlane.f32.xlu0 %v7695
        %v7823 = vpop.xlane.xlu0 %7822
        %7824 = vadd.xlane.f32.xlu0 %v7697
        %v7825 = vpop.xlane.xlu0 %7824
        %7826 = vadd.xlane.f32.xlu0 %v7699
        %v7827 = vpop.xlane.xlu0 %7826
        %7828 = vadd.xlane.f32.xlu0 %v7701
        %v7829 = vpop.xlane.xlu0 %7828
        %7830 = vadd.xlane.f32.xlu0 %v7703
        %v7831 = vpop.xlane.xlu0 %7830
        %7832 = vadd.xlane.f32.xlu0 %v7705
        %v7833 = vpop.xlane.xlu0 %7832
        %7834 = vadd.xlane.f32.xlu0 %v7707
        %v7835 = vpop.xlane.xlu0 %7834
        %7836 = vadd.xlane.f32.xlu0 %v7709
        %v7837 = vpop.xlane.xlu0 %7836
        %7838 = vadd.xlane.f32.xlu0 %v7711
        %v7839 = vpop.xlane.xlu0 %7838
        %7840 = vadd.xlane.f32.xlu0 %v7713
        %v7841 = vpop.xlane.xlu0 %7840
        %7842 = vadd.xlane.f32.xlu0 %v7715
        %v7843 = vpop.xlane.xlu0 %7842
        %7844 = vadd.xlane.f32.xlu0 %v7717
        %v7845 = vpop.xlane.xlu0 %7844
        %7846 = vadd.xlane.f32.xlu0 %v7719
        %v7847 = vpop.xlane.xlu0 %7846
        %7848 = vadd.xlane.f32.xlu0 %v7721
        %v7849 = vpop.xlane.xlu0 %7848
        %7850 = vadd.xlane.f32.xlu0 %v7723
        %v7851 = vpop.xlane.xlu0 %7850
        %7852 = vadd.xlane.f32.xlu0 %v7725
        %v7853 = vpop.xlane.xlu0 %7852
        %7854 = vadd.xlane.f32.xlu0 %v7727
        %v7855 = vpop.xlane.xlu0 %7854
        %7856 = vadd.xlane.f32.xlu0 %v7729
        %v7857 = vpop.xlane.xlu0 %7856
        %7858 = vadd.xlane.f32.xlu0 %v7731
        %v7859 = vpop.xlane.xlu0 %7858
        %7860 = vadd.xlane.f32.xlu0 %v7733
        %v7861 = vpop.xlane.xlu0 %7860
        %7862 = vadd.xlane.f32.xlu0 %v7735
        %v7863 = vpop.xlane.xlu0 %7862
        %7864 = vadd.xlane.f32.xlu0 %v7737
        %v7865 = vpop.xlane.xlu0 %7864
        %7866 = vadd.xlane.f32.xlu0 %v7739
        %v7867 = vpop.xlane.xlu0 %7866
        %7868 = vadd.xlane.f32.xlu0 %v7741
        %v7869 = vpop.xlane.xlu0 %7868
        %7870 = vadd.xlane.f32.xlu0 %v7743
        %v7871 = vpop.xlane.xlu0 %7870
        %v7872 = vpack.c.bf16 %v7617, %v7617
        %v7873 = vpack.c.bf16 %v7619, %v7619
        %v7874 = vpack.c.bf16 %v7621, %v7621
        %v7875 = vpack.c.bf16 %v7623, %v7623
        %v7876 = vpack.c.bf16 %v7625, %v7625
        %v7877 = vpack.c.bf16 %v7627, %v7627
        %v7878 = vpack.c.bf16 %v7629, %v7629
        %v7879 = vpack.c.bf16 %v7631, %v7631
        %v7880 = vpack.c.bf16 %v7633, %v7633
        %v7881 = vpack.c.bf16 %v7635, %v7635
        %v7882 = vpack.c.bf16 %v7637, %v7637
        %v7883 = vpack.c.bf16 %v7639, %v7639
        %v7884 = vpack.c.bf16 %v7641, %v7641
        %v7885 = vpack.c.bf16 %v7643, %v7643
        %v7886 = vpack.c.bf16 %v7645, %v7645
        %v7887 = vpack.c.bf16 %v7647, %v7647
        %v7888 = vpack.c.bf16 %v7649, %v7649
        %v7889 = vpack.c.bf16 %v7651, %v7651
        %v7890 = vpack.c.bf16 %v7653, %v7653
        %v7891 = vpack.c.bf16 %v7655, %v7655
        %v7892 = vpack.c.bf16 %v7657, %v7657
        %v7893 = vpack.c.bf16 %v7659, %v7659
        %v7894 = vpack.c.bf16 %v7661, %v7661
        %v7895 = vpack.c.bf16 %v7663, %v7663
        %v7896 = vpack.c.bf16 %v7665, %v7665
        %v7897 = vpack.c.bf16 %v7667, %v7667
        %v7898 = vpack.c.bf16 %v7669, %v7669
        %v7899 = vpack.c.bf16 %v7671, %v7671
        %v7900 = vpack.c.bf16 %v7673, %v7673
        %v7901 = vpack.c.bf16 %v7675, %v7675
        %v7902 = vpack.c.bf16 %v7677, %v7677
        %v7903 = vpack.c.bf16 %v7679, %v7679
        %v7904 = vpack.c.bf16 %v7681, %v7681
        %v7905 = vpack.c.bf16 %v7683, %v7683
        %v7906 = vpack.c.bf16 %v7685, %v7685
        %v7907 = vpack.c.bf16 %v7687, %v7687
        %v7908 = vpack.c.bf16 %v7689, %v7689
        %v7909 = vpack.c.bf16 %v7691, %v7691
        %v7910 = vpack.c.bf16 %v7693, %v7693
        %v7911 = vpack.c.bf16 %v7695, %v7695
        %v7912 = vpack.c.bf16 %v7697, %v7697
        %v7913 = vpack.c.bf16 %v7699, %v7699
        %v7914 = vpack.c.bf16 %v7701, %v7701
        %v7915 = vpack.c.bf16 %v7703, %v7703
        %v7916 = vpack.c.bf16 %v7705, %v7705
        %v7917 = vpack.c.bf16 %v7707, %v7707
        %v7918 = vpack.c.bf16 %v7709, %v7709
        %v7919 = vpack.c.bf16 %v7711, %v7711
        %v7920 = vpack.c.bf16 %v7713, %v7713
        %v7921 = vpack.c.bf16 %v7715, %v7715
        %v7922 = vpack.c.bf16 %v7717, %v7717
        %v7923 = vpack.c.bf16 %v7719, %v7719
        %v7924 = vpack.c.bf16 %v7721, %v7721
        %v7925 = vpack.c.bf16 %v7723, %v7723
        %v7926 = vpack.c.bf16 %v7725, %v7725
        %v7927 = vpack.c.bf16 %v7727, %v7727
        %v7928 = vpack.c.bf16 %v7729, %v7729
        %v7929 = vpack.c.bf16 %v7731, %v7731
        %v7930 = vpack.c.bf16 %v7733, %v7733
        %v7931 = vpack.c.bf16 %v7735, %v7735
        %v7932 = vpack.c.bf16 %v7737, %v7737
        %v7933 = vpack.c.bf16 %v7739, %v7739
        %v7934 = vpack.c.bf16 %v7741, %v7741
        %v7935 = vpack.c.bf16 %v7743, %v7743
        %v7952 = vunpack.c.l.b16 %v7872
        %v7953 = vunpack.c.l.b16 %v7873
        %v7954 = vunpack.c.l.b16 %v7874
        %v7955 = vunpack.c.l.b16 %v7875
        %v7956 = vunpack.c.l.b16 %v7876
        %v7957 = vunpack.c.l.b16 %v7877
        %v7958 = vunpack.c.l.b16 %v7878
        %v7959 = vunpack.c.l.b16 %v7879
        %v7960 = vunpack.c.l.b16 %v7880
        %v7961 = vunpack.c.l.b16 %v7881
        %v7962 = vunpack.c.l.b16 %v7882
        %v7963 = vunpack.c.l.b16 %v7883
        %v7964 = vunpack.c.l.b16 %v7884
        %v7965 = vunpack.c.l.b16 %v7885
        %v7966 = vunpack.c.l.b16 %v7886
        %v7967 = vunpack.c.l.b16 %v7887
        %v7968 = vpack.c.b16 %v7953, %v7952
        %v7969 = vpack.c.b16 %v7955, %v7954
        %v7970 = vpack.c.b16 %v7957, %v7956
        %v7971 = vpack.c.b16 %v7959, %v7958
        %v7972 = vpack.c.b16 %v7961, %v7960
        %v7973 = vpack.c.b16 %v7963, %v7962
        %v7974 = vpack.c.b16 %v7965, %v7964
        %v7975 = vpack.c.b16 %v7967, %v7966
        %v7984 = vunpack.c.l.b16 %v6653
        %v7985 = vunpack.c.l.b16 %v6665
        %v7986 = vunpack.c.l.b16 %v6677
        %v7987 = vunpack.c.l.b16 %v6689
        %v7988 = vunpack.c.l.b16 %v6701
        %v7989 = vunpack.c.l.b16 %v6713
        %v7990 = vunpack.c.l.b16 %v6725
        %v7991 = vunpack.c.l.b16 %v6737
        %v7992 = vunpack.c.l.b16 %v6749
        %v7993 = vunpack.c.l.b16 %v6761
        %v7994 = vunpack.c.l.b16 %v6773
        %v7995 = vunpack.c.l.b16 %v6785
        %v7996 = vunpack.c.l.b16 %v6797
        %v7997 = vunpack.c.l.b16 %v6809
        %v7998 = vunpack.c.l.b16 %v6821
        %v7999 = vunpack.c.l.b16 %v6833
        %v8000 = vpack.c.b16 %v7985, %v7984
        %v8001 = vpack.c.b16 %v7987, %v7986
        %v8002 = vpack.c.b16 %v7989, %v7988
        %v8003 = vpack.c.b16 %v7991, %v7990
        %v8004 = vpack.c.b16 %v7993, %v7992
        %v8005 = vpack.c.b16 %v7995, %v7994
        %v8006 = vpack.c.b16 %v7997, %v7996
        %v8007 = vpack.c.b16 %v7999, %v7998
        %8016 = vmatpush.bf16.msra.mxu0 %v8007
        %8017 = vmatpush.bf16.msra.mxu0 %v8006
        %8018 = vmatpush.bf16.msra.mxu0 %v8005
        %8019 = vmatpush.bf16.msra.mxu0 %v8004
        %8020 = vmatpush.bf16.msra.mxu0 %v8003
        %8021 = vmatpush.bf16.msra.mxu0 %v8002
        %8022 = vmatpush.bf16.msra.mxu0 %v8001
        %8023 = vmatpush.bf16.msra.mxu0 %v8000
        %8024 = vmatmul.bf16.gmra.mxu0 %v7968
        %v8025 = vpop.f32.mrf.mxu0
        %v8026 = vadd.f32 0.0, %v8025
        %v8027 = vpop.f32.mrf.mxu0
        %v8028 = vadd.f32 0.0, %v8027
        %8029 = vmatmul.bf16.gmra.mxu0 %v7969
        %v8030 = vpop.f32.mrf.mxu0
        %v8031 = vadd.f32 0.0, %v8030
        %v8032 = vpop.f32.mrf.mxu0
        %v8033 = vadd.f32 0.0, %v8032
        %8034 = vmatmul.bf16.gmra.mxu0 %v7970
        %v8035 = vpop.f32.mrf.mxu0
        %v8036 = vadd.f32 0.0, %v8035
        %v8037 = vpop.f32.mrf.mxu0
        %v8038 = vadd.f32 0.0, %v8037
        %8039 = vmatmul.bf16.gmra.mxu0 %v7971
        %v8040 = vpop.f32.mrf.mxu0
        %v8041 = vadd.f32 0.0, %v8040
        %v8042 = vpop.f32.mrf.mxu0
        %v8043 = vadd.f32 0.0, %v8042
        %8044 = vmatmul.bf16.gmra.mxu0 %v7972
        %v8045 = vpop.f32.mrf.mxu0
        %v8046 = vadd.f32 0.0, %v8045
        %v8047 = vpop.f32.mrf.mxu0
        %v8048 = vadd.f32 0.0, %v8047
        %8049 = vmatmul.bf16.gmra.mxu0 %v7973
        %v8050 = vpop.f32.mrf.mxu0
        %v8051 = vadd.f32 0.0, %v8050
        %v8052 = vpop.f32.mrf.mxu0
        %v8053 = vadd.f32 0.0, %v8052
        %8054 = vmatmul.bf16.gmra.mxu0 %v7974
        %v8055 = vpop.f32.mrf.mxu0
        %v8056 = vadd.f32 0.0, %v8055
        %v8057 = vpop.f32.mrf.mxu0
        %v8058 = vadd.f32 0.0, %v8057
        %8059 = vmatmul.bf16.gmra.mxu0 %v7975
        %v8060 = vpop.f32.mrf.mxu0
        %v8061 = vadd.f32 0.0, %v8060
        %v8062 = vpop.f32.mrf.mxu0
        %v8063 = vadd.f32 0.0, %v8062
        %8064 = vdwg.mxu0
        %v8081 = vunpack.c.l.b16 %v7888
        %v8082 = vunpack.c.l.b16 %v7889
        %v8083 = vunpack.c.l.b16 %v7890
        %v8084 = vunpack.c.l.b16 %v7891
        %v8085 = vunpack.c.l.b16 %v7892
        %v8086 = vunpack.c.l.b16 %v7893
        %v8087 = vunpack.c.l.b16 %v7894
        %v8088 = vunpack.c.l.b16 %v7895
        %v8089 = vunpack.c.l.b16 %v7896
        %v8090 = vunpack.c.l.b16 %v7897
        %v8091 = vunpack.c.l.b16 %v7898
        %v8092 = vunpack.c.l.b16 %v7899
        %v8093 = vunpack.c.l.b16 %v7900
        %v8094 = vunpack.c.l.b16 %v7901
        %v8095 = vunpack.c.l.b16 %v7902
        %v8096 = vunpack.c.l.b16 %v7903
        %v8097 = vpack.c.b16 %v8082, %v8081
        %v8098 = vpack.c.b16 %v8084, %v8083
        %v8099 = vpack.c.b16 %v8086, %v8085
        %v8100 = vpack.c.b16 %v8088, %v8087
        %v8101 = vpack.c.b16 %v8090, %v8089
        %v8102 = vpack.c.b16 %v8092, %v8091
        %v8103 = vpack.c.b16 %v8094, %v8093
        %v8104 = vpack.c.b16 %v8096, %v8095
        %v8113 = vunpack.c.l.b16 %v6656
        %v8114 = vunpack.c.l.b16 %v6668
        %v8115 = vunpack.c.l.b16 %v6680
        %v8116 = vunpack.c.l.b16 %v6692
        %v8117 = vunpack.c.l.b16 %v6704
        %v8118 = vunpack.c.l.b16 %v6716
        %v8119 = vunpack.c.l.b16 %v6728
        %v8120 = vunpack.c.l.b16 %v6740
        %v8121 = vunpack.c.l.b16 %v6752
        %v8122 = vunpack.c.l.b16 %v6764
        %v8123 = vunpack.c.l.b16 %v6776
        %v8124 = vunpack.c.l.b16 %v6788
        %v8125 = vunpack.c.l.b16 %v6800
        %v8126 = vunpack.c.l.b16 %v6812
        %v8127 = vunpack.c.l.b16 %v6824
        %v8128 = vunpack.c.l.b16 %v6836
        %v8129 = vpack.c.b16 %v8114, %v8113
        %v8130 = vpack.c.b16 %v8116, %v8115
        %v8131 = vpack.c.b16 %v8118, %v8117
        %v8132 = vpack.c.b16 %v8120, %v8119
        %v8133 = vpack.c.b16 %v8122, %v8121
        %v8134 = vpack.c.b16 %v8124, %v8123
        %v8135 = vpack.c.b16 %v8126, %v8125
        %v8136 = vpack.c.b16 %v8128, %v8127
        %8145 = vmatpush.bf16.msra.mxu0 %v8136
        %8146 = vmatpush.bf16.msra.mxu0 %v8135
        %8147 = vmatpush.bf16.msra.mxu0 %v8134
        %8148 = vmatpush.bf16.msra.mxu0 %v8133
        %8149 = vmatpush.bf16.msra.mxu0 %v8132
        %8150 = vmatpush.bf16.msra.mxu0 %v8131
        %8151 = vmatpush.bf16.msra.mxu0 %v8130
        %8152 = vmatpush.bf16.msra.mxu0 %v8129
        %8153 = vmatmul.bf16.gmra.mxu0 %v8097
        %v8154 = vpop.f32.mrf.mxu0
        %v8155 = vadd.f32 0.0, %v8154
        %v8156 = vpop.f32.mrf.mxu0
        %v8157 = vadd.f32 0.0, %v8156
        %8158 = vmatmul.bf16.gmra.mxu0 %v8098
        %v8159 = vpop.f32.mrf.mxu0
        %v8160 = vadd.f32 0.0, %v8159
        %v8161 = vpop.f32.mrf.mxu0
        %v8162 = vadd.f32 0.0, %v8161
        %8163 = vmatmul.bf16.gmra.mxu0 %v8099
        %v8164 = vpop.f32.mrf.mxu0
        %v8165 = vadd.f32 0.0, %v8164
        %v8166 = vpop.f32.mrf.mxu0
        %v8167 = vadd.f32 0.0, %v8166
        %8168 = vmatmul.bf16.gmra.mxu0 %v8100
        %v8169 = vpop.f32.mrf.mxu0
        %v8170 = vadd.f32 0.0, %v8169
        %v8171 = vpop.f32.mrf.mxu0
        %v8172 = vadd.f32 0.0, %v8171
        %8173 = vmatmul.bf16.gmra.mxu0 %v8101
        %v8174 = vpop.f32.mrf.mxu0
        %v8175 = vadd.f32 0.0, %v8174
        %v8176 = vpop.f32.mrf.mxu0
        %v8177 = vadd.f32 0.0, %v8176
        %8178 = vmatmul.bf16.gmra.mxu0 %v8102
        %v8179 = vpop.f32.mrf.mxu0
        %v8180 = vadd.f32 0.0, %v8179
        %v8181 = vpop.f32.mrf.mxu0
        %v8182 = vadd.f32 0.0, %v8181
        %8183 = vmatmul.bf16.gmra.mxu0 %v8103
        %v8184 = vpop.f32.mrf.mxu0
        %v8185 = vadd.f32 0.0, %v8184
        %v8186 = vpop.f32.mrf.mxu0
        %v8187 = vadd.f32 0.0, %v8186
        %8188 = vmatmul.bf16.gmra.mxu0 %v8104
        %v8189 = vpop.f32.mrf.mxu0
        %v8190 = vadd.f32 0.0, %v8189
        %v8191 = vpop.f32.mrf.mxu0
        %v8192 = vadd.f32 0.0, %v8191
        %8193 = vdwg.mxu0
        %v8210 = vunpack.c.l.b16 %v7904
        %v8211 = vunpack.c.l.b16 %v7905
        %v8212 = vunpack.c.l.b16 %v7906
        %v8213 = vunpack.c.l.b16 %v7907
        %v8214 = vunpack.c.l.b16 %v7908
        %v8215 = vunpack.c.l.b16 %v7909
        %v8216 = vunpack.c.l.b16 %v7910
        %v8217 = vunpack.c.l.b16 %v7911
        %v8218 = vunpack.c.l.b16 %v7912
        %v8219 = vunpack.c.l.b16 %v7913
        %v8220 = vunpack.c.l.b16 %v7914
        %v8221 = vunpack.c.l.b16 %v7915
        %v8222 = vunpack.c.l.b16 %v7916
        %v8223 = vunpack.c.l.b16 %v7917
        %v8224 = vunpack.c.l.b16 %v7918
        %v8225 = vunpack.c.l.b16 %v7919
        %v8226 = vpack.c.b16 %v8211, %v8210
        %v8227 = vpack.c.b16 %v8213, %v8212
        %v8228 = vpack.c.b16 %v8215, %v8214
        %v8229 = vpack.c.b16 %v8217, %v8216
        %v8230 = vpack.c.b16 %v8219, %v8218
        %v8231 = vpack.c.b16 %v8221, %v8220
        %v8232 = vpack.c.b16 %v8223, %v8222
        %v8233 = vpack.c.b16 %v8225, %v8224
        %v8242 = vunpack.c.l.b16 %v6659
        %v8243 = vunpack.c.l.b16 %v6671
        %v8244 = vunpack.c.l.b16 %v6683
        %v8245 = vunpack.c.l.b16 %v6695
        %v8246 = vunpack.c.l.b16 %v6707
        %v8247 = vunpack.c.l.b16 %v6719
        %v8248 = vunpack.c.l.b16 %v6731
        %v8249 = vunpack.c.l.b16 %v6743
        %v8250 = vunpack.c.l.b16 %v6755
        %v8251 = vunpack.c.l.b16 %v6767
        %v8252 = vunpack.c.l.b16 %v6779
        %v8253 = vunpack.c.l.b16 %v6791
        %v8254 = vunpack.c.l.b16 %v6803
        %v8255 = vunpack.c.l.b16 %v6815
        %v8256 = vunpack.c.l.b16 %v6827
        %v8257 = vunpack.c.l.b16 %v6839
        %v8258 = vpack.c.b16 %v8243, %v8242
        %v8259 = vpack.c.b16 %v8245, %v8244
        %v8260 = vpack.c.b16 %v8247, %v8246
        %v8261 = vpack.c.b16 %v8249, %v8248
        %v8262 = vpack.c.b16 %v8251, %v8250
        %v8263 = vpack.c.b16 %v8253, %v8252
        %v8264 = vpack.c.b16 %v8255, %v8254
        %v8265 = vpack.c.b16 %v8257, %v8256
        %8274 = vmatpush.bf16.msra.mxu0 %v8265
        %8275 = vmatpush.bf16.msra.mxu0 %v8264
        %8276 = vmatpush.bf16.msra.mxu0 %v8263
        %8277 = vmatpush.bf16.msra.mxu0 %v8262
        %8278 = vmatpush.bf16.msra.mxu0 %v8261
        %8279 = vmatpush.bf16.msra.mxu0 %v8260
        %8280 = vmatpush.bf16.msra.mxu0 %v8259
        %8281 = vmatpush.bf16.msra.mxu0 %v8258
        %8282 = vmatmul.bf16.gmra.mxu0 %v8226
        %v8283 = vpop.f32.mrf.mxu0
        %v8284 = vadd.f32 0.0, %v8283
        %v8285 = vpop.f32.mrf.mxu0
        %v8286 = vadd.f32 0.0, %v8285
        %8287 = vmatmul.bf16.gmra.mxu0 %v8227
        %v8288 = vpop.f32.mrf.mxu0
        %v8289 = vadd.f32 0.0, %v8288
        %v8290 = vpop.f32.mrf.mxu0
        %v8291 = vadd.f32 0.0, %v8290
        %8292 = vmatmul.bf16.gmra.mxu0 %v8228
        %v8293 = vpop.f32.mrf.mxu0
        %v8294 = vadd.f32 0.0, %v8293
        %v8295 = vpop.f32.mrf.mxu0
        %v8296 = vadd.f32 0.0, %v8295
        %8297 = vmatmul.bf16.gmra.mxu0 %v8229
        %v8298 = vpop.f32.mrf.mxu0
        %v8299 = vadd.f32 0.0, %v8298
        %v8300 = vpop.f32.mrf.mxu0
        %v8301 = vadd.f32 0.0, %v8300
        %8302 = vmatmul.bf16.gmra.mxu0 %v8230
        %v8303 = vpop.f32.mrf.mxu0
        %v8304 = vadd.f32 0.0, %v8303
        %v8305 = vpop.f32.mrf.mxu0
        %v8306 = vadd.f32 0.0, %v8305
        %8307 = vmatmul.bf16.gmra.mxu0 %v8231
        %v8308 = vpop.f32.mrf.mxu0
        %v8309 = vadd.f32 0.0, %v8308
        %v8310 = vpop.f32.mrf.mxu0
        %v8311 = vadd.f32 0.0, %v8310
        %8312 = vmatmul.bf16.gmra.mxu0 %v8232
        %v8313 = vpop.f32.mrf.mxu0
        %v8314 = vadd.f32 0.0, %v8313
        %v8315 = vpop.f32.mrf.mxu0
        %v8316 = vadd.f32 0.0, %v8315
        %8317 = vmatmul.bf16.gmra.mxu0 %v8233
        %v8318 = vpop.f32.mrf.mxu0
        %v8319 = vadd.f32 0.0, %v8318
        %v8320 = vpop.f32.mrf.mxu0
        %v8321 = vadd.f32 0.0, %v8320
        %8322 = vdwg.mxu0
        %v8339 = vunpack.c.l.b16 %v7920
        %v8340 = vunpack.c.l.b16 %v7921
        %v8341 = vunpack.c.l.b16 %v7922
        %v8342 = vunpack.c.l.b16 %v7923
        %v8343 = vunpack.c.l.b16 %v7924
        %v8344 = vunpack.c.l.b16 %v7925
        %v8345 = vunpack.c.l.b16 %v7926
        %v8346 = vunpack.c.l.b16 %v7927
        %v8347 = vunpack.c.l.b16 %v7928
        %v8348 = vunpack.c.l.b16 %v7929
        %v8349 = vunpack.c.l.b16 %v7930
        %v8350 = vunpack.c.l.b16 %v7931
        %v8351 = vunpack.c.l.b16 %v7932
        %v8352 = vunpack.c.l.b16 %v7933
        %v8353 = vunpack.c.l.b16 %v7934
        %v8354 = vunpack.c.l.b16 %v7935
        %v8355 = vpack.c.b16 %v8340, %v8339
        %v8356 = vpack.c.b16 %v8342, %v8341
        %v8357 = vpack.c.b16 %v8344, %v8343
        %v8358 = vpack.c.b16 %v8346, %v8345
        %v8359 = vpack.c.b16 %v8348, %v8347
        %v8360 = vpack.c.b16 %v8350, %v8349
        %v8361 = vpack.c.b16 %v8352, %v8351
        %v8362 = vpack.c.b16 %v8354, %v8353
        %v8371 = vunpack.c.l.b16 %v6662
        %v8372 = vunpack.c.l.b16 %v6674
        %v8373 = vunpack.c.l.b16 %v6686
        %v8374 = vunpack.c.l.b16 %v6698
        %v8375 = vunpack.c.l.b16 %v6710
        %v8376 = vunpack.c.l.b16 %v6722
        %v8377 = vunpack.c.l.b16 %v6734
        %v8378 = vunpack.c.l.b16 %v6746
        %v8379 = vunpack.c.l.b16 %v6758
        %v8380 = vunpack.c.l.b16 %v6770
        %v8381 = vunpack.c.l.b16 %v6782
        %v8382 = vunpack.c.l.b16 %v6794
        %v8383 = vunpack.c.l.b16 %v6806
        %v8384 = vunpack.c.l.b16 %v6818
        %v8385 = vunpack.c.l.b16 %v6830
        %v8386 = vunpack.c.l.b16 %v6842
        %v8387 = vpack.c.b16 %v8372, %v8371
        %v8388 = vpack.c.b16 %v8374, %v8373
        %v8389 = vpack.c.b16 %v8376, %v8375
        %v8390 = vpack.c.b16 %v8378, %v8377
        %v8391 = vpack.c.b16 %v8380, %v8379
        %v8392 = vpack.c.b16 %v8382, %v8381
        %v8393 = vpack.c.b16 %v8384, %v8383
        %v8394 = vpack.c.b16 %v8386, %v8385
        %8403 = vmatpush.bf16.msra.mxu0 %v8394
        %8404 = vmatpush.bf16.msra.mxu0 %v8393
        %8405 = vmatpush.bf16.msra.mxu0 %v8392
        %8406 = vmatpush.bf16.msra.mxu0 %v8391
        %8407 = vmatpush.bf16.msra.mxu0 %v8390
        %8408 = vmatpush.bf16.msra.mxu0 %v8389
        %8409 = vmatpush.bf16.msra.mxu0 %v8388
        %8410 = vmatpush.bf16.msra.mxu0 %v8387
        %8411 = vmatmul.bf16.gmra.mxu0 %v8355
        %v8412 = vpop.f32.mrf.mxu0
        %v8413 = vadd.f32 0.0, %v8412
        %v8414 = vpop.f32.mrf.mxu0
        %v8415 = vadd.f32 0.0, %v8414
        %8416 = vmatmul.bf16.gmra.mxu0 %v8356
        %v8417 = vpop.f32.mrf.mxu0
        %v8418 = vadd.f32 0.0, %v8417
        %v8419 = vpop.f32.mrf.mxu0
        %v8420 = vadd.f32 0.0, %v8419
        %8421 = vmatmul.bf16.gmra.mxu0 %v8357
        %v8422 = vpop.f32.mrf.mxu0
        %v8423 = vadd.f32 0.0, %v8422
        %v8424 = vpop.f32.mrf.mxu0
        %v8425 = vadd.f32 0.0, %v8424
        %8426 = vmatmul.bf16.gmra.mxu0 %v8358
        %v8427 = vpop.f32.mrf.mxu0
        %v8428 = vadd.f32 0.0, %v8427
        %v8429 = vpop.f32.mrf.mxu0
        %v8430 = vadd.f32 0.0, %v8429
        %8431 = vmatmul.bf16.gmra.mxu0 %v8359
        %v8432 = vpop.f32.mrf.mxu0
        %v8433 = vadd.f32 0.0, %v8432
        %v8434 = vpop.f32.mrf.mxu0
        %v8435 = vadd.f32 0.0, %v8434
        %8436 = vmatmul.bf16.gmra.mxu0 %v8360
        %v8437 = vpop.f32.mrf.mxu0
        %v8438 = vadd.f32 0.0, %v8437
        %v8439 = vpop.f32.mrf.mxu0
        %v8440 = vadd.f32 0.0, %v8439
        %8441 = vmatmul.bf16.gmra.mxu0 %v8361
        %v8442 = vpop.f32.mrf.mxu0
        %v8443 = vadd.f32 0.0, %v8442
        %v8444 = vpop.f32.mrf.mxu0
        %v8445 = vadd.f32 0.0, %v8444
        %8446 = vmatmul.bf16.gmra.mxu0 %v8362
        %v8447 = vpop.f32.mrf.mxu0
        %v8448 = vadd.f32 0.0, %v8447
        %v8449 = vpop.f32.mrf.mxu0
        %v8450 = vadd.f32 0.0, %v8449
        %8451 = vdwg.mxu0
        %v8452 = vrcp.pop %v7745
        %v8453 = vrcp.pop %v7747
        %v8454 = vrcp.pop %v7749
        %v8455 = vrcp.pop %v7751
        %v8456 = vrcp.pop %v7753
        %v8457 = vrcp.pop %v7755
        %v8458 = vrcp.pop %v7757
        %v8459 = vrcp.pop %v7759
        %v8460 = vrcp.pop %v7761
        %v8461 = vrcp.pop %v7763
        %v8462 = vrcp.pop %v7765
        %v8463 = vrcp.pop %v7767
        %v8464 = vrcp.pop %v7769
        %v8465 = vrcp.pop %v7771
        %v8466 = vrcp.pop %v7773
        %v8467 = vrcp.pop %v7775
        %v8468 = vrcp.pop %v7777
        %v8469 = vrcp.pop %v7779
        %v8470 = vrcp.pop %v7781
        %v8471 = vrcp.pop %v7783
        %v8472 = vrcp.pop %v7785
        %v8473 = vrcp.pop %v7787
        %v8474 = vrcp.pop %v7789
        %v8475 = vrcp.pop %v7791
        %v8476 = vrcp.pop %v7793
        %v8477 = vrcp.pop %v7795
        %v8478 = vrcp.pop %v7797
        %v8479 = vrcp.pop %v7799
        %v8480 = vrcp.pop %v7801
        %v8481 = vrcp.pop %v7803
        %v8482 = vrcp.pop %v7805
        %v8483 = vrcp.pop %v7807
        %v8484 = vrcp.pop %v7809
        %v8485 = vrcp.pop %v7811
        %v8486 = vrcp.pop %v7813
        %v8487 = vrcp.pop %v7815
        %v8488 = vrcp.pop %v7817
        %v8489 = vrcp.pop %v7819
        %v8490 = vrcp.pop %v7821
        %v8491 = vrcp.pop %v7823
        %v8492 = vrcp.pop %v7825
        %v8493 = vrcp.pop %v7827
        %v8494 = vrcp.pop %v7829
        %v8495 = vrcp.pop %v7831
        %v8496 = vrcp.pop %v7833
        %v8497 = vrcp.pop %v7835
        %v8498 = vrcp.pop %v7837
        %v8499 = vrcp.pop %v7839
        %v8500 = vrcp.pop %v7841
        %v8501 = vrcp.pop %v7843
        %v8502 = vrcp.pop %v7845
        %v8503 = vrcp.pop %v7847
        %v8504 = vrcp.pop %v7849
        %v8505 = vrcp.pop %v7851
        %v8506 = vrcp.pop %v7853
        %v8507 = vrcp.pop %v7855
        %v8508 = vrcp.pop %v7857
        %v8509 = vrcp.pop %v7859
        %v8510 = vrcp.pop %v7861
        %v8511 = vrcp.pop %v7863
        %v8512 = vrcp.pop %v7865
        %v8513 = vrcp.pop %v7867
        %v8514 = vrcp.pop %v7869
        %v8515 = vrcp.pop %v7871
        %v8516 = vmul.f32 %v8026, %v8452
        %v8517 = vmul.f32 %v8028, %v8453
        %v8518 = vmul.f32 %v8031, %v8454
        %v8519 = vmul.f32 %v8033, %v8455
        %v8520 = vmul.f32 %v8036, %v8456
        %v8521 = vmul.f32 %v8038, %v8457
        %v8522 = vmul.f32 %v8041, %v8458
        %v8523 = vmul.f32 %v8043, %v8459
        %v8524 = vmul.f32 %v8046, %v8460
        %v8525 = vmul.f32 %v8048, %v8461
        %v8526 = vmul.f32 %v8051, %v8462
        %v8527 = vmul.f32 %v8053, %v8463
        %v8528 = vmul.f32 %v8056, %v8464
        %v8529 = vmul.f32 %v8058, %v8465
        %v8530 = vmul.f32 %v8061, %v8466
        %v8531 = vmul.f32 %v8063, %v8467
        %v8532 = vmul.f32 %v8155, %v8468
        %v8533 = vmul.f32 %v8157, %v8469
        %v8534 = vmul.f32 %v8160, %v8470
        %v8535 = vmul.f32 %v8162, %v8471
        %v8536 = vmul.f32 %v8165, %v8472
        %v8537 = vmul.f32 %v8167, %v8473
        %v8538 = vmul.f32 %v8170, %v8474
        %v8539 = vmul.f32 %v8172, %v8475
        %v8540 = vmul.f32 %v8175, %v8476
        %v8541 = vmul.f32 %v8177, %v8477
        %v8542 = vmul.f32 %v8180, %v8478
        %v8543 = vmul.f32 %v8182, %v8479
        %v8544 = vmul.f32 %v8185, %v8480
        %v8545 = vmul.f32 %v8187, %v8481
        %v8546 = vmul.f32 %v8190, %v8482
        %v8547 = vmul.f32 %v8192, %v8483
        %v8548 = vmul.f32 %v8284, %v8484
        %v8549 = vmul.f32 %v8286, %v8485
        %v8550 = vmul.f32 %v8289, %v8486
        %v8551 = vmul.f32 %v8291, %v8487
        %v8552 = vmul.f32 %v8294, %v8488
        %v8553 = vmul.f32 %v8296, %v8489
        %v8554 = vmul.f32 %v8299, %v8490
        %v8555 = vmul.f32 %v8301, %v8491
        %v8556 = vmul.f32 %v8304, %v8492
        %v8557 = vmul.f32 %v8306, %v8493
        %v8558 = vmul.f32 %v8309, %v8494
        %v8559 = vmul.f32 %v8311, %v8495
        %v8560 = vmul.f32 %v8314, %v8496
        %v8561 = vmul.f32 %v8316, %v8497
        %v8562 = vmul.f32 %v8319, %v8498
        %v8563 = vmul.f32 %v8321, %v8499
        %v8564 = vmul.f32 %v8413, %v8500
        %v8565 = vmul.f32 %v8415, %v8501
        %v8566 = vmul.f32 %v8418, %v8502
        %v8567 = vmul.f32 %v8420, %v8503
        %v8568 = vmul.f32 %v8423, %v8504
        %v8569 = vmul.f32 %v8425, %v8505
        %v8570 = vmul.f32 %v8428, %v8506
        %v8571 = vmul.f32 %v8430, %v8507
        %v8572 = vmul.f32 %v8433, %v8508
        %v8573 = vmul.f32 %v8435, %v8509
        %v8574 = vmul.f32 %v8438, %v8510
        %v8575 = vmul.f32 %v8440, %v8511
        %v8576 = vmul.f32 %v8443, %v8512
        %v8577 = vmul.f32 %v8445, %v8513
        %v8578 = vmul.f32 %v8448, %v8514
        %v8579 = vmul.f32 %v8450, %v8515
        %v8580 = vrot.slane %v8548, 4
        %vm8581 = vcmask 1047556
        %v8582 = vsel %vm8581, %v8580, %v8516
        %v8583 = vrot.slane %v8516, 4
        %v8584 = vsel %vm8581, %v8548, %v8583
        %v8586 = vunpack.c.l.s4 1983009808
        %v8587 = vunpack.c.0.s8 %v8586
        %v8588 = vperm.slane %v8582, %v8587
        %v8590 = vunpack.c.l.s4 1983009808
        %v8591 = vunpack.c.0.s8 %v8590
        %v8592 = vperm.slane %v8584, %v8591
        %v8593 = vrot.slane %v8564, 4
        %v8594 = vsel %vm8581, %v8593, %v8532
        %v8595 = vrot.slane %v8532, 4
        %v8596 = vsel %vm8581, %v8564, %v8595
        %v8598 = vunpack.c.l.s4 1983009808
        %v8599 = vunpack.c.0.s8 %v8598
        %v8600 = vperm.slane %v8594, %v8599
        %v8602 = vunpack.c.l.s4 1983009808
        %v8603 = vunpack.c.0.s8 %v8602
        %v8604 = vperm.slane %v8596, %v8603
        %v8605 = vrot.slane %v8600, 4
        %v8606 = vsel %vm8581, %v8605, %v8588
        %v8607 = vrot.slane %v8588, 4
        %v8608 = vsel %vm8581, %v8600, %v8607
        %v8610 = vunpack.c.l.s4 1934713408
        %v8611 = vunpack.c.0.s8 %v8610
        %v8612 = vperm.slane %v8606, %v8611
        %v8614 = vunpack.c.l.s4 1934713408
        %v8615 = vunpack.c.0.s8 %v8614
        %v8616 = vperm.slane %v8608, %v8615
        %v8617 = vrot.slane %v8604, 4
        %v8618 = vsel %vm8581, %v8617, %v8592
        %v8619 = vrot.slane %v8592, 4
        %v8620 = vsel %vm8581, %v8604, %v8619
        %v8622 = vunpack.c.l.s4 1934713408
        %v8623 = vunpack.c.0.s8 %v8622
        %v8624 = vperm.slane %v8618, %v8623
        %v8626 = vunpack.c.l.s4 1934713408
        %v8627 = vunpack.c.0.s8 %v8626
        %v8628 = vperm.slane %v8620, %v8627
        %v8629 = vrot.slane %v8612, 4
        %v8630 = vsel %vm8581, 0.0, %v8629
        %v8631 = vrot.slane %v8616, 4
        %v8632 = vsel %vm8581, 0.0, %v8631
        %v8633 = vrot.slane %v8624, 4
        %v8634 = vsel %vm8581, 0.0, %v8633
        %v8635 = vrot.slane %v8628, 4
        %v8636 = vsel %vm8581, 0.0, %v8635
        %v8637 = vrot.slane %v8549, 4
        %v8638 = vsel %vm8581, %v8637, %v8517
        %v8639 = vrot.slane %v8517, 4
        %v8640 = vsel %vm8581, %v8549, %v8639
        %v8642 = vunpack.c.l.s4 1983009808
        %v8643 = vunpack.c.0.s8 %v8642
        %v8644 = vperm.slane %v8638, %v8643
        %v8646 = vunpack.c.l.s4 1983009808
        %v8647 = vunpack.c.0.s8 %v8646
        %v8648 = vperm.slane %v8640, %v8647
        %v8649 = vrot.slane %v8565, 4
        %v8650 = vsel %vm8581, %v8649, %v8533
        %v8651 = vrot.slane %v8533, 4
        %v8652 = vsel %vm8581, %v8565, %v8651
        %v8654 = vunpack.c.l.s4 1983009808
        %v8655 = vunpack.c.0.s8 %v8654
        %v8656 = vperm.slane %v8650, %v8655
        %v8658 = vunpack.c.l.s4 1983009808
        %v8659 = vunpack.c.0.s8 %v8658
        %v8660 = vperm.slane %v8652, %v8659
        %v8661 = vrot.slane %v8656, 4
        %v8662 = vsel %vm8581, %v8661, %v8644
        %v8663 = vrot.slane %v8644, 4
        %v8664 = vsel %vm8581, %v8656, %v8663
        %v8666 = vunpack.c.l.s4 1934713408
        %v8667 = vunpack.c.0.s8 %v8666
        %v8668 = vperm.slane %v8662, %v8667
        %v8670 = vunpack.c.l.s4 1934713408
        %v8671 = vunpack.c.0.s8 %v8670
        %v8672 = vperm.slane %v8664, %v8671
        %v8673 = vrot.slane %v8660, 4
        %v8674 = vsel %vm8581, %v8673, %v8648
        %v8675 = vrot.slane %v8648, 4
        %v8676 = vsel %vm8581, %v8660, %v8675
        %v8678 = vunpack.c.l.s4 1934713408
        %v8679 = vunpack.c.0.s8 %v8678
        %v8680 = vperm.slane %v8674, %v8679
        %v8682 = vunpack.c.l.s4 1934713408
        %v8683 = vunpack.c.0.s8 %v8682
        %v8684 = vperm.slane %v8676, %v8683
        %v8685 = vrot.slane %v8668, 4
        %v8686 = vsel %vm8581, 0.0, %v8685
        %v8687 = vrot.slane %v8672, 4
        %v8688 = vsel %vm8581, 0.0, %v8687
        %v8689 = vrot.slane %v8680, 4
        %v8690 = vsel %vm8581, 0.0, %v8689
        %v8691 = vrot.slane %v8684, 4
        %v8692 = vsel %vm8581, 0.0, %v8691
        %v8693 = vrot.slane %v8550, 4
        %v8694 = vsel %vm8581, %v8693, %v8518
        %v8695 = vrot.slane %v8518, 4
        %v8696 = vsel %vm8581, %v8550, %v8695
        %v8698 = vunpack.c.l.s4 1983009808
        %v8699 = vunpack.c.0.s8 %v8698
        %v8700 = vperm.slane %v8694, %v8699
        %v8702 = vunpack.c.l.s4 1983009808
        %v8703 = vunpack.c.0.s8 %v8702
        %v8704 = vperm.slane %v8696, %v8703
        %v8705 = vrot.slane %v8566, 4
        %v8706 = vsel %vm8581, %v8705, %v8534
        %v8707 = vrot.slane %v8534, 4
        %v8708 = vsel %vm8581, %v8566, %v8707
        %v8710 = vunpack.c.l.s4 1983009808
        %v8711 = vunpack.c.0.s8 %v8710
        %v8712 = vperm.slane %v8706, %v8711
        %v8714 = vunpack.c.l.s4 1983009808
        %v8715 = vunpack.c.0.s8 %v8714
        %v8716 = vperm.slane %v8708, %v8715
        %v8717 = vrot.slane %v8712, 4
        %v8718 = vsel %vm8581, %v8717, %v8700
        %v8719 = vrot.slane %v8700, 4
        %v8720 = vsel %vm8581, %v8712, %v8719
        %v8722 = vunpack.c.l.s4 1934713408
        %v8723 = vunpack.c.0.s8 %v8722
        %v8724 = vperm.slane %v8718, %v8723
        %v8726 = vunpack.c.l.s4 1934713408
        %v8727 = vunpack.c.0.s8 %v8726
        %v8728 = vperm.slane %v8720, %v8727
        %v8729 = vrot.slane %v8716, 4
        %v8730 = vsel %vm8581, %v8729, %v8704
        %v8731 = vrot.slane %v8704, 4
        %v8732 = vsel %vm8581, %v8716, %v8731
        %v8734 = vunpack.c.l.s4 1934713408
        %v8735 = vunpack.c.0.s8 %v8734
        %v8736 = vperm.slane %v8730, %v8735
        %v8738 = vunpack.c.l.s4 1934713408
        %v8739 = vunpack.c.0.s8 %v8738
        %v8740 = vperm.slane %v8732, %v8739
        %v8741 = vrot.slane %v8724, 4
        %v8742 = vsel %vm8581, 0.0, %v8741
        %v8743 = vrot.slane %v8728, 4
        %v8744 = vsel %vm8581, 0.0, %v8743
        %v8745 = vrot.slane %v8736, 4
        %v8746 = vsel %vm8581, 0.0, %v8745
        %v8747 = vrot.slane %v8740, 4
        %v8748 = vsel %vm8581, 0.0, %v8747
        %v8749 = vrot.slane %v8551, 4
        %v8750 = vsel %vm8581, %v8749, %v8519
        %v8751 = vrot.slane %v8519, 4
        %v8752 = vsel %vm8581, %v8551, %v8751
        %v8754 = vunpack.c.l.s4 1983009808
        %v8755 = vunpack.c.0.s8 %v8754
        %v8756 = vperm.slane %v8750, %v8755
        %v8758 = vunpack.c.l.s4 1983009808
        %v8759 = vunpack.c.0.s8 %v8758
        %v8760 = vperm.slane %v8752, %v8759
        %v8761 = vrot.slane %v8567, 4
        %v8762 = vsel %vm8581, %v8761, %v8535
        %v8763 = vrot.slane %v8535, 4
        %v8764 = vsel %vm8581, %v8567, %v8763
        %v8766 = vunpack.c.l.s4 1983009808
        %v8767 = vunpack.c.0.s8 %v8766
        %v8768 = vperm.slane %v8762, %v8767
        %v8770 = vunpack.c.l.s4 1983009808
        %v8771 = vunpack.c.0.s8 %v8770
        %v8772 = vperm.slane %v8764, %v8771
        %v8773 = vrot.slane %v8768, 4
        %v8774 = vsel %vm8581, %v8773, %v8756
        %v8775 = vrot.slane %v8756, 4
        %v8776 = vsel %vm8581, %v8768, %v8775
        %v8778 = vunpack.c.l.s4 1934713408
        %v8779 = vunpack.c.0.s8 %v8778
        %v8780 = vperm.slane %v8774, %v8779
        %v8782 = vunpack.c.l.s4 1934713408
        %v8783 = vunpack.c.0.s8 %v8782
        %v8784 = vperm.slane %v8776, %v8783
        %v8785 = vrot.slane %v8772, 4
        %v8786 = vsel %vm8581, %v8785, %v8760
        %v8787 = vrot.slane %v8760, 4
        %v8788 = vsel %vm8581, %v8772, %v8787
        %v8790 = vunpack.c.l.s4 1934713408
        %v8791 = vunpack.c.0.s8 %v8790
        %v8792 = vperm.slane %v8786, %v8791
        %v8794 = vunpack.c.l.s4 1934713408
        %v8795 = vunpack.c.0.s8 %v8794
        %v8796 = vperm.slane %v8788, %v8795
        %v8797 = vrot.slane %v8780, 4
        %v8798 = vsel %vm8581, 0.0, %v8797
        %v8799 = vrot.slane %v8784, 4
        %v8800 = vsel %vm8581, 0.0, %v8799
        %v8801 = vrot.slane %v8792, 4
        %v8802 = vsel %vm8581, 0.0, %v8801
        %v8803 = vrot.slane %v8796, 4
        %v8804 = vsel %vm8581, 0.0, %v8803
        %v8805 = vrot.slane %v8552, 4
        %v8806 = vsel %vm8581, %v8805, %v8520
        %v8807 = vrot.slane %v8520, 4
        %v8808 = vsel %vm8581, %v8552, %v8807
        %v8810 = vunpack.c.l.s4 1983009808
        %v8811 = vunpack.c.0.s8 %v8810
        %v8812 = vperm.slane %v8806, %v8811
        %v8814 = vunpack.c.l.s4 1983009808
        %v8815 = vunpack.c.0.s8 %v8814
        %v8816 = vperm.slane %v8808, %v8815
        %v8817 = vrot.slane %v8568, 4
        %v8818 = vsel %vm8581, %v8817, %v8536
        %v8819 = vrot.slane %v8536, 4
        %v8820 = vsel %vm8581, %v8568, %v8819
        %v8822 = vunpack.c.l.s4 1983009808
        %v8823 = vunpack.c.0.s8 %v8822
        %v8824 = vperm.slane %v8818, %v8823
        %v8826 = vunpack.c.l.s4 1983009808
        %v8827 = vunpack.c.0.s8 %v8826
        %v8828 = vperm.slane %v8820, %v8827
        %v8829 = vrot.slane %v8824, 4
        %v8830 = vsel %vm8581, %v8829, %v8812
        %v8831 = vrot.slane %v8812, 4
        %v8832 = vsel %vm8581, %v8824, %v8831
        %v8834 = vunpack.c.l.s4 1934713408
        %v8835 = vunpack.c.0.s8 %v8834
        %v8836 = vperm.slane %v8830, %v8835
        %v8838 = vunpack.c.l.s4 1934713408
        %v8839 = vunpack.c.0.s8 %v8838
        %v8840 = vperm.slane %v8832, %v8839
        %v8841 = vrot.slane %v8828, 4
        %v8842 = vsel %vm8581, %v8841, %v8816
        %v8843 = vrot.slane %v8816, 4
        %v8844 = vsel %vm8581, %v8828, %v8843
        %v8846 = vunpack.c.l.s4 1934713408
        %v8847 = vunpack.c.0.s8 %v8846
        %v8848 = vperm.slane %v8842, %v8847
        %v8850 = vunpack.c.l.s4 1934713408
        %v8851 = vunpack.c.0.s8 %v8850
        %v8852 = vperm.slane %v8844, %v8851
        %v8853 = vrot.slane %v8836, 4
        %v8854 = vsel %vm8581, 0.0, %v8853
        %v8855 = vrot.slane %v8840, 4
        %v8856 = vsel %vm8581, 0.0, %v8855
        %v8857 = vrot.slane %v8848, 4
        %v8858 = vsel %vm8581, 0.0, %v8857
        %v8859 = vrot.slane %v8852, 4
        %v8860 = vsel %vm8581, 0.0, %v8859
        %v8861 = vrot.slane %v8553, 4
        %v8862 = vsel %vm8581, %v8861, %v8521
        %v8863 = vrot.slane %v8521, 4
        %v8864 = vsel %vm8581, %v8553, %v8863
        %v8866 = vunpack.c.l.s4 1983009808
        %v8867 = vunpack.c.0.s8 %v8866
        %v8868 = vperm.slane %v8862, %v8867
        %v8870 = vunpack.c.l.s4 1983009808
        %v8871 = vunpack.c.0.s8 %v8870
        %v8872 = vperm.slane %v8864, %v8871
        %v8873 = vrot.slane %v8569, 4
        %v8874 = vsel %vm8581, %v8873, %v8537
        %v8875 = vrot.slane %v8537, 4
        %v8876 = vsel %vm8581, %v8569, %v8875
        %v8878 = vunpack.c.l.s4 1983009808
        %v8879 = vunpack.c.0.s8 %v8878
        %v8880 = vperm.slane %v8874, %v8879
        %v8882 = vunpack.c.l.s4 1983009808
        %v8883 = vunpack.c.0.s8 %v8882
        %v8884 = vperm.slane %v8876, %v8883
        %v8885 = vrot.slane %v8880, 4
        %v8886 = vsel %vm8581, %v8885, %v8868
        %v8887 = vrot.slane %v8868, 4
        %v8888 = vsel %vm8581, %v8880, %v8887
        %v8890 = vunpack.c.l.s4 1934713408
        %v8891 = vunpack.c.0.s8 %v8890
        %v8892 = vperm.slane %v8886, %v8891
        %v8894 = vunpack.c.l.s4 1934713408
        %v8895 = vunpack.c.0.s8 %v8894
        %v8896 = vperm.slane %v8888, %v8895
        %v8897 = vrot.slane %v8884, 4
        %v8898 = vsel %vm8581, %v8897, %v8872
        %v8899 = vrot.slane %v8872, 4
        %v8900 = vsel %vm8581, %v8884, %v8899
        %v8902 = vunpack.c.l.s4 1934713408
        %v8903 = vunpack.c.0.s8 %v8902
        %v8904 = vperm.slane %v8898, %v8903
        %v8906 = vunpack.c.l.s4 1934713408
        %v8907 = vunpack.c.0.s8 %v8906
        %v8908 = vperm.slane %v8900, %v8907
        %v8909 = vrot.slane %v8892, 4
        %v8910 = vsel %vm8581, 0.0, %v8909
        %v8911 = vrot.slane %v8896, 4
        %v8912 = vsel %vm8581, 0.0, %v8911
        %v8913 = vrot.slane %v8904, 4
        %v8914 = vsel %vm8581, 0.0, %v8913
        %v8915 = vrot.slane %v8908, 4
        %v8916 = vsel %vm8581, 0.0, %v8915
        %v8917 = vrot.slane %v8554, 4
        %v8918 = vsel %vm8581, %v8917, %v8522
        %v8919 = vrot.slane %v8522, 4
        %v8920 = vsel %vm8581, %v8554, %v8919
        %v8922 = vunpack.c.l.s4 1983009808
        %v8923 = vunpack.c.0.s8 %v8922
        %v8924 = vperm.slane %v8918, %v8923
        %v8926 = vunpack.c.l.s4 1983009808
        %v8927 = vunpack.c.0.s8 %v8926
        %v8928 = vperm.slane %v8920, %v8927
        %v8929 = vrot.slane %v8570, 4
        %v8930 = vsel %vm8581, %v8929, %v8538
        %v8931 = vrot.slane %v8538, 4
        %v8932 = vsel %vm8581, %v8570, %v8931
        %v8934 = vunpack.c.l.s4 1983009808
        %v8935 = vunpack.c.0.s8 %v8934
        %v8936 = vperm.slane %v8930, %v8935
        %v8938 = vunpack.c.l.s4 1983009808
        %v8939 = vunpack.c.0.s8 %v8938
        %v8940 = vperm.slane %v8932, %v8939
        %v8941 = vrot.slane %v8936, 4
        %v8942 = vsel %vm8581, %v8941, %v8924
        %v8943 = vrot.slane %v8924, 4
        %v8944 = vsel %vm8581, %v8936, %v8943
        %v8946 = vunpack.c.l.s4 1934713408
        %v8947 = vunpack.c.0.s8 %v8946
        %v8948 = vperm.slane %v8942, %v8947
        %v8950 = vunpack.c.l.s4 1934713408
        %v8951 = vunpack.c.0.s8 %v8950
        %v8952 = vperm.slane %v8944, %v8951
        %v8953 = vrot.slane %v8940, 4
        %v8954 = vsel %vm8581, %v8953, %v8928
        %v8955 = vrot.slane %v8928, 4
        %v8956 = vsel %vm8581, %v8940, %v8955
        %v8958 = vunpack.c.l.s4 1934713408
        %v8959 = vunpack.c.0.s8 %v8958
        %v8960 = vperm.slane %v8954, %v8959
        %v8962 = vunpack.c.l.s4 1934713408
        %v8963 = vunpack.c.0.s8 %v8962
        %v8964 = vperm.slane %v8956, %v8963
        %v8965 = vrot.slane %v8948, 4
        %v8966 = vsel %vm8581, 0.0, %v8965
        %v8967 = vrot.slane %v8952, 4
        %v8968 = vsel %vm8581, 0.0, %v8967
        %v8969 = vrot.slane %v8960, 4
        %v8970 = vsel %vm8581, 0.0, %v8969
        %v8971 = vrot.slane %v8964, 4
        %v8972 = vsel %vm8581, 0.0, %v8971
        %v8973 = vrot.slane %v8555, 4
        %v8974 = vsel %vm8581, %v8973, %v8523
        %v8975 = vrot.slane %v8523, 4
        %v8976 = vsel %vm8581, %v8555, %v8975
        %v8978 = vunpack.c.l.s4 1983009808
        %v8979 = vunpack.c.0.s8 %v8978
        %v8980 = vperm.slane %v8974, %v8979
        %v8982 = vunpack.c.l.s4 1983009808
        %v8983 = vunpack.c.0.s8 %v8982
        %v8984 = vperm.slane %v8976, %v8983
        %v8985 = vrot.slane %v8571, 4
        %v8986 = vsel %vm8581, %v8985, %v8539
        %v8987 = vrot.slane %v8539, 4
        %v8988 = vsel %vm8581, %v8571, %v8987
        %v8990 = vunpack.c.l.s4 1983009808
        %v8991 = vunpack.c.0.s8 %v8990
        %v8992 = vperm.slane %v8986, %v8991
        %v8994 = vunpack.c.l.s4 1983009808
        %v8995 = vunpack.c.0.s8 %v8994
        %v8996 = vperm.slane %v8988, %v8995
        %v8997 = vrot.slane %v8992, 4
        %v8998 = vsel %vm8581, %v8997, %v8980
        %v8999 = vrot.slane %v8980, 4
        %v9000 = vsel %vm8581, %v8992, %v8999
        %v9002 = vunpack.c.l.s4 1934713408
        %v9003 = vunpack.c.0.s8 %v9002
        %v9004 = vperm.slane %v8998, %v9003
        %v9006 = vunpack.c.l.s4 1934713408
        %v9007 = vunpack.c.0.s8 %v9006
        %v9008 = vperm.slane %v9000, %v9007
        %v9009 = vrot.slane %v8996, 4
        %v9010 = vsel %vm8581, %v9009, %v8984
        %v9011 = vrot.slane %v8984, 4
        %v9012 = vsel %vm8581, %v8996, %v9011
        %v9014 = vunpack.c.l.s4 1934713408
        %v9015 = vunpack.c.0.s8 %v9014
        %v9016 = vperm.slane %v9010, %v9015
        %v9018 = vunpack.c.l.s4 1934713408
        %v9019 = vunpack.c.0.s8 %v9018
        %v9020 = vperm.slane %v9012, %v9019
        %v9021 = vrot.slane %v9004, 4
        %v9022 = vsel %vm8581, 0.0, %v9021
        %v9023 = vrot.slane %v9008, 4
        %v9024 = vsel %vm8581, 0.0, %v9023
        %v9025 = vrot.slane %v9016, 4
        %v9026 = vsel %vm8581, 0.0, %v9025
        %v9027 = vrot.slane %v9020, 4
        %v9028 = vsel %vm8581, 0.0, %v9027
        %v9029 = vrot.slane %v8556, 4
        %v9030 = vsel %vm8581, %v9029, %v8524
        %v9031 = vrot.slane %v8524, 4
        %v9032 = vsel %vm8581, %v8556, %v9031
        %v9034 = vunpack.c.l.s4 1983009808
        %v9035 = vunpack.c.0.s8 %v9034
        %v9036 = vperm.slane %v9030, %v9035
        %v9038 = vunpack.c.l.s4 1983009808
        %v9039 = vunpack.c.0.s8 %v9038
        %v9040 = vperm.slane %v9032, %v9039
        %v9041 = vrot.slane %v8572, 4
        %v9042 = vsel %vm8581, %v9041, %v8540
        %v9043 = vrot.slane %v8540, 4
        %v9044 = vsel %vm8581, %v8572, %v9043
        %v9046 = vunpack.c.l.s4 1983009808
        %v9047 = vunpack.c.0.s8 %v9046
        %v9048 = vperm.slane %v9042, %v9047
        %v9050 = vunpack.c.l.s4 1983009808
        %v9051 = vunpack.c.0.s8 %v9050
        %v9052 = vperm.slane %v9044, %v9051
        %v9053 = vrot.slane %v9048, 4
        %v9054 = vsel %vm8581, %v9053, %v9036
        %v9055 = vrot.slane %v9036, 4
        %v9056 = vsel %vm8581, %v9048, %v9055
        %v9058 = vunpack.c.l.s4 1934713408
        %v9059 = vunpack.c.0.s8 %v9058
        %v9060 = vperm.slane %v9054, %v9059
        %v9062 = vunpack.c.l.s4 1934713408
        %v9063 = vunpack.c.0.s8 %v9062
        %v9064 = vperm.slane %v9056, %v9063
        %v9065 = vrot.slane %v9052, 4
        %v9066 = vsel %vm8581, %v9065, %v9040
        %v9067 = vrot.slane %v9040, 4
        %v9068 = vsel %vm8581, %v9052, %v9067
        %v9070 = vunpack.c.l.s4 1934713408
        %v9071 = vunpack.c.0.s8 %v9070
        %v9072 = vperm.slane %v9066, %v9071
        %v9074 = vunpack.c.l.s4 1934713408
        %v9075 = vunpack.c.0.s8 %v9074
        %v9076 = vperm.slane %v9068, %v9075
        %v9077 = vrot.slane %v9060, 4
        %v9078 = vsel %vm8581, 0.0, %v9077
        %v9079 = vrot.slane %v9064, 4
        %v9080 = vsel %vm8581, 0.0, %v9079
        %v9081 = vrot.slane %v9072, 4
        %v9082 = vsel %vm8581, 0.0, %v9081
        %v9083 = vrot.slane %v9076, 4
        %v9084 = vsel %vm8581, 0.0, %v9083
        %v9085 = vrot.slane %v8557, 4
        %v9086 = vsel %vm8581, %v9085, %v8525
        %v9087 = vrot.slane %v8525, 4
        %v9088 = vsel %vm8581, %v8557, %v9087
        %v9090 = vunpack.c.l.s4 1983009808
        %v9091 = vunpack.c.0.s8 %v9090
        %v9092 = vperm.slane %v9086, %v9091
        %v9094 = vunpack.c.l.s4 1983009808
        %v9095 = vunpack.c.0.s8 %v9094
        %v9096 = vperm.slane %v9088, %v9095
        %v9097 = vrot.slane %v8573, 4
        %v9098 = vsel %vm8581, %v9097, %v8541
        %v9099 = vrot.slane %v8541, 4
        %v9100 = vsel %vm8581, %v8573, %v9099
        %v9102 = vunpack.c.l.s4 1983009808
        %v9103 = vunpack.c.0.s8 %v9102
        %v9104 = vperm.slane %v9098, %v9103
        %v9106 = vunpack.c.l.s4 1983009808
        %v9107 = vunpack.c.0.s8 %v9106
        %v9108 = vperm.slane %v9100, %v9107
        %v9109 = vrot.slane %v9104, 4
        %v9110 = vsel %vm8581, %v9109, %v9092
        %v9111 = vrot.slane %v9092, 4
        %v9112 = vsel %vm8581, %v9104, %v9111
        %v9114 = vunpack.c.l.s4 1934713408
        %v9115 = vunpack.c.0.s8 %v9114
        %v9116 = vperm.slane %v9110, %v9115
        %v9118 = vunpack.c.l.s4 1934713408
        %v9119 = vunpack.c.0.s8 %v9118
        %v9120 = vperm.slane %v9112, %v9119
        %v9121 = vrot.slane %v9108, 4
        %v9122 = vsel %vm8581, %v9121, %v9096
        %v9123 = vrot.slane %v9096, 4
        %v9124 = vsel %vm8581, %v9108, %v9123
        %v9126 = vunpack.c.l.s4 1934713408
        %v9127 = vunpack.c.0.s8 %v9126
        %v9128 = vperm.slane %v9122, %v9127
        %v9130 = vunpack.c.l.s4 1934713408
        %v9131 = vunpack.c.0.s8 %v9130
        %v9132 = vperm.slane %v9124, %v9131
        %v9133 = vrot.slane %v9116, 4
        %v9134 = vsel %vm8581, 0.0, %v9133
        %v9135 = vrot.slane %v9120, 4
        %v9136 = vsel %vm8581, 0.0, %v9135
        %v9137 = vrot.slane %v9128, 4
        %v9138 = vsel %vm8581, 0.0, %v9137
        %v9139 = vrot.slane %v9132, 4
        %v9140 = vsel %vm8581, 0.0, %v9139
        %v9141 = vrot.slane %v8558, 4
        %v9142 = vsel %vm8581, %v9141, %v8526
        %v9143 = vrot.slane %v8526, 4
        %v9144 = vsel %vm8581, %v8558, %v9143
        %v9146 = vunpack.c.l.s4 1983009808
        %v9147 = vunpack.c.0.s8 %v9146
        %v9148 = vperm.slane %v9142, %v9147
        %v9150 = vunpack.c.l.s4 1983009808
        %v9151 = vunpack.c.0.s8 %v9150
        %v9152 = vperm.slane %v9144, %v9151
        %v9153 = vrot.slane %v8574, 4
        %v9154 = vsel %vm8581, %v9153, %v8542
        %v9155 = vrot.slane %v8542, 4
        %v9156 = vsel %vm8581, %v8574, %v9155
        %v9158 = vunpack.c.l.s4 1983009808
        %v9159 = vunpack.c.0.s8 %v9158
        %v9160 = vperm.slane %v9154, %v9159
        %v9162 = vunpack.c.l.s4 1983009808
        %v9163 = vunpack.c.0.s8 %v9162
        %v9164 = vperm.slane %v9156, %v9163
        %v9165 = vrot.slane %v9160, 4
        %v9166 = vsel %vm8581, %v9165, %v9148
        %v9167 = vrot.slane %v9148, 4
        %v9168 = vsel %vm8581, %v9160, %v9167
        %v9170 = vunpack.c.l.s4 1934713408
        %v9171 = vunpack.c.0.s8 %v9170
        %v9172 = vperm.slane %v9166, %v9171
        %v9174 = vunpack.c.l.s4 1934713408
        %v9175 = vunpack.c.0.s8 %v9174
        %v9176 = vperm.slane %v9168, %v9175
        %v9177 = vrot.slane %v9164, 4
        %v9178 = vsel %vm8581, %v9177, %v9152
        %v9179 = vrot.slane %v9152, 4
        %v9180 = vsel %vm8581, %v9164, %v9179
        %v9182 = vunpack.c.l.s4 1934713408
        %v9183 = vunpack.c.0.s8 %v9182
        %v9184 = vperm.slane %v9178, %v9183
        %v9186 = vunpack.c.l.s4 1934713408
        %v9187 = vunpack.c.0.s8 %v9186
        %v9188 = vperm.slane %v9180, %v9187
        %v9189 = vrot.slane %v9172, 4
        %v9190 = vsel %vm8581, 0.0, %v9189
        %v9191 = vrot.slane %v9176, 4
        %v9192 = vsel %vm8581, 0.0, %v9191
        %v9193 = vrot.slane %v9184, 4
        %v9194 = vsel %vm8581, 0.0, %v9193
        %v9195 = vrot.slane %v9188, 4
        %v9196 = vsel %vm8581, 0.0, %v9195
        %v9197 = vrot.slane %v8559, 4
        %v9198 = vsel %vm8581, %v9197, %v8527
        %v9199 = vrot.slane %v8527, 4
        %v9200 = vsel %vm8581, %v8559, %v9199
        %v9202 = vunpack.c.l.s4 1983009808
        %v9203 = vunpack.c.0.s8 %v9202
        %v9204 = vperm.slane %v9198, %v9203
        %v9206 = vunpack.c.l.s4 1983009808
        %v9207 = vunpack.c.0.s8 %v9206
        %v9208 = vperm.slane %v9200, %v9207
        %v9209 = vrot.slane %v8575, 4
        %v9210 = vsel %vm8581, %v9209, %v8543
        %v9211 = vrot.slane %v8543, 4
        %v9212 = vsel %vm8581, %v8575, %v9211
        %v9214 = vunpack.c.l.s4 1983009808
        %v9215 = vunpack.c.0.s8 %v9214
        %v9216 = vperm.slane %v9210, %v9215
        %v9218 = vunpack.c.l.s4 1983009808
        %v9219 = vunpack.c.0.s8 %v9218
        %v9220 = vperm.slane %v9212, %v9219
        %v9221 = vrot.slane %v9216, 4
        %v9222 = vsel %vm8581, %v9221, %v9204
        %v9223 = vrot.slane %v9204, 4
        %v9224 = vsel %vm8581, %v9216, %v9223
        %v9226 = vunpack.c.l.s4 1934713408
        %v9227 = vunpack.c.0.s8 %v9226
        %v9228 = vperm.slane %v9222, %v9227
        %v9230 = vunpack.c.l.s4 1934713408
        %v9231 = vunpack.c.0.s8 %v9230
        %v9232 = vperm.slane %v9224, %v9231
        %v9233 = vrot.slane %v9220, 4
        %v9234 = vsel %vm8581, %v9233, %v9208
        %v9235 = vrot.slane %v9208, 4
        %v9236 = vsel %vm8581, %v9220, %v9235
        %v9238 = vunpack.c.l.s4 1934713408
        %v9239 = vunpack.c.0.s8 %v9238
        %v9240 = vperm.slane %v9234, %v9239
        %v9242 = vunpack.c.l.s4 1934713408
        %v9243 = vunpack.c.0.s8 %v9242
        %v9244 = vperm.slane %v9236, %v9243
        %v9245 = vrot.slane %v9228, 4
        %v9246 = vsel %vm8581, 0.0, %v9245
        %v9247 = vrot.slane %v9232, 4
        %v9248 = vsel %vm8581, 0.0, %v9247
        %v9249 = vrot.slane %v9240, 4
        %v9250 = vsel %vm8581, 0.0, %v9249
        %v9251 = vrot.slane %v9244, 4
        %v9252 = vsel %vm8581, 0.0, %v9251
        %v9253 = vrot.slane %v8560, 4
        %v9254 = vsel %vm8581, %v9253, %v8528
        %v9255 = vrot.slane %v8528, 4
        %v9256 = vsel %vm8581, %v8560, %v9255
        %v9258 = vunpack.c.l.s4 1983009808
        %v9259 = vunpack.c.0.s8 %v9258
        %v9260 = vperm.slane %v9254, %v9259
        %v9262 = vunpack.c.l.s4 1983009808
        %v9263 = vunpack.c.0.s8 %v9262
        %v9264 = vperm.slane %v9256, %v9263
        %v9265 = vrot.slane %v8576, 4
        %v9266 = vsel %vm8581, %v9265, %v8544
        %v9267 = vrot.slane %v8544, 4
        %v9268 = vsel %vm8581, %v8576, %v9267
        %v9270 = vunpack.c.l.s4 1983009808
        %v9271 = vunpack.c.0.s8 %v9270
        %v9272 = vperm.slane %v9266, %v9271
        %v9274 = vunpack.c.l.s4 1983009808
        %v9275 = vunpack.c.0.s8 %v9274
        %v9276 = vperm.slane %v9268, %v9275
        %v9277 = vrot.slane %v9272, 4
        %v9278 = vsel %vm8581, %v9277, %v9260
        %v9279 = vrot.slane %v9260, 4
        %v9280 = vsel %vm8581, %v9272, %v9279
        %v9282 = vunpack.c.l.s4 1934713408
        %v9283 = vunpack.c.0.s8 %v9282
        %v9284 = vperm.slane %v9278, %v9283
        %v9286 = vunpack.c.l.s4 1934713408
        %v9287 = vunpack.c.0.s8 %v9286
        %v9288 = vperm.slane %v9280, %v9287
        %v9289 = vrot.slane %v9276, 4
        %v9290 = vsel %vm8581, %v9289, %v9264
        %v9291 = vrot.slane %v9264, 4
        %v9292 = vsel %vm8581, %v9276, %v9291
        %v9294 = vunpack.c.l.s4 1934713408
        %v9295 = vunpack.c.0.s8 %v9294
        %v9296 = vperm.slane %v9290, %v9295
        %v9298 = vunpack.c.l.s4 1934713408
        %v9299 = vunpack.c.0.s8 %v9298
        %v9300 = vperm.slane %v9292, %v9299
        %v9301 = vrot.slane %v9284, 4
        %v9302 = vsel %vm8581, 0.0, %v9301
        %v9303 = vrot.slane %v9288, 4
        %v9304 = vsel %vm8581, 0.0, %v9303
        %v9305 = vrot.slane %v9296, 4
        %v9306 = vsel %vm8581, 0.0, %v9305
        %v9307 = vrot.slane %v9300, 4
        %v9308 = vsel %vm8581, 0.0, %v9307
        %v9309 = vrot.slane %v8561, 4
        %v9310 = vsel %vm8581, %v9309, %v8529
        %v9311 = vrot.slane %v8529, 4
        %v9312 = vsel %vm8581, %v8561, %v9311
        %v9314 = vunpack.c.l.s4 1983009808
        %v9315 = vunpack.c.0.s8 %v9314
        %v9316 = vperm.slane %v9310, %v9315
        %v9318 = vunpack.c.l.s4 1983009808
        %v9319 = vunpack.c.0.s8 %v9318
        %v9320 = vperm.slane %v9312, %v9319
        %v9321 = vrot.slane %v8577, 4
        %v9322 = vsel %vm8581, %v9321, %v8545
        %v9323 = vrot.slane %v8545, 4
        %v9324 = vsel %vm8581, %v8577, %v9323
        %v9326 = vunpack.c.l.s4 1983009808
        %v9327 = vunpack.c.0.s8 %v9326
        %v9328 = vperm.slane %v9322, %v9327
        %v9330 = vunpack.c.l.s4 1983009808
        %v9331 = vunpack.c.0.s8 %v9330
        %v9332 = vperm.slane %v9324, %v9331
        %v9333 = vrot.slane %v9328, 4
        %v9334 = vsel %vm8581, %v9333, %v9316
        %v9335 = vrot.slane %v9316, 4
        %v9336 = vsel %vm8581, %v9328, %v9335
        %v9338 = vunpack.c.l.s4 1934713408
        %v9339 = vunpack.c.0.s8 %v9338
        %v9340 = vperm.slane %v9334, %v9339
        %v9342 = vunpack.c.l.s4 1934713408
        %v9343 = vunpack.c.0.s8 %v9342
        %v9344 = vperm.slane %v9336, %v9343
        %v9345 = vrot.slane %v9332, 4
        %v9346 = vsel %vm8581, %v9345, %v9320
        %v9347 = vrot.slane %v9320, 4
        %v9348 = vsel %vm8581, %v9332, %v9347
        %v9350 = vunpack.c.l.s4 1934713408
        %v9351 = vunpack.c.0.s8 %v9350
        %v9352 = vperm.slane %v9346, %v9351
        %v9354 = vunpack.c.l.s4 1934713408
        %v9355 = vunpack.c.0.s8 %v9354
        %v9356 = vperm.slane %v9348, %v9355
        %v9357 = vrot.slane %v9340, 4
        %v9358 = vsel %vm8581, 0.0, %v9357
        %v9359 = vrot.slane %v9344, 4
        %v9360 = vsel %vm8581, 0.0, %v9359
        %v9361 = vrot.slane %v9352, 4
        %v9362 = vsel %vm8581, 0.0, %v9361
        %v9363 = vrot.slane %v9356, 4
        %v9364 = vsel %vm8581, 0.0, %v9363
        %v9365 = vrot.slane %v8562, 4
        %v9366 = vsel %vm8581, %v9365, %v8530
        %v9367 = vrot.slane %v8530, 4
        %v9368 = vsel %vm8581, %v8562, %v9367
        %v9370 = vunpack.c.l.s4 1983009808
        %v9371 = vunpack.c.0.s8 %v9370
        %v9372 = vperm.slane %v9366, %v9371
        %v9374 = vunpack.c.l.s4 1983009808
        %v9375 = vunpack.c.0.s8 %v9374
        %v9376 = vperm.slane %v9368, %v9375
        %v9377 = vrot.slane %v8578, 4
        %v9378 = vsel %vm8581, %v9377, %v8546
        %v9379 = vrot.slane %v8546, 4
        %v9380 = vsel %vm8581, %v8578, %v9379
        %v9382 = vunpack.c.l.s4 1983009808
        %v9383 = vunpack.c.0.s8 %v9382
        %v9384 = vperm.slane %v9378, %v9383
        %v9386 = vunpack.c.l.s4 1983009808
        %v9387 = vunpack.c.0.s8 %v9386
        %v9388 = vperm.slane %v9380, %v9387
        %v9389 = vrot.slane %v9384, 4
        %v9390 = vsel %vm8581, %v9389, %v9372
        %v9391 = vrot.slane %v9372, 4
        %v9392 = vsel %vm8581, %v9384, %v9391
        %v9394 = vunpack.c.l.s4 1934713408
        %v9395 = vunpack.c.0.s8 %v9394
        %v9396 = vperm.slane %v9390, %v9395
        %v9398 = vunpack.c.l.s4 1934713408
        %v9399 = vunpack.c.0.s8 %v9398
        %v9400 = vperm.slane %v9392, %v9399
        %v9401 = vrot.slane %v9388, 4
        %v9402 = vsel %vm8581, %v9401, %v9376
        %v9403 = vrot.slane %v9376, 4
        %v9404 = vsel %vm8581, %v9388, %v9403
        %v9406 = vunpack.c.l.s4 1934713408
        %v9407 = vunpack.c.0.s8 %v9406
        %v9408 = vperm.slane %v9402, %v9407
        %v9410 = vunpack.c.l.s4 1934713408
        %v9411 = vunpack.c.0.s8 %v9410
        %v9412 = vperm.slane %v9404, %v9411
        %v9413 = vrot.slane %v9396, 4
        %v9414 = vsel %vm8581, 0.0, %v9413
        %v9415 = vrot.slane %v9400, 4
        %v9416 = vsel %vm8581, 0.0, %v9415
        %v9417 = vrot.slane %v9408, 4
        %v9418 = vsel %vm8581, 0.0, %v9417
        %v9419 = vrot.slane %v9412, 4
        %v9420 = vsel %vm8581, 0.0, %v9419
        %v9421 = vrot.slane %v8563, 4
        %v9422 = vsel %vm8581, %v9421, %v8531
        %v9423 = vrot.slane %v8531, 4
        %v9424 = vsel %vm8581, %v8563, %v9423
        %v9426 = vunpack.c.l.s4 1983009808
        %v9427 = vunpack.c.0.s8 %v9426
        %v9428 = vperm.slane %v9422, %v9427
        %v9430 = vunpack.c.l.s4 1983009808
        %v9431 = vunpack.c.0.s8 %v9430
        %v9432 = vperm.slane %v9424, %v9431
        %v9433 = vrot.slane %v8579, 4
        %v9434 = vsel %vm8581, %v9433, %v8547
        %v9435 = vrot.slane %v8547, 4
        %v9436 = vsel %vm8581, %v8579, %v9435
        %v9438 = vunpack.c.l.s4 1983009808
        %v9439 = vunpack.c.0.s8 %v9438
        %v9440 = vperm.slane %v9434, %v9439
        %v9442 = vunpack.c.l.s4 1983009808
        %v9443 = vunpack.c.0.s8 %v9442
        %v9444 = vperm.slane %v9436, %v9443
        %v9445 = vrot.slane %v9440, 4
        %v9446 = vsel %vm8581, %v9445, %v9428
        %v9447 = vrot.slane %v9428, 4
        %v9448 = vsel %vm8581, %v9440, %v9447
        %v9450 = vunpack.c.l.s4 1934713408
        %v9451 = vunpack.c.0.s8 %v9450
        %v9452 = vperm.slane %v9446, %v9451
        %v9454 = vunpack.c.l.s4 1934713408
        %v9455 = vunpack.c.0.s8 %v9454
        %v9456 = vperm.slane %v9448, %v9455
        %v9457 = vrot.slane %v9444, 4
        %v9458 = vsel %vm8581, %v9457, %v9432
        %v9459 = vrot.slane %v9432, 4
        %v9460 = vsel %vm8581, %v9444, %v9459
        %v9462 = vunpack.c.l.s4 1934713408
        %v9463 = vunpack.c.0.s8 %v9462
        %v9464 = vperm.slane %v9458, %v9463
        %v9466 = vunpack.c.l.s4 1934713408
        %v9467 = vunpack.c.0.s8 %v9466
        %v9468 = vperm.slane %v9460, %v9467
        %v9469 = vrot.slane %v9452, 4
        %v9470 = vsel %vm8581, 0.0, %v9469
        %v9471 = vrot.slane %v9456, 4
        %v9472 = vsel %vm8581, 0.0, %v9471
        %v9473 = vrot.slane %v9464, 4
        %v9474 = vsel %vm8581, 0.0, %v9473
        %v9475 = vrot.slane %v9468, 4
        %v9476 = vsel %vm8581, 0.0, %v9475
        %v9477 = vsel %vm8581, %v8631, %v8612
        %v9479 = vunpack.c.l.s4 1983009808
        %v9480 = vunpack.c.0.s8 %v9479
        %v9481 = vperm.slane %v9477, %v9480
        %v9482 = vrot.slane %v8632, 4
        %v9483 = vsel %vm8581, %v9482, %v8630
        %v9485 = vunpack.c.l.s4 1983009808
        %v9486 = vunpack.c.0.s8 %v9485
        %v9487 = vperm.slane %v9483, %v9486
        %v9488 = vsel %vm8581, %v8635, %v8624
        %v9490 = vunpack.c.l.s4 1983009808
        %v9491 = vunpack.c.0.s8 %v9490
        %v9492 = vperm.slane %v9488, %v9491
        %v9493 = vrot.slane %v8636, 4
        %v9494 = vsel %vm8581, %v9493, %v8634
        %v9496 = vunpack.c.l.s4 1983009808
        %v9497 = vunpack.c.0.s8 %v9496
        %v9498 = vperm.slane %v9494, %v9497
        %v9499 = vrot.slane %v9487, 4
        %v9500 = vsel %vm8581, %v9499, %v9481
        %v9501 = vrot.slane %v9481, 4
        %v9502 = vsel %vm8581, %v9487, %v9501
        %v9504 = vunpack.c.l.s4 1934713408
        %v9505 = vunpack.c.0.s8 %v9504
        %v9506 = vperm.slane %v9500, %v9505
        %v9508 = vunpack.c.l.s4 1934713408
        %v9509 = vunpack.c.0.s8 %v9508
        %v9510 = vperm.slane %v9502, %v9509
        %v9511 = vrot.slane %v9498, 4
        %v9512 = vsel %vm8581, %v9511, %v9492
        %v9513 = vrot.slane %v9492, 4
        %v9514 = vsel %vm8581, %v9498, %v9513
        %v9516 = vunpack.c.l.s4 1934713408
        %v9517 = vunpack.c.0.s8 %v9516
        %v9518 = vperm.slane %v9512, %v9517
        %v9520 = vunpack.c.l.s4 1934713408
        %v9521 = vunpack.c.0.s8 %v9520
        %v9522 = vperm.slane %v9514, %v9521
        %v9523 = vrot.slane %v9518, 4
        %v9524 = vsel %vm8581, %v9523, %v9506
        %v9525 = vrot.slane %v9506, 4
        %v9526 = vsel %vm8581, %v9518, %v9525
        %v9527 = vrot.slane %v9522, 4
        %v9528 = vsel %vm8581, %v9527, %v9510
        %v9529 = vrot.slane %v9510, 4
        %v9530 = vsel %vm8581, %v9522, %v9529
        %v9531 = vsel %vm8581, %v8687, %v8668
        %v9533 = vunpack.c.l.s4 1983009808
        %v9534 = vunpack.c.0.s8 %v9533
        %v9535 = vperm.slane %v9531, %v9534
        %v9536 = vrot.slane %v8688, 4
        %v9537 = vsel %vm8581, %v9536, %v8686
        %v9539 = vunpack.c.l.s4 1983009808
        %v9540 = vunpack.c.0.s8 %v9539
        %v9541 = vperm.slane %v9537, %v9540
        %v9542 = vsel %vm8581, %v8691, %v8680
        %v9544 = vunpack.c.l.s4 1983009808
        %v9545 = vunpack.c.0.s8 %v9544
        %v9546 = vperm.slane %v9542, %v9545
        %v9547 = vrot.slane %v8692, 4
        %v9548 = vsel %vm8581, %v9547, %v8690
        %v9550 = vunpack.c.l.s4 1983009808
        %v9551 = vunpack.c.0.s8 %v9550
        %v9552 = vperm.slane %v9548, %v9551
        %v9553 = vrot.slane %v9541, 4
        %v9554 = vsel %vm8581, %v9553, %v9535
        %v9555 = vrot.slane %v9535, 4
        %v9556 = vsel %vm8581, %v9541, %v9555
        %v9558 = vunpack.c.l.s4 1934713408
        %v9559 = vunpack.c.0.s8 %v9558
        %v9560 = vperm.slane %v9554, %v9559
        %v9562 = vunpack.c.l.s4 1934713408
        %v9563 = vunpack.c.0.s8 %v9562
        %v9564 = vperm.slane %v9556, %v9563
        %v9565 = vrot.slane %v9552, 4
        %v9566 = vsel %vm8581, %v9565, %v9546
        %v9567 = vrot.slane %v9546, 4
        %v9568 = vsel %vm8581, %v9552, %v9567
        %v9570 = vunpack.c.l.s4 1934713408
        %v9571 = vunpack.c.0.s8 %v9570
        %v9572 = vperm.slane %v9566, %v9571
        %v9574 = vunpack.c.l.s4 1934713408
        %v9575 = vunpack.c.0.s8 %v9574
        %v9576 = vperm.slane %v9568, %v9575
        %v9577 = vrot.slane %v9572, 4
        %v9578 = vsel %vm8581, %v9577, %v9560
        %v9579 = vrot.slane %v9560, 4
        %v9580 = vsel %vm8581, %v9572, %v9579
        %v9581 = vrot.slane %v9576, 4
        %v9582 = vsel %vm8581, %v9581, %v9564
        %v9583 = vrot.slane %v9564, 4
        %v9584 = vsel %vm8581, %v9576, %v9583
        %v9585 = vsel %vm8581, %v8743, %v8724
        %v9587 = vunpack.c.l.s4 1983009808
        %v9588 = vunpack.c.0.s8 %v9587
        %v9589 = vperm.slane %v9585, %v9588
        %v9590 = vrot.slane %v8744, 4
        %v9591 = vsel %vm8581, %v9590, %v8742
        %v9593 = vunpack.c.l.s4 1983009808
        %v9594 = vunpack.c.0.s8 %v9593
        %v9595 = vperm.slane %v9591, %v9594
        %v9596 = vsel %vm8581, %v8747, %v8736
        %v9598 = vunpack.c.l.s4 1983009808
        %v9599 = vunpack.c.0.s8 %v9598
        %v9600 = vperm.slane %v9596, %v9599
        %v9601 = vrot.slane %v8748, 4
        %v9602 = vsel %vm8581, %v9601, %v8746
        %v9604 = vunpack.c.l.s4 1983009808
        %v9605 = vunpack.c.0.s8 %v9604
        %v9606 = vperm.slane %v9602, %v9605
        %v9607 = vrot.slane %v9595, 4
        %v9608 = vsel %vm8581, %v9607, %v9589
        %v9609 = vrot.slane %v9589, 4
        %v9610 = vsel %vm8581, %v9595, %v9609
        %v9612 = vunpack.c.l.s4 1934713408
        %v9613 = vunpack.c.0.s8 %v9612
        %v9614 = vperm.slane %v9608, %v9613
        %v9616 = vunpack.c.l.s4 1934713408
        %v9617 = vunpack.c.0.s8 %v9616
        %v9618 = vperm.slane %v9610, %v9617
        %v9619 = vrot.slane %v9606, 4
        %v9620 = vsel %vm8581, %v9619, %v9600
        %v9621 = vrot.slane %v9600, 4
        %v9622 = vsel %vm8581, %v9606, %v9621
        %v9624 = vunpack.c.l.s4 1934713408
        %v9625 = vunpack.c.0.s8 %v9624
        %v9626 = vperm.slane %v9620, %v9625
        %v9628 = vunpack.c.l.s4 1934713408
        %v9629 = vunpack.c.0.s8 %v9628
        %v9630 = vperm.slane %v9622, %v9629
        %v9631 = vrot.slane %v9626, 4
        %v9632 = vsel %vm8581, %v9631, %v9614
        %v9633 = vrot.slane %v9614, 4
        %v9634 = vsel %vm8581, %v9626, %v9633
        %v9635 = vrot.slane %v9630, 4
        %v9636 = vsel %vm8581, %v9635, %v9618
        %v9637 = vrot.slane %v9618, 4
        %v9638 = vsel %vm8581, %v9630, %v9637
        %v9639 = vsel %vm8581, %v8799, %v8780
        %v9641 = vunpack.c.l.s4 1983009808
        %v9642 = vunpack.c.0.s8 %v9641
        %v9643 = vperm.slane %v9639, %v9642
        %v9644 = vrot.slane %v8800, 4
        %v9645 = vsel %vm8581, %v9644, %v8798
        %v9647 = vunpack.c.l.s4 1983009808
        %v9648 = vunpack.c.0.s8 %v9647
        %v9649 = vperm.slane %v9645, %v9648
        %v9650 = vsel %vm8581, %v8803, %v8792
        %v9652 = vunpack.c.l.s4 1983009808
        %v9653 = vunpack.c.0.s8 %v9652
        %v9654 = vperm.slane %v9650, %v9653
        %v9655 = vrot.slane %v8804, 4
        %v9656 = vsel %vm8581, %v9655, %v8802
        %v9658 = vunpack.c.l.s4 1983009808
        %v9659 = vunpack.c.0.s8 %v9658
        %v9660 = vperm.slane %v9656, %v9659
        %v9661 = vrot.slane %v9649, 4
        %v9662 = vsel %vm8581, %v9661, %v9643
        %v9663 = vrot.slane %v9643, 4
        %v9664 = vsel %vm8581, %v9649, %v9663
        %v9666 = vunpack.c.l.s4 1934713408
        %v9667 = vunpack.c.0.s8 %v9666
        %v9668 = vperm.slane %v9662, %v9667
        %v9670 = vunpack.c.l.s4 1934713408
        %v9671 = vunpack.c.0.s8 %v9670
        %v9672 = vperm.slane %v9664, %v9671
        %v9673 = vrot.slane %v9660, 4
        %v9674 = vsel %vm8581, %v9673, %v9654
        %v9675 = vrot.slane %v9654, 4
        %v9676 = vsel %vm8581, %v9660, %v9675
        %v9678 = vunpack.c.l.s4 1934713408
        %v9679 = vunpack.c.0.s8 %v9678
        %v9680 = vperm.slane %v9674, %v9679
        %v9682 = vunpack.c.l.s4 1934713408
        %v9683 = vunpack.c.0.s8 %v9682
        %v9684 = vperm.slane %v9676, %v9683
        %v9685 = vrot.slane %v9680, 4
        %v9686 = vsel %vm8581, %v9685, %v9668
        %v9687 = vrot.slane %v9668, 4
        %v9688 = vsel %vm8581, %v9680, %v9687
        %v9689 = vrot.slane %v9684, 4
        %v9690 = vsel %vm8581, %v9689, %v9672
        %v9691 = vrot.slane %v9672, 4
        %v9692 = vsel %vm8581, %v9684, %v9691
        %v9693 = vsel %vm8581, %v8855, %v8836
        %v9695 = vunpack.c.l.s4 1983009808
        %v9696 = vunpack.c.0.s8 %v9695
        %v9697 = vperm.slane %v9693, %v9696
        %v9698 = vrot.slane %v8856, 4
        %v9699 = vsel %vm8581, %v9698, %v8854
        %v9701 = vunpack.c.l.s4 1983009808
        %v9702 = vunpack.c.0.s8 %v9701
        %v9703 = vperm.slane %v9699, %v9702
        %v9704 = vsel %vm8581, %v8859, %v8848
        %v9706 = vunpack.c.l.s4 1983009808
        %v9707 = vunpack.c.0.s8 %v9706
        %v9708 = vperm.slane %v9704, %v9707
        %v9709 = vrot.slane %v8860, 4
        %v9710 = vsel %vm8581, %v9709, %v8858
        %v9712 = vunpack.c.l.s4 1983009808
        %v9713 = vunpack.c.0.s8 %v9712
        %v9714 = vperm.slane %v9710, %v9713
        %v9715 = vrot.slane %v9703, 4
        %v9716 = vsel %vm8581, %v9715, %v9697
        %v9717 = vrot.slane %v9697, 4
        %v9718 = vsel %vm8581, %v9703, %v9717
        %v9720 = vunpack.c.l.s4 1934713408
        %v9721 = vunpack.c.0.s8 %v9720
        %v9722 = vperm.slane %v9716, %v9721
        %v9724 = vunpack.c.l.s4 1934713408
        %v9725 = vunpack.c.0.s8 %v9724
        %v9726 = vperm.slane %v9718, %v9725
        %v9727 = vrot.slane %v9714, 4
        %v9728 = vsel %vm8581, %v9727, %v9708
        %v9729 = vrot.slane %v9708, 4
        %v9730 = vsel %vm8581, %v9714, %v9729
        %v9732 = vunpack.c.l.s4 1934713408
        %v9733 = vunpack.c.0.s8 %v9732
        %v9734 = vperm.slane %v9728, %v9733
        %v9736 = vunpack.c.l.s4 1934713408
        %v9737 = vunpack.c.0.s8 %v9736
        %v9738 = vperm.slane %v9730, %v9737
        %v9739 = vrot.slane %v9734, 4
        %v9740 = vsel %vm8581, %v9739, %v9722
        %v9741 = vrot.slane %v9722, 4
        %v9742 = vsel %vm8581, %v9734, %v9741
        %v9743 = vrot.slane %v9738, 4
        %v9744 = vsel %vm8581, %v9743, %v9726
        %v9745 = vrot.slane %v9726, 4
        %v9746 = vsel %vm8581, %v9738, %v9745
        %v9747 = vsel %vm8581, %v8911, %v8892
        %v9749 = vunpack.c.l.s4 1983009808
        %v9750 = vunpack.c.0.s8 %v9749
        %v9751 = vperm.slane %v9747, %v9750
        %v9752 = vrot.slane %v8912, 4
        %v9753 = vsel %vm8581, %v9752, %v8910
        %v9755 = vunpack.c.l.s4 1983009808
        %v9756 = vunpack.c.0.s8 %v9755
        %v9757 = vperm.slane %v9753, %v9756
        %v9758 = vsel %vm8581, %v8915, %v8904
        %v9760 = vunpack.c.l.s4 1983009808
        %v9761 = vunpack.c.0.s8 %v9760
        %v9762 = vperm.slane %v9758, %v9761
        %v9763 = vrot.slane %v8916, 4
        %v9764 = vsel %vm8581, %v9763, %v8914
        %v9766 = vunpack.c.l.s4 1983009808
        %v9767 = vunpack.c.0.s8 %v9766
        %v9768 = vperm.slane %v9764, %v9767
        %v9769 = vrot.slane %v9757, 4
        %v9770 = vsel %vm8581, %v9769, %v9751
        %v9771 = vrot.slane %v9751, 4
        %v9772 = vsel %vm8581, %v9757, %v9771
        %v9774 = vunpack.c.l.s4 1934713408
        %v9775 = vunpack.c.0.s8 %v9774
        %v9776 = vperm.slane %v9770, %v9775
        %v9778 = vunpack.c.l.s4 1934713408
        %v9779 = vunpack.c.0.s8 %v9778
        %v9780 = vperm.slane %v9772, %v9779
        %v9781 = vrot.slane %v9768, 4
        %v9782 = vsel %vm8581, %v9781, %v9762
        %v9783 = vrot.slane %v9762, 4
        %v9784 = vsel %vm8581, %v9768, %v9783
        %v9786 = vunpack.c.l.s4 1934713408
        %v9787 = vunpack.c.0.s8 %v9786
        %v9788 = vperm.slane %v9782, %v9787
        %v9790 = vunpack.c.l.s4 1934713408
        %v9791 = vunpack.c.0.s8 %v9790
        %v9792 = vperm.slane %v9784, %v9791
        %v9793 = vrot.slane %v9788, 4
        %v9794 = vsel %vm8581, %v9793, %v9776
        %v9795 = vrot.slane %v9776, 4
        %v9796 = vsel %vm8581, %v9788, %v9795
        %v9797 = vrot.slane %v9792, 4
        %v9798 = vsel %vm8581, %v9797, %v9780
        %v9799 = vrot.slane %v9780, 4
        %v9800 = vsel %vm8581, %v9792, %v9799
        %v9801 = vsel %vm8581, %v8967, %v8948
        %v9803 = vunpack.c.l.s4 1983009808
        %v9804 = vunpack.c.0.s8 %v9803
        %v9805 = vperm.slane %v9801, %v9804
        %v9806 = vrot.slane %v8968, 4
        %v9807 = vsel %vm8581, %v9806, %v8966
        %v9809 = vunpack.c.l.s4 1983009808
        %v9810 = vunpack.c.0.s8 %v9809
        %v9811 = vperm.slane %v9807, %v9810
        %v9812 = vsel %vm8581, %v8971, %v8960
        %v9814 = vunpack.c.l.s4 1983009808
        %v9815 = vunpack.c.0.s8 %v9814
        %v9816 = vperm.slane %v9812, %v9815
        %v9817 = vrot.slane %v8972, 4
        %v9818 = vsel %vm8581, %v9817, %v8970
        %v9820 = vunpack.c.l.s4 1983009808
        %v9821 = vunpack.c.0.s8 %v9820
        %v9822 = vperm.slane %v9818, %v9821
        %v9823 = vrot.slane %v9811, 4
        %v9824 = vsel %vm8581, %v9823, %v9805
        %v9825 = vrot.slane %v9805, 4
        %v9826 = vsel %vm8581, %v9811, %v9825
        %v9828 = vunpack.c.l.s4 1934713408
        %v9829 = vunpack.c.0.s8 %v9828
        %v9830 = vperm.slane %v9824, %v9829
        %v9832 = vunpack.c.l.s4 1934713408
        %v9833 = vunpack.c.0.s8 %v9832
        %v9834 = vperm.slane %v9826, %v9833
        %v9835 = vrot.slane %v9822, 4
        %v9836 = vsel %vm8581, %v9835, %v9816
        %v9837 = vrot.slane %v9816, 4
        %v9838 = vsel %vm8581, %v9822, %v9837
        %v9840 = vunpack.c.l.s4 1934713408
        %v9841 = vunpack.c.0.s8 %v9840
        %v9842 = vperm.slane %v9836, %v9841
        %v9844 = vunpack.c.l.s4 1934713408
        %v9845 = vunpack.c.0.s8 %v9844
        %v9846 = vperm.slane %v9838, %v9845
        %v9847 = vrot.slane %v9842, 4
        %v9848 = vsel %vm8581, %v9847, %v9830
        %v9849 = vrot.slane %v9830, 4
        %v9850 = vsel %vm8581, %v9842, %v9849
        %v9851 = vrot.slane %v9846, 4
        %v9852 = vsel %vm8581, %v9851, %v9834
        %v9853 = vrot.slane %v9834, 4
        %v9854 = vsel %vm8581, %v9846, %v9853
        %v9855 = vsel %vm8581, %v9023, %v9004
        %v9857 = vunpack.c.l.s4 1983009808
        %v9858 = vunpack.c.0.s8 %v9857
        %v9859 = vperm.slane %v9855, %v9858
        %v9860 = vrot.slane %v9024, 4
        %v9861 = vsel %vm8581, %v9860, %v9022
        %v9863 = vunpack.c.l.s4 1983009808
        %v9864 = vunpack.c.0.s8 %v9863
        %v9865 = vperm.slane %v9861, %v9864
        %v9866 = vsel %vm8581, %v9027, %v9016
        %v9868 = vunpack.c.l.s4 1983009808
        %v9869 = vunpack.c.0.s8 %v9868
        %v9870 = vperm.slane %v9866, %v9869
        %v9871 = vrot.slane %v9028, 4
        %v9872 = vsel %vm8581, %v9871, %v9026
        %v9874 = vunpack.c.l.s4 1983009808
        %v9875 = vunpack.c.0.s8 %v9874
        %v9876 = vperm.slane %v9872, %v9875
        %v9877 = vrot.slane %v9865, 4
        %v9878 = vsel %vm8581, %v9877, %v9859
        %v9879 = vrot.slane %v9859, 4
        %v9880 = vsel %vm8581, %v9865, %v9879
        %v9882 = vunpack.c.l.s4 1934713408
        %v9883 = vunpack.c.0.s8 %v9882
        %v9884 = vperm.slane %v9878, %v9883
        %v9886 = vunpack.c.l.s4 1934713408
        %v9887 = vunpack.c.0.s8 %v9886
        %v9888 = vperm.slane %v9880, %v9887
        %v9889 = vrot.slane %v9876, 4
        %v9890 = vsel %vm8581, %v9889, %v9870
        %v9891 = vrot.slane %v9870, 4
        %v9892 = vsel %vm8581, %v9876, %v9891
        %v9894 = vunpack.c.l.s4 1934713408
        %v9895 = vunpack.c.0.s8 %v9894
        %v9896 = vperm.slane %v9890, %v9895
        %v9898 = vunpack.c.l.s4 1934713408
        %v9899 = vunpack.c.0.s8 %v9898
        %v9900 = vperm.slane %v9892, %v9899
        %v9901 = vrot.slane %v9896, 4
        %v9902 = vsel %vm8581, %v9901, %v9884
        %v9903 = vrot.slane %v9884, 4
        %v9904 = vsel %vm8581, %v9896, %v9903
        %v9905 = vrot.slane %v9900, 4
        %v9906 = vsel %vm8581, %v9905, %v9888
        %v9907 = vrot.slane %v9888, 4
        %v9908 = vsel %vm8581, %v9900, %v9907
        %v9909 = vsel %vm8581, %v9079, %v9060
        %v9911 = vunpack.c.l.s4 1983009808
        %v9912 = vunpack.c.0.s8 %v9911
        %v9913 = vperm.slane %v9909, %v9912
        %v9914 = vrot.slane %v9080, 4
        %v9915 = vsel %vm8581, %v9914, %v9078
        %v9917 = vunpack.c.l.s4 1983009808
        %v9918 = vunpack.c.0.s8 %v9917
        %v9919 = vperm.slane %v9915, %v9918
        %v9920 = vsel %vm8581, %v9083, %v9072
        %v9922 = vunpack.c.l.s4 1983009808
        %v9923 = vunpack.c.0.s8 %v9922
        %v9924 = vperm.slane %v9920, %v9923
        %v9925 = vrot.slane %v9084, 4
        %v9926 = vsel %vm8581, %v9925, %v9082
        %v9928 = vunpack.c.l.s4 1983009808
        %v9929 = vunpack.c.0.s8 %v9928
        %v9930 = vperm.slane %v9926, %v9929
        %v9931 = vrot.slane %v9919, 4
        %v9932 = vsel %vm8581, %v9931, %v9913
        %v9933 = vrot.slane %v9913, 4
        %v9934 = vsel %vm8581, %v9919, %v9933
        %v9936 = vunpack.c.l.s4 1934713408
        %v9937 = vunpack.c.0.s8 %v9936
        %v9938 = vperm.slane %v9932, %v9937
        %v9940 = vunpack.c.l.s4 1934713408
        %v9941 = vunpack.c.0.s8 %v9940
        %v9942 = vperm.slane %v9934, %v9941
        %v9943 = vrot.slane %v9930, 4
        %v9944 = vsel %vm8581, %v9943, %v9924
        %v9945 = vrot.slane %v9924, 4
        %v9946 = vsel %vm8581, %v9930, %v9945
        %v9948 = vunpack.c.l.s4 1934713408
        %v9949 = vunpack.c.0.s8 %v9948
        %v9950 = vperm.slane %v9944, %v9949
        %v9952 = vunpack.c.l.s4 1934713408
        %v9953 = vunpack.c.0.s8 %v9952
        %v9954 = vperm.slane %v9946, %v9953
        %v9955 = vrot.slane %v9950, 4
        %v9956 = vsel %vm8581, %v9955, %v9938
        %v9957 = vrot.slane %v9938, 4
        %v9958 = vsel %vm8581, %v9950, %v9957
        %v9959 = vrot.slane %v9954, 4
        %v9960 = vsel %vm8581, %v9959, %v9942
        %v9961 = vrot.slane %v9942, 4
        %v9962 = vsel %vm8581, %v9954, %v9961
        %v9963 = vsel %vm8581, %v9135, %v9116
        %v9965 = vunpack.c.l.s4 1983009808
        %v9966 = vunpack.c.0.s8 %v9965
        %v9967 = vperm.slane %v9963, %v9966
        %v9968 = vrot.slane %v9136, 4
        %v9969 = vsel %vm8581, %v9968, %v9134
        %v9971 = vunpack.c.l.s4 1983009808
        %v9972 = vunpack.c.0.s8 %v9971
        %v9973 = vperm.slane %v9969, %v9972
        %v9974 = vsel %vm8581, %v9139, %v9128
        %v9976 = vunpack.c.l.s4 1983009808
        %v9977 = vunpack.c.0.s8 %v9976
        %v9978 = vperm.slane %v9974, %v9977
        %v9979 = vrot.slane %v9140, 4
        %v9980 = vsel %vm8581, %v9979, %v9138
        %v9982 = vunpack.c.l.s4 1983009808
        %v9983 = vunpack.c.0.s8 %v9982
        %v9984 = vperm.slane %v9980, %v9983
        %v9985 = vrot.slane %v9973, 4
        %v9986 = vsel %vm8581, %v9985, %v9967
        %v9987 = vrot.slane %v9967, 4
        %v9988 = vsel %vm8581, %v9973, %v9987
        %v9990 = vunpack.c.l.s4 1934713408
        %v9991 = vunpack.c.0.s8 %v9990
        %v9992 = vperm.slane %v9986, %v9991
        %v9994 = vunpack.c.l.s4 1934713408
        %v9995 = vunpack.c.0.s8 %v9994
        %v9996 = vperm.slane %v9988, %v9995
        %v9997 = vrot.slane %v9984, 4
        %v9998 = vsel %vm8581, %v9997, %v9978
        %v9999 = vrot.slane %v9978, 4
        %v10000 = vsel %vm8581, %v9984, %v9999
        %v10002 = vunpack.c.l.s4 1934713408
        %v10003 = vunpack.c.0.s8 %v10002
        %v10004 = vperm.slane %v9998, %v10003
        %v10006 = vunpack.c.l.s4 1934713408
        %v10007 = vunpack.c.0.s8 %v10006
        %v10008 = vperm.slane %v10000, %v10007
        %v10009 = vrot.slane %v10004, 4
        %v10010 = vsel %vm8581, %v10009, %v9992
        %v10011 = vrot.slane %v9992, 4
        %v10012 = vsel %vm8581, %v10004, %v10011
        %v10013 = vrot.slane %v10008, 4
        %v10014 = vsel %vm8581, %v10013, %v9996
        %v10015 = vrot.slane %v9996, 4
        %v10016 = vsel %vm8581, %v10008, %v10015
        %v10017 = vsel %vm8581, %v9191, %v9172
        %v10019 = vunpack.c.l.s4 1983009808
        %v10020 = vunpack.c.0.s8 %v10019
        %v10021 = vperm.slane %v10017, %v10020
        %v10022 = vrot.slane %v9192, 4
        %v10023 = vsel %vm8581, %v10022, %v9190
        %v10025 = vunpack.c.l.s4 1983009808
        %v10026 = vunpack.c.0.s8 %v10025
        %v10027 = vperm.slane %v10023, %v10026
        %v10028 = vsel %vm8581, %v9195, %v9184
        %v10030 = vunpack.c.l.s4 1983009808
        %v10031 = vunpack.c.0.s8 %v10030
        %v10032 = vperm.slane %v10028, %v10031
        %v10033 = vrot.slane %v9196, 4
        %v10034 = vsel %vm8581, %v10033, %v9194
        %v10036 = vunpack.c.l.s4 1983009808
        %v10037 = vunpack.c.0.s8 %v10036
        %v10038 = vperm.slane %v10034, %v10037
        %v10039 = vrot.slane %v10027, 4
        %v10040 = vsel %vm8581, %v10039, %v10021
        %v10041 = vrot.slane %v10021, 4
        %v10042 = vsel %vm8581, %v10027, %v10041
        %v10044 = vunpack.c.l.s4 1934713408
        %v10045 = vunpack.c.0.s8 %v10044
        %v10046 = vperm.slane %v10040, %v10045
        %v10048 = vunpack.c.l.s4 1934713408
        %v10049 = vunpack.c.0.s8 %v10048
        %v10050 = vperm.slane %v10042, %v10049
        %v10051 = vrot.slane %v10038, 4
        %v10052 = vsel %vm8581, %v10051, %v10032
        %v10053 = vrot.slane %v10032, 4
        %v10054 = vsel %vm8581, %v10038, %v10053
        %v10056 = vunpack.c.l.s4 1934713408
        %v10057 = vunpack.c.0.s8 %v10056
        %v10058 = vperm.slane %v10052, %v10057
        %v10060 = vunpack.c.l.s4 1934713408
        %v10061 = vunpack.c.0.s8 %v10060
        %v10062 = vperm.slane %v10054, %v10061
        %v10063 = vrot.slane %v10058, 4
        %v10064 = vsel %vm8581, %v10063, %v10046
        %v10065 = vrot.slane %v10046, 4
        %v10066 = vsel %vm8581, %v10058, %v10065
        %v10067 = vrot.slane %v10062, 4
        %v10068 = vsel %vm8581, %v10067, %v10050
        %v10069 = vrot.slane %v10050, 4
        %v10070 = vsel %vm8581, %v10062, %v10069
        %v10071 = vsel %vm8581, %v9247, %v9228
        %v10073 = vunpack.c.l.s4 1983009808
        %v10074 = vunpack.c.0.s8 %v10073
        %v10075 = vperm.slane %v10071, %v10074
        %v10076 = vrot.slane %v9248, 4
        %v10077 = vsel %vm8581, %v10076, %v9246
        %v10079 = vunpack.c.l.s4 1983009808
        %v10080 = vunpack.c.0.s8 %v10079
        %v10081 = vperm.slane %v10077, %v10080
        %v10082 = vsel %vm8581, %v9251, %v9240
        %v10084 = vunpack.c.l.s4 1983009808
        %v10085 = vunpack.c.0.s8 %v10084
        %v10086 = vperm.slane %v10082, %v10085
        %v10087 = vrot.slane %v9252, 4
        %v10088 = vsel %vm8581, %v10087, %v9250
        %v10090 = vunpack.c.l.s4 1983009808
        %v10091 = vunpack.c.0.s8 %v10090
        %v10092 = vperm.slane %v10088, %v10091
        %v10093 = vrot.slane %v10081, 4
        %v10094 = vsel %vm8581, %v10093, %v10075
        %v10095 = vrot.slane %v10075, 4
        %v10096 = vsel %vm8581, %v10081, %v10095
        %v10098 = vunpack.c.l.s4 1934713408
        %v10099 = vunpack.c.0.s8 %v10098
        %v10100 = vperm.slane %v10094, %v10099
        %v10102 = vunpack.c.l.s4 1934713408
        %v10103 = vunpack.c.0.s8 %v10102
        %v10104 = vperm.slane %v10096, %v10103
        %v10105 = vrot.slane %v10092, 4
        %v10106 = vsel %vm8581, %v10105, %v10086
        %v10107 = vrot.slane %v10086, 4
        %v10108 = vsel %vm8581, %v10092, %v10107
        %v10110 = vunpack.c.l.s4 1934713408
        %v10111 = vunpack.c.0.s8 %v10110
        %v10112 = vperm.slane %v10106, %v10111
        %v10114 = vunpack.c.l.s4 1934713408
        %v10115 = vunpack.c.0.s8 %v10114
        %v10116 = vperm.slane %v10108, %v10115
        %v10117 = vrot.slane %v10112, 4
        %v10118 = vsel %vm8581, %v10117, %v10100
        %v10119 = vrot.slane %v10100, 4
        %v10120 = vsel %vm8581, %v10112, %v10119
        %v10121 = vrot.slane %v10116, 4
        %v10122 = vsel %vm8581, %v10121, %v10104
        %v10123 = vrot.slane %v10104, 4
        %v10124 = vsel %vm8581, %v10116, %v10123
        %v10125 = vsel %vm8581, %v9303, %v9284
        %v10127 = vunpack.c.l.s4 1983009808
        %v10128 = vunpack.c.0.s8 %v10127
        %v10129 = vperm.slane %v10125, %v10128
        %v10130 = vrot.slane %v9304, 4
        %v10131 = vsel %vm8581, %v10130, %v9302
        %v10133 = vunpack.c.l.s4 1983009808
        %v10134 = vunpack.c.0.s8 %v10133
        %v10135 = vperm.slane %v10131, %v10134
        %v10136 = vsel %vm8581, %v9307, %v9296
        %v10138 = vunpack.c.l.s4 1983009808
        %v10139 = vunpack.c.0.s8 %v10138
        %v10140 = vperm.slane %v10136, %v10139
        %v10141 = vrot.slane %v9308, 4
        %v10142 = vsel %vm8581, %v10141, %v9306
        %v10144 = vunpack.c.l.s4 1983009808
        %v10145 = vunpack.c.0.s8 %v10144
        %v10146 = vperm.slane %v10142, %v10145
        %v10147 = vrot.slane %v10135, 4
        %v10148 = vsel %vm8581, %v10147, %v10129
        %v10149 = vrot.slane %v10129, 4
        %v10150 = vsel %vm8581, %v10135, %v10149
        %v10152 = vunpack.c.l.s4 1934713408
        %v10153 = vunpack.c.0.s8 %v10152
        %v10154 = vperm.slane %v10148, %v10153
        %v10156 = vunpack.c.l.s4 1934713408
        %v10157 = vunpack.c.0.s8 %v10156
        %v10158 = vperm.slane %v10150, %v10157
        %v10159 = vrot.slane %v10146, 4
        %v10160 = vsel %vm8581, %v10159, %v10140
        %v10161 = vrot.slane %v10140, 4
        %v10162 = vsel %vm8581, %v10146, %v10161
        %v10164 = vunpack.c.l.s4 1934713408
        %v10165 = vunpack.c.0.s8 %v10164
        %v10166 = vperm.slane %v10160, %v10165
        %v10168 = vunpack.c.l.s4 1934713408
        %v10169 = vunpack.c.0.s8 %v10168
        %v10170 = vperm.slane %v10162, %v10169
        %v10171 = vrot.slane %v10166, 4
        %v10172 = vsel %vm8581, %v10171, %v10154
        %v10173 = vrot.slane %v10154, 4
        %v10174 = vsel %vm8581, %v10166, %v10173
        %v10175 = vrot.slane %v10170, 4
        %v10176 = vsel %vm8581, %v10175, %v10158
        %v10177 = vrot.slane %v10158, 4
        %v10178 = vsel %vm8581, %v10170, %v10177
        %v10179 = vsel %vm8581, %v9359, %v9340
        %v10181 = vunpack.c.l.s4 1983009808
        %v10182 = vunpack.c.0.s8 %v10181
        %v10183 = vperm.slane %v10179, %v10182
        %v10184 = vrot.slane %v9360, 4
        %v10185 = vsel %vm8581, %v10184, %v9358
        %v10187 = vunpack.c.l.s4 1983009808
        %v10188 = vunpack.c.0.s8 %v10187
        %v10189 = vperm.slane %v10185, %v10188
        %v10190 = vsel %vm8581, %v9363, %v9352
        %v10192 = vunpack.c.l.s4 1983009808
        %v10193 = vunpack.c.0.s8 %v10192
        %v10194 = vperm.slane %v10190, %v10193
        %v10195 = vrot.slane %v9364, 4
        %v10196 = vsel %vm8581, %v10195, %v9362
        %v10198 = vunpack.c.l.s4 1983009808
        %v10199 = vunpack.c.0.s8 %v10198
        %v10200 = vperm.slane %v10196, %v10199
        %v10201 = vrot.slane %v10189, 4
        %v10202 = vsel %vm8581, %v10201, %v10183
        %v10203 = vrot.slane %v10183, 4
        %v10204 = vsel %vm8581, %v10189, %v10203
        %v10206 = vunpack.c.l.s4 1934713408
        %v10207 = vunpack.c.0.s8 %v10206
        %v10208 = vperm.slane %v10202, %v10207
        %v10210 = vunpack.c.l.s4 1934713408
        %v10211 = vunpack.c.0.s8 %v10210
        %v10212 = vperm.slane %v10204, %v10211
        %v10213 = vrot.slane %v10200, 4
        %v10214 = vsel %vm8581, %v10213, %v10194
        %v10215 = vrot.slane %v10194, 4
        %v10216 = vsel %vm8581, %v10200, %v10215
        %v10218 = vunpack.c.l.s4 1934713408
        %v10219 = vunpack.c.0.s8 %v10218
        %v10220 = vperm.slane %v10214, %v10219
        %v10222 = vunpack.c.l.s4 1934713408
        %v10223 = vunpack.c.0.s8 %v10222
        %v10224 = vperm.slane %v10216, %v10223
        %v10225 = vrot.slane %v10220, 4
        %v10226 = vsel %vm8581, %v10225, %v10208
        %v10227 = vrot.slane %v10208, 4
        %v10228 = vsel %vm8581, %v10220, %v10227
        %v10229 = vrot.slane %v10224, 4
        %v10230 = vsel %vm8581, %v10229, %v10212
        %v10231 = vrot.slane %v10212, 4
        %v10232 = vsel %vm8581, %v10224, %v10231
        %v10233 = vsel %vm8581, %v9415, %v9396
        %v10235 = vunpack.c.l.s4 1983009808
        %v10236 = vunpack.c.0.s8 %v10235
        %v10237 = vperm.slane %v10233, %v10236
        %v10238 = vrot.slane %v9416, 4
        %v10239 = vsel %vm8581, %v10238, %v9414
        %v10241 = vunpack.c.l.s4 1983009808
        %v10242 = vunpack.c.0.s8 %v10241
        %v10243 = vperm.slane %v10239, %v10242
        %v10244 = vsel %vm8581, %v9419, %v9408
        %v10246 = vunpack.c.l.s4 1983009808
        %v10247 = vunpack.c.0.s8 %v10246
        %v10248 = vperm.slane %v10244, %v10247
        %v10249 = vrot.slane %v9420, 4
        %v10250 = vsel %vm8581, %v10249, %v9418
        %v10252 = vunpack.c.l.s4 1983009808
        %v10253 = vunpack.c.0.s8 %v10252
        %v10254 = vperm.slane %v10250, %v10253
        %v10255 = vrot.slane %v10243, 4
        %v10256 = vsel %vm8581, %v10255, %v10237
        %v10257 = vrot.slane %v10237, 4
        %v10258 = vsel %vm8581, %v10243, %v10257
        %v10260 = vunpack.c.l.s4 1934713408
        %v10261 = vunpack.c.0.s8 %v10260
        %v10262 = vperm.slane %v10256, %v10261
        %v10264 = vunpack.c.l.s4 1934713408
        %v10265 = vunpack.c.0.s8 %v10264
        %v10266 = vperm.slane %v10258, %v10265
        %v10267 = vrot.slane %v10254, 4
        %v10268 = vsel %vm8581, %v10267, %v10248
        %v10269 = vrot.slane %v10248, 4
        %v10270 = vsel %vm8581, %v10254, %v10269
        %v10272 = vunpack.c.l.s4 1934713408
        %v10273 = vunpack.c.0.s8 %v10272
        %v10274 = vperm.slane %v10268, %v10273
        %v10276 = vunpack.c.l.s4 1934713408
        %v10277 = vunpack.c.0.s8 %v10276
        %v10278 = vperm.slane %v10270, %v10277
        %v10279 = vrot.slane %v10274, 4
        %v10280 = vsel %vm8581, %v10279, %v10262
        %v10281 = vrot.slane %v10262, 4
        %v10282 = vsel %vm8581, %v10274, %v10281
        %v10283 = vrot.slane %v10278, 4
        %v10284 = vsel %vm8581, %v10283, %v10266
        %v10285 = vrot.slane %v10266, 4
        %v10286 = vsel %vm8581, %v10278, %v10285
        %v10287 = vsel %vm8581, %v9471, %v9452
        %v10289 = vunpack.c.l.s4 1983009808
        %v10290 = vunpack.c.0.s8 %v10289
        %v10291 = vperm.slane %v10287, %v10290
        %v10292 = vrot.slane %v9472, 4
        %v10293 = vsel %vm8581, %v10292, %v9470
        %v10295 = vunpack.c.l.s4 1983009808
        %v10296 = vunpack.c.0.s8 %v10295
        %v10297 = vperm.slane %v10293, %v10296
        %v10298 = vsel %vm8581, %v9475, %v9464
        %v10300 = vunpack.c.l.s4 1983009808
        %v10301 = vunpack.c.0.s8 %v10300
        %v10302 = vperm.slane %v10298, %v10301
        %v10303 = vrot.slane %v9476, 4
        %v10304 = vsel %vm8581, %v10303, %v9474
        %v10306 = vunpack.c.l.s4 1983009808
        %v10307 = vunpack.c.0.s8 %v10306
        %v10308 = vperm.slane %v10304, %v10307
        %v10309 = vrot.slane %v10297, 4
        %v10310 = vsel %vm8581, %v10309, %v10291
        %v10311 = vrot.slane %v10291, 4
        %v10312 = vsel %vm8581, %v10297, %v10311
        %v10314 = vunpack.c.l.s4 1934713408
        %v10315 = vunpack.c.0.s8 %v10314
        %v10316 = vperm.slane %v10310, %v10315
        %v10318 = vunpack.c.l.s4 1934713408
        %v10319 = vunpack.c.0.s8 %v10318
        %v10320 = vperm.slane %v10312, %v10319
        %v10321 = vrot.slane %v10308, 4
        %v10322 = vsel %vm8581, %v10321, %v10302
        %v10323 = vrot.slane %v10302, 4
        %v10324 = vsel %vm8581, %v10308, %v10323
        %v10326 = vunpack.c.l.s4 1934713408
        %v10327 = vunpack.c.0.s8 %v10326
        %v10328 = vperm.slane %v10322, %v10327
        %v10330 = vunpack.c.l.s4 1934713408
        %v10331 = vunpack.c.0.s8 %v10330
        %v10332 = vperm.slane %v10324, %v10331
        %v10333 = vrot.slane %v10328, 4
        %v10334 = vsel %vm8581, %v10333, %v10316
        %v10335 = vrot.slane %v10316, 4
        %v10336 = vsel %vm8581, %v10328, %v10335
        %v10337 = vrot.slane %v10332, 4
        %v10338 = vsel %vm8581, %v10337, %v10320
        %v10339 = vrot.slane %v10320, 4
        %v10340 = vsel %vm8581, %v10332, %v10339
        %10357 = vrot.lane.b32.xlu0 %v9526, 32
        %v10358 = vpop.permute.xlu0 %10357
        %10359 = vrot.lane.b32.xlu0 %v9580, 32
        %v10360 = vpop.permute.xlu0 %10359
        %10361 = vrot.lane.b32.xlu0 %v9634, 32
        %v10362 = vpop.permute.xlu0 %10361
        %10363 = vrot.lane.b32.xlu0 %v9688, 32
        %v10364 = vpop.permute.xlu0 %10363
        %10365 = vrot.lane.b32.xlu0 %v9742, 32
        %v10366 = vpop.permute.xlu0 %10365
        %10367 = vrot.lane.b32.xlu0 %v9796, 32
        %v10368 = vpop.permute.xlu0 %10367
        %10369 = vrot.lane.b32.xlu0 %v9850, 32
        %v10370 = vpop.permute.xlu0 %10369
        %10371 = vrot.lane.b32.xlu0 %v9904, 32
        %v10372 = vpop.permute.xlu0 %10371
        %10373 = vrot.lane.b32.xlu0 %v9958, 32
        %v10374 = vpop.permute.xlu0 %10373
        %10375 = vrot.lane.b32.xlu0 %v10012, 32
        %v10376 = vpop.permute.xlu0 %10375
        %10377 = vrot.lane.b32.xlu0 %v10066, 32
        %v10378 = vpop.permute.xlu0 %10377
        %10379 = vrot.lane.b32.xlu0 %v10120, 32
        %v10380 = vpop.permute.xlu0 %10379
        %10381 = vrot.lane.b32.xlu0 %v10174, 32
        %v10382 = vpop.permute.xlu0 %10381
        %10383 = vrot.lane.b32.xlu0 %v10228, 32
        %v10384 = vpop.permute.xlu0 %10383
        %10385 = vrot.lane.b32.xlu0 %v10282, 32
        %v10386 = vpop.permute.xlu0 %10385
        %10387 = vrot.lane.b32.xlu0 %v10336, 32
        %v10388 = vpop.permute.xlu0 %10387
        %10421 = vrot.lane.b32.xlu0 %v9528, 64
        %v10422 = vpop.permute.xlu0 %10421
        %10423 = vrot.lane.b32.xlu0 %v9582, 64
        %v10424 = vpop.permute.xlu0 %10423
        %10425 = vrot.lane.b32.xlu0 %v9636, 64
        %v10426 = vpop.permute.xlu0 %10425
        %10427 = vrot.lane.b32.xlu0 %v9690, 64
        %v10428 = vpop.permute.xlu0 %10427
        %10429 = vrot.lane.b32.xlu0 %v9744, 64
        %v10430 = vpop.permute.xlu0 %10429
        %10431 = vrot.lane.b32.xlu0 %v9798, 64
        %v10432 = vpop.permute.xlu0 %10431
        %10433 = vrot.lane.b32.xlu0 %v9852, 64
        %v10434 = vpop.permute.xlu0 %10433
        %10435 = vrot.lane.b32.xlu0 %v9906, 64
        %v10436 = vpop.permute.xlu0 %10435
        %10437 = vrot.lane.b32.xlu0 %v9960, 64
        %v10438 = vpop.permute.xlu0 %10437
        %10439 = vrot.lane.b32.xlu0 %v10014, 64
        %v10440 = vpop.permute.xlu0 %10439
        %10441 = vrot.lane.b32.xlu0 %v10068, 64
        %v10442 = vpop.permute.xlu0 %10441
        %10443 = vrot.lane.b32.xlu0 %v10122, 64
        %v10444 = vpop.permute.xlu0 %10443
        %10445 = vrot.lane.b32.xlu0 %v10176, 64
        %v10446 = vpop.permute.xlu0 %10445
        %10447 = vrot.lane.b32.xlu0 %v10230, 64
        %v10448 = vpop.permute.xlu0 %10447
        %10449 = vrot.lane.b32.xlu0 %v10284, 64
        %v10450 = vpop.permute.xlu0 %10449
        %10451 = vrot.lane.b32.xlu0 %v10338, 64
        %v10452 = vpop.permute.xlu0 %10451
        %10485 = vrot.lane.b32.xlu0 %v9530, 96
        %v10486 = vpop.permute.xlu0 %10485
        %10487 = vrot.lane.b32.xlu0 %v9584, 96
        %v10488 = vpop.permute.xlu0 %10487
        %10489 = vrot.lane.b32.xlu0 %v9638, 96
        %v10490 = vpop.permute.xlu0 %10489
        %10491 = vrot.lane.b32.xlu0 %v9692, 96
        %v10492 = vpop.permute.xlu0 %10491
        %10493 = vrot.lane.b32.xlu0 %v9746, 96
        %v10494 = vpop.permute.xlu0 %10493
        %10495 = vrot.lane.b32.xlu0 %v9800, 96
        %v10496 = vpop.permute.xlu0 %10495
        %10497 = vrot.lane.b32.xlu0 %v9854, 96
        %v10498 = vpop.permute.xlu0 %10497
        %10499 = vrot.lane.b32.xlu0 %v9908, 96
        %v10500 = vpop.permute.xlu0 %10499
        %10501 = vrot.lane.b32.xlu0 %v9962, 96
        %v10502 = vpop.permute.xlu0 %10501
        %10503 = vrot.lane.b32.xlu0 %v10016, 96
        %v10504 = vpop.permute.xlu0 %10503
        %10505 = vrot.lane.b32.xlu0 %v10070, 96
        %v10506 = vpop.permute.xlu0 %10505
        %10507 = vrot.lane.b32.xlu0 %v10124, 96
        %v10508 = vpop.permute.xlu0 %10507
        %10509 = vrot.lane.b32.xlu0 %v10178, 96
        %v10510 = vpop.permute.xlu0 %10509
        %10511 = vrot.lane.b32.xlu0 %v10232, 96
        %v10512 = vpop.permute.xlu0 %10511
        %10513 = vrot.lane.b32.xlu0 %v10286, 96
        %v10514 = vpop.permute.xlu0 %10513
        %10515 = vrot.lane.b32.xlu0 %v10340, 96
        %v10516 = vpop.permute.xlu0 %10515
        %v10533 = vsel %vm6891, %v9524, %v10358
        %v10534 = vsel %vm6891, %v9578, %v10360
        %v10535 = vsel %vm6891, %v9632, %v10362
        %v10536 = vsel %vm6891, %v9686, %v10364
        %v10537 = vsel %vm6891, %v9740, %v10366
        %v10538 = vsel %vm6891, %v9794, %v10368
        %v10539 = vsel %vm6891, %v9848, %v10370
        %v10540 = vsel %vm6891, %v9902, %v10372
        %v10541 = vsel %vm6891, %v9956, %v10374
        %v10542 = vsel %vm6891, %v10010, %v10376
        %v10543 = vsel %vm6891, %v10064, %v10378
        %v10544 = vsel %vm6891, %v10118, %v10380
        %v10545 = vsel %vm6891, %v10172, %v10382
        %v10546 = vsel %vm6891, %v10226, %v10384
        %v10547 = vsel %vm6891, %v10280, %v10386
        %v10548 = vsel %vm6891, %v10334, %v10388
        %vm10549 = vcmask 523264
        %v10550 = vsel %vm10549, %v10533, %v10422
        %v10551 = vsel %vm10549, %v10534, %v10424
        %v10552 = vsel %vm10549, %v10535, %v10426
        %v10553 = vsel %vm10549, %v10536, %v10428
        %v10554 = vsel %vm10549, %v10537, %v10430
        %v10555 = vsel %vm10549, %v10538, %v10432
        %v10556 = vsel %vm10549, %v10539, %v10434
        %v10557 = vsel %vm10549, %v10540, %v10436
        %v10558 = vsel %vm10549, %v10541, %v10438
        %v10559 = vsel %vm10549, %v10542, %v10440
        %v10560 = vsel %vm10549, %v10543, %v10442
        %v10561 = vsel %vm10549, %v10544, %v10444
        %v10562 = vsel %vm10549, %v10545, %v10446
        %v10563 = vsel %vm10549, %v10546, %v10448
        %v10564 = vsel %vm10549, %v10547, %v10450
        %v10565 = vsel %vm10549, %v10548, %v10452
        %vm10566 = vcmask 785408
        %v10567 = vsel %vm10566, %v10550, %v10486
        %v10568 = vsel %vm10566, %v10551, %v10488
        %v10569 = vsel %vm10566, %v10552, %v10490
        %v10570 = vsel %vm10566, %v10553, %v10492
        %v10571 = vsel %vm10566, %v10554, %v10494
        %v10572 = vsel %vm10566, %v10555, %v10496
        %v10573 = vsel %vm10566, %v10556, %v10498
        %v10574 = vsel %vm10566, %v10557, %v10500
        %v10575 = vsel %vm10566, %v10558, %v10502
        %v10576 = vsel %vm10566, %v10559, %v10504
        %v10577 = vsel %vm10566, %v10560, %v10506
        %v10578 = vsel %vm10566, %v10561, %v10508
        %v10579 = vsel %vm10566, %v10562, %v10510
        %v10580 = vsel %vm10566, %v10563, %v10512
        %v10581 = vsel %vm10566, %v10564, %v10514
        %v10582 = vsel %vm10566, %v10565, %v10516
        %v10583 = vpack.c.bf16 %v10568, %v10567
        %v10584 = vpack.c.bf16 %v10570, %v10569
        %v10585 = vpack.c.bf16 %v10572, %v10571
        %v10586 = vpack.c.bf16 %v10574, %v10573
        %v10587 = vpack.c.bf16 %v10576, %v10575
        %v10588 = vpack.c.bf16 %v10578, %v10577
        %v10589 = vpack.c.bf16 %v10580, %v10579
        %v10590 = vpack.c.bf16 %v10582, %v10581
        %s10591 = smul.u32 %s39, 16
        %s10592 = smul.addr %s10591, 4
        %s10593 = scalar_lea.vmem [#allocation8], %s10592
        %v10594 = vld [vmem:[%s10593] sm:$0xf]
        %v10595 = vld [vmem:[%s10593 + $0x4] sm:$0xf]
        %v10596 = vld [vmem:[%s10593 + $0x8] sm:$0xf]
        %v10597 = vld [vmem:[%s10593 + $0xc] sm:$0xf]
        %v10598 = vld [vmem:[%s10593 + $0x10] sm:$0xf]
        %v10599 = vld [vmem:[%s10593 + $0x14] sm:$0xf]
        %v10600 = vld [vmem:[%s10593 + $0x18] sm:$0xf]
        %v10601 = vld [vmem:[%s10593 + $0x1c] sm:$0xf]
        %v10602 = vld [vmem:[%s10593 + $0x20] sm:$0xf]
        %v10603 = vld [vmem:[%s10593 + $0x24] sm:$0xf]
        %v10604 = vld [vmem:[%s10593 + $0x28] sm:$0xf]
        %v10605 = vld [vmem:[%s10593 + $0x2c] sm:$0xf]
        %v10606 = vld [vmem:[%s10593 + $0x30] sm:$0xf]
        %v10607 = vld [vmem:[%s10593 + $0x34] sm:$0xf]
        %v10608 = vld [vmem:[%s10593 + $0x38] sm:$0xf]
        %v10609 = vld [vmem:[%s10593 + $0x3c] sm:$0xf]
        %s10610 = scalar_lea.vmem %s4, %s39
        %v10611 = vld [vmem:[%s10610] sm:$0x1]
        %v10613 = vperm.slane %v10611, 0
        %v10631 = vunpack.c.l.b16 %v10594
        %v10632 = vunpack.c.l.b16 %v10595
        %v10633 = vunpack.c.l.b16 %v10596
        %v10634 = vunpack.c.l.b16 %v10597
        %v10635 = vunpack.c.l.b16 %v10598
        %v10636 = vunpack.c.l.b16 %v10599
        %v10637 = vunpack.c.l.b16 %v10600
        %v10638 = vunpack.c.l.b16 %v10601
        %v10639 = vunpack.c.l.b16 %v10602
        %v10640 = vunpack.c.l.b16 %v10603
        %v10641 = vunpack.c.l.b16 %v10604
        %v10642 = vunpack.c.l.b16 %v10605
        %v10643 = vunpack.c.l.b16 %v10606
        %v10644 = vunpack.c.l.b16 %v10607
        %v10645 = vunpack.c.l.b16 %v10608
        %v10646 = vunpack.c.l.b16 %v10609
        %v10647 = vpack.c.b16 %v10632, %v10631
        %v10648 = vpack.c.b16 %v10634, %v10633
        %v10649 = vpack.c.b16 %v10636, %v10635
        %v10650 = vpack.c.b16 %v10638, %v10637
        %v10651 = vpack.c.b16 %v10640, %v10639
        %v10652 = vpack.c.b16 %v10642, %v10641
        %v10653 = vpack.c.b16 %v10644, %v10643
        %v10654 = vpack.c.b16 %v10646, %v10645
        %10663 = vmatpush.bf16.msra.mxu0 %v10654
        %10664 = vmatpush.bf16.msra.mxu0 %v10653
        %10665 = vmatpush.bf16.msra.mxu0 %v10652
        %10666 = vmatpush.bf16.msra.mxu0 %v10651
        %10667 = vmatpush.bf16.msra.mxu0 %v10650
        %10668 = vmatpush.bf16.msra.mxu0 %v10649
        %10669 = vmatpush.bf16.msra.mxu0 %v10648
        %10670 = vmatpush.bf16.msra.mxu0 %v10647
        %10671 = vmatmul.bf16.gmra.mxu0 %v10583
        %v10672 = vpop.f32.mrf.mxu0
        %v10673 = vadd.f32 %v10613, %v10672
        %v10674 = vpop.f32.mrf.mxu0
        %v10675 = vadd.f32 %v10613, %v10674
        %10676 = vmatmul.bf16.gmra.mxu0 %v10584
        %v10677 = vpop.f32.mrf.mxu0
        %v10678 = vadd.f32 %v10613, %v10677
        %v10679 = vpop.f32.mrf.mxu0
        %v10680 = vadd.f32 %v10613, %v10679
        %10681 = vmatmul.bf16.gmra.mxu0 %v10585
        %v10682 = vpop.f32.mrf.mxu0
        %v10683 = vadd.f32 %v10613, %v10682
        %v10684 = vpop.f32.mrf.mxu0
        %v10685 = vadd.f32 %v10613, %v10684
        %10686 = vmatmul.bf16.gmra.mxu0 %v10586
        %v10687 = vpop.f32.mrf.mxu0
        %v10688 = vadd.f32 %v10613, %v10687
        %v10689 = vpop.f32.mrf.mxu0
        %v10690 = vadd.f32 %v10613, %v10689
        %10691 = vmatmul.bf16.gmra.mxu0 %v10587
        %v10692 = vpop.f32.mrf.mxu0
        %v10693 = vadd.f32 %v10613, %v10692
        %v10694 = vpop.f32.mrf.mxu0
        %v10695 = vadd.f32 %v10613, %v10694
        %10696 = vmatmul.bf16.gmra.mxu0 %v10588
        %v10697 = vpop.f32.mrf.mxu0
        %v10698 = vadd.f32 %v10613, %v10697
        %v10699 = vpop.f32.mrf.mxu0
        %v10700 = vadd.f32 %v10613, %v10699
        %10701 = vmatmul.bf16.gmra.mxu0 %v10589
        %v10702 = vpop.f32.mrf.mxu0
        %v10703 = vadd.f32 %v10613, %v10702
        %v10704 = vpop.f32.mrf.mxu0
        %v10705 = vadd.f32 %v10613, %v10704
        %10706 = vmatmul.bf16.gmra.mxu0 %v10590
        %v10707 = vpop.f32.mrf.mxu0
        %v10708 = vadd.f32 %v10613, %v10707
        %v10709 = vpop.f32.mrf.mxu0
        %v10710 = vadd.f32 %v10613, %v10709
        %10711 = vdwg.mxu0
        %v10712 = vadd.f32 %v642, %v10673
        %v10713 = vadd.f32 %v643, %v10675
        %v10714 = vadd.f32 %v644, %v10678
        %v10715 = vadd.f32 %v645, %v10680
        %v10716 = vadd.f32 %v646, %v10683
        %v10717 = vadd.f32 %v647, %v10685
        %v10718 = vadd.f32 %v648, %v10688
        %v10719 = vadd.f32 %v649, %v10690
        %v10720 = vadd.f32 %v650, %v10693
        %v10721 = vadd.f32 %v651, %v10695
        %v10722 = vadd.f32 %v652, %v10698
        %v10723 = vadd.f32 %v653, %v10700
        %v10724 = vadd.f32 %v654, %v10703
        %v10725 = vadd.f32 %v655, %v10705
        %v10726 = vadd.f32 %v656, %v10708
        %v10727 = vadd.f32 %v657, %v10710
        %10728 = vadd.xlane.f32.xlu0 %v10712
        %v10729 = vpop.xlane.xlu0 %10728
        %10730 = vadd.xlane.f32.xlu0 %v10713
        %v10731 = vpop.xlane.xlu0 %10730
        %10732 = vadd.xlane.f32.xlu0 %v10714
        %v10733 = vpop.xlane.xlu0 %10732
        %10734 = vadd.xlane.f32.xlu0 %v10715
        %v10735 = vpop.xlane.xlu0 %10734
        %10736 = vadd.xlane.f32.xlu0 %v10716
        %v10737 = vpop.xlane.xlu0 %10736
        %10738 = vadd.xlane.f32.xlu0 %v10717
        %v10739 = vpop.xlane.xlu0 %10738
        %10740 = vadd.xlane.f32.xlu0 %v10718
        %v10741 = vpop.xlane.xlu0 %10740
        %10742 = vadd.xlane.f32.xlu0 %v10719
        %v10743 = vpop.xlane.xlu0 %10742
        %10744 = vadd.xlane.f32.xlu0 %v10720
        %v10745 = vpop.xlane.xlu0 %10744
        %10746 = vadd.xlane.f32.xlu0 %v10721
        %v10747 = vpop.xlane.xlu0 %10746
        %10748 = vadd.xlane.f32.xlu0 %v10722
        %v10749 = vpop.xlane.xlu0 %10748
        %10750 = vadd.xlane.f32.xlu0 %v10723
        %v10751 = vpop.xlane.xlu0 %10750
        %10752 = vadd.xlane.f32.xlu0 %v10724
        %v10753 = vpop.xlane.xlu0 %10752
        %10754 = vadd.xlane.f32.xlu0 %v10725
        %v10755 = vpop.xlane.xlu0 %10754
        %10756 = vadd.xlane.f32.xlu0 %v10726
        %v10757 = vpop.xlane.xlu0 %10756
        %10758 = vadd.xlane.f32.xlu0 %v10727
        %v10759 = vpop.xlane.xlu0 %10758
        %v10760 = vrcp.pop 128.0
        %v10761 = vmul.f32 128.0, %v10760
        %v10762 = vsub.f32 1.0, %v10761
        %v10763 = vmul.f32 %v10760, %v10762
        %v10764 = vadd.f32 %v10760, %v10763
        %vm10765 = vweird.f32 %v10760
        %v10766 = vsel %vm10765, %v10760, %v10764
        %v10767 = vmul.f32 %v10729, %v10766
        %v10768 = vmul.f32 %v10731, %v10766
        %v10769 = vmul.f32 %v10733, %v10766
        %v10770 = vmul.f32 %v10735, %v10766
        %v10771 = vmul.f32 %v10737, %v10766
        %v10772 = vmul.f32 %v10739, %v10766
        %v10773 = vmul.f32 %v10741, %v10766
        %v10774 = vmul.f32 %v10743, %v10766
        %v10775 = vmul.f32 %v10745, %v10766
        %v10776 = vmul.f32 %v10747, %v10766
        %v10777 = vmul.f32 %v10749, %v10766
        %v10778 = vmul.f32 %v10751, %v10766
        %v10779 = vmul.f32 %v10753, %v10766
        %v10780 = vmul.f32 %v10755, %v10766
        %v10781 = vmul.f32 %v10757, %v10766
        %v10782 = vmul.f32 %v10759, %v10766
        %v10783 = vsub.f32 %v10712, %v10767
        %v10784 = vsub.f32 %v10713, %v10768
        %v10785 = vsub.f32 %v10714, %v10769
        %v10786 = vsub.f32 %v10715, %v10770
        %v10787 = vsub.f32 %v10716, %v10771
        %v10788 = vsub.f32 %v10717, %v10772
        %v10789 = vsub.f32 %v10718, %v10773
        %v10790 = vsub.f32 %v10719, %v10774
        %v10791 = vsub.f32 %v10720, %v10775
        %v10792 = vsub.f32 %v10721, %v10776
        %v10793 = vsub.f32 %v10722, %v10777
        %v10794 = vsub.f32 %v10723, %v10778
        %v10795 = vsub.f32 %v10724, %v10779
        %v10796 = vsub.f32 %v10725, %v10780
        %v10797 = vsub.f32 %v10726, %v10781
        %v10798 = vsub.f32 %v10727, %v10782
        %v10799 = vmul.f32 %v10783, %v10783
        %v10800 = vmul.f32 %v10784, %v10784
        %v10801 = vmul.f32 %v10785, %v10785
        %v10802 = vmul.f32 %v10786, %v10786
        %v10803 = vmul.f32 %v10787, %v10787
        %v10804 = vmul.f32 %v10788, %v10788
        %v10805 = vmul.f32 %v10789, %v10789
        %v10806 = vmul.f32 %v10790, %v10790
        %v10807 = vmul.f32 %v10791, %v10791
        %v10808 = vmul.f32 %v10792, %v10792
        %v10809 = vmul.f32 %v10793, %v10793
        %v10810 = vmul.f32 %v10794, %v10794
        %v10811 = vmul.f32 %v10795, %v10795
        %v10812 = vmul.f32 %v10796, %v10796
        %v10813 = vmul.f32 %v10797, %v10797
        %v10814 = vmul.f32 %v10798, %v10798
        %10815 = vadd.xlane.f32.xlu0 %v10799
        %v10816 = vpop.xlane.xlu0 %10815
        %10817 = vadd.xlane.f32.xlu0 %v10800
        %v10818 = vpop.xlane.xlu0 %10817
        %10819 = vadd.xlane.f32.xlu0 %v10801
        %v10820 = vpop.xlane.xlu0 %10819
        %10821 = vadd.xlane.f32.xlu0 %v10802
        %v10822 = vpop.xlane.xlu0 %10821
        %10823 = vadd.xlane.f32.xlu0 %v10803
        %v10824 = vpop.xlane.xlu0 %10823
        %10825 = vadd.xlane.f32.xlu0 %v10804
        %v10826 = vpop.xlane.xlu0 %10825
        %10827 = vadd.xlane.f32.xlu0 %v10805
        %v10828 = vpop.xlane.xlu0 %10827
        %10829 = vadd.xlane.f32.xlu0 %v10806
        %v10830 = vpop.xlane.xlu0 %10829
        %10831 = vadd.xlane.f32.xlu0 %v10807
        %v10832 = vpop.xlane.xlu0 %10831
        %10833 = vadd.xlane.f32.xlu0 %v10808
        %v10834 = vpop.xlane.xlu0 %10833
        %10835 = vadd.xlane.f32.xlu0 %v10809
        %v10836 = vpop.xlane.xlu0 %10835
        %10837 = vadd.xlane.f32.xlu0 %v10810
        %v10838 = vpop.xlane.xlu0 %10837
        %10839 = vadd.xlane.f32.xlu0 %v10811
        %v10840 = vpop.xlane.xlu0 %10839
        %10841 = vadd.xlane.f32.xlu0 %v10812
        %v10842 = vpop.xlane.xlu0 %10841
        %10843 = vadd.xlane.f32.xlu0 %v10813
        %v10844 = vpop.xlane.xlu0 %10843
        %10845 = vadd.xlane.f32.xlu0 %v10814
        %v10846 = vpop.xlane.xlu0 %10845
        %v10847 = vmul.f32 %v10816, %v10766
        %v10848 = vmul.f32 %v10818, %v10766
        %v10849 = vmul.f32 %v10820, %v10766
        %v10850 = vmul.f32 %v10822, %v10766
        %v10851 = vmul.f32 %v10824, %v10766
        %v10852 = vmul.f32 %v10826, %v10766
        %v10853 = vmul.f32 %v10828, %v10766
        %v10854 = vmul.f32 %v10830, %v10766
        %v10855 = vmul.f32 %v10832, %v10766
        %v10856 = vmul.f32 %v10834, %v10766
        %v10857 = vmul.f32 %v10836, %v10766
        %v10858 = vmul.f32 %v10838, %v10766
        %v10859 = vmul.f32 %v10840, %v10766
        %v10860 = vmul.f32 %v10842, %v10766
        %v10861 = vmul.f32 %v10844, %v10766
        %v10862 = vmul.f32 %v10846, %v10766
        %v10863 = vadd.f32 %v10847, 1e-05
        %v10864 = vadd.f32 %v10848, 1e-05
        %v10865 = vadd.f32 %v10849, 1e-05
        %v10866 = vadd.f32 %v10850, 1e-05
        %v10867 = vadd.f32 %v10851, 1e-05
        %v10868 = vadd.f32 %v10852, 1e-05
        %v10869 = vadd.f32 %v10853, 1e-05
        %v10870 = vadd.f32 %v10854, 1e-05
        %v10871 = vadd.f32 %v10855, 1e-05
        %v10872 = vadd.f32 %v10856, 1e-05
        %v10873 = vadd.f32 %v10857, 1e-05
        %v10874 = vadd.f32 %v10858, 1e-05
        %v10875 = vadd.f32 %v10859, 1e-05
        %v10876 = vadd.f32 %v10860, 1e-05
        %v10877 = vadd.f32 %v10861, 1e-05
        %v10878 = vadd.f32 %v10862, 1e-05
        %v10879 = vrsqrt.pop %v10863
        %v10880 = vmul.f32 %v10879, %v10863
        %v10881 = vmul.f32 %v10880, %v10879
        %v10882 = vmul.f32 0.5, %v10881
        %v10883 = vsub.f32 1.5, %v10882
        %v10884 = vmul.f32 %v10879, %v10883
        %vm10885 = vweird.f32 %v10863
        %vm10886 = vweird.f32 %v10879
        %vm10887 = vmor %vm10885, %vm10886
        %v10888 = vsel %vm10887, %v10879, %v10884
        %v10889 = vrsqrt.pop %v10864
        %v10890 = vmul.f32 %v10889, %v10864
        %v10891 = vmul.f32 %v10890, %v10889
        %v10892 = vmul.f32 0.5, %v10891
        %v10893 = vsub.f32 1.5, %v10892
        %v10894 = vmul.f32 %v10889, %v10893
        %vm10895 = vweird.f32 %v10864
        %vm10896 = vweird.f32 %v10889
        %vm10897 = vmor %vm10895, %vm10896
        %v10898 = vsel %vm10897, %v10889, %v10894
        %v10899 = vrsqrt.pop %v10865
        %v10900 = vmul.f32 %v10899, %v10865
        %v10901 = vmul.f32 %v10900, %v10899
        %v10902 = vmul.f32 0.5, %v10901
        %v10903 = vsub.f32 1.5, %v10902
        %v10904 = vmul.f32 %v10899, %v10903
        %vm10905 = vweird.f32 %v10865
        %vm10906 = vweird.f32 %v10899
        %vm10907 = vmor %vm10905, %vm10906
        %v10908 = vsel %vm10907, %v10899, %v10904
        %v10909 = vrsqrt.pop %v10866
        %v10910 = vmul.f32 %v10909, %v10866
        %v10911 = vmul.f32 %v10910, %v10909
        %v10912 = vmul.f32 0.5, %v10911
        %v10913 = vsub.f32 1.5, %v10912
        %v10914 = vmul.f32 %v10909, %v10913
        %vm10915 = vweird.f32 %v10866
        %vm10916 = vweird.f32 %v10909
        %vm10917 = vmor %vm10915, %vm10916
        %v10918 = vsel %vm10917, %v10909, %v10914
        %v10919 = vrsqrt.pop %v10867
        %v10920 = vmul.f32 %v10919, %v10867
        %v10921 = vmul.f32 %v10920, %v10919
        %v10922 = vmul.f32 0.5, %v10921
        %v10923 = vsub.f32 1.5, %v10922
        %v10924 = vmul.f32 %v10919, %v10923
        %vm10925 = vweird.f32 %v10867
        %vm10926 = vweird.f32 %v10919
        %vm10927 = vmor %vm10925, %vm10926
        %v10928 = vsel %vm10927, %v10919, %v10924
        %v10929 = vrsqrt.pop %v10868
        %v10930 = vmul.f32 %v10929, %v10868
        %v10931 = vmul.f32 %v10930, %v10929
        %v10932 = vmul.f32 0.5, %v10931
        %v10933 = vsub.f32 1.5, %v10932
        %v10934 = vmul.f32 %v10929, %v10933
        %vm10935 = vweird.f32 %v10868
        %vm10936 = vweird.f32 %v10929
        %vm10937 = vmor %vm10935, %vm10936
        %v10938 = vsel %vm10937, %v10929, %v10934
        %v10939 = vrsqrt.pop %v10869
        %v10940 = vmul.f32 %v10939, %v10869
        %v10941 = vmul.f32 %v10940, %v10939
        %v10942 = vmul.f32 0.5, %v10941
        %v10943 = vsub.f32 1.5, %v10942
        %v10944 = vmul.f32 %v10939, %v10943
        %vm10945 = vweird.f32 %v10869
        %vm10946 = vweird.f32 %v10939
        %vm10947 = vmor %vm10945, %vm10946
        %v10948 = vsel %vm10947, %v10939, %v10944
        %v10949 = vrsqrt.pop %v10870
        %v10950 = vmul.f32 %v10949, %v10870
        %v10951 = vmul.f32 %v10950, %v10949
        %v10952 = vmul.f32 0.5, %v10951
        %v10953 = vsub.f32 1.5, %v10952
        %v10954 = vmul.f32 %v10949, %v10953
        %vm10955 = vweird.f32 %v10870
        %vm10956 = vweird.f32 %v10949
        %vm10957 = vmor %vm10955, %vm10956
        %v10958 = vsel %vm10957, %v10949, %v10954
        %v10959 = vrsqrt.pop %v10871
        %v10960 = vmul.f32 %v10959, %v10871
        %v10961 = vmul.f32 %v10960, %v10959
        %v10962 = vmul.f32 0.5, %v10961
        %v10963 = vsub.f32 1.5, %v10962
        %v10964 = vmul.f32 %v10959, %v10963
        %vm10965 = vweird.f32 %v10871
        %vm10966 = vweird.f32 %v10959
        %vm10967 = vmor %vm10965, %vm10966
        %v10968 = vsel %vm10967, %v10959, %v10964
        %v10969 = vrsqrt.pop %v10872
        %v10970 = vmul.f32 %v10969, %v10872
        %v10971 = vmul.f32 %v10970, %v10969
        %v10972 = vmul.f32 0.5, %v10971
        %v10973 = vsub.f32 1.5, %v10972
        %v10974 = vmul.f32 %v10969, %v10973
        %vm10975 = vweird.f32 %v10872
        %vm10976 = vweird.f32 %v10969
        %vm10977 = vmor %vm10975, %vm10976
        %v10978 = vsel %vm10977, %v10969, %v10974
        %v10979 = vrsqrt.pop %v10873
        %v10980 = vmul.f32 %v10979, %v10873
        %v10981 = vmul.f32 %v10980, %v10979
        %v10982 = vmul.f32 0.5, %v10981
        %v10983 = vsub.f32 1.5, %v10982
        %v10984 = vmul.f32 %v10979, %v10983
        %vm10985 = vweird.f32 %v10873
        %vm10986 = vweird.f32 %v10979
        %vm10987 = vmor %vm10985, %vm10986
        %v10988 = vsel %vm10987, %v10979, %v10984
        %v10989 = vrsqrt.pop %v10874
        %v10990 = vmul.f32 %v10989, %v10874
        %v10991 = vmul.f32 %v10990, %v10989
        %v10992 = vmul.f32 0.5, %v10991
        %v10993 = vsub.f32 1.5, %v10992
        %v10994 = vmul.f32 %v10989, %v10993
        %vm10995 = vweird.f32 %v10874
        %vm10996 = vweird.f32 %v10989
        %vm10997 = vmor %vm10995, %vm10996
        %v10998 = vsel %vm10997, %v10989, %v10994
        %v10999 = vrsqrt.pop %v10875
        %v11000 = vmul.f32 %v10999, %v10875
        %v11001 = vmul.f32 %v11000, %v10999
        %v11002 = vmul.f32 0.5, %v11001
        %v11003 = vsub.f32 1.5, %v11002
        %v11004 = vmul.f32 %v10999, %v11003
        %vm11005 = vweird.f32 %v10875
        %vm11006 = vweird.f32 %v10999
        %vm11007 = vmor %vm11005, %vm11006
        %v11008 = vsel %vm11007, %v10999, %v11004
        %v11009 = vrsqrt.pop %v10876
        %v11010 = vmul.f32 %v11009, %v10876
        %v11011 = vmul.f32 %v11010, %v11009
        %v11012 = vmul.f32 0.5, %v11011
        %v11013 = vsub.f32 1.5, %v11012
        %v11014 = vmul.f32 %v11009, %v11013
        %vm11015 = vweird.f32 %v10876
        %vm11016 = vweird.f32 %v11009
        %vm11017 = vmor %vm11015, %vm11016
        %v11018 = vsel %vm11017, %v11009, %v11014
        %v11019 = vrsqrt.pop %v10877
        %v11020 = vmul.f32 %v11019, %v10877
        %v11021 = vmul.f32 %v11020, %v11019
        %v11022 = vmul.f32 0.5, %v11021
        %v11023 = vsub.f32 1.5, %v11022
        %v11024 = vmul.f32 %v11019, %v11023
        %vm11025 = vweird.f32 %v10877
        %vm11026 = vweird.f32 %v11019
        %vm11027 = vmor %vm11025, %vm11026
        %v11028 = vsel %vm11027, %v11019, %v11024
        %v11029 = vrsqrt.pop %v10878
        %v11030 = vmul.f32 %v11029, %v10878
        %v11031 = vmul.f32 %v11030, %v11029
        %v11032 = vmul.f32 0.5, %v11031
        %v11033 = vsub.f32 1.5, %v11032
        %v11034 = vmul.f32 %v11029, %v11033
        %vm11035 = vweird.f32 %v10878
        %vm11036 = vweird.f32 %v11029
        %vm11037 = vmor %vm11035, %vm11036
        %v11038 = vsel %vm11037, %v11029, %v11034
        %v11039 = vmul.f32 %v10783, %v10888
        %v11040 = vmul.f32 %v10784, %v10898
        %v11041 = vmul.f32 %v10785, %v10908
        %v11042 = vmul.f32 %v10786, %v10918
        %v11043 = vmul.f32 %v10787, %v10928
        %v11044 = vmul.f32 %v10788, %v10938
        %v11045 = vmul.f32 %v10789, %v10948
        %v11046 = vmul.f32 %v10790, %v10958
        %v11047 = vmul.f32 %v10791, %v10968
        %v11048 = vmul.f32 %v10792, %v10978
        %v11049 = vmul.f32 %v10793, %v10988
        %v11050 = vmul.f32 %v10794, %v10998
        %v11051 = vmul.f32 %v10795, %v11008
        %v11052 = vmul.f32 %v10796, %v11018
        %v11053 = vmul.f32 %v10797, %v11028
        %v11054 = vmul.f32 %v10798, %v11038
        %s11055 = scalar_lea.vmem [#allocation10], %s39
        %v11056 = vld [vmem:[%s11055] sm:$0x1]
        %v11058 = vperm.slane %v11056, 0
        %v11060 = vmul.f32 %v11039, %v11058
        %v11061 = vmul.f32 %v11040, %v11058
        %v11062 = vmul.f32 %v11041, %v11058
        %v11063 = vmul.f32 %v11042, %v11058
        %v11064 = vmul.f32 %v11043, %v11058
        %v11065 = vmul.f32 %v11044, %v11058
        %v11066 = vmul.f32 %v11045, %v11058
        %v11067 = vmul.f32 %v11046, %v11058
        %v11068 = vmul.f32 %v11047, %v11058
        %v11069 = vmul.f32 %v11048, %v11058
        %v11070 = vmul.f32 %v11049, %v11058
        %v11071 = vmul.f32 %v11050, %v11058
        %v11072 = vmul.f32 %v11051, %v11058
        %v11073 = vmul.f32 %v11052, %v11058
        %v11074 = vmul.f32 %v11053, %v11058
        %v11075 = vmul.f32 %v11054, %v11058
        %s11076 = scalar_lea.vmem [#allocation11], %s39
        %v11077 = vld [vmem:[%s11076] sm:$0x1]
        %v11079 = vperm.slane %v11077, 0
        %v11081 = vadd.f32 %v11060, %v11079
        %v11082 = vadd.f32 %v11061, %v11079
        %v11083 = vadd.f32 %v11062, %v11079
        %v11084 = vadd.f32 %v11063, %v11079
        %v11085 = vadd.f32 %v11064, %v11079
        %v11086 = vadd.f32 %v11065, %v11079
        %v11087 = vadd.f32 %v11066, %v11079
        %v11088 = vadd.f32 %v11067, %v11079
        %v11089 = vadd.f32 %v11068, %v11079
        %v11090 = vadd.f32 %v11069, %v11079
        %v11091 = vadd.f32 %v11070, %v11079
        %v11092 = vadd.f32 %v11071, %v11079
        %v11093 = vadd.f32 %v11072, %v11079
        %v11094 = vadd.f32 %v11073, %v11079
        %v11095 = vadd.f32 %v11074, %v11079
        %v11096 = vadd.f32 %v11075, %v11079
        %v11097 = vpack.c.bf16 %v11082, %v11081
        %v11098 = vpack.c.bf16 %v11084, %v11083
        %v11099 = vpack.c.bf16 %v11086, %v11085
        %v11100 = vpack.c.bf16 %v11088, %v11087
        %v11101 = vpack.c.bf16 %v11090, %v11089
        %v11102 = vpack.c.bf16 %v11092, %v11091
        %v11103 = vpack.c.bf16 %v11094, %v11093
        %v11104 = vpack.c.bf16 %v11096, %v11095
        %s11105 = smul.u32 %s39, 32
        %s11106 = smul.addr %s11105, 4
        %s11107 = scalar_lea.vmem [#allocation13], %s11106
        %v11108 = vld [vmem:[%s11107] sm:$0xff]
        %v11109 = vld [vmem:[%s11107 + $0x8] sm:$0xff]
        %v11110 = vld [vmem:[%s11107 + $0x10] sm:$0xff]
        %v11111 = vld [vmem:[%s11107 + $0x18] sm:$0xff]
        %v11112 = vld [vmem:[%s11107 + $0x20] sm:$0xff]
        %v11113 = vld [vmem:[%s11107 + $0x28] sm:$0xff]
        %v11114 = vld [vmem:[%s11107 + $0x30] sm:$0xff]
        %v11115 = vld [vmem:[%s11107 + $0x38] sm:$0xff]
        %v11116 = vld [vmem:[%s11107 + $0x40] sm:$0xff]
        %v11117 = vld [vmem:[%s11107 + $0x48] sm:$0xff]
        %v11118 = vld [vmem:[%s11107 + $0x50] sm:$0xff]
        %v11119 = vld [vmem:[%s11107 + $0x58] sm:$0xff]
        %v11120 = vld [vmem:[%s11107 + $0x60] sm:$0xff]
        %v11121 = vld [vmem:[%s11107 + $0x68] sm:$0xff]
        %v11122 = vld [vmem:[%s11107 + $0x70] sm:$0xff]
        %v11123 = vld [vmem:[%s11107 + $0x78] sm:$0xff]
        %s11124 = smul.u32 %s39, 2
        %s11125 = scalar_lea.vmem %s8, %s11124
        %v11126 = vld [vmem:[%s11125] sm:$0x3]
        %v11128 = vperm.slane %v11126, 0
        %v11129 = vperm.slane %v11126, 1
        %v11148 = vunpack.c.l.b16 %v11108
        %v11149 = vunpack.c.h.b16 %v11108
        %v11150 = vunpack.c.l.b16 %v11109
        %v11151 = vunpack.c.h.b16 %v11109
        %v11152 = vunpack.c.l.b16 %v11110
        %v11153 = vunpack.c.h.b16 %v11110
        %v11154 = vunpack.c.l.b16 %v11111
        %v11155 = vunpack.c.h.b16 %v11111
        %v11156 = vunpack.c.l.b16 %v11112
        %v11157 = vunpack.c.h.b16 %v11112
        %v11158 = vunpack.c.l.b16 %v11113
        %v11159 = vunpack.c.h.b16 %v11113
        %v11160 = vunpack.c.l.b16 %v11114
        %v11161 = vunpack.c.h.b16 %v11114
        %v11162 = vunpack.c.l.b16 %v11115
        %v11163 = vunpack.c.h.b16 %v11115
        %v11164 = vunpack.c.l.b16 %v11116
        %v11165 = vunpack.c.h.b16 %v11116
        %v11166 = vunpack.c.l.b16 %v11117
        %v11167 = vunpack.c.h.b16 %v11117
        %v11168 = vunpack.c.l.b16 %v11118
        %v11169 = vunpack.c.h.b16 %v11118
        %v11170 = vunpack.c.l.b16 %v11119
        %v11171 = vunpack.c.h.b16 %v11119
        %v11172 = vunpack.c.l.b16 %v11120
        %v11173 = vunpack.c.h.b16 %v11120
        %v11174 = vunpack.c.l.b16 %v11121
        %v11175 = vunpack.c.h.b16 %v11121
        %v11176 = vunpack.c.l.b16 %v11122
        %v11177 = vunpack.c.h.b16 %v11122
        %v11178 = vunpack.c.l.b16 %v11123
        %v11179 = vunpack.c.h.b16 %v11123
        %v11180 = vpack.c.b16 %v11150, %v11148
        %v11181 = vpack.c.b16 %v11151, %v11149
        %v11182 = vpack.c.b16 %v11154, %v11152
        %v11183 = vpack.c.b16 %v11155, %v11153
        %v11184 = vpack.c.b16 %v11158, %v11156
        %v11185 = vpack.c.b16 %v11159, %v11157
        %v11186 = vpack.c.b16 %v11162, %v11160
        %v11187 = vpack.c.b16 %v11163, %v11161
        %v11188 = vpack.c.b16 %v11166, %v11164
        %v11189 = vpack.c.b16 %v11167, %v11165
        %v11190 = vpack.c.b16 %v11170, %v11168
        %v11191 = vpack.c.b16 %v11171, %v11169
        %v11192 = vpack.c.b16 %v11174, %v11172
        %v11193 = vpack.c.b16 %v11175, %v11173
        %v11194 = vpack.c.b16 %v11178, %v11176
        %v11195 = vpack.c.b16 %v11179, %v11177
        %11212 = vmatpush.bf16.msra.mxu0 %v11194
        %11213 = vmatpush.bf16.msra.mxu0 %v11192
        %11214 = vmatpush.bf16.msra.mxu0 %v11190
        %11215 = vmatpush.bf16.msra.mxu0 %v11188
        %11216 = vmatpush.bf16.msra.mxu0 %v11186
        %11217 = vmatpush.bf16.msra.mxu0 %v11184
        %11218 = vmatpush.bf16.msra.mxu0 %v11182
        %11219 = vmatpush.bf16.msra.mxu0 %v11180
        %11220 = vmatmul.bf16.gmra.mxu0 %v11097
        %v11221 = vpop.f32.mrf.mxu0
        %v11222 = vadd.f32 %v11128, %v11221
        %v11223 = vpop.f32.mrf.mxu0
        %v11224 = vadd.f32 %v11128, %v11223
        %11225 = vmatmul.bf16.gmra.mxu0 %v11098
        %v11226 = vpop.f32.mrf.mxu0
        %v11227 = vadd.f32 %v11128, %v11226
        %v11228 = vpop.f32.mrf.mxu0
        %v11229 = vadd.f32 %v11128, %v11228
        %11230 = vmatmul.bf16.gmra.mxu0 %v11099
        %v11231 = vpop.f32.mrf.mxu0
        %v11232 = vadd.f32 %v11128, %v11231
        %v11233 = vpop.f32.mrf.mxu0
        %v11234 = vadd.f32 %v11128, %v11233
        %11235 = vmatmul.bf16.gmra.mxu0 %v11100
        %v11236 = vpop.f32.mrf.mxu0
        %v11237 = vadd.f32 %v11128, %v11236
        %v11238 = vpop.f32.mrf.mxu0
        %v11239 = vadd.f32 %v11128, %v11238
        %11240 = vmatmul.bf16.gmra.mxu0 %v11101
        %v11241 = vpop.f32.mrf.mxu0
        %v11242 = vadd.f32 %v11128, %v11241
        %v11243 = vpop.f32.mrf.mxu0
        %v11244 = vadd.f32 %v11128, %v11243
        %11245 = vmatmul.bf16.gmra.mxu0 %v11102
        %v11246 = vpop.f32.mrf.mxu0
        %v11247 = vadd.f32 %v11128, %v11246
        %v11248 = vpop.f32.mrf.mxu0
        %v11249 = vadd.f32 %v11128, %v11248
        %11250 = vmatmul.bf16.gmra.mxu0 %v11103
        %v11251 = vpop.f32.mrf.mxu0
        %v11252 = vadd.f32 %v11128, %v11251
        %v11253 = vpop.f32.mrf.mxu0
        %v11254 = vadd.f32 %v11128, %v11253
        %11255 = vmatmul.bf16.gmra.mxu0 %v11104
        %v11256 = vpop.f32.mrf.mxu0
        %v11257 = vadd.f32 %v11128, %v11256
        %v11258 = vpop.f32.mrf.mxu0
        %v11259 = vadd.f32 %v11128, %v11258
        %11260 = vdwg.mxu0
        %11261 = vmatpush.bf16.msra.mxu0 %v11195
        %11262 = vmatpush.bf16.msra.mxu0 %v11193
        %11263 = vmatpush.bf16.msra.mxu0 %v11191
        %11264 = vmatpush.bf16.msra.mxu0 %v11189
        %11265 = vmatpush.bf16.msra.mxu0 %v11187
        %11266 = vmatpush.bf16.msra.mxu0 %v11185
        %11267 = vmatpush.bf16.msra.mxu0 %v11183
        %11268 = vmatpush.bf16.msra.mxu0 %v11181
        %11269 = vmatmul.bf16.gmra.mxu0 %v11097
        %v11270 = vpop.f32.mrf.mxu0
        %v11271 = vadd.f32 %v11129, %v11270
        %v11272 = vpop.f32.mrf.mxu0
        %v11273 = vadd.f32 %v11129, %v11272
        %11274 = vmatmul.bf16.gmra.mxu0 %v11098
        %v11275 = vpop.f32.mrf.mxu0
        %v11276 = vadd.f32 %v11129, %v11275
        %v11277 = vpop.f32.mrf.mxu0
        %v11278 = vadd.f32 %v11129, %v11277
        %11279 = vmatmul.bf16.gmra.mxu0 %v11099
        %v11280 = vpop.f32.mrf.mxu0
        %v11281 = vadd.f32 %v11129, %v11280
        %v11282 = vpop.f32.mrf.mxu0
        %v11283 = vadd.f32 %v11129, %v11282
        %11284 = vmatmul.bf16.gmra.mxu0 %v11100
        %v11285 = vpop.f32.mrf.mxu0
        %v11286 = vadd.f32 %v11129, %v11285
        %v11287 = vpop.f32.mrf.mxu0
        %v11288 = vadd.f32 %v11129, %v11287
        %11289 = vmatmul.bf16.gmra.mxu0 %v11101
        %v11290 = vpop.f32.mrf.mxu0
        %v11291 = vadd.f32 %v11129, %v11290
        %v11292 = vpop.f32.mrf.mxu0
        %v11293 = vadd.f32 %v11129, %v11292
        %11294 = vmatmul.bf16.gmra.mxu0 %v11102
        %v11295 = vpop.f32.mrf.mxu0
        %v11296 = vadd.f32 %v11129, %v11295
        %v11297 = vpop.f32.mrf.mxu0
        %v11298 = vadd.f32 %v11129, %v11297
        %11299 = vmatmul.bf16.gmra.mxu0 %v11103
        %v11300 = vpop.f32.mrf.mxu0
        %v11301 = vadd.f32 %v11129, %v11300
        %v11302 = vpop.f32.mrf.mxu0
        %v11303 = vadd.f32 %v11129, %v11302
        %11304 = vmatmul.bf16.gmra.mxu0 %v11104
        %v11305 = vpop.f32.mrf.mxu0
        %v11306 = vadd.f32 %v11129, %v11305
        %v11307 = vpop.f32.mrf.mxu0
        %v11308 = vadd.f32 %v11129, %v11307
        %11309 = vdwg.mxu0
        %v11310 = vmax.f32 %v11222, 0.0
        %v11311 = vmax.f32 %v11271, 0.0
        %v11312 = vmax.f32 %v11224, 0.0
        %v11313 = vmax.f32 %v11273, 0.0
        %v11314 = vmax.f32 %v11227, 0.0
        %v11315 = vmax.f32 %v11276, 0.0
        %v11316 = vmax.f32 %v11229, 0.0
        %v11317 = vmax.f32 %v11278, 0.0
        %v11318 = vmax.f32 %v11232, 0.0
        %v11319 = vmax.f32 %v11281, 0.0
        %v11320 = vmax.f32 %v11234, 0.0
        %v11321 = vmax.f32 %v11283, 0.0
        %v11322 = vmax.f32 %v11237, 0.0
        %v11323 = vmax.f32 %v11286, 0.0
        %v11324 = vmax.f32 %v11239, 0.0
        %v11325 = vmax.f32 %v11288, 0.0
        %v11326 = vmax.f32 %v11242, 0.0
        %v11327 = vmax.f32 %v11291, 0.0
        %v11328 = vmax.f32 %v11244, 0.0
        %v11329 = vmax.f32 %v11293, 0.0
        %v11330 = vmax.f32 %v11247, 0.0
        %v11331 = vmax.f32 %v11296, 0.0
        %v11332 = vmax.f32 %v11249, 0.0
        %v11333 = vmax.f32 %v11298, 0.0
        %v11334 = vmax.f32 %v11252, 0.0
        %v11335 = vmax.f32 %v11301, 0.0
        %v11336 = vmax.f32 %v11254, 0.0
        %v11337 = vmax.f32 %v11303, 0.0
        %v11338 = vmax.f32 %v11257, 0.0
        %v11339 = vmax.f32 %v11306, 0.0
        %v11340 = vmax.f32 %v11259, 0.0
        %v11341 = vmax.f32 %v11308, 0.0
        %v11342 = vpack.c.bf16 %v11312, %v11310
        %v11343 = vpack.c.bf16 %v11313, %v11311
        %v11344 = vpack.c.bf16 %v11316, %v11314
        %v11345 = vpack.c.bf16 %v11317, %v11315
        %v11346 = vpack.c.bf16 %v11320, %v11318
        %v11347 = vpack.c.bf16 %v11321, %v11319
        %v11348 = vpack.c.bf16 %v11324, %v11322
        %v11349 = vpack.c.bf16 %v11325, %v11323
        %v11350 = vpack.c.bf16 %v11328, %v11326
        %v11351 = vpack.c.bf16 %v11329, %v11327
        %v11352 = vpack.c.bf16 %v11332, %v11330
        %v11353 = vpack.c.bf16 %v11333, %v11331
        %v11354 = vpack.c.bf16 %v11336, %v11334
        %v11355 = vpack.c.bf16 %v11337, %v11335
        %v11356 = vpack.c.bf16 %v11340, %v11338
        %v11357 = vpack.c.bf16 %v11341, %v11339
        %s11358 = smul.addr %s11105, 4
        %s11359 = scalar_lea.vmem [#allocation14], %s11358
        %v11360 = vld [vmem:[%s11359] sm:$0xf]
        %v11361 = vld [vmem:[%s11359 + $0x4] sm:$0xf]
        %v11362 = vld [vmem:[%s11359 + $0x8] sm:$0xf]
        %v11363 = vld [vmem:[%s11359 + $0xc] sm:$0xf]
        %v11364 = vld [vmem:[%s11359 + $0x10] sm:$0xf]
        %v11365 = vld [vmem:[%s11359 + $0x14] sm:$0xf]
        %v11366 = vld [vmem:[%s11359 + $0x18] sm:$0xf]
        %v11367 = vld [vmem:[%s11359 + $0x1c] sm:$0xf]
        %v11368 = vld [vmem:[%s11359 + $0x20] sm:$0xf]
        %v11369 = vld [vmem:[%s11359 + $0x24] sm:$0xf]
        %v11370 = vld [vmem:[%s11359 + $0x28] sm:$0xf]
        %v11371 = vld [vmem:[%s11359 + $0x2c] sm:$0xf]
        %v11372 = vld [vmem:[%s11359 + $0x30] sm:$0xf]
        %v11373 = vld [vmem:[%s11359 + $0x34] sm:$0xf]
        %v11374 = vld [vmem:[%s11359 + $0x38] sm:$0xf]
        %v11375 = vld [vmem:[%s11359 + $0x3c] sm:$0xf]
        %v11376 = vld [vmem:[%s11359 + $0x40] sm:$0xf]
        %v11377 = vld [vmem:[%s11359 + $0x44] sm:$0xf]
        %v11378 = vld [vmem:[%s11359 + $0x48] sm:$0xf]
        %v11379 = vld [vmem:[%s11359 + $0x4c] sm:$0xf]
        %v11380 = vld [vmem:[%s11359 + $0x50] sm:$0xf]
        %v11381 = vld [vmem:[%s11359 + $0x54] sm:$0xf]
        %v11382 = vld [vmem:[%s11359 + $0x58] sm:$0xf]
        %v11383 = vld [vmem:[%s11359 + $0x5c] sm:$0xf]
        %v11384 = vld [vmem:[%s11359 + $0x60] sm:$0xf]
        %v11385 = vld [vmem:[%s11359 + $0x64] sm:$0xf]
        %v11386 = vld [vmem:[%s11359 + $0x68] sm:$0xf]
        %v11387 = vld [vmem:[%s11359 + $0x6c] sm:$0xf]
        %v11388 = vld [vmem:[%s11359 + $0x70] sm:$0xf]
        %v11389 = vld [vmem:[%s11359 + $0x74] sm:$0xf]
        %v11390 = vld [vmem:[%s11359 + $0x78] sm:$0xf]
        %v11391 = vld [vmem:[%s11359 + $0x7c] sm:$0xf]
        %s11392 = scalar_lea.vmem %s10, %s39
        %v11393 = vld [vmem:[%s11392] sm:$0x1]
        %v11395 = vperm.slane %v11393, 0
        %v11429 = vunpack.c.l.b16 %v11360
        %v11430 = vunpack.c.l.b16 %v11361
        %v11431 = vunpack.c.l.b16 %v11362
        %v11432 = vunpack.c.l.b16 %v11363
        %v11433 = vunpack.c.l.b16 %v11364
        %v11434 = vunpack.c.l.b16 %v11365
        %v11435 = vunpack.c.l.b16 %v11366
        %v11436 = vunpack.c.l.b16 %v11367
        %v11437 = vunpack.c.l.b16 %v11368
        %v11438 = vunpack.c.l.b16 %v11369
        %v11439 = vunpack.c.l.b16 %v11370
        %v11440 = vunpack.c.l.b16 %v11371
        %v11441 = vunpack.c.l.b16 %v11372
        %v11442 = vunpack.c.l.b16 %v11373
        %v11443 = vunpack.c.l.b16 %v11374
        %v11444 = vunpack.c.l.b16 %v11375
        %v11445 = vunpack.c.l.b16 %v11376
        %v11446 = vunpack.c.l.b16 %v11377
        %v11447 = vunpack.c.l.b16 %v11378
        %v11448 = vunpack.c.l.b16 %v11379
        %v11449 = vunpack.c.l.b16 %v11380
        %v11450 = vunpack.c.l.b16 %v11381
        %v11451 = vunpack.c.l.b16 %v11382
        %v11452 = vunpack.c.l.b16 %v11383
        %v11453 = vunpack.c.l.b16 %v11384
        %v11454 = vunpack.c.l.b16 %v11385
        %v11455 = vunpack.c.l.b16 %v11386
        %v11456 = vunpack.c.l.b16 %v11387
        %v11457 = vunpack.c.l.b16 %v11388
        %v11458 = vunpack.c.l.b16 %v11389
        %v11459 = vunpack.c.l.b16 %v11390
        %v11460 = vunpack.c.l.b16 %v11391
        %v11461 = vpack.c.b16 %v11430, %v11429
        %v11462 = vpack.c.b16 %v11432, %v11431
        %v11463 = vpack.c.b16 %v11434, %v11433
        %v11464 = vpack.c.b16 %v11436, %v11435
        %v11465 = vpack.c.b16 %v11438, %v11437
        %v11466 = vpack.c.b16 %v11440, %v11439
        %v11467 = vpack.c.b16 %v11442, %v11441
        %v11468 = vpack.c.b16 %v11444, %v11443
        %v11469 = vpack.c.b16 %v11446, %v11445
        %v11470 = vpack.c.b16 %v11448, %v11447
        %v11471 = vpack.c.b16 %v11450, %v11449
        %v11472 = vpack.c.b16 %v11452, %v11451
        %v11473 = vpack.c.b16 %v11454, %v11453
        %v11474 = vpack.c.b16 %v11456, %v11455
        %v11475 = vpack.c.b16 %v11458, %v11457
        %v11476 = vpack.c.b16 %v11460, %v11459
        %11493 = vmatpush.bf16.msra.mxu0 %v11468
        %11494 = vmatpush.bf16.msra.mxu0 %v11467
        %11495 = vmatpush.bf16.msra.mxu0 %v11466
        %11496 = vmatpush.bf16.msra.mxu0 %v11465
        %11497 = vmatpush.bf16.msra.mxu0 %v11464
        %11498 = vmatpush.bf16.msra.mxu0 %v11463
        %11499 = vmatpush.bf16.msra.mxu0 %v11462
        %11500 = vmatpush.bf16.msra.mxu0 %v11461
        %11501 = vmatmul.bf16.gmra.mxu0 %v11342
        %v11502 = vpop.f32.mrf.mxu0
        %v11503 = vadd.f32 %v11395, %v11502
        %v11504 = vpop.f32.mrf.mxu0
        %v11505 = vadd.f32 %v11395, %v11504
        %11506 = vmatmul.bf16.gmra.mxu0 %v11344
        %v11507 = vpop.f32.mrf.mxu0
        %v11508 = vadd.f32 %v11395, %v11507
        %v11509 = vpop.f32.mrf.mxu0
        %v11510 = vadd.f32 %v11395, %v11509
        %11511 = vmatmul.bf16.gmra.mxu0 %v11346
        %v11512 = vpop.f32.mrf.mxu0
        %v11513 = vadd.f32 %v11395, %v11512
        %v11514 = vpop.f32.mrf.mxu0
        %v11515 = vadd.f32 %v11395, %v11514
        %11516 = vmatmul.bf16.gmra.mxu0 %v11348
        %v11517 = vpop.f32.mrf.mxu0
        %v11518 = vadd.f32 %v11395, %v11517
        %v11519 = vpop.f32.mrf.mxu0
        %v11520 = vadd.f32 %v11395, %v11519
        %11521 = vmatmul.bf16.gmra.mxu0 %v11350
        %v11522 = vpop.f32.mrf.mxu0
        %v11523 = vadd.f32 %v11395, %v11522
        %v11524 = vpop.f32.mrf.mxu0
        %v11525 = vadd.f32 %v11395, %v11524
        %11526 = vmatmul.bf16.gmra.mxu0 %v11352
        %v11527 = vpop.f32.mrf.mxu0
        %v11528 = vadd.f32 %v11395, %v11527
        %v11529 = vpop.f32.mrf.mxu0
        %v11530 = vadd.f32 %v11395, %v11529
        %11531 = vmatmul.bf16.gmra.mxu0 %v11354
        %v11532 = vpop.f32.mrf.mxu0
        %v11533 = vadd.f32 %v11395, %v11532
        %v11534 = vpop.f32.mrf.mxu0
        %v11535 = vadd.f32 %v11395, %v11534
        %11536 = vmatmul.bf16.gmra.mxu0 %v11356
        %v11537 = vpop.f32.mrf.mxu0
        %v11538 = vadd.f32 %v11395, %v11537
        %v11539 = vpop.f32.mrf.mxu0
        %v11540 = vadd.f32 %v11395, %v11539
        %11541 = vdwg.mxu0
        %11542 = vmatpush.bf16.msra.mxu0 %v11476
        %11543 = vmatpush.bf16.msra.mxu0 %v11475
        %11544 = vmatpush.bf16.msra.mxu0 %v11474
        %11545 = vmatpush.bf16.msra.mxu0 %v11473
        %11546 = vmatpush.bf16.msra.mxu0 %v11472
        %11547 = vmatpush.bf16.msra.mxu0 %v11471
        %11548 = vmatpush.bf16.msra.mxu0 %v11470
        %11549 = vmatpush.bf16.msra.mxu0 %v11469
        %11550 = vmatmul.bf16.gmra.mxu0 %v11343
        %v11551 = vpop.f32.mrf.mxu0
        %v11552 = vadd.f32 %v11503, %v11551
        %v11553 = vpop.f32.mrf.mxu0
        %v11554 = vadd.f32 %v11505, %v11553
        %11555 = vmatmul.bf16.gmra.mxu0 %v11345
        %v11556 = vpop.f32.mrf.mxu0
        %v11557 = vadd.f32 %v11508, %v11556
        %v11558 = vpop.f32.mrf.mxu0
        %v11559 = vadd.f32 %v11510, %v11558
        %11560 = vmatmul.bf16.gmra.mxu0 %v11347
        %v11561 = vpop.f32.mrf.mxu0
        %v11562 = vadd.f32 %v11513, %v11561
        %v11563 = vpop.f32.mrf.mxu0
        %v11564 = vadd.f32 %v11515, %v11563
        %11565 = vmatmul.bf16.gmra.mxu0 %v11349
        %v11566 = vpop.f32.mrf.mxu0
        %v11567 = vadd.f32 %v11518, %v11566
        %v11568 = vpop.f32.mrf.mxu0
        %v11569 = vadd.f32 %v11520, %v11568
        %11570 = vmatmul.bf16.gmra.mxu0 %v11351
        %v11571 = vpop.f32.mrf.mxu0
        %v11572 = vadd.f32 %v11523, %v11571
        %v11573 = vpop.f32.mrf.mxu0
        %v11574 = vadd.f32 %v11525, %v11573
        %11575 = vmatmul.bf16.gmra.mxu0 %v11353
        %v11576 = vpop.f32.mrf.mxu0
        %v11577 = vadd.f32 %v11528, %v11576
        %v11578 = vpop.f32.mrf.mxu0
        %v11579 = vadd.f32 %v11530, %v11578
        %11580 = vmatmul.bf16.gmra.mxu0 %v11355
        %v11581 = vpop.f32.mrf.mxu0
        %v11582 = vadd.f32 %v11533, %v11581
        %v11583 = vpop.f32.mrf.mxu0
        %v11584 = vadd.f32 %v11535, %v11583
        %11585 = vmatmul.bf16.gmra.mxu0 %v11357
        %v11586 = vpop.f32.mrf.mxu0
        %v11587 = vadd.f32 %v11538, %v11586
        %v11588 = vpop.f32.mrf.mxu0
        %v11589 = vadd.f32 %v11540, %v11588
        %11590 = vdwg.mxu0
        %v11591 = vadd.f32 %v11081, %v11552
        %v11592 = vadd.f32 %v11082, %v11554
        %v11593 = vadd.f32 %v11083, %v11557
        %v11594 = vadd.f32 %v11084, %v11559
        %v11595 = vadd.f32 %v11085, %v11562
        %v11596 = vadd.f32 %v11086, %v11564
        %v11597 = vadd.f32 %v11087, %v11567
        %v11598 = vadd.f32 %v11088, %v11569
        %v11599 = vadd.f32 %v11089, %v11572
        %v11600 = vadd.f32 %v11090, %v11574
        %v11601 = vadd.f32 %v11091, %v11577
        %v11602 = vadd.f32 %v11092, %v11579
        %v11603 = vadd.f32 %v11093, %v11582
        %v11604 = vadd.f32 %v11094, %v11584
        %v11605 = vadd.f32 %v11095, %v11587
        %v11606 = vadd.f32 %v11096, %v11589
        %11607 = vadd.xlane.f32.xlu0 %v11591
        %v11608 = vpop.xlane.xlu0 %11607
        %11609 = vadd.xlane.f32.xlu0 %v11592
        %v11610 = vpop.xlane.xlu0 %11609
        %11611 = vadd.xlane.f32.xlu0 %v11593
        %v11612 = vpop.xlane.xlu0 %11611
        %11613 = vadd.xlane.f32.xlu0 %v11594
        %v11614 = vpop.xlane.xlu0 %11613
        %11615 = vadd.xlane.f32.xlu0 %v11595
        %v11616 = vpop.xlane.xlu0 %11615
        %11617 = vadd.xlane.f32.xlu0 %v11596
        %v11618 = vpop.xlane.xlu0 %11617
        %11619 = vadd.xlane.f32.xlu0 %v11597
        %v11620 = vpop.xlane.xlu0 %11619
        %11621 = vadd.xlane.f32.xlu0 %v11598
        %v11622 = vpop.xlane.xlu0 %11621
        %11623 = vadd.xlane.f32.xlu0 %v11599
        %v11624 = vpop.xlane.xlu0 %11623
        %11625 = vadd.xlane.f32.xlu0 %v11600
        %v11626 = vpop.xlane.xlu0 %11625
        %11627 = vadd.xlane.f32.xlu0 %v11601
        %v11628 = vpop.xlane.xlu0 %11627
        %11629 = vadd.xlane.f32.xlu0 %v11602
        %v11630 = vpop.xlane.xlu0 %11629
        %11631 = vadd.xlane.f32.xlu0 %v11603
        %v11632 = vpop.xlane.xlu0 %11631
        %11633 = vadd.xlane.f32.xlu0 %v11604
        %v11634 = vpop.xlane.xlu0 %11633
        %11635 = vadd.xlane.f32.xlu0 %v11605
        %v11636 = vpop.xlane.xlu0 %11635
        %11637 = vadd.xlane.f32.xlu0 %v11606
        %v11638 = vpop.xlane.xlu0 %11637
        %v11639 = vmul.f32 %v11608, %v10766
        %v11640 = vmul.f32 %v11610, %v10766
        %v11641 = vmul.f32 %v11612, %v10766
        %v11642 = vmul.f32 %v11614, %v10766
        %v11643 = vmul.f32 %v11616, %v10766
        %v11644 = vmul.f32 %v11618, %v10766
        %v11645 = vmul.f32 %v11620, %v10766
        %v11646 = vmul.f32 %v11622, %v10766
        %v11647 = vmul.f32 %v11624, %v10766
        %v11648 = vmul.f32 %v11626, %v10766
        %v11649 = vmul.f32 %v11628, %v10766
        %v11650 = vmul.f32 %v11630, %v10766
        %v11651 = vmul.f32 %v11632, %v10766
        %v11652 = vmul.f32 %v11634, %v10766
        %v11653 = vmul.f32 %v11636, %v10766
        %v11654 = vmul.f32 %v11638, %v10766
        %v11655 = vsub.f32 %v11591, %v11639
        %v11656 = vsub.f32 %v11592, %v11640
        %v11657 = vsub.f32 %v11593, %v11641
        %v11658 = vsub.f32 %v11594, %v11642
        %v11659 = vsub.f32 %v11595, %v11643
        %v11660 = vsub.f32 %v11596, %v11644
        %v11661 = vsub.f32 %v11597, %v11645
        %v11662 = vsub.f32 %v11598, %v11646
        %v11663 = vsub.f32 %v11599, %v11647
        %v11664 = vsub.f32 %v11600, %v11648
        %v11665 = vsub.f32 %v11601, %v11649
        %v11666 = vsub.f32 %v11602, %v11650
        %v11667 = vsub.f32 %v11603, %v11651
        %v11668 = vsub.f32 %v11604, %v11652
        %v11669 = vsub.f32 %v11605, %v11653
        %v11670 = vsub.f32 %v11606, %v11654
        %v11671 = vmul.f32 %v11655, %v11655
        %v11672 = vmul.f32 %v11656, %v11656
        %v11673 = vmul.f32 %v11657, %v11657
        %v11674 = vmul.f32 %v11658, %v11658
        %v11675 = vmul.f32 %v11659, %v11659
        %v11676 = vmul.f32 %v11660, %v11660
        %v11677 = vmul.f32 %v11661, %v11661
        %v11678 = vmul.f32 %v11662, %v11662
        %v11679 = vmul.f32 %v11663, %v11663
        %v11680 = vmul.f32 %v11664, %v11664
        %v11681 = vmul.f32 %v11665, %v11665
        %v11682 = vmul.f32 %v11666, %v11666
        %v11683 = vmul.f32 %v11667, %v11667
        %v11684 = vmul.f32 %v11668, %v11668
        %v11685 = vmul.f32 %v11669, %v11669
        %v11686 = vmul.f32 %v11670, %v11670
        %11687 = vadd.xlane.f32.xlu0 %v11671
        %v11688 = vpop.xlane.xlu0 %11687
        %11689 = vadd.xlane.f32.xlu0 %v11672
        %v11690 = vpop.xlane.xlu0 %11689
        %11691 = vadd.xlane.f32.xlu0 %v11673
        %v11692 = vpop.xlane.xlu0 %11691
        %11693 = vadd.xlane.f32.xlu0 %v11674
        %v11694 = vpop.xlane.xlu0 %11693
        %11695 = vadd.xlane.f32.xlu0 %v11675
        %v11696 = vpop.xlane.xlu0 %11695
        %11697 = vadd.xlane.f32.xlu0 %v11676
        %v11698 = vpop.xlane.xlu0 %11697
        %11699 = vadd.xlane.f32.xlu0 %v11677
        %v11700 = vpop.xlane.xlu0 %11699
        %11701 = vadd.xlane.f32.xlu0 %v11678
        %v11702 = vpop.xlane.xlu0 %11701
        %11703 = vadd.xlane.f32.xlu0 %v11679
        %v11704 = vpop.xlane.xlu0 %11703
        %11705 = vadd.xlane.f32.xlu0 %v11680
        %v11706 = vpop.xlane.xlu0 %11705
        %11707 = vadd.xlane.f32.xlu0 %v11681
        %v11708 = vpop.xlane.xlu0 %11707
        %11709 = vadd.xlane.f32.xlu0 %v11682
        %v11710 = vpop.xlane.xlu0 %11709
        %11711 = vadd.xlane.f32.xlu0 %v11683
        %v11712 = vpop.xlane.xlu0 %11711
        %11713 = vadd.xlane.f32.xlu0 %v11684
        %v11714 = vpop.xlane.xlu0 %11713
        %11715 = vadd.xlane.f32.xlu0 %v11685
        %v11716 = vpop.xlane.xlu0 %11715
        %11717 = vadd.xlane.f32.xlu0 %v11686
        %v11718 = vpop.xlane.xlu0 %11717
        %v11719 = vmul.f32 %v11688, %v10766
        %v11720 = vmul.f32 %v11690, %v10766
        %v11721 = vmul.f32 %v11692, %v10766
        %v11722 = vmul.f32 %v11694, %v10766
        %v11723 = vmul.f32 %v11696, %v10766
        %v11724 = vmul.f32 %v11698, %v10766
        %v11725 = vmul.f32 %v11700, %v10766
        %v11726 = vmul.f32 %v11702, %v10766
        %v11727 = vmul.f32 %v11704, %v10766
        %v11728 = vmul.f32 %v11706, %v10766
        %v11729 = vmul.f32 %v11708, %v10766
        %v11730 = vmul.f32 %v11710, %v10766
        %v11731 = vmul.f32 %v11712, %v10766
        %v11732 = vmul.f32 %v11714, %v10766
        %v11733 = vmul.f32 %v11716, %v10766
        %v11734 = vmul.f32 %v11718, %v10766
        %v11735 = vadd.f32 %v11719, 1e-05
        %v11736 = vadd.f32 %v11720, 1e-05
        %v11737 = vadd.f32 %v11721, 1e-05
        %v11738 = vadd.f32 %v11722, 1e-05
        %v11739 = vadd.f32 %v11723, 1e-05
        %v11740 = vadd.f32 %v11724, 1e-05
        %v11741 = vadd.f32 %v11725, 1e-05
        %v11742 = vadd.f32 %v11726, 1e-05
        %v11743 = vadd.f32 %v11727, 1e-05
        %v11744 = vadd.f32 %v11728, 1e-05
        %v11745 = vadd.f32 %v11729, 1e-05
        %v11746 = vadd.f32 %v11730, 1e-05
        %v11747 = vadd.f32 %v11731, 1e-05
        %v11748 = vadd.f32 %v11732, 1e-05
        %v11749 = vadd.f32 %v11733, 1e-05
        %v11750 = vadd.f32 %v11734, 1e-05
        %v11751 = vrsqrt.pop %v11735
        %v11752 = vmul.f32 %v11751, %v11735
        %v11753 = vmul.f32 %v11752, %v11751
        %v11754 = vmul.f32 0.5, %v11753
        %v11755 = vsub.f32 1.5, %v11754
        %v11756 = vmul.f32 %v11751, %v11755
        %vm11757 = vweird.f32 %v11735
        %vm11758 = vweird.f32 %v11751
        %vm11759 = vmor %vm11757, %vm11758
        %v11760 = vsel %vm11759, %v11751, %v11756
        %v11761 = vrsqrt.pop %v11736
        %v11762 = vmul.f32 %v11761, %v11736
        %v11763 = vmul.f32 %v11762, %v11761
        %v11764 = vmul.f32 0.5, %v11763
        %v11765 = vsub.f32 1.5, %v11764
        %v11766 = vmul.f32 %v11761, %v11765
        %vm11767 = vweird.f32 %v11736
        %vm11768 = vweird.f32 %v11761
        %vm11769 = vmor %vm11767, %vm11768
        %v11770 = vsel %vm11769, %v11761, %v11766
        %v11771 = vrsqrt.pop %v11737
        %v11772 = vmul.f32 %v11771, %v11737
        %v11773 = vmul.f32 %v11772, %v11771
        %v11774 = vmul.f32 0.5, %v11773
        %v11775 = vsub.f32 1.5, %v11774
        %v11776 = vmul.f32 %v11771, %v11775
        %vm11777 = vweird.f32 %v11737
        %vm11778 = vweird.f32 %v11771
        %vm11779 = vmor %vm11777, %vm11778
        %v11780 = vsel %vm11779, %v11771, %v11776
        %v11781 = vrsqrt.pop %v11738
        %v11782 = vmul.f32 %v11781, %v11738
        %v11783 = vmul.f32 %v11782, %v11781
        %v11784 = vmul.f32 0.5, %v11783
        %v11785 = vsub.f32 1.5, %v11784
        %v11786 = vmul.f32 %v11781, %v11785
        %vm11787 = vweird.f32 %v11738
        %vm11788 = vweird.f32 %v11781
        %vm11789 = vmor %vm11787, %vm11788
        %v11790 = vsel %vm11789, %v11781, %v11786
        %v11791 = vrsqrt.pop %v11739
        %v11792 = vmul.f32 %v11791, %v11739
        %v11793 = vmul.f32 %v11792, %v11791
        %v11794 = vmul.f32 0.5, %v11793
        %v11795 = vsub.f32 1.5, %v11794
        %v11796 = vmul.f32 %v11791, %v11795
        %vm11797 = vweird.f32 %v11739
        %vm11798 = vweird.f32 %v11791
        %vm11799 = vmor %vm11797, %vm11798
        %v11800 = vsel %vm11799, %v11791, %v11796
        %v11801 = vrsqrt.pop %v11740
        %v11802 = vmul.f32 %v11801, %v11740
        %v11803 = vmul.f32 %v11802, %v11801
        %v11804 = vmul.f32 0.5, %v11803
        %v11805 = vsub.f32 1.5, %v11804
        %v11806 = vmul.f32 %v11801, %v11805
        %vm11807 = vweird.f32 %v11740
        %vm11808 = vweird.f32 %v11801
        %vm11809 = vmor %vm11807, %vm11808
        %v11810 = vsel %vm11809, %v11801, %v11806
        %v11811 = vrsqrt.pop %v11741
        %v11812 = vmul.f32 %v11811, %v11741
        %v11813 = vmul.f32 %v11812, %v11811
        %v11814 = vmul.f32 0.5, %v11813
        %v11815 = vsub.f32 1.5, %v11814
        %v11816 = vmul.f32 %v11811, %v11815
        %vm11817 = vweird.f32 %v11741
        %vm11818 = vweird.f32 %v11811
        %vm11819 = vmor %vm11817, %vm11818
        %v11820 = vsel %vm11819, %v11811, %v11816
        %v11821 = vrsqrt.pop %v11742
        %v11822 = vmul.f32 %v11821, %v11742
        %v11823 = vmul.f32 %v11822, %v11821
        %v11824 = vmul.f32 0.5, %v11823
        %v11825 = vsub.f32 1.5, %v11824
        %v11826 = vmul.f32 %v11821, %v11825
        %vm11827 = vweird.f32 %v11742
        %vm11828 = vweird.f32 %v11821
        %vm11829 = vmor %vm11827, %vm11828
        %v11830 = vsel %vm11829, %v11821, %v11826
        %v11831 = vrsqrt.pop %v11743
        %v11832 = vmul.f32 %v11831, %v11743
        %v11833 = vmul.f32 %v11832, %v11831
        %v11834 = vmul.f32 0.5, %v11833
        %v11835 = vsub.f32 1.5, %v11834
        %v11836 = vmul.f32 %v11831, %v11835
        %vm11837 = vweird.f32 %v11743
        %vm11838 = vweird.f32 %v11831
        %vm11839 = vmor %vm11837, %vm11838
        %v11840 = vsel %vm11839, %v11831, %v11836
        %v11841 = vrsqrt.pop %v11744
        %v11842 = vmul.f32 %v11841, %v11744
        %v11843 = vmul.f32 %v11842, %v11841
        %v11844 = vmul.f32 0.5, %v11843
        %v11845 = vsub.f32 1.5, %v11844
        %v11846 = vmul.f32 %v11841, %v11845
        %vm11847 = vweird.f32 %v11744
        %vm11848 = vweird.f32 %v11841
        %vm11849 = vmor %vm11847, %vm11848
        %v11850 = vsel %vm11849, %v11841, %v11846
        %v11851 = vrsqrt.pop %v11745
        %v11852 = vmul.f32 %v11851, %v11745
        %v11853 = vmul.f32 %v11852, %v11851
        %v11854 = vmul.f32 0.5, %v11853
        %v11855 = vsub.f32 1.5, %v11854
        %v11856 = vmul.f32 %v11851, %v11855
        %vm11857 = vweird.f32 %v11745
        %vm11858 = vweird.f32 %v11851
        %vm11859 = vmor %vm11857, %vm11858
        %v11860 = vsel %vm11859, %v11851, %v11856
        %v11861 = vrsqrt.pop %v11746
        %v11862 = vmul.f32 %v11861, %v11746
        %v11863 = vmul.f32 %v11862, %v11861
        %v11864 = vmul.f32 0.5, %v11863
        %v11865 = vsub.f32 1.5, %v11864
        %v11866 = vmul.f32 %v11861, %v11865
        %vm11867 = vweird.f32 %v11746
        %vm11868 = vweird.f32 %v11861
        %vm11869 = vmor %vm11867, %vm11868
        %v11870 = vsel %vm11869, %v11861, %v11866
        %v11871 = vrsqrt.pop %v11747
        %v11872 = vmul.f32 %v11871, %v11747
        %v11873 = vmul.f32 %v11872, %v11871
        %v11874 = vmul.f32 0.5, %v11873
        %v11875 = vsub.f32 1.5, %v11874
        %v11876 = vmul.f32 %v11871, %v11875
        %vm11877 = vweird.f32 %v11747
        %vm11878 = vweird.f32 %v11871
        %vm11879 = vmor %vm11877, %vm11878
        %v11880 = vsel %vm11879, %v11871, %v11876
        %v11881 = vrsqrt.pop %v11748
        %v11882 = vmul.f32 %v11881, %v11748
        %v11883 = vmul.f32 %v11882, %v11881
        %v11884 = vmul.f32 0.5, %v11883
        %v11885 = vsub.f32 1.5, %v11884
        %v11886 = vmul.f32 %v11881, %v11885
        %vm11887 = vweird.f32 %v11748
        %vm11888 = vweird.f32 %v11881
        %vm11889 = vmor %vm11887, %vm11888
        %v11890 = vsel %vm11889, %v11881, %v11886
        %v11891 = vrsqrt.pop %v11749
        %v11892 = vmul.f32 %v11891, %v11749
        %v11893 = vmul.f32 %v11892, %v11891
        %v11894 = vmul.f32 0.5, %v11893
        %v11895 = vsub.f32 1.5, %v11894
        %v11896 = vmul.f32 %v11891, %v11895
        %vm11897 = vweird.f32 %v11749
        %vm11898 = vweird.f32 %v11891
        %vm11899 = vmor %vm11897, %vm11898
        %v11900 = vsel %vm11899, %v11891, %v11896
        %v11901 = vrsqrt.pop %v11750
        %v11902 = vmul.f32 %v11901, %v11750
        %v11903 = vmul.f32 %v11902, %v11901
        %v11904 = vmul.f32 0.5, %v11903
        %v11905 = vsub.f32 1.5, %v11904
        %v11906 = vmul.f32 %v11901, %v11905
        %vm11907 = vweird.f32 %v11750
        %vm11908 = vweird.f32 %v11901
        %vm11909 = vmor %vm11907, %vm11908
        %v11910 = vsel %vm11909, %v11901, %v11906
        %v11911 = vmul.f32 %v11655, %v11760
        %v11912 = vmul.f32 %v11656, %v11770
        %v11913 = vmul.f32 %v11657, %v11780
        %v11914 = vmul.f32 %v11658, %v11790
        %v11915 = vmul.f32 %v11659, %v11800
        %v11916 = vmul.f32 %v11660, %v11810
        %v11917 = vmul.f32 %v11661, %v11820
        %v11918 = vmul.f32 %v11662, %v11830
        %v11919 = vmul.f32 %v11663, %v11840
        %v11920 = vmul.f32 %v11664, %v11850
        %v11921 = vmul.f32 %v11665, %v11860
        %v11922 = vmul.f32 %v11666, %v11870
        %v11923 = vmul.f32 %v11667, %v11880
        %v11924 = vmul.f32 %v11668, %v11890
        %v11925 = vmul.f32 %v11669, %v11900
        %v11926 = vmul.f32 %v11670, %v11910
        %s11927 = scalar_lea.vmem %s11, %s39
        %v11928 = vld [vmem:[%s11927] sm:$0x1]
        %v11930 = vperm.slane %v11928, 0
        %v11932 = vmul.f32 %v11911, %v11930
        %v11933 = vmul.f32 %v11912, %v11930
        %v11934 = vmul.f32 %v11913, %v11930
        %v11935 = vmul.f32 %v11914, %v11930
        %v11936 = vmul.f32 %v11915, %v11930
        %v11937 = vmul.f32 %v11916, %v11930
        %v11938 = vmul.f32 %v11917, %v11930
        %v11939 = vmul.f32 %v11918, %v11930
        %v11940 = vmul.f32 %v11919, %v11930
        %v11941 = vmul.f32 %v11920, %v11930
        %v11942 = vmul.f32 %v11921, %v11930
        %v11943 = vmul.f32 %v11922, %v11930
        %v11944 = vmul.f32 %v11923, %v11930
        %v11945 = vmul.f32 %v11924, %v11930
        %v11946 = vmul.f32 %v11925, %v11930
        %v11947 = vmul.f32 %v11926, %v11930
        %s11948 = scalar_lea.vmem [#allocation16], %s39
        %v11949 = vld [vmem:[%s11948] sm:$0x1]
        %v11951 = vperm.slane %v11949, 0
        %v11953 = vadd.f32 %v11932, %v11951
        %v11954 = vadd.f32 %v11933, %v11951
        %v11955 = vadd.f32 %v11934, %v11951
        %v11956 = vadd.f32 %v11935, %v11951
        %v11957 = vadd.f32 %v11936, %v11951
        %v11958 = vadd.f32 %v11937, %v11951
        %v11959 = vadd.f32 %v11938, %v11951
        %v11960 = vadd.f32 %v11939, %v11951
        %v11961 = vadd.f32 %v11940, %v11951
        %v11962 = vadd.f32 %v11941, %v11951
        %v11963 = vadd.f32 %v11942, %v11951
        %v11964 = vadd.f32 %v11943, %v11951
        %v11965 = vadd.f32 %v11944, %v11951
        %v11966 = vadd.f32 %v11945, %v11951
        %v11967 = vadd.f32 %v11946, %v11951
        %v11968 = vadd.f32 %v11947, %v11951
        %11969 = vst [vmem:[%s604] sm:$0xff] %v11953
        %11970 = vst [vmem:[%s604 + $0x8] sm:$0xff] %v11954
        %11971 = vst [vmem:[%s604 + $0x10] sm:$0xff] %v11955
        %11972 = vst [vmem:[%s604 + $0x18] sm:$0xff] %v11956
        %11973 = vst [vmem:[%s604 + $0x20] sm:$0xff] %v11957
        %11974 = vst [vmem:[%s604 + $0x28] sm:$0xff] %v11958
        %11975 = vst [vmem:[%s604 + $0x30] sm:$0xff] %v11959
        %11976 = vst [vmem:[%s604 + $0x38] sm:$0xff] %v11960
        %11977 = vst [vmem:[%s604 + $0x40] sm:$0xff] %v11961
        %11978 = vst [vmem:[%s604 + $0x48] sm:$0xff] %v11962
        %11979 = vst [vmem:[%s604 + $0x50] sm:$0xff] %v11963
        %11980 = vst [vmem:[%s604 + $0x58] sm:$0xff] %v11964
        %11981 = vst [vmem:[%s604 + $0x60] sm:$0xff] %v11965
        %11982 = vst [vmem:[%s604 + $0x68] sm:$0xff] %v11966
        %11983 = vst [vmem:[%s604 + $0x70] sm:$0xff] %v11967
        %11984 = vst [vmem:[%s604 + $0x78] sm:$0xff] %v11968
        %s11985 = sand.u32 %s332, 1
        %s11986 = scalar_lea.sflag [#allocation4], %s11985
        %s11987 = sand.u32 %s332, 1
        %s11988 = smul.addr %s11987, 128
        %s11989 = scalar_lea.vmem [#allocation17], %s11988
        // Predicated region
        $region113: #{tpu_custom_call.1} parent=71 // pred_check
          %p11990 = pneg %p342
        $region114: #{tpu_custom_call.1} parent=71 // pred_check_branch
          %11992 = sbr.rel (%p11990) target = $region116
        $region115: #{tpu_custom_call.1} parent=71 // pred_region
          %11994 = vsyncadd %s11986, 0
          %s11995 = smul.addr %s38, 16
          %s11996 = smul.addr %s11995, 8
          %s11997 = scalar_lea.hbm %s13, %s11996
          %s11998 = sshll.u32 %s11989, 4
          %s11999 = int_to_ptr.vmem [resolvable:$true] %s11998
          %s12000 = sshll.u32 %s11997, 4
          %s12001 = int_to_ptr.hbm [resolvable:$true] %s12000
          %12006 = dma.vmem_to_hbm [thread:$0]  %s11999, 2048, %s12001, %s11986, 128, 128, 8
        $region116: #{tpu_custom_call.1} parent=71 // pred_fallthru
          _
      $region72: #{tpu_custom_call.1} parent=5 // pred_fallthru
        _
      %p12007 = scmp.le.s32.totalorder 2, %s29
      // Predicated region
      $region117: #{tpu_custom_call.1} parent=5 // pred_check
        %p12008 = pneg %p12007
      $region118: #{tpu_custom_call.1} parent=5 // pred_check_branch
        %12010 = sbr.rel (%p12008) target = $region120
      $region119: #{tpu_custom_call.1} parent=5 // pred_region
        %s12011 = ssub.s32 %s29, 2
        // Predicated region
        $region121: #{tpu_custom_call.1} parent=119 // pred_check
          %p12012 = pneg %p348
        $region122: #{tpu_custom_call.1} parent=119 // pred_check_branch
          %12014 = sbr.rel (%p12012) target = $region124
        $region123: #{tpu_custom_call.1} parent=119 // pred_region
          %s12015 = sand.u32 %s333, 1
          %s12016 = scalar_lea.sflag [#allocation4], %s12015
          %s12017 = sand.u32 %s333, 1
          %s12018 = smul.addr %s12017, 128
          %s12019 = scalar_lea.vmem [#allocation17], %s12018
          %12021 = dma.done %s12016, 2048
        $region124: #{tpu_custom_call.1} parent=119 // pred_fallthru
          _
      $region120: #{tpu_custom_call.1} parent=5 // pred_fallthru
        _
    $region6: #{tpu_custom_call.1} parent=1 // loop_footer
      %s33 = sadd.s32 1, %s29
    $region7: #{tpu_custom_call.1} parent=1 // loop_footer_branch
      %28 = sbr.rel target = $region3
    $region8: #{tpu_custom_call.1} parent=1 // loop_exit
      _
    %12022 = vsyncpa [#allocation3], 1
    %s12023 = scalar_lea.sflag [#allocation3], 1
    %12024 = vsyncpa %s12023, 1
    %12025 = vsyncpa [#allocation6], 1
    %12026 = vsyncpa [#allocation9], 1
    %12027 = vsyncpa [#allocation12], 1
    %12028 = vsyncpa [#allocation15], 1
    %12029 = vsyncpa [#allocation4], 1
    %s12030 = scalar_lea.sflag [#allocation4], 1
    %12031 = vsyncpa %s12030, 1

</llo_original>
